<compile_context>
chip_gen: v7x
topology: tpu7x:2x2x1
jax: 0.10.0
libtpu: 0.0.40
codegen_flags: <defaults>
</compile_context>

<pallas_src>
import math

import jax
import jax.numpy as jnp
from jax import lax
from jax.experimental import pallas as pl
from jax.experimental.pallas import tpu as pltpu


_VMEM_LIMIT_BYTES = 48 * 1024 * 1024   # safe on v5e/v6e (128 MiB) and v7x (64 MiB)
_VMEM_BUDGET_BYTES = 40 * 1024 * 1024  # chunk-sizing budget (headroom under limit)


def _round_up(n, m):
    return ((n + m - 1) // m) * m


def _pick_time_chunk(T, B, H, L, Lm1, wbytes, budget=_VMEM_BUDGET_BYTES):
    """Largest divisor of T whose chunk fits the VMEM budget."""
    def need(tt):
        rows = tt * B
        return (2 * rows * 3 * H * 4        # gi0 input, double-buffered
                + 2 * rows * H * 4          # y output, double-buffered
                + rows * 3 * H * 4          # gi scratch
                + rows * H * 4              # cur scratch
                + 2 * (Lm1 + L) * H * 3 * H * wbytes   # stacked weights
                + 4 * L * B * H * 4         # h0 + resident hT
                + 2 * (Lm1 * 3 * H + L * H) * 4)       # biases
    best = 1
    for tt in range(1, T + 1):
        if T % tt == 0 and need(tt) <= budget:
            best = tt
    # TODO(synk): for awkward/prime large T, pad T to a chunk multiple and mask
    # the tail instead of degrading toward Tt=1.
    return best


def _gru_fused_kernel(gi0_ref, h0_ref, wih_ref, whh_ref, bgi_ref, bhn_ref,
                      y_ref, hT_ref, gi_scr, cur_scr):
    # gi0_ref: (rows, 3H)    layer-0 input projection chunk (f32, biases folded)
    # h0_ref : (L, B, H)     initial hidden states
    # wih_ref: (Lm1, H, 3H)  W_ih^T for layers 1..L-1 (bf16 or f32)
    # whh_ref: (L, H, 3H)    W_hh^T for all layers
    # bgi_ref: (Lm1, 1, 3H)  folded [b_ir+b_hr, b_iz+b_hz, b_in] for layers 1..L-1
    # bhn_ref: (L, 1, H)     b_hn per layer
    # y_ref  : (rows, H)     last layer's output chunk
    # hT_ref : (L, B, H)     resident per-layer hidden carry / final hidden
    # gi_scr : (rows, 3H)    VMEM scratch for the current layer's input projection
    # cur_scr: (rows, H)     VMEM scratch for the current layer's output chunk
    L, B, H = hT_ref.shape
    rows = gi0_ref.shape[0]
    Tt = rows // B
    cd = whh_ref.dtype                       # matmul operand dtype (bf16 or f32)
    unroll = max(1, min(Tt, 8))              # bounded unroll of the recurrence

    # Initialize the resident hidden-state carry from h0 on the first chunk.
    @pl.when(pl.program_id(0) == 0)
    def _():
        hT_ref[...] = h0_ref[...]

    for l in range(L):                       # static layer loop (fused layers)
        if l == 0:
            src_gi = gi0_ref                 # precomputed outside the kernel
        else:
            # Input projection for this layer over the whole chunk: one big
            # matmul (M = Tt*B) hoisted out of the recurrence, biases folded,
            # result staged in VMEM scratch.
            gi_scr[...] = (
                jnp.dot(cur_scr[...].astype(cd), wih_ref[l - 1],
                        preferred_element_type=jnp.float32)
                + bgi_ref[l - 1])
            src_gi = gi_scr

        dst = y_ref if l == L - 1 else cur_scr
        b_hn = jnp.broadcast_to(bhn_ref[l], (B, H))     # hoisted broadcast

        def step(t, h, *, l=l, src_gi=src_gi, dst=dst, b_hn=b_hn):
            row = pl.multiple_of(t * B, B)              # sublane-aligned offset
            gi_t = src_gi[pl.ds(row, B), :]             # (B, 3H) aligned load
            gh = jnp.dot(h.astype(cd), whh_ref[l],      # read whh from ref here
                         preferred_element_type=jnp.float32)
            r = jax.nn.sigmoid(gi_t[:, 0:H] + gh[:, 0:H])
            z = jax.nn.sigmoid(gi_t[:, H:2 * H] + gh[:, H:2 * H])
            n = jnp.tanh(gi_t[:, 2 * H:3 * H] + r * (gh[:, 2 * H:3 * H] + b_hn))
            h_new = n + z * (h - n)                     # == (1-z)*n + z*h
            dst[pl.ds(row, B), :] = h_new
            return h_new

        h_final = lax.fori_loop(0, Tt, step, hT_ref[l], unroll=unroll)
        hT_ref[l] = h_final


def prepare_params(params, compute_dtype=jnp.bfloat16):
    """Convert PyTorch-layout GRU params [(W_ih, W_hh, b_ih, b_hh)] * L into the
    fused-kernel layout. Matmul operands use `compute_dtype` (bf16 default,
    MXU-native); biases and gate math stay f32."""
    L = len(params)
    H = params[0][0].shape[0] // 3

    def fold_bias(bih, bhh):
        return jnp.concatenate([bih[0:H] + bhh[0:H],
                                bih[H:2 * H] + bhh[H:2 * H],
                                bih[2 * H:3 * H]]).astype(jnp.float32)

    # Layer-0 input projection is done outside the kernel (XLA), keep it f32.
    wih0_t = jnp.asarray(params[0][0].T, jnp.float32)                 # (E, 3H)
    bgi0 = fold_bias(params[0][2], params[0][3]).reshape(1, 3 * H)

    if L > 1:
        wih_rest = jnp.stack(
            [jnp.asarray(p[0].T, compute_dtype) for p in params[1:]])  # (L-1,H,3H)
        bgi_rest = jnp.stack(
            [fold_bias(p[2], p[3]).reshape(1, 3 * H) for p in params[1:]])
    else:  # dummies (never read by the kernel when L == 1)
        wih_rest = jnp.zeros((1, H, 3 * H), compute_dtype)
        bgi_rest = jnp.zeros((1, 1, 3 * H), jnp.float32)

    whh_all = jnp.stack([jnp.asarray(p[1].T, compute_dtype) for p in params])
    bhn_all = jnp.stack(
        [p[3][2 * H:3 * H].reshape(1, H).astype(jnp.float32) for p in params])

    return dict(wih0_t=wih0_t, bgi0=bgi0, wih_rest=wih_rest, whh_all=whh_all,
                bgi_rest=bgi_rest, bhn_all=bhn_all)


def pt_gru_encoder_forward(x, hidden, prepared):
    """x: (B, T, E), hidden: (L, B, H) -> (output (B, T, H), hidden (L, B, H))."""
    B0, T, E = x.shape
    L, _, H = hidden.shape
    Lm1 = prepared['wih_rest'].shape[0]
    Bp = _round_up(B0, 8)                    # pad batch to sublane multiple

    xf = x.astype(jnp.float32)
    h0 = hidden.astype(jnp.float32)
    if Bp != B0:
        xf = jnp.pad(xf, ((0, Bp - B0), (0, 0), (0, 0)))
        h0 = jnp.pad(h0, ((0, 0), (0, Bp - B0), (0, 0)))

    # Time-major flatten so each per-step slab is an (8,128)-aligned (B, .) tile.
    x2d = jnp.transpose(xf, (1, 0, 2)).reshape(T * Bp, E)
    # Layer-0 input projection (K=E is tiny & lane-sparse) done once in XLA.
    gi0 = x2d @ prepared['wih0_t'] + prepared['bgi0']              # (T*Bp, 3H)

    wbytes = prepared['whh_all'].dtype.itemsize
    Tt = _pick_time_chunk(T, Bp, H, L, Lm1, wbytes)
    rows = Tt * Bp
    n_chunks = T // Tt

    y2d, hT = pl.pallas_call(
        _gru_fused_kernel,
        out_shape=(
            jax.ShapeDtypeStruct((T * Bp, H), jnp.float32),
            jax.ShapeDtypeStruct((L, Bp, H), jnp.float32),
        ),
        grid_spec=pltpu.PrefetchScalarGridSpec(
            num_scalar_prefetch=0,
            grid=(n_chunks,),
            in_specs=[
                pl.BlockSpec((rows, 3 * H), lambda i: (i, 0)),        # gi0 chunk
                pl.BlockSpec((L, Bp, H), lambda i: (0, 0, 0)),        # h0
                pl.BlockSpec((Lm1, H, 3 * H), lambda i: (0, 0, 0)),   # W_ih^T 1..L-1
                pl.BlockSpec((L, H, 3 * H), lambda i: (0, 0, 0)),     # W_hh^T
                pl.BlockSpec((Lm1, 1, 3 * H), lambda i: (0, 0, 0)),   # folded biases
                pl.BlockSpec((L, 1, H), lambda i: (0, 0, 0)),         # b_hn
            ],
            out_specs=(
                pl.BlockSpec((rows, H), lambda i: (i, 0)),            # y chunk
                pl.BlockSpec((L, Bp, H), lambda i: (0, 0, 0)),        # hT (resident)
            ),
            scratch_shapes=[
                pltpu.VMEM((rows, 3 * H), jnp.float32),               # gi staging
                pltpu.VMEM((rows, H), jnp.float32),                   # layer output
            ],
        ),
        compiler_params=pltpu.CompilerParams(
            dimension_semantics=("arbitrary",),   # serial recurrence — never parallel
            vmem_limit_bytes=_VMEM_LIMIT_BYTES,
        ),
    )(gi0, h0, prepared['wih_rest'], prepared['whh_all'],
      prepared['bgi_rest'], prepared['bhn_all'])

    y = y2d.reshape(T, Bp, H)[:, :B0, :]
    output = jnp.transpose(y, (1, 0, 2))          # back to (B, T, H)
    return output, hT[:, :B0, :]


def init_gru_params(key, embed_size, hidden_size, num_layers):
    """Deterministic init matching PyTorch nn.GRU param shapes & uniform init."""
    stdv = 1.0 / math.sqrt(hidden_size)
    params = []
    for layer_idx in range(num_layers):
        d_in = embed_size if layer_idx == 0 else hidden_size
        key, k1, k2, k3, k4 = jax.random.split(key, 5)
        wih = jax.random.uniform(k1, (3 * hidden_size, d_in), jnp.float32, -stdv, stdv)
        whh = jax.random.uniform(k2, (3 * hidden_size, hidden_size), jnp.float32, -stdv, stdv)
        bih = jax.random.uniform(k3, (3 * hidden_size,), jnp.float32, -stdv, stdv)
        bhh = jax.random.uniform(k4, (3 * hidden_size,), jnp.float32, -stdv, stdv)
        params.append((wih, whh, bih, bhh))
    return params


def gru_reference(x, hidden, params):
    """Pure-JAX reference implementing the same PyTorch GRU math (all f32)."""
    B, T, _ = x.shape
    H = hidden.shape[-1]
    inp = x.astype(jnp.float32)
    h_finals = []
    for layer_idx, (wih, whh, bih, bhh) in enumerate(params):
        h = hidden[layer_idx]
        ys = []
        for t in range(T):
            x_t = inp[:, t, :]
            gi = x_t @ wih.T + bih
            gh = h @ whh.T + bhh
            i_r, i_z, i_n = gi[:, :H], gi[:, H:2 * H], gi[:, 2 * H:]
            h_r, h_z, h_n = gh[:, :H], gh[:, H:2 * H], gh[:, 2 * H:]
            r = jax.nn.sigmoid(i_r + h_r)
            z = jax.nn.sigmoid(i_z + h_z)
            n = jnp.tanh(i_n + r * h_n)
            h = (1.0 - z) * n + z * h
            ys.append(h)
        inp = jnp.stack(ys, axis=1)
        h_finals.append(h)
    return inp, jnp.stack(h_finals, axis=0)


if __name__ == "__main__":
    # Shapes consistent with the module defaults (hidden_size=128, num_layers=4,
    # embed_size=4); H=128 keeps gate slices lane-aligned.
    batch = 2
    seq = 8
    embed_size = 4
    hidden_size = 128
    num_layers = 4

    key = jax.random.PRNGKey(0)
    k_params, k_x = jax.random.split(key)

    params = init_gru_params(k_params, embed_size, hidden_size, num_layers)
    x = jax.random.normal(k_x, (batch, seq, embed_size), dtype=jnp.float32)
    # init_hidden(batch_size) -> zeros(num_layers, batch, hidden)
    hidden0 = jnp.zeros((num_layers, batch, hidden_size), dtype=jnp.float32)

    ref_out, ref_hidden = gru_reference(x, hidden0, params)

    forward = jax.jit(pt_gru_encoder_forward)

    # f32-operand path: close to the PyTorch f32 math.
    out_f32, hid_f32 = forward(x, hidden0, prepare_params(params, jnp.float32))
    jax.block_until_ready((out_f32, hid_f32))
    assert out_f32.shape == (batch, seq, hidden_size)
    assert hid_f32.shape == (num_layers, batch, hidden_size)
    err_y32 = float(jnp.max(jnp.abs(out_f32 - ref_out)))
    err_h32 = float(jnp.max(jnp.abs(hid_f32 - ref_hidden)))
    assert err_y32 < 5e-3 and err_h32 < 5e-3, (err_y32, err_h32)

    # bf16-operand default path (MXU-native), f32 accumulation + f32 gates.
    out_bf, hid_bf = forward(x, hidden0, prepare_params(params))
    jax.block_until_ready((out_bf, hid_bf))
    err_y = float(jnp.max(jnp.abs(out_bf - ref_out)))
    err_h = float(jnp.max(jnp.abs(hid_bf - ref_hidden)))
    assert err_y < 2.5e-1 and err_h < 2.5e-1, (err_y, err_h)

    print("KERNEL_OK")
</pallas_src>

<mosaic_0001>
module attributes {stable_mosaic.version = 11 : i64} {
  func.func @_gru_fused_kernel(%arg0: i32, %arg1: memref<64x384xf32, #tpu.memory_space<vmem>>, %arg2: memref<4x8x128xf32, #tpu.memory_space<vmem>>, %arg3: memref<3x128x384xf32, #tpu.memory_space<vmem>>, %arg4: memref<4x128x384xf32, #tpu.memory_space<vmem>>, %arg5: memref<3x1x384xf32, #tpu.memory_space<vmem>>, %arg6: memref<4x1x128xf32, #tpu.memory_space<vmem>>, %arg7: memref<64x128xf32, #tpu.memory_space<vmem>>, %arg8: memref<4x8x128xf32, #tpu.memory_space<vmem>>, %arg9: memref<64x384xf32, #tpu.memory_space<vmem>>, %arg10: memref<64x128xf32, #tpu.memory_space<vmem>>) attributes {dimension_semantics = [#tpu.dimension_semantics<arbitrary>], iteration_bounds = array<i64: 1>, scalar_prefetch = 0 : i64, scratch_operands = 2 : i64, tpu.core_type = #tpu.core_type<tc>, window_params = [{transform_indices = @transform_0, window_bounds = array<i64: 64, 384>}, {pipeline_mode = #tpu.pipeline_mode<synchronous>, transform_indices = @transform_1, window_bounds = array<i64: 4, 8, 128>}, {pipeline_mode = #tpu.pipeline_mode<synchronous>, transform_indices = @transform_2, window_bounds = array<i64: 3, 128, 384>}, {pipeline_mode = #tpu.pipeline_mode<synchronous>, transform_indices = @transform_3, window_bounds = array<i64: 4, 128, 384>}, {pipeline_mode = #tpu.pipeline_mode<synchronous>, transform_indices = @transform_4, window_bounds = array<i64: 3, 1, 384>}, {pipeline_mode = #tpu.pipeline_mode<synchronous>, transform_indices = @transform_5, window_bounds = array<i64: 4, 1, 128>}, {transform_indices = @transform_6, window_bounds = array<i64: 64, 128>}, {pipeline_mode = #tpu.pipeline_mode<synchronous>, transform_indices = @transform_7, window_bounds = array<i64: 4, 8, 128>}]} {
    %c0_i32 = arith.constant 0 : i32
    %0 = arith.cmpi eq, %arg0, %c0_i32 : i32
    %1 = arith.extui %0 : i1 to i32
    %c0_i32_0 = arith.constant 0 : i32
    %2 = arith.cmpi ne, %1, %c0_i32_0 : i32
    scf.if %2 {
      %c0_381 = arith.constant 0 : index
      %c0_382 = arith.constant 0 : index
      %c0_383 = arith.constant 0 : index
      %1154 = vector.load %arg2[%c0_381, %c0_382, %c0_383] : memref<4x8x128xf32, #tpu.memory_space<vmem>>, vector<4x8x128xf32>
      %c0_384 = arith.constant 0 : index
      %c0_385 = arith.constant 0 : index
      %c0_386 = arith.constant 0 : index
      %1155 = vector.load %arg8[%c0_384, %c0_385, %c0_386] : memref<4x8x128xf32, #tpu.memory_space<vmem>>, vector<4x8x128xf32>
      tpu.vector_store %arg8[%c0_384, %c0_385, %c0_386], %1154 {strides = array<i32>} : memref<4x8x128xf32, #tpu.memory_space<vmem>>, vector<4x8x128xf32>,
    } else {
    }
    %c0 = arith.constant 0 : index
    %c0_1 = arith.constant 0 : index
    %c0_2 = arith.constant 0 : index
    %3 = vector.load %arg6[%c0, %c0_1, %c0_2] : memref<4x1x128xf32, #tpu.memory_space<vmem>>, vector<1x1x128xf32>
    %4 = vector.shape_cast %3 : vector<1x1x128xf32> to vector<1x128xf32>
    %5 = vector.shape_cast %4 : vector<1x128xf32> to vector<1x128xf32>
    %6 = vector.broadcast %5 : vector<1x128xf32> to vector<8x128xf32>
    %c0_3 = arith.constant 0 : index
    %c0_4 = arith.constant 0 : index
    %c0_5 = arith.constant 0 : index
    %7 = vector.load %arg8[%c0_3, %c0_4, %c0_5] : memref<4x8x128xf32, #tpu.memory_space<vmem>>, vector<1x8x128xf32>
    %8 = vector.shape_cast %7 : vector<1x8x128xf32> to vector<8x128xf32>
    %c0_i32_6 = arith.constant 0 : i32
    %c8_i32 = arith.constant 8 : i32
    %9 = arith.muli %c0_i32_6, %c8_i32 : i32
    %10 = tpu.assume_multiple %9, 8 : i32
    %11 = arith.index_cast %10 : i32 to index
    %c0_7 = arith.constant 0 : index
    %12 = vector.load %arg1[%11, %c0_7] : memref<64x384xf32, #tpu.memory_space<vmem>>, vector<8x384xf32>
    %c0_8 = arith.constant 0 : index
    %c0_9 = arith.constant 0 : index
    %c0_10 = arith.constant 0 : index
    %13 = vector.load %arg4[%c0_8, %c0_9, %c0_10] : memref<4x128x384xf32, #tpu.memory_space<vmem>>, vector<1x128x384xf32>
    %14 = vector.shape_cast %13 : vector<1x128x384xf32> to vector<128x384xf32>
    %cst = arith.constant dense<0.000000e+00> : vector<8x384xf32>
    %15 = tpu.matmul %8, %14, %cst {dimension_numbers = #tpu.dot_dimension_numbers<[1], [0], [0], [1], [0, 0, 1, 1], [], []>} : vector<8x128xf32>, vector<128x384xf32>, vector<8x384xf32> -> vector<8x384xf32>
    %16 = vector.extract_strided_slice %12 {offsets = [0, 0], sizes = [8, 128], strides = [1, 1]} : vector<8x384xf32> to vector<8x128xf32>
    %17 = vector.extract_strided_slice %15 {offsets = [0, 0], sizes = [8, 128], strides = [1, 1]} : vector<8x384xf32> to vector<8x128xf32>
    %18 = arith.addf %16, %17 : vector<8x128xf32>
    %19 = arith.negf %18 : vector<8x128xf32>
    %20 = math.exp %19 : vector<8x128xf32>
    %cst_11 = arith.constant 1.000000e+00 : f32
    %21 = vector.broadcast %cst_11 : f32 to vector<8x128xf32>
    %22 = arith.addf %21, %20 : vector<8x128xf32>
    %23 = arith.divf %21, %22 : vector<8x128xf32>
    %24 = vector.extract_strided_slice %12 {offsets = [0, 128], sizes = [8, 128], strides = [1, 1]} : vector<8x384xf32> to vector<8x128xf32>
    %25 = vector.extract_strided_slice %15 {offsets = [0, 128], sizes = [8, 128], strides = [1, 1]} : vector<8x384xf32> to vector<8x128xf32>
    %26 = arith.addf %24, %25 : vector<8x128xf32>
    %27 = arith.negf %26 : vector<8x128xf32>
    %28 = math.exp %27 : vector<8x128xf32>
    %cst_12 = arith.constant 1.000000e+00 : f32
    %29 = vector.broadcast %cst_12 : f32 to vector<8x128xf32>
    %30 = arith.addf %29, %28 : vector<8x128xf32>
    %31 = arith.divf %29, %30 : vector<8x128xf32>
    %32 = vector.extract_strided_slice %12 {offsets = [0, 256], sizes = [8, 128], strides = [1, 1]} : vector<8x384xf32> to vector<8x128xf32>
    %33 = vector.extract_strided_slice %15 {offsets = [0, 256], sizes = [8, 128], strides = [1, 1]} : vector<8x384xf32> to vector<8x128xf32>
    %34 = arith.addf %33, %6 : vector<8x128xf32>
    %35 = arith.mulf %23, %34 : vector<8x128xf32>
    %36 = arith.addf %32, %35 : vector<8x128xf32>
    %37 = math.tanh %36 : vector<8x128xf32>
    %38 = arith.subf %8, %37 : vector<8x128xf32>
    %39 = arith.mulf %31, %38 : vector<8x128xf32>
    %40 = arith.addf %37, %39 : vector<8x128xf32>
    %41 = arith.index_cast %10 : i32 to index
    %c0_13 = arith.constant 0 : index
    %42 = vector.load %arg10[%41, %c0_13] : memref<64x128xf32, #tpu.memory_space<vmem>>, vector<8x128xf32>
    tpu.vector_store %arg10[%41, %c0_13], %40 {strides = array<i32>} : memref<64x128xf32, #tpu.memory_space<vmem>>, vector<8x128xf32>,
    %c1_i32 = arith.constant 1 : i32
    %c8_i32_14 = arith.constant 8 : i32
    %43 = arith.muli %c1_i32, %c8_i32_14 : i32
    %44 = tpu.assume_multiple %43, 8 : i32
    %45 = arith.index_cast %44 : i32 to index
    %c0_15 = arith.constant 0 : index
    %46 = vector.load %arg1[%45, %c0_15] : memref<64x384xf32, #tpu.memory_space<vmem>>, vector<8x384xf32>
    %c0_16 = arith.constant 0 : index
    %c0_17 = arith.constant 0 : index
    %c0_18 = arith.constant 0 : index
    %47 = vector.load %arg4[%c0_16, %c0_17, %c0_18] : memref<4x128x384xf32, #tpu.memory_space<vmem>>, vector<1x128x384xf32>
    %48 = vector.shape_cast %47 : vector<1x128x384xf32> to vector<128x384xf32>
    %cst_19 = arith.constant dense<0.000000e+00> : vector<8x384xf32>
    %49 = tpu.matmul %40, %48, %cst_19 {dimension_numbers = #tpu.dot_dimension_numbers<[1], [0], [0], [1], [0, 0, 1, 1], [], []>} : vector<8x128xf32>, vector<128x384xf32>, vector<8x384xf32> -> vector<8x384xf32>
    %50 = vector.extract_strided_slice %46 {offsets = [0, 0], sizes = [8, 128], strides = [1, 1]} : vector<8x384xf32> to vector<8x128xf32>
    %51 = vector.extract_strided_slice %49 {offsets = [0, 0], sizes = [8, 128], strides = [1, 1]} : vector<8x384xf32> to vector<8x128xf32>
    %52 = arith.addf %50, %51 : vector<8x128xf32>
    %53 = arith.negf %52 : vector<8x128xf32>
    %54 = math.exp %53 : vector<8x128xf32>
    %cst_20 = arith.constant 1.000000e+00 : f32
    %55 = vector.broadcast %cst_20 : f32 to vector<8x128xf32>
    %56 = arith.addf %55, %54 : vector<8x128xf32>
    %57 = arith.divf %55, %56 : vector<8x128xf32>
    %58 = vector.extract_strided_slice %46 {offsets = [0, 128], sizes = [8, 128], strides = [1, 1]} : vector<8x384xf32> to vector<8x128xf32>
    %59 = vector.extract_strided_slice %49 {offsets = [0, 128], sizes = [8, 128], strides = [1, 1]} : vector<8x384xf32> to vector<8x128xf32>
    %60 = arith.addf %58, %59 : vector<8x128xf32>
    %61 = arith.negf %60 : vector<8x128xf32>
    %62 = math.exp %61 : vector<8x128xf32>
    %cst_21 = arith.constant 1.000000e+00 : f32
    %63 = vector.broadcast %cst_21 : f32 to vector<8x128xf32>
    %64 = arith.addf %63, %62 : vector<8x128xf32>
    %65 = arith.divf %63, %64 : vector<8x128xf32>
    %66 = vector.extract_strided_slice %46 {offsets = [0, 256], sizes = [8, 128], strides = [1, 1]} : vector<8x384xf32> to vector<8x128xf32>
    %67 = vector.extract_strided_slice %49 {offsets = [0, 256], sizes = [8, 128], strides = [1, 1]} : vector<8x384xf32> to vector<8x128xf32>
    %68 = arith.addf %67, %6 : vector<8x128xf32>
    %69 = arith.mulf %57, %68 : vector<8x128xf32>
    %70 = arith.addf %66, %69 : vector<8x128xf32>
    %71 = math.tanh %70 : vector<8x128xf32>
    %72 = arith.subf %40, %71 : vector<8x128xf32>
    %73 = arith.mulf %65, %72 : vector<8x128xf32>
    %74 = arith.addf %71, %73 : vector<8x128xf32>
    %75 = arith.index_cast %44 : i32 to index
    %c0_22 = arith.constant 0 : index
    %76 = vector.load %arg10[%75, %c0_22] : memref<64x128xf32, #tpu.memory_space<vmem>>, vector<8x128xf32>
    tpu.vector_store %arg10[%75, %c0_22], %74 {strides = array<i32>} : memref<64x128xf32, #tpu.memory_space<vmem>>, vector<8x128xf32>,
    %c2_i32 = arith.constant 2 : i32
    %c8_i32_23 = arith.constant 8 : i32
    %77 = arith.muli %c2_i32, %c8_i32_23 : i32
    %78 = tpu.assume_multiple %77, 8 : i32
    %79 = arith.index_cast %78 : i32 to index
    %c0_24 = arith.constant 0 : index
    %80 = vector.load %arg1[%79, %c0_24] : memref<64x384xf32, #tpu.memory_space<vmem>>, vector<8x384xf32>
    %c0_25 = arith.constant 0 : index
    %c0_26 = arith.constant 0 : index
    %c0_27 = arith.constant 0 : index
    %81 = vector.load %arg4[%c0_25, %c0_26, %c0_27] : memref<4x128x384xf32, #tpu.memory_space<vmem>>, vector<1x128x384xf32>
    %82 = vector.shape_cast %81 : vector<1x128x384xf32> to vector<128x384xf32>
    %cst_28 = arith.constant dense<0.000000e+00> : vector<8x384xf32>
    %83 = tpu.matmul %74, %82, %cst_28 {dimension_numbers = #tpu.dot_dimension_numbers<[1], [0], [0], [1], [0, 0, 1, 1], [], []>} : vector<8x128xf32>, vector<128x384xf32>, vector<8x384xf32> -> vector<8x384xf32>
    %84 = vector.extract_strided_slice %80 {offsets = [0, 0], sizes = [8, 128], strides = [1, 1]} : vector<8x384xf32> to vector<8x128xf32>
    %85 = vector.extract_strided_slice %83 {offsets = [0, 0], sizes = [8, 128], strides = [1, 1]} : vector<8x384xf32> to vector<8x128xf32>
    %86 = arith.addf %84, %85 : vector<8x128xf32>
    %87 = arith.negf %86 : vector<8x128xf32>
    %88 = math.exp %87 : vector<8x128xf32>
    %cst_29 = arith.constant 1.000000e+00 : f32
    %89 = vector.broadcast %cst_29 : f32 to vector<8x128xf32>
    %90 = arith.addf %89, %88 : vector<8x128xf32>
    %91 = arith.divf %89, %90 : vector<8x128xf32>
    %92 = vector.extract_strided_slice %80 {offsets = [0, 128], sizes = [8, 128], strides = [1, 1]} : vector<8x384xf32> to vector<8x128xf32>
    %93 = vector.extract_strided_slice %83 {offsets = [0, 128], sizes = [8, 128], strides = [1, 1]} : vector<8x384xf32> to vector<8x128xf32>
    %94 = arith.addf %92, %93 : vector<8x128xf32>
    %95 = arith.negf %94 : vector<8x128xf32>
    %96 = math.exp %95 : vector<8x128xf32>
    %cst_30 = arith.constant 1.000000e+00 : f32
    %97 = vector.broadcast %cst_30 : f32 to vector<8x128xf32>
    %98 = arith.addf %97, %96 : vector<8x128xf32>
    %99 = arith.divf %97, %98 : vector<8x128xf32>
    %100 = vector.extract_strided_slice %80 {offsets = [0, 256], sizes = [8, 128], strides = [1, 1]} : vector<8x384xf32> to vector<8x128xf32>
    %101 = vector.extract_strided_slice %83 {offsets = [0, 256], sizes = [8, 128], strides = [1, 1]} : vector<8x384xf32> to vector<8x128xf32>
    %102 = arith.addf %101, %6 : vector<8x128xf32>
    %103 = arith.mulf %91, %102 : vector<8x128xf32>
    %104 = arith.addf %100, %103 : vector<8x128xf32>
    %105 = math.tanh %104 : vector<8x128xf32>
    %106 = arith.subf %74, %105 : vector<8x128xf32>
    %107 = arith.mulf %99, %106 : vector<8x128xf32>
    %108 = arith.addf %105, %107 : vector<8x128xf32>
    %109 = arith.index_cast %78 : i32 to index
    %c0_31 = arith.constant 0 : index
    %110 = vector.load %arg10[%109, %c0_31] : memref<64x128xf32, #tpu.memory_space<vmem>>, vector<8x128xf32>
    tpu.vector_store %arg10[%109, %c0_31], %108 {strides = array<i32>} : memref<64x128xf32, #tpu.memory_space<vmem>>, vector<8x128xf32>,
    %c3_i32 = arith.constant 3 : i32
    %c8_i32_32 = arith.constant 8 : i32
    %111 = arith.muli %c3_i32, %c8_i32_32 : i32
    %112 = tpu.assume_multiple %111, 8 : i32
    %113 = arith.index_cast %112 : i32 to index
    %c0_33 = arith.constant 0 : index
    %114 = vector.load %arg1[%113, %c0_33] : memref<64x384xf32, #tpu.memory_space<vmem>>, vector<8x384xf32>
    %c0_34 = arith.constant 0 : index
    %c0_35 = arith.constant 0 : index
    %c0_36 = arith.constant 0 : index
    %115 = vector.load %arg4[%c0_34, %c0_35, %c0_36] : memref<4x128x384xf32, #tpu.memory_space<vmem>>, vector<1x128x384xf32>
    %116 = vector.shape_cast %115 : vector<1x128x384xf32> to vector<128x384xf32>
    %cst_37 = arith.constant dense<0.000000e+00> : vector<8x384xf32>
    %117 = tpu.matmul %108, %116, %cst_37 {dimension_numbers = #tpu.dot_dimension_numbers<[1], [0], [0], [1], [0, 0, 1, 1], [], []>} : vector<8x128xf32>, vector<128x384xf32>, vector<8x384xf32> -> vector<8x384xf32>
    %118 = vector.extract_strided_slice %114 {offsets = [0, 0], sizes = [8, 128], strides = [1, 1]} : vector<8x384xf32> to vector<8x128xf32>
    %119 = vector.extract_strided_slice %117 {offsets = [0, 0], sizes = [8, 128], strides = [1, 1]} : vector<8x384xf32> to vector<8x128xf32>
    %120 = arith.addf %118, %119 : vector<8x128xf32>
    %121 = arith.negf %120 : vector<8x128xf32>
    %122 = math.exp %121 : vector<8x128xf32>
    %cst_38 = arith.constant 1.000000e+00 : f32
    %123 = vector.broadcast %cst_38 : f32 to vector<8x128xf32>
    %124 = arith.addf %123, %122 : vector<8x128xf32>
    %125 = arith.divf %123, %124 : vector<8x128xf32>
    %126 = vector.extract_strided_slice %114 {offsets = [0, 128], sizes = [8, 128], strides = [1, 1]} : vector<8x384xf32> to vector<8x128xf32>
    %127 = vector.extract_strided_slice %117 {offsets = [0, 128], sizes = [8, 128], strides = [1, 1]} : vector<8x384xf32> to vector<8x128xf32>
    %128 = arith.addf %126, %127 : vector<8x128xf32>
    %129 = arith.negf %128 : vector<8x128xf32>
    %130 = math.exp %129 : vector<8x128xf32>
    %cst_39 = arith.constant 1.000000e+00 : f32
    %131 = vector.broadcast %cst_39 : f32 to vector<8x128xf32>
    %132 = arith.addf %131, %130 : vector<8x128xf32>
    %133 = arith.divf %131, %132 : vector<8x128xf32>
    %134 = vector.extract_strided_slice %114 {offsets = [0, 256], sizes = [8, 128], strides = [1, 1]} : vector<8x384xf32> to vector<8x128xf32>
    %135 = vector.extract_strided_slice %117 {offsets = [0, 256], sizes = [8, 128], strides = [1, 1]} : vector<8x384xf32> to vector<8x128xf32>
    %136 = arith.addf %135, %6 : vector<8x128xf32>
    %137 = arith.mulf %125, %136 : vector<8x128xf32>
    %138 = arith.addf %134, %137 : vector<8x128xf32>
    %139 = math.tanh %138 : vector<8x128xf32>
    %140 = arith.subf %108, %139 : vector<8x128xf32>
    %141 = arith.mulf %133, %140 : vector<8x128xf32>
    %142 = arith.addf %139, %141 : vector<8x128xf32>
    %143 = arith.index_cast %112 : i32 to index
    %c0_40 = arith.constant 0 : index
    %144 = vector.load %arg10[%143, %c0_40] : memref<64x128xf32, #tpu.memory_space<vmem>>, vector<8x128xf32>
    tpu.vector_store %arg10[%143, %c0_40], %142 {strides = array<i32>} : memref<64x128xf32, #tpu.memory_space<vmem>>, vector<8x128xf32>,
    %c4_i32 = arith.constant 4 : i32
    %c8_i32_41 = arith.constant 8 : i32
    %145 = arith.muli %c4_i32, %c8_i32_41 : i32
    %146 = tpu.assume_multiple %145, 8 : i32
    %147 = arith.index_cast %146 : i32 to index
    %c0_42 = arith.constant 0 : index
    %148 = vector.load %arg1[%147, %c0_42] : memref<64x384xf32, #tpu.memory_space<vmem>>, vector<8x384xf32>
    %c0_43 = arith.constant 0 : index
    %c0_44 = arith.constant 0 : index
    %c0_45 = arith.constant 0 : index
    %149 = vector.load %arg4[%c0_43, %c0_44, %c0_45] : memref<4x128x384xf32, #tpu.memory_space<vmem>>, vector<1x128x384xf32>
    %150 = vector.shape_cast %149 : vector<1x128x384xf32> to vector<128x384xf32>
    %cst_46 = arith.constant dense<0.000000e+00> : vector<8x384xf32>
    %151 = tpu.matmul %142, %150, %cst_46 {dimension_numbers = #tpu.dot_dimension_numbers<[1], [0], [0], [1], [0, 0, 1, 1], [], []>} : vector<8x128xf32>, vector<128x384xf32>, vector<8x384xf32> -> vector<8x384xf32>
    %152 = vector.extract_strided_slice %148 {offsets = [0, 0], sizes = [8, 128], strides = [1, 1]} : vector<8x384xf32> to vector<8x128xf32>
    %153 = vector.extract_strided_slice %151 {offsets = [0, 0], sizes = [8, 128], strides = [1, 1]} : vector<8x384xf32> to vector<8x128xf32>
    %154 = arith.addf %152, %153 : vector<8x128xf32>
    %155 = arith.negf %154 : vector<8x128xf32>
    %156 = math.exp %155 : vector<8x128xf32>
    %cst_47 = arith.constant 1.000000e+00 : f32
    %157 = vector.broadcast %cst_47 : f32 to vector<8x128xf32>
    %158 = arith.addf %157, %156 : vector<8x128xf32>
    %159 = arith.divf %157, %158 : vector<8x128xf32>
    %160 = vector.extract_strided_slice %148 {offsets = [0, 128], sizes = [8, 128], strides = [1, 1]} : vector<8x384xf32> to vector<8x128xf32>
    %161 = vector.extract_strided_slice %151 {offsets = [0, 128], sizes = [8, 128], strides = [1, 1]} : vector<8x384xf32> to vector<8x128xf32>
    %162 = arith.addf %160, %161 : vector<8x128xf32>
    %163 = arith.negf %162 : vector<8x128xf32>
    %164 = math.exp %163 : vector<8x128xf32>
    %cst_48 = arith.constant 1.000000e+00 : f32
    %165 = vector.broadcast %cst_48 : f32 to vector<8x128xf32>
    %166 = arith.addf %165, %164 : vector<8x128xf32>
    %167 = arith.divf %165, %166 : vector<8x128xf32>
    %168 = vector.extract_strided_slice %148 {offsets = [0, 256], sizes = [8, 128], strides = [1, 1]} : vector<8x384xf32> to vector<8x128xf32>
    %169 = vector.extract_strided_slice %151 {offsets = [0, 256], sizes = [8, 128], strides = [1, 1]} : vector<8x384xf32> to vector<8x128xf32>
    %170 = arith.addf %169, %6 : vector<8x128xf32>
    %171 = arith.mulf %159, %170 : vector<8x128xf32>
    %172 = arith.addf %168, %171 : vector<8x128xf32>
    %173 = math.tanh %172 : vector<8x128xf32>
    %174 = arith.subf %142, %173 : vector<8x128xf32>
    %175 = arith.mulf %167, %174 : vector<8x128xf32>
    %176 = arith.addf %173, %175 : vector<8x128xf32>
    %177 = arith.index_cast %146 : i32 to index
    %c0_49 = arith.constant 0 : index
    %178 = vector.load %arg10[%177, %c0_49] : memref<64x128xf32, #tpu.memory_space<vmem>>, vector<8x128xf32>
    tpu.vector_store %arg10[%177, %c0_49], %176 {strides = array<i32>} : memref<64x128xf32, #tpu.memory_space<vmem>>, vector<8x128xf32>,
    %c5_i32 = arith.constant 5 : i32
    %c8_i32_50 = arith.constant 8 : i32
    %179 = arith.muli %c5_i32, %c8_i32_50 : i32
    %180 = tpu.assume_multiple %179, 8 : i32
    %181 = arith.index_cast %180 : i32 to index
    %c0_51 = arith.constant 0 : index
    %182 = vector.load %arg1[%181, %c0_51] : memref<64x384xf32, #tpu.memory_space<vmem>>, vector<8x384xf32>
    %c0_52 = arith.constant 0 : index
    %c0_53 = arith.constant 0 : index
    %c0_54 = arith.constant 0 : index
    %183 = vector.load %arg4[%c0_52, %c0_53, %c0_54] : memref<4x128x384xf32, #tpu.memory_space<vmem>>, vector<1x128x384xf32>
    %184 = vector.shape_cast %183 : vector<1x128x384xf32> to vector<128x384xf32>
    %cst_55 = arith.constant dense<0.000000e+00> : vector<8x384xf32>
    %185 = tpu.matmul %176, %184, %cst_55 {dimension_numbers = #tpu.dot_dimension_numbers<[1], [0], [0], [1], [0, 0, 1, 1], [], []>} : vector<8x128xf32>, vector<128x384xf32>, vector<8x384xf32> -> vector<8x384xf32>
    %186 = vector.extract_strided_slice %182 {offsets = [0, 0], sizes = [8, 128], strides = [1, 1]} : vector<8x384xf32> to vector<8x128xf32>
    %187 = vector.extract_strided_slice %185 {offsets = [0, 0], sizes = [8, 128], strides = [1, 1]} : vector<8x384xf32> to vector<8x128xf32>
    %188 = arith.addf %186, %187 : vector<8x128xf32>
    %189 = arith.negf %188 : vector<8x128xf32>
    %190 = math.exp %189 : vector<8x128xf32>
    %cst_56 = arith.constant 1.000000e+00 : f32
    %191 = vector.broadcast %cst_56 : f32 to vector<8x128xf32>
    %192 = arith.addf %191, %190 : vector<8x128xf32>
    %193 = arith.divf %191, %192 : vector<8x128xf32>
    %194 = vector.extract_strided_slice %182 {offsets = [0, 128], sizes = [8, 128], strides = [1, 1]} : vector<8x384xf32> to vector<8x128xf32>
    %195 = vector.extract_strided_slice %185 {offsets = [0, 128], sizes = [8, 128], strides = [1, 1]} : vector<8x384xf32> to vector<8x128xf32>
    %196 = arith.addf %194, %195 : vector<8x128xf32>
    %197 = arith.negf %196 : vector<8x128xf32>
    %198 = math.exp %197 : vector<8x128xf32>
    %cst_57 = arith.constant 1.000000e+00 : f32
    %199 = vector.broadcast %cst_57 : f32 to vector<8x128xf32>
    %200 = arith.addf %199, %198 : vector<8x128xf32>
    %201 = arith.divf %199, %200 : vector<8x128xf32>
    %202 = vector.extract_strided_slice %182 {offsets = [0, 256], sizes = [8, 128], strides = [1, 1]} : vector<8x384xf32> to vector<8x128xf32>
    %203 = vector.extract_strided_slice %185 {offsets = [0, 256], sizes = [8, 128], strides = [1, 1]} : vector<8x384xf32> to vector<8x128xf32>
    %204 = arith.addf %203, %6 : vector<8x128xf32>
    %205 = arith.mulf %193, %204 : vector<8x128xf32>
    %206 = arith.addf %202, %205 : vector<8x128xf32>
    %207 = math.tanh %206 : vector<8x128xf32>
    %208 = arith.subf %176, %207 : vector<8x128xf32>
    %209 = arith.mulf %201, %208 : vector<8x128xf32>
    %210 = arith.addf %207, %209 : vector<8x128xf32>
    %211 = arith.index_cast %180 : i32 to index
    %c0_58 = arith.constant 0 : index
    %212 = vector.load %arg10[%211, %c0_58] : memref<64x128xf32, #tpu.memory_space<vmem>>, vector<8x128xf32>
    tpu.vector_store %arg10[%211, %c0_58], %210 {strides = array<i32>} : memref<64x128xf32, #tpu.memory_space<vmem>>, vector<8x128xf32>,
    %c6_i32 = arith.constant 6 : i32
    %c8_i32_59 = arith.constant 8 : i32
    %213 = arith.muli %c6_i32, %c8_i32_59 : i32
    %214 = tpu.assume_multiple %213, 8 : i32
    %215 = arith.index_cast %214 : i32 to index
    %c0_60 = arith.constant 0 : index
    %216 = vector.load %arg1[%215, %c0_60] : memref<64x384xf32, #tpu.memory_space<vmem>>, vector<8x384xf32>
    %c0_61 = arith.constant 0 : index
    %c0_62 = arith.constant 0 : index
    %c0_63 = arith.constant 0 : index
    %217 = vector.load %arg4[%c0_61, %c0_62, %c0_63] : memref<4x128x384xf32, #tpu.memory_space<vmem>>, vector<1x128x384xf32>
    %218 = vector.shape_cast %217 : vector<1x128x384xf32> to vector<128x384xf32>
    %cst_64 = arith.constant dense<0.000000e+00> : vector<8x384xf32>
    %219 = tpu.matmul %210, %218, %cst_64 {dimension_numbers = #tpu.dot_dimension_numbers<[1], [0], [0], [1], [0, 0, 1, 1], [], []>} : vector<8x128xf32>, vector<128x384xf32>, vector<8x384xf32> -> vector<8x384xf32>
    %220 = vector.extract_strided_slice %216 {offsets = [0, 0], sizes = [8, 128], strides = [1, 1]} : vector<8x384xf32> to vector<8x128xf32>
    %221 = vector.extract_strided_slice %219 {offsets = [0, 0], sizes = [8, 128], strides = [1, 1]} : vector<8x384xf32> to vector<8x128xf32>
    %222 = arith.addf %220, %221 : vector<8x128xf32>
    %223 = arith.negf %222 : vector<8x128xf32>
    %224 = math.exp %223 : vector<8x128xf32>
    %cst_65 = arith.constant 1.000000e+00 : f32
    %225 = vector.broadcast %cst_65 : f32 to vector<8x128xf32>
    %226 = arith.addf %225, %224 : vector<8x128xf32>
    %227 = arith.divf %225, %226 : vector<8x128xf32>
    %228 = vector.extract_strided_slice %216 {offsets = [0, 128], sizes = [8, 128], strides = [1, 1]} : vector<8x384xf32> to vector<8x128xf32>
    %229 = vector.extract_strided_slice %219 {offsets = [0, 128], sizes = [8, 128], strides = [1, 1]} : vector<8x384xf32> to vector<8x128xf32>
    %230 = arith.addf %228, %229 : vector<8x128xf32>
    %231 = arith.negf %230 : vector<8x128xf32>
    %232 = math.exp %231 : vector<8x128xf32>
    %cst_66 = arith.constant 1.000000e+00 : f32
    %233 = vector.broadcast %cst_66 : f32 to vector<8x128xf32>
    %234 = arith.addf %233, %232 : vector<8x128xf32>
    %235 = arith.divf %233, %234 : vector<8x128xf32>
    %236 = vector.extract_strided_slice %216 {offsets = [0, 256], sizes = [8, 128], strides = [1, 1]} : vector<8x384xf32> to vector<8x128xf32>
    %237 = vector.extract_strided_slice %219 {offsets = [0, 256], sizes = [8, 128], strides = [1, 1]} : vector<8x384xf32> to vector<8x128xf32>
    %238 = arith.addf %237, %6 : vector<8x128xf32>
    %239 = arith.mulf %227, %238 : vector<8x128xf32>
    %240 = arith.addf %236, %239 : vector<8x128xf32>
    %241 = math.tanh %240 : vector<8x128xf32>
    %242 = arith.subf %210, %241 : vector<8x128xf32>
    %243 = arith.mulf %235, %242 : vector<8x128xf32>
    %244 = arith.addf %241, %243 : vector<8x128xf32>
    %245 = arith.index_cast %214 : i32 to index
    %c0_67 = arith.constant 0 : index
    %246 = vector.load %arg10[%245, %c0_67] : memref<64x128xf32, #tpu.memory_space<vmem>>, vector<8x128xf32>
    tpu.vector_store %arg10[%245, %c0_67], %244 {strides = array<i32>} : memref<64x128xf32, #tpu.memory_space<vmem>>, vector<8x128xf32>,
    %c7_i32 = arith.constant 7 : i32
    %c8_i32_68 = arith.constant 8 : i32
    %247 = arith.muli %c7_i32, %c8_i32_68 : i32
    %248 = tpu.assume_multiple %247, 8 : i32
    %249 = arith.index_cast %248 : i32 to index
    %c0_69 = arith.constant 0 : index
    %250 = vector.load %arg1[%249, %c0_69] : memref<64x384xf32, #tpu.memory_space<vmem>>, vector<8x384xf32>
    %c0_70 = arith.constant 0 : index
    %c0_71 = arith.constant 0 : index
    %c0_72 = arith.constant 0 : index
    %251 = vector.load %arg4[%c0_70, %c0_71, %c0_72] : memref<4x128x384xf32, #tpu.memory_space<vmem>>, vector<1x128x384xf32>
    %252 = vector.shape_cast %251 : vector<1x128x384xf32> to vector<128x384xf32>
    %cst_73 = arith.constant dense<0.000000e+00> : vector<8x384xf32>
    %253 = tpu.matmul %244, %252, %cst_73 {dimension_numbers = #tpu.dot_dimension_numbers<[1], [0], [0], [1], [0, 0, 1, 1], [], []>} : vector<8x128xf32>, vector<128x384xf32>, vector<8x384xf32> -> vector<8x384xf32>
    %254 = vector.extract_strided_slice %250 {offsets = [0, 0], sizes = [8, 128], strides = [1, 1]} : vector<8x384xf32> to vector<8x128xf32>
    %255 = vector.extract_strided_slice %253 {offsets = [0, 0], sizes = [8, 128], strides = [1, 1]} : vector<8x384xf32> to vector<8x128xf32>
    %256 = arith.addf %254, %255 : vector<8x128xf32>
    %257 = arith.negf %256 : vector<8x128xf32>
    %258 = math.exp %257 : vector<8x128xf32>
    %cst_74 = arith.constant 1.000000e+00 : f32
    %259 = vector.broadcast %cst_74 : f32 to vector<8x128xf32>
    %260 = arith.addf %259, %258 : vector<8x128xf32>
    %261 = arith.divf %259, %260 : vector<8x128xf32>
    %262 = vector.extract_strided_slice %250 {offsets = [0, 128], sizes = [8, 128], strides = [1, 1]} : vector<8x384xf32> to vector<8x128xf32>
    %263 = vector.extract_strided_slice %253 {offsets = [0, 128], sizes = [8, 128], strides = [1, 1]} : vector<8x384xf32> to vector<8x128xf32>
    %264 = arith.addf %262, %263 : vector<8x128xf32>
    %265 = arith.negf %264 : vector<8x128xf32>
    %266 = math.exp %265 : vector<8x128xf32>
    %cst_75 = arith.constant 1.000000e+00 : f32
    %267 = vector.broadcast %cst_75 : f32 to vector<8x128xf32>
    %268 = arith.addf %267, %266 : vector<8x128xf32>
    %269 = arith.divf %267, %268 : vector<8x128xf32>
    %270 = vector.extract_strided_slice %250 {offsets = [0, 256], sizes = [8, 128], strides = [1, 1]} : vector<8x384xf32> to vector<8x128xf32>
    %271 = vector.extract_strided_slice %253 {offsets = [0, 256], sizes = [8, 128], strides = [1, 1]} : vector<8x384xf32> to vector<8x128xf32>
    %272 = arith.addf %271, %6 : vector<8x128xf32>
    %273 = arith.mulf %261, %272 : vector<8x128xf32>
    %274 = arith.addf %270, %273 : vector<8x128xf32>
    %275 = math.tanh %274 : vector<8x128xf32>
    %276 = arith.subf %244, %275 : vector<8x128xf32>
    %277 = arith.mulf %269, %276 : vector<8x128xf32>
    %278 = arith.addf %275, %277 : vector<8x128xf32>
    %279 = arith.index_cast %248 : i32 to index
    %c0_76 = arith.constant 0 : index
    %280 = vector.load %arg10[%279, %c0_76] : memref<64x128xf32, #tpu.memory_space<vmem>>, vector<8x128xf32>
    tpu.vector_store %arg10[%279, %c0_76], %278 {strides = array<i32>} : memref<64x128xf32, #tpu.memory_space<vmem>>, vector<8x128xf32>,
    %c8_i32_77 = arith.constant 8 : i32
    %c0_78 = arith.constant 0 : index
    %c0_79 = arith.constant 0 : index
    %c0_80 = arith.constant 0 : index
    %281 = vector.load %arg8[%c0_78, %c0_79, %c0_80] : memref<4x8x128xf32, #tpu.memory_space<vmem>>, vector<1x8x128xf32>
    %282 = vector.shape_cast %281 : vector<1x8x128xf32> to vector<8x128xf32>
    %283 = vector.shape_cast %278 : vector<8x128xf32> to vector<1x8x128xf32>
    tpu.vector_store %arg8[%c0_78, %c0_79, %c0_80], %283 {strides = array<i32>} : memref<4x8x128xf32, #tpu.memory_space<vmem>>, vector<1x8x128xf32>,
    %c0_81 = arith.constant 0 : index
    %c0_82 = arith.constant 0 : index
    %284 = vector.load %arg10[%c0_81, %c0_82] : memref<64x128xf32, #tpu.memory_space<vmem>>, vector<64x128xf32>
    %c0_83 = arith.constant 0 : index
    %c0_84 = arith.constant 0 : index
    %c0_85 = arith.constant 0 : index
    %285 = vector.load %arg3[%c0_83, %c0_84, %c0_85] : memref<3x128x384xf32, #tpu.memory_space<vmem>>, vector<1x128x384xf32>
    %286 = vector.shape_cast %285 : vector<1x128x384xf32> to vector<128x384xf32>
    %cst_86 = arith.constant dense<0.000000e+00> : vector<64x384xf32>
    %287 = tpu.matmul %284, %286, %cst_86 {dimension_numbers = #tpu.dot_dimension_numbers<[1], [0], [0], [1], [0, 0, 1, 1], [], []>} : vector<64x128xf32>, vector<128x384xf32>, vector<64x384xf32> -> vector<64x384xf32>
    %c0_87 = arith.constant 0 : index
    %c0_88 = arith.constant 0 : index
    %c0_89 = arith.constant 0 : index
    %288 = vector.load %arg5[%c0_87, %c0_88, %c0_89] : memref<3x1x384xf32, #tpu.memory_space<vmem>>, vector<1x1x384xf32>
    %289 = vector.shape_cast %288 : vector<1x1x384xf32> to vector<1x384xf32>
    %290 = vector.broadcast %289 : vector<1x384xf32> to vector<64x384xf32>
    %291 = arith.addf %287, %290 : vector<64x384xf32>
    %c0_90 = arith.constant 0 : index
    %c0_91 = arith.constant 0 : index
    %292 = vector.load %arg9[%c0_90, %c0_91] : memref<64x384xf32, #tpu.memory_space<vmem>>, vector<64x384xf32>
    tpu.vector_store %arg9[%c0_90, %c0_91], %291 {strides = array<i32>} : memref<64x384xf32, #tpu.memory_space<vmem>>, vector<64x384xf32>,
    %c1 = arith.constant 1 : index
    %c0_92 = arith.constant 0 : index
    %c0_93 = arith.constant 0 : index
    %293 = vector.load %arg6[%c1, %c0_92, %c0_93] : memref<4x1x128xf32, #tpu.memory_space<vmem>>, vector<1x1x128xf32>
    %294 = vector.shape_cast %293 : vector<1x1x128xf32> to vector<1x128xf32>
    %295 = vector.shape_cast %294 : vector<1x128xf32> to vector<1x128xf32>
    %296 = vector.broadcast %295 : vector<1x128xf32> to vector<8x128xf32>
    %c1_94 = arith.constant 1 : index
    %c0_95 = arith.constant 0 : index
    %c0_96 = arith.constant 0 : index
    %297 = vector.load %arg8[%c1_94, %c0_95, %c0_96] : memref<4x8x128xf32, #tpu.memory_space<vmem>>, vector<1x8x128xf32>
    %298 = vector.shape_cast %297 : vector<1x8x128xf32> to vector<8x128xf32>
    %c0_i32_97 = arith.constant 0 : i32
    %c8_i32_98 = arith.constant 8 : i32
    %299 = arith.muli %c0_i32_97, %c8_i32_98 : i32
    %300 = tpu.assume_multiple %299, 8 : i32
    %301 = arith.index_cast %300 : i32 to index
    %c0_99 = arith.constant 0 : index
    %302 = vector.load %arg9[%301, %c0_99] : memref<64x384xf32, #tpu.memory_space<vmem>>, vector<8x384xf32>
    %c1_100 = arith.constant 1 : index
    %c0_101 = arith.constant 0 : index
    %c0_102 = arith.constant 0 : index
    %303 = vector.load %arg4[%c1_100, %c0_101, %c0_102] : memref<4x128x384xf32, #tpu.memory_space<vmem>>, vector<1x128x384xf32>
    %304 = vector.shape_cast %303 : vector<1x128x384xf32> to vector<128x384xf32>
    %cst_103 = arith.constant dense<0.000000e+00> : vector<8x384xf32>
    %305 = tpu.matmul %298, %304, %cst_103 {dimension_numbers = #tpu.dot_dimension_numbers<[1], [0], [0], [1], [0, 0, 1, 1], [], []>} : vector<8x128xf32>, vector<128x384xf32>, vector<8x384xf32> -> vector<8x384xf32>
    %306 = vector.extract_strided_slice %302 {offsets = [0, 0], sizes = [8, 128], strides = [1, 1]} : vector<8x384xf32> to vector<8x128xf32>
    %307 = vector.extract_strided_slice %305 {offsets = [0, 0], sizes = [8, 128], strides = [1, 1]} : vector<8x384xf32> to vector<8x128xf32>
    %308 = arith.addf %306, %307 : vector<8x128xf32>
    %309 = arith.negf %308 : vector<8x128xf32>
    %310 = math.exp %309 : vector<8x128xf32>
    %cst_104 = arith.constant 1.000000e+00 : f32
    %311 = vector.broadcast %cst_104 : f32 to vector<8x128xf32>
    %312 = arith.addf %311, %310 : vector<8x128xf32>
    %313 = arith.divf %311, %312 : vector<8x128xf32>
    %314 = vector.extract_strided_slice %302 {offsets = [0, 128], sizes = [8, 128], strides = [1, 1]} : vector<8x384xf32> to vector<8x128xf32>
    %315 = vector.extract_strided_slice %305 {offsets = [0, 128], sizes = [8, 128], strides = [1, 1]} : vector<8x384xf32> to vector<8x128xf32>
    %316 = arith.addf %314, %315 : vector<8x128xf32>
    %317 = arith.negf %316 : vector<8x128xf32>
    %318 = math.exp %317 : vector<8x128xf32>
    %cst_105 = arith.constant 1.000000e+00 : f32
    %319 = vector.broadcast %cst_105 : f32 to vector<8x128xf32>
    %320 = arith.addf %319, %318 : vector<8x128xf32>
    %321 = arith.divf %319, %320 : vector<8x128xf32>
    %322 = vector.extract_strided_slice %302 {offsets = [0, 256], sizes = [8, 128], strides = [1, 1]} : vector<8x384xf32> to vector<8x128xf32>
    %323 = vector.extract_strided_slice %305 {offsets = [0, 256], sizes = [8, 128], strides = [1, 1]} : vector<8x384xf32> to vector<8x128xf32>
    %324 = arith.addf %323, %296 : vector<8x128xf32>
    %325 = arith.mulf %313, %324 : vector<8x128xf32>
    %326 = arith.addf %322, %325 : vector<8x128xf32>
    %327 = math.tanh %326 : vector<8x128xf32>
    %328 = arith.subf %298, %327 : vector<8x128xf32>
    %329 = arith.mulf %321, %328 : vector<8x128xf32>
    %330 = arith.addf %327, %329 : vector<8x128xf32>
    %331 = arith.index_cast %300 : i32 to index
    %c0_106 = arith.constant 0 : index
    %332 = vector.load %arg10[%331, %c0_106] : memref<64x128xf32, #tpu.memory_space<vmem>>, vector<8x128xf32>
    tpu.vector_store %arg10[%331, %c0_106], %330 {strides = array<i32>} : memref<64x128xf32, #tpu.memory_space<vmem>>, vector<8x128xf32>,
    %c1_i32_107 = arith.constant 1 : i32
    %c8_i32_108 = arith.constant 8 : i32
    %333 = arith.muli %c1_i32_107, %c8_i32_108 : i32
    %334 = tpu.assume_multiple %333, 8 : i32
    %335 = arith.index_cast %334 : i32 to index
    %c0_109 = arith.constant 0 : index
    %336 = vector.load %arg9[%335, %c0_109] : memref<64x384xf32, #tpu.memory_space<vmem>>, vector<8x384xf32>
    %c1_110 = arith.constant 1 : index
    %c0_111 = arith.constant 0 : index
    %c0_112 = arith.constant 0 : index
    %337 = vector.load %arg4[%c1_110, %c0_111, %c0_112] : memref<4x128x384xf32, #tpu.memory_space<vmem>>, vector<1x128x384xf32>
    %338 = vector.shape_cast %337 : vector<1x128x384xf32> to vector<128x384xf32>
    %cst_113 = arith.constant dense<0.000000e+00> : vector<8x384xf32>
    %339 = tpu.matmul %330, %338, %cst_113 {dimension_numbers = #tpu.dot_dimension_numbers<[1], [0], [0], [1], [0, 0, 1, 1], [], []>} : vector<8x128xf32>, vector<128x384xf32>, vector<8x384xf32> -> vector<8x384xf32>
    %340 = vector.extract_strided_slice %336 {offsets = [0, 0], sizes = [8, 128], strides = [1, 1]} : vector<8x384xf32> to vector<8x128xf32>
    %341 = vector.extract_strided_slice %339 {offsets = [0, 0], sizes = [8, 128], strides = [1, 1]} : vector<8x384xf32> to vector<8x128xf32>
    %342 = arith.addf %340, %341 : vector<8x128xf32>
    %343 = arith.negf %342 : vector<8x128xf32>
    %344 = math.exp %343 : vector<8x128xf32>
    %cst_114 = arith.constant 1.000000e+00 : f32
    %345 = vector.broadcast %cst_114 : f32 to vector<8x128xf32>
    %346 = arith.addf %345, %344 : vector<8x128xf32>
    %347 = arith.divf %345, %346 : vector<8x128xf32>
    %348 = vector.extract_strided_slice %336 {offsets = [0, 128], sizes = [8, 128], strides = [1, 1]} : vector<8x384xf32> to vector<8x128xf32>
    %349 = vector.extract_strided_slice %339 {offsets = [0, 128], sizes = [8, 128], strides = [1, 1]} : vector<8x384xf32> to vector<8x128xf32>
    %350 = arith.addf %348, %349 : vector<8x128xf32>
    %351 = arith.negf %350 : vector<8x128xf32>
    %352 = math.exp %351 : vector<8x128xf32>
    %cst_115 = arith.constant 1.000000e+00 : f32
    %353 = vector.broadcast %cst_115 : f32 to vector<8x128xf32>
    %354 = arith.addf %353, %352 : vector<8x128xf32>
    %355 = arith.divf %353, %354 : vector<8x128xf32>
    %356 = vector.extract_strided_slice %336 {offsets = [0, 256], sizes = [8, 128], strides = [1, 1]} : vector<8x384xf32> to vector<8x128xf32>
    %357 = vector.extract_strided_slice %339 {offsets = [0, 256], sizes = [8, 128], strides = [1, 1]} : vector<8x384xf32> to vector<8x128xf32>
    %358 = arith.addf %357, %296 : vector<8x128xf32>
    %359 = arith.mulf %347, %358 : vector<8x128xf32>
    %360 = arith.addf %356, %359 : vector<8x128xf32>
    %361 = math.tanh %360 : vector<8x128xf32>
    %362 = arith.subf %330, %361 : vector<8x128xf32>
    %363 = arith.mulf %355, %362 : vector<8x128xf32>
    %364 = arith.addf %361, %363 : vector<8x128xf32>
    %365 = arith.index_cast %334 : i32 to index
    %c0_116 = arith.constant 0 : index
    %366 = vector.load %arg10[%365, %c0_116] : memref<64x128xf32, #tpu.memory_space<vmem>>, vector<8x128xf32>
    tpu.vector_store %arg10[%365, %c0_116], %364 {strides = array<i32>} : memref<64x128xf32, #tpu.memory_space<vmem>>, vector<8x128xf32>,
    %c2_i32_117 = arith.constant 2 : i32
    %c8_i32_118 = arith.constant 8 : i32
    %367 = arith.muli %c2_i32_117, %c8_i32_118 : i32
    %368 = tpu.assume_multiple %367, 8 : i32
    %369 = arith.index_cast %368 : i32 to index
    %c0_119 = arith.constant 0 : index
    %370 = vector.load %arg9[%369, %c0_119] : memref<64x384xf32, #tpu.memory_space<vmem>>, vector<8x384xf32>
    %c1_120 = arith.constant 1 : index
    %c0_121 = arith.constant 0 : index
    %c0_122 = arith.constant 0 : index
    %371 = vector.load %arg4[%c1_120, %c0_121, %c0_122] : memref<4x128x384xf32, #tpu.memory_space<vmem>>, vector<1x128x384xf32>
    %372 = vector.shape_cast %371 : vector<1x128x384xf32> to vector<128x384xf32>
    %cst_123 = arith.constant dense<0.000000e+00> : vector<8x384xf32>
    %373 = tpu.matmul %364, %372, %cst_123 {dimension_numbers = #tpu.dot_dimension_numbers<[1], [0], [0], [1], [0, 0, 1, 1], [], []>} : vector<8x128xf32>, vector<128x384xf32>, vector<8x384xf32> -> vector<8x384xf32>
    %374 = vector.extract_strided_slice %370 {offsets = [0, 0], sizes = [8, 128], strides = [1, 1]} : vector<8x384xf32> to vector<8x128xf32>
    %375 = vector.extract_strided_slice %373 {offsets = [0, 0], sizes = [8, 128], strides = [1, 1]} : vector<8x384xf32> to vector<8x128xf32>
    %376 = arith.addf %374, %375 : vector<8x128xf32>
    %377 = arith.negf %376 : vector<8x128xf32>
    %378 = math.exp %377 : vector<8x128xf32>
    %cst_124 = arith.constant 1.000000e+00 : f32
    %379 = vector.broadcast %cst_124 : f32 to vector<8x128xf32>
    %380 = arith.addf %379, %378 : vector<8x128xf32>
    %381 = arith.divf %379, %380 : vector<8x128xf32>
    %382 = vector.extract_strided_slice %370 {offsets = [0, 128], sizes = [8, 128], strides = [1, 1]} : vector<8x384xf32> to vector<8x128xf32>
    %383 = vector.extract_strided_slice %373 {offsets = [0, 128], sizes = [8, 128], strides = [1, 1]} : vector<8x384xf32> to vector<8x128xf32>
    %384 = arith.addf %382, %383 : vector<8x128xf32>
    %385 = arith.negf %384 : vector<8x128xf32>
    %386 = math.exp %385 : vector<8x128xf32>
    %cst_125 = arith.constant 1.000000e+00 : f32
    %387 = vector.broadcast %cst_125 : f32 to vector<8x128xf32>
    %388 = arith.addf %387, %386 : vector<8x128xf32>
    %389 = arith.divf %387, %388 : vector<8x128xf32>
    %390 = vector.extract_strided_slice %370 {offsets = [0, 256], sizes = [8, 128], strides = [1, 1]} : vector<8x384xf32> to vector<8x128xf32>
    %391 = vector.extract_strided_slice %373 {offsets = [0, 256], sizes = [8, 128], strides = [1, 1]} : vector<8x384xf32> to vector<8x128xf32>
    %392 = arith.addf %391, %296 : vector<8x128xf32>
    %393 = arith.mulf %381, %392 : vector<8x128xf32>
    %394 = arith.addf %390, %393 : vector<8x128xf32>
    %395 = math.tanh %394 : vector<8x128xf32>
    %396 = arith.subf %364, %395 : vector<8x128xf32>
    %397 = arith.mulf %389, %396 : vector<8x128xf32>
    %398 = arith.addf %395, %397 : vector<8x128xf32>
    %399 = arith.index_cast %368 : i32 to index
    %c0_126 = arith.constant 0 : index
    %400 = vector.load %arg10[%399, %c0_126] : memref<64x128xf32, #tpu.memory_space<vmem>>, vector<8x128xf32>
    tpu.vector_store %arg10[%399, %c0_126], %398 {strides = array<i32>} : memref<64x128xf32, #tpu.memory_space<vmem>>, vector<8x128xf32>,
    %c3_i32_127 = arith.constant 3 : i32
    %c8_i32_128 = arith.constant 8 : i32
    %401 = arith.muli %c3_i32_127, %c8_i32_128 : i32
    %402 = tpu.assume_multiple %401, 8 : i32
    %403 = arith.index_cast %402 : i32 to index
    %c0_129 = arith.constant 0 : index
    %404 = vector.load %arg9[%403, %c0_129] : memref<64x384xf32, #tpu.memory_space<vmem>>, vector<8x384xf32>
    %c1_130 = arith.constant 1 : index
    %c0_131 = arith.constant 0 : index
    %c0_132 = arith.constant 0 : index
    %405 = vector.load %arg4[%c1_130, %c0_131, %c0_132] : memref<4x128x384xf32, #tpu.memory_space<vmem>>, vector<1x128x384xf32>
    %406 = vector.shape_cast %405 : vector<1x128x384xf32> to vector<128x384xf32>
    %cst_133 = arith.constant dense<0.000000e+00> : vector<8x384xf32>
    %407 = tpu.matmul %398, %406, %cst_133 {dimension_numbers = #tpu.dot_dimension_numbers<[1], [0], [0], [1], [0, 0, 1, 1], [], []>} : vector<8x128xf32>, vector<128x384xf32>, vector<8x384xf32> -> vector<8x384xf32>
    %408 = vector.extract_strided_slice %404 {offsets = [0, 0], sizes = [8, 128], strides = [1, 1]} : vector<8x384xf32> to vector<8x128xf32>
    %409 = vector.extract_strided_slice %407 {offsets = [0, 0], sizes = [8, 128], strides = [1, 1]} : vector<8x384xf32> to vector<8x128xf32>
    %410 = arith.addf %408, %409 : vector<8x128xf32>
    %411 = arith.negf %410 : vector<8x128xf32>
    %412 = math.exp %411 : vector<8x128xf32>
    %cst_134 = arith.constant 1.000000e+00 : f32
    %413 = vector.broadcast %cst_134 : f32 to vector<8x128xf32>
    %414 = arith.addf %413, %412 : vector<8x128xf32>
    %415 = arith.divf %413, %414 : vector<8x128xf32>
    %416 = vector.extract_strided_slice %404 {offsets = [0, 128], sizes = [8, 128], strides = [1, 1]} : vector<8x384xf32> to vector<8x128xf32>
    %417 = vector.extract_strided_slice %407 {offsets = [0, 128], sizes = [8, 128], strides = [1, 1]} : vector<8x384xf32> to vector<8x128xf32>
    %418 = arith.addf %416, %417 : vector<8x128xf32>
    %419 = arith.negf %418 : vector<8x128xf32>
    %420 = math.exp %419 : vector<8x128xf32>
    %cst_135 = arith.constant 1.000000e+00 : f32
    %421 = vector.broadcast %cst_135 : f32 to vector<8x128xf32>
    %422 = arith.addf %421, %420 : vector<8x128xf32>
    %423 = arith.divf %421, %422 : vector<8x128xf32>
    %424 = vector.extract_strided_slice %404 {offsets = [0, 256], sizes = [8, 128], strides = [1, 1]} : vector<8x384xf32> to vector<8x128xf32>
    %425 = vector.extract_strided_slice %407 {offsets = [0, 256], sizes = [8, 128], strides = [1, 1]} : vector<8x384xf32> to vector<8x128xf32>
    %426 = arith.addf %425, %296 : vector<8x128xf32>
    %427 = arith.mulf %415, %426 : vector<8x128xf32>
    %428 = arith.addf %424, %427 : vector<8x128xf32>
    %429 = math.tanh %428 : vector<8x128xf32>
    %430 = arith.subf %398, %429 : vector<8x128xf32>
    %431 = arith.mulf %423, %430 : vector<8x128xf32>
    %432 = arith.addf %429, %431 : vector<8x128xf32>
    %433 = arith.index_cast %402 : i32 to index
    %c0_136 = arith.constant 0 : index
    %434 = vector.load %arg10[%433, %c0_136] : memref<64x128xf32, #tpu.memory_space<vmem>>, vector<8x128xf32>
    tpu.vector_store %arg10[%433, %c0_136], %432 {strides = array<i32>} : memref<64x128xf32, #tpu.memory_space<vmem>>, vector<8x128xf32>,
    %c4_i32_137 = arith.constant 4 : i32
    %c8_i32_138 = arith.constant 8 : i32
    %435 = arith.muli %c4_i32_137, %c8_i32_138 : i32
    %436 = tpu.assume_multiple %435, 8 : i32
    %437 = arith.index_cast %436 : i32 to index
    %c0_139 = arith.constant 0 : index
    %438 = vector.load %arg9[%437, %c0_139] : memref<64x384xf32, #tpu.memory_space<vmem>>, vector<8x384xf32>
    %c1_140 = arith.constant 1 : index
    %c0_141 = arith.constant 0 : index
    %c0_142 = arith.constant 0 : index
    %439 = vector.load %arg4[%c1_140, %c0_141, %c0_142] : memref<4x128x384xf32, #tpu.memory_space<vmem>>, vector<1x128x384xf32>
    %440 = vector.shape_cast %439 : vector<1x128x384xf32> to vector<128x384xf32>
    %cst_143 = arith.constant dense<0.000000e+00> : vector<8x384xf32>
    %441 = tpu.matmul %432, %440, %cst_143 {dimension_numbers = #tpu.dot_dimension_numbers<[1], [0], [0], [1], [0, 0, 1, 1], [], []>} : vector<8x128xf32>, vector<128x384xf32>, vector<8x384xf32> -> vector<8x384xf32>
    %442 = vector.extract_strided_slice %438 {offsets = [0, 0], sizes = [8, 128], strides = [1, 1]} : vector<8x384xf32> to vector<8x128xf32>
    %443 = vector.extract_strided_slice %441 {offsets = [0, 0], sizes = [8, 128], strides = [1, 1]} : vector<8x384xf32> to vector<8x128xf32>
    %444 = arith.addf %442, %443 : vector<8x128xf32>
    %445 = arith.negf %444 : vector<8x128xf32>
    %446 = math.exp %445 : vector<8x128xf32>
    %cst_144 = arith.constant 1.000000e+00 : f32
    %447 = vector.broadcast %cst_144 : f32 to vector<8x128xf32>
    %448 = arith.addf %447, %446 : vector<8x128xf32>
    %449 = arith.divf %447, %448 : vector<8x128xf32>
    %450 = vector.extract_strided_slice %438 {offsets = [0, 128], sizes = [8, 128], strides = [1, 1]} : vector<8x384xf32> to vector<8x128xf32>
    %451 = vector.extract_strided_slice %441 {offsets = [0, 128], sizes = [8, 128], strides = [1, 1]} : vector<8x384xf32> to vector<8x128xf32>
    %452 = arith.addf %450, %451 : vector<8x128xf32>
    %453 = arith.negf %452 : vector<8x128xf32>
    %454 = math.exp %453 : vector<8x128xf32>
    %cst_145 = arith.constant 1.000000e+00 : f32
    %455 = vector.broadcast %cst_145 : f32 to vector<8x128xf32>
    %456 = arith.addf %455, %454 : vector<8x128xf32>
    %457 = arith.divf %455, %456 : vector<8x128xf32>
    %458 = vector.extract_strided_slice %438 {offsets = [0, 256], sizes = [8, 128], strides = [1, 1]} : vector<8x384xf32> to vector<8x128xf32>
    %459 = vector.extract_strided_slice %441 {offsets = [0, 256], sizes = [8, 128], strides = [1, 1]} : vector<8x384xf32> to vector<8x128xf32>
    %460 = arith.addf %459, %296 : vector<8x128xf32>
    %461 = arith.mulf %449, %460 : vector<8x128xf32>
    %462 = arith.addf %458, %461 : vector<8x128xf32>
    %463 = math.tanh %462 : vector<8x128xf32>
    %464 = arith.subf %432, %463 : vector<8x128xf32>
    %465 = arith.mulf %457, %464 : vector<8x128xf32>
    %466 = arith.addf %463, %465 : vector<8x128xf32>
    %467 = arith.index_cast %436 : i32 to index
    %c0_146 = arith.constant 0 : index
    %468 = vector.load %arg10[%467, %c0_146] : memref<64x128xf32, #tpu.memory_space<vmem>>, vector<8x128xf32>
    tpu.vector_store %arg10[%467, %c0_146], %466 {strides = array<i32>} : memref<64x128xf32, #tpu.memory_space<vmem>>, vector<8x128xf32>,
    %c5_i32_147 = arith.constant 5 : i32
    %c8_i32_148 = arith.constant 8 : i32
    %469 = arith.muli %c5_i32_147, %c8_i32_148 : i32
    %470 = tpu.assume_multiple %469, 8 : i32
    %471 = arith.index_cast %470 : i32 to index
    %c0_149 = arith.constant 0 : index
    %472 = vector.load %arg9[%471, %c0_149] : memref<64x384xf32, #tpu.memory_space<vmem>>, vector<8x384xf32>
    %c1_150 = arith.constant 1 : index
    %c0_151 = arith.constant 0 : index
    %c0_152 = arith.constant 0 : index
    %473 = vector.load %arg4[%c1_150, %c0_151, %c0_152] : memref<4x128x384xf32, #tpu.memory_space<vmem>>, vector<1x128x384xf32>
    %474 = vector.shape_cast %473 : vector<1x128x384xf32> to vector<128x384xf32>
    %cst_153 = arith.constant dense<0.000000e+00> : vector<8x384xf32>
    %475 = tpu.matmul %466, %474, %cst_153 {dimension_numbers = #tpu.dot_dimension_numbers<[1], [0], [0], [1], [0, 0, 1, 1], [], []>} : vector<8x128xf32>, vector<128x384xf32>, vector<8x384xf32> -> vector<8x384xf32>
    %476 = vector.extract_strided_slice %472 {offsets = [0, 0], sizes = [8, 128], strides = [1, 1]} : vector<8x384xf32> to vector<8x128xf32>
    %477 = vector.extract_strided_slice %475 {offsets = [0, 0], sizes = [8, 128], strides = [1, 1]} : vector<8x384xf32> to vector<8x128xf32>
    %478 = arith.addf %476, %477 : vector<8x128xf32>
    %479 = arith.negf %478 : vector<8x128xf32>
    %480 = math.exp %479 : vector<8x128xf32>
    %cst_154 = arith.constant 1.000000e+00 : f32
    %481 = vector.broadcast %cst_154 : f32 to vector<8x128xf32>
    %482 = arith.addf %481, %480 : vector<8x128xf32>
    %483 = arith.divf %481, %482 : vector<8x128xf32>
    %484 = vector.extract_strided_slice %472 {offsets = [0, 128], sizes = [8, 128], strides = [1, 1]} : vector<8x384xf32> to vector<8x128xf32>
    %485 = vector.extract_strided_slice %475 {offsets = [0, 128], sizes = [8, 128], strides = [1, 1]} : vector<8x384xf32> to vector<8x128xf32>
    %486 = arith.addf %484, %485 : vector<8x128xf32>
    %487 = arith.negf %486 : vector<8x128xf32>
    %488 = math.exp %487 : vector<8x128xf32>
    %cst_155 = arith.constant 1.000000e+00 : f32
    %489 = vector.broadcast %cst_155 : f32 to vector<8x128xf32>
    %490 = arith.addf %489, %488 : vector<8x128xf32>
    %491 = arith.divf %489, %490 : vector<8x128xf32>
    %492 = vector.extract_strided_slice %472 {offsets = [0, 256], sizes = [8, 128], strides = [1, 1]} : vector<8x384xf32> to vector<8x128xf32>
    %493 = vector.extract_strided_slice %475 {offsets = [0, 256], sizes = [8, 128], strides = [1, 1]} : vector<8x384xf32> to vector<8x128xf32>
    %494 = arith.addf %493, %296 : vector<8x128xf32>
    %495 = arith.mulf %483, %494 : vector<8x128xf32>
    %496 = arith.addf %492, %495 : vector<8x128xf32>
    %497 = math.tanh %496 : vector<8x128xf32>
    %498 = arith.subf %466, %497 : vector<8x128xf32>
    %499 = arith.mulf %491, %498 : vector<8x128xf32>
    %500 = arith.addf %497, %499 : vector<8x128xf32>
    %501 = arith.index_cast %470 : i32 to index
    %c0_156 = arith.constant 0 : index
    %502 = vector.load %arg10[%501, %c0_156] : memref<64x128xf32, #tpu.memory_space<vmem>>, vector<8x128xf32>
    tpu.vector_store %arg10[%501, %c0_156], %500 {strides = array<i32>} : memref<64x128xf32, #tpu.memory_space<vmem>>, vector<8x128xf32>,
    %c6_i32_157 = arith.constant 6 : i32
    %c8_i32_158 = arith.constant 8 : i32
    %503 = arith.muli %c6_i32_157, %c8_i32_158 : i32
    %504 = tpu.assume_multiple %503, 8 : i32
    %505 = arith.index_cast %504 : i32 to index
    %c0_159 = arith.constant 0 : index
    %506 = vector.load %arg9[%505, %c0_159] : memref<64x384xf32, #tpu.memory_space<vmem>>, vector<8x384xf32>
    %c1_160 = arith.constant 1 : index
    %c0_161 = arith.constant 0 : index
    %c0_162 = arith.constant 0 : index
    %507 = vector.load %arg4[%c1_160, %c0_161, %c0_162] : memref<4x128x384xf32, #tpu.memory_space<vmem>>, vector<1x128x384xf32>
    %508 = vector.shape_cast %507 : vector<1x128x384xf32> to vector<128x384xf32>
    %cst_163 = arith.constant dense<0.000000e+00> : vector<8x384xf32>
    %509 = tpu.matmul %500, %508, %cst_163 {dimension_numbers = #tpu.dot_dimension_numbers<[1], [0], [0], [1], [0, 0, 1, 1], [], []>} : vector<8x128xf32>, vector<128x384xf32>, vector<8x384xf32> -> vector<8x384xf32>
    %510 = vector.extract_strided_slice %506 {offsets = [0, 0], sizes = [8, 128], strides = [1, 1]} : vector<8x384xf32> to vector<8x128xf32>
    %511 = vector.extract_strided_slice %509 {offsets = [0, 0], sizes = [8, 128], strides = [1, 1]} : vector<8x384xf32> to vector<8x128xf32>
    %512 = arith.addf %510, %511 : vector<8x128xf32>
    %513 = arith.negf %512 : vector<8x128xf32>
    %514 = math.exp %513 : vector<8x128xf32>
    %cst_164 = arith.constant 1.000000e+00 : f32
    %515 = vector.broadcast %cst_164 : f32 to vector<8x128xf32>
    %516 = arith.addf %515, %514 : vector<8x128xf32>
    %517 = arith.divf %515, %516 : vector<8x128xf32>
    %518 = vector.extract_strided_slice %506 {offsets = [0, 128], sizes = [8, 128], strides = [1, 1]} : vector<8x384xf32> to vector<8x128xf32>
    %519 = vector.extract_strided_slice %509 {offsets = [0, 128], sizes = [8, 128], strides = [1, 1]} : vector<8x384xf32> to vector<8x128xf32>
    %520 = arith.addf %518, %519 : vector<8x128xf32>
    %521 = arith.negf %520 : vector<8x128xf32>
    %522 = math.exp %521 : vector<8x128xf32>
    %cst_165 = arith.constant 1.000000e+00 : f32
    %523 = vector.broadcast %cst_165 : f32 to vector<8x128xf32>
    %524 = arith.addf %523, %522 : vector<8x128xf32>
    %525 = arith.divf %523, %524 : vector<8x128xf32>
    %526 = vector.extract_strided_slice %506 {offsets = [0, 256], sizes = [8, 128], strides = [1, 1]} : vector<8x384xf32> to vector<8x128xf32>
    %527 = vector.extract_strided_slice %509 {offsets = [0, 256], sizes = [8, 128], strides = [1, 1]} : vector<8x384xf32> to vector<8x128xf32>
    %528 = arith.addf %527, %296 : vector<8x128xf32>
    %529 = arith.mulf %517, %528 : vector<8x128xf32>
    %530 = arith.addf %526, %529 : vector<8x128xf32>
    %531 = math.tanh %530 : vector<8x128xf32>
    %532 = arith.subf %500, %531 : vector<8x128xf32>
    %533 = arith.mulf %525, %532 : vector<8x128xf32>
    %534 = arith.addf %531, %533 : vector<8x128xf32>
    %535 = arith.index_cast %504 : i32 to index
    %c0_166 = arith.constant 0 : index
    %536 = vector.load %arg10[%535, %c0_166] : memref<64x128xf32, #tpu.memory_space<vmem>>, vector<8x128xf32>
    tpu.vector_store %arg10[%535, %c0_166], %534 {strides = array<i32>} : memref<64x128xf32, #tpu.memory_space<vmem>>, vector<8x128xf32>,
    %c7_i32_167 = arith.constant 7 : i32
    %c8_i32_168 = arith.constant 8 : i32
    %537 = arith.muli %c7_i32_167, %c8_i32_168 : i32
    %538 = tpu.assume_multiple %537, 8 : i32
    %539 = arith.index_cast %538 : i32 to index
    %c0_169 = arith.constant 0 : index
    %540 = vector.load %arg9[%539, %c0_169] : memref<64x384xf32, #tpu.memory_space<vmem>>, vector<8x384xf32>
    %c1_170 = arith.constant 1 : index
    %c0_171 = arith.constant 0 : index
    %c0_172 = arith.constant 0 : index
    %541 = vector.load %arg4[%c1_170, %c0_171, %c0_172] : memref<4x128x384xf32, #tpu.memory_space<vmem>>, vector<1x128x384xf32>
    %542 = vector.shape_cast %541 : vector<1x128x384xf32> to vector<128x384xf32>
    %cst_173 = arith.constant dense<0.000000e+00> : vector<8x384xf32>
    %543 = tpu.matmul %534, %542, %cst_173 {dimension_numbers = #tpu.dot_dimension_numbers<[1], [0], [0], [1], [0, 0, 1, 1], [], []>} : vector<8x128xf32>, vector<128x384xf32>, vector<8x384xf32> -> vector<8x384xf32>
    %544 = vector.extract_strided_slice %540 {offsets = [0, 0], sizes = [8, 128], strides = [1, 1]} : vector<8x384xf32> to vector<8x128xf32>
    %545 = vector.extract_strided_slice %543 {offsets = [0, 0], sizes = [8, 128], strides = [1, 1]} : vector<8x384xf32> to vector<8x128xf32>
    %546 = arith.addf %544, %545 : vector<8x128xf32>
    %547 = arith.negf %546 : vector<8x128xf32>
    %548 = math.exp %547 : vector<8x128xf32>
    %cst_174 = arith.constant 1.000000e+00 : f32
    %549 = vector.broadcast %cst_174 : f32 to vector<8x128xf32>
    %550 = arith.addf %549, %548 : vector<8x128xf32>
    %551 = arith.divf %549, %550 : vector<8x128xf32>
    %552 = vector.extract_strided_slice %540 {offsets = [0, 128], sizes = [8, 128], strides = [1, 1]} : vector<8x384xf32> to vector<8x128xf32>
    %553 = vector.extract_strided_slice %543 {offsets = [0, 128], sizes = [8, 128], strides = [1, 1]} : vector<8x384xf32> to vector<8x128xf32>
    %554 = arith.addf %552, %553 : vector<8x128xf32>
    %555 = arith.negf %554 : vector<8x128xf32>
    %556 = math.exp %555 : vector<8x128xf32>
    %cst_175 = arith.constant 1.000000e+00 : f32
    %557 = vector.broadcast %cst_175 : f32 to vector<8x128xf32>
    %558 = arith.addf %557, %556 : vector<8x128xf32>
    %559 = arith.divf %557, %558 : vector<8x128xf32>
    %560 = vector.extract_strided_slice %540 {offsets = [0, 256], sizes = [8, 128], strides = [1, 1]} : vector<8x384xf32> to vector<8x128xf32>
    %561 = vector.extract_strided_slice %543 {offsets = [0, 256], sizes = [8, 128], strides = [1, 1]} : vector<8x384xf32> to vector<8x128xf32>
    %562 = arith.addf %561, %296 : vector<8x128xf32>
    %563 = arith.mulf %551, %562 : vector<8x128xf32>
    %564 = arith.addf %560, %563 : vector<8x128xf32>
    %565 = math.tanh %564 : vector<8x128xf32>
    %566 = arith.subf %534, %565 : vector<8x128xf32>
    %567 = arith.mulf %559, %566 : vector<8x128xf32>
    %568 = arith.addf %565, %567 : vector<8x128xf32>
    %569 = arith.index_cast %538 : i32 to index
    %c0_176 = arith.constant 0 : index
    %570 = vector.load %arg10[%569, %c0_176] : memref<64x128xf32, #tpu.memory_space<vmem>>, vector<8x128xf32>
    tpu.vector_store %arg10[%569, %c0_176], %568 {strides = array<i32>} : memref<64x128xf32, #tpu.memory_space<vmem>>, vector<8x128xf32>,
    %c8_i32_177 = arith.constant 8 : i32
    %c1_178 = arith.constant 1 : index
    %c0_179 = arith.constant 0 : index
    %c0_180 = arith.constant 0 : index
    %571 = vector.load %arg8[%c1_178, %c0_179, %c0_180] : memref<4x8x128xf32, #tpu.memory_space<vmem>>, vector<1x8x128xf32>
    %572 = vector.shape_cast %571 : vector<1x8x128xf32> to vector<8x128xf32>
    %573 = vector.shape_cast %568 : vector<8x128xf32> to vector<1x8x128xf32>
    tpu.vector_store %arg8[%c1_178, %c0_179, %c0_180], %573 {strides = array<i32>} : memref<4x8x128xf32, #tpu.memory_space<vmem>>, vector<1x8x128xf32>,
    %c0_181 = arith.constant 0 : index
    %c0_182 = arith.constant 0 : index
    %574 = vector.load %arg10[%c0_181, %c0_182] : memref<64x128xf32, #tpu.memory_space<vmem>>, vector<64x128xf32>
    %c1_183 = arith.constant 1 : index
    %c0_184 = arith.constant 0 : index
    %c0_185 = arith.constant 0 : index
    %575 = vector.load %arg3[%c1_183, %c0_184, %c0_185] : memref<3x128x384xf32, #tpu.memory_space<vmem>>, vector<1x128x384xf32>
    %576 = vector.shape_cast %575 : vector<1x128x384xf32> to vector<128x384xf32>
    %cst_186 = arith.constant dense<0.000000e+00> : vector<64x384xf32>
    %577 = tpu.matmul %574, %576, %cst_186 {dimension_numbers = #tpu.dot_dimension_numbers<[1], [0], [0], [1], [0, 0, 1, 1], [], []>} : vector<64x128xf32>, vector<128x384xf32>, vector<64x384xf32> -> vector<64x384xf32>
    %c1_187 = arith.constant 1 : index
    %c0_188 = arith.constant 0 : index
    %c0_189 = arith.constant 0 : index
    %578 = vector.load %arg5[%c1_187, %c0_188, %c0_189] : memref<3x1x384xf32, #tpu.memory_space<vmem>>, vector<1x1x384xf32>
    %579 = vector.shape_cast %578 : vector<1x1x384xf32> to vector<1x384xf32>
    %580 = vector.broadcast %579 : vector<1x384xf32> to vector<64x384xf32>
    %581 = arith.addf %577, %580 : vector<64x384xf32>
    %c0_190 = arith.constant 0 : index
    %c0_191 = arith.constant 0 : index
    %582 = vector.load %arg9[%c0_190, %c0_191] : memref<64x384xf32, #tpu.memory_space<vmem>>, vector<64x384xf32>
    tpu.vector_store %arg9[%c0_190, %c0_191], %581 {strides = array<i32>} : memref<64x384xf32, #tpu.memory_space<vmem>>, vector<64x384xf32>,
    %c2 = arith.constant 2 : index
    %c0_192 = arith.constant 0 : index
    %c0_193 = arith.constant 0 : index
    %583 = vector.load %arg6[%c2, %c0_192, %c0_193] : memref<4x1x128xf32, #tpu.memory_space<vmem>>, vector<1x1x128xf32>
    %584 = vector.shape_cast %583 : vector<1x1x128xf32> to vector<1x128xf32>
    %585 = vector.shape_cast %584 : vector<1x128xf32> to vector<1x128xf32>
    %586 = vector.broadcast %585 : vector<1x128xf32> to vector<8x128xf32>
    %c2_194 = arith.constant 2 : index
    %c0_195 = arith.constant 0 : index
    %c0_196 = arith.constant 0 : index
    %587 = vector.load %arg8[%c2_194, %c0_195, %c0_196] : memref<4x8x128xf32, #tpu.memory_space<vmem>>, vector<1x8x128xf32>
    %588 = vector.shape_cast %587 : vector<1x8x128xf32> to vector<8x128xf32>
    %c0_i32_197 = arith.constant 0 : i32
    %c8_i32_198 = arith.constant 8 : i32
    %589 = arith.muli %c0_i32_197, %c8_i32_198 : i32
    %590 = tpu.assume_multiple %589, 8 : i32
    %591 = arith.index_cast %590 : i32 to index
    %c0_199 = arith.constant 0 : index
    %592 = vector.load %arg9[%591, %c0_199] : memref<64x384xf32, #tpu.memory_space<vmem>>, vector<8x384xf32>
    %c2_200 = arith.constant 2 : index
    %c0_201 = arith.constant 0 : index
    %c0_202 = arith.constant 0 : index
    %593 = vector.load %arg4[%c2_200, %c0_201, %c0_202] : memref<4x128x384xf32, #tpu.memory_space<vmem>>, vector<1x128x384xf32>
    %594 = vector.shape_cast %593 : vector<1x128x384xf32> to vector<128x384xf32>
    %cst_203 = arith.constant dense<0.000000e+00> : vector<8x384xf32>
    %595 = tpu.matmul %588, %594, %cst_203 {dimension_numbers = #tpu.dot_dimension_numbers<[1], [0], [0], [1], [0, 0, 1, 1], [], []>} : vector<8x128xf32>, vector<128x384xf32>, vector<8x384xf32> -> vector<8x384xf32>
    %596 = vector.extract_strided_slice %592 {offsets = [0, 0], sizes = [8, 128], strides = [1, 1]} : vector<8x384xf32> to vector<8x128xf32>
    %597 = vector.extract_strided_slice %595 {offsets = [0, 0], sizes = [8, 128], strides = [1, 1]} : vector<8x384xf32> to vector<8x128xf32>
    %598 = arith.addf %596, %597 : vector<8x128xf32>
    %599 = arith.negf %598 : vector<8x128xf32>
    %600 = math.exp %599 : vector<8x128xf32>
    %cst_204 = arith.constant 1.000000e+00 : f32
    %601 = vector.broadcast %cst_204 : f32 to vector<8x128xf32>
    %602 = arith.addf %601, %600 : vector<8x128xf32>
    %603 = arith.divf %601, %602 : vector<8x128xf32>
    %604 = vector.extract_strided_slice %592 {offsets = [0, 128], sizes = [8, 128], strides = [1, 1]} : vector<8x384xf32> to vector<8x128xf32>
    %605 = vector.extract_strided_slice %595 {offsets = [0, 128], sizes = [8, 128], strides = [1, 1]} : vector<8x384xf32> to vector<8x128xf32>
    %606 = arith.addf %604, %605 : vector<8x128xf32>
    %607 = arith.negf %606 : vector<8x128xf32>
    %608 = math.exp %607 : vector<8x128xf32>
    %cst_205 = arith.constant 1.000000e+00 : f32
    %609 = vector.broadcast %cst_205 : f32 to vector<8x128xf32>
    %610 = arith.addf %609, %608 : vector<8x128xf32>
    %611 = arith.divf %609, %610 : vector<8x128xf32>
    %612 = vector.extract_strided_slice %592 {offsets = [0, 256], sizes = [8, 128], strides = [1, 1]} : vector<8x384xf32> to vector<8x128xf32>
    %613 = vector.extract_strided_slice %595 {offsets = [0, 256], sizes = [8, 128], strides = [1, 1]} : vector<8x384xf32> to vector<8x128xf32>
    %614 = arith.addf %613, %586 : vector<8x128xf32>
    %615 = arith.mulf %603, %614 : vector<8x128xf32>
    %616 = arith.addf %612, %615 : vector<8x128xf32>
    %617 = math.tanh %616 : vector<8x128xf32>
    %618 = arith.subf %588, %617 : vector<8x128xf32>
    %619 = arith.mulf %611, %618 : vector<8x128xf32>
    %620 = arith.addf %617, %619 : vector<8x128xf32>
    %621 = arith.index_cast %590 : i32 to index
    %c0_206 = arith.constant 0 : index
    %622 = vector.load %arg10[%621, %c0_206] : memref<64x128xf32, #tpu.memory_space<vmem>>, vector<8x128xf32>
    tpu.vector_store %arg10[%621, %c0_206], %620 {strides = array<i32>} : memref<64x128xf32, #tpu.memory_space<vmem>>, vector<8x128xf32>,
    %c1_i32_207 = arith.constant 1 : i32
    %c8_i32_208 = arith.constant 8 : i32
    %623 = arith.muli %c1_i32_207, %c8_i32_208 : i32
    %624 = tpu.assume_multiple %623, 8 : i32
    %625 = arith.index_cast %624 : i32 to index
    %c0_209 = arith.constant 0 : index
    %626 = vector.load %arg9[%625, %c0_209] : memref<64x384xf32, #tpu.memory_space<vmem>>, vector<8x384xf32>
    %c2_210 = arith.constant 2 : index
    %c0_211 = arith.constant 0 : index
    %c0_212 = arith.constant 0 : index
    %627 = vector.load %arg4[%c2_210, %c0_211, %c0_212] : memref<4x128x384xf32, #tpu.memory_space<vmem>>, vector<1x128x384xf32>
    %628 = vector.shape_cast %627 : vector<1x128x384xf32> to vector<128x384xf32>
    %cst_213 = arith.constant dense<0.000000e+00> : vector<8x384xf32>
    %629 = tpu.matmul %620, %628, %cst_213 {dimension_numbers = #tpu.dot_dimension_numbers<[1], [0], [0], [1], [0, 0, 1, 1], [], []>} : vector<8x128xf32>, vector<128x384xf32>, vector<8x384xf32> -> vector<8x384xf32>
    %630 = vector.extract_strided_slice %626 {offsets = [0, 0], sizes = [8, 128], strides = [1, 1]} : vector<8x384xf32> to vector<8x128xf32>
    %631 = vector.extract_strided_slice %629 {offsets = [0, 0], sizes = [8, 128], strides = [1, 1]} : vector<8x384xf32> to vector<8x128xf32>
    %632 = arith.addf %630, %631 : vector<8x128xf32>
    %633 = arith.negf %632 : vector<8x128xf32>
    %634 = math.exp %633 : vector<8x128xf32>
    %cst_214 = arith.constant 1.000000e+00 : f32
    %635 = vector.broadcast %cst_214 : f32 to vector<8x128xf32>
    %636 = arith.addf %635, %634 : vector<8x128xf32>
    %637 = arith.divf %635, %636 : vector<8x128xf32>
    %638 = vector.extract_strided_slice %626 {offsets = [0, 128], sizes = [8, 128], strides = [1, 1]} : vector<8x384xf32> to vector<8x128xf32>
    %639 = vector.extract_strided_slice %629 {offsets = [0, 128], sizes = [8, 128], strides = [1, 1]} : vector<8x384xf32> to vector<8x128xf32>
    %640 = arith.addf %638, %639 : vector<8x128xf32>
    %641 = arith.negf %640 : vector<8x128xf32>
    %642 = math.exp %641 : vector<8x128xf32>
    %cst_215 = arith.constant 1.000000e+00 : f32
    %643 = vector.broadcast %cst_215 : f32 to vector<8x128xf32>
    %644 = arith.addf %643, %642 : vector<8x128xf32>
    %645 = arith.divf %643, %644 : vector<8x128xf32>
    %646 = vector.extract_strided_slice %626 {offsets = [0, 256], sizes = [8, 128], strides = [1, 1]} : vector<8x384xf32> to vector<8x128xf32>
    %647 = vector.extract_strided_slice %629 {offsets = [0, 256], sizes = [8, 128], strides = [1, 1]} : vector<8x384xf32> to vector<8x128xf32>
    %648 = arith.addf %647, %586 : vector<8x128xf32>
    %649 = arith.mulf %637, %648 : vector<8x128xf32>
    %650 = arith.addf %646, %649 : vector<8x128xf32>
    %651 = math.tanh %650 : vector<8x128xf32>
    %652 = arith.subf %620, %651 : vector<8x128xf32>
    %653 = arith.mulf %645, %652 : vector<8x128xf32>
    %654 = arith.addf %651, %653 : vector<8x128xf32>
    %655 = arith.index_cast %624 : i32 to index
    %c0_216 = arith.constant 0 : index
    %656 = vector.load %arg10[%655, %c0_216] : memref<64x128xf32, #tpu.memory_space<vmem>>, vector<8x128xf32>
    tpu.vector_store %arg10[%655, %c0_216], %654 {strides = array<i32>} : memref<64x128xf32, #tpu.memory_space<vmem>>, vector<8x128xf32>,
    %c2_i32_217 = arith.constant 2 : i32
    %c8_i32_218 = arith.constant 8 : i32
    %657 = arith.muli %c2_i32_217, %c8_i32_218 : i32
    %658 = tpu.assume_multiple %657, 8 : i32
    %659 = arith.index_cast %658 : i32 to index
    %c0_219 = arith.constant 0 : index
    %660 = vector.load %arg9[%659, %c0_219] : memref<64x384xf32, #tpu.memory_space<vmem>>, vector<8x384xf32>
    %c2_220 = arith.constant 2 : index
    %c0_221 = arith.constant 0 : index
    %c0_222 = arith.constant 0 : index
    %661 = vector.load %arg4[%c2_220, %c0_221, %c0_222] : memref<4x128x384xf32, #tpu.memory_space<vmem>>, vector<1x128x384xf32>
    %662 = vector.shape_cast %661 : vector<1x128x384xf32> to vector<128x384xf32>
    %cst_223 = arith.constant dense<0.000000e+00> : vector<8x384xf32>
    %663 = tpu.matmul %654, %662, %cst_223 {dimension_numbers = #tpu.dot_dimension_numbers<[1], [0], [0], [1], [0, 0, 1, 1], [], []>} : vector<8x128xf32>, vector<128x384xf32>, vector<8x384xf32> -> vector<8x384xf32>
    %664 = vector.extract_strided_slice %660 {offsets = [0, 0], sizes = [8, 128], strides = [1, 1]} : vector<8x384xf32> to vector<8x128xf32>
    %665 = vector.extract_strided_slice %663 {offsets = [0, 0], sizes = [8, 128], strides = [1, 1]} : vector<8x384xf32> to vector<8x128xf32>
    %666 = arith.addf %664, %665 : vector<8x128xf32>
    %667 = arith.negf %666 : vector<8x128xf32>
    %668 = math.exp %667 : vector<8x128xf32>
    %cst_224 = arith.constant 1.000000e+00 : f32
    %669 = vector.broadcast %cst_224 : f32 to vector<8x128xf32>
    %670 = arith.addf %669, %668 : vector<8x128xf32>
    %671 = arith.divf %669, %670 : vector<8x128xf32>
    %672 = vector.extract_strided_slice %660 {offsets = [0, 128], sizes = [8, 128], strides = [1, 1]} : vector<8x384xf32> to vector<8x128xf32>
    %673 = vector.extract_strided_slice %663 {offsets = [0, 128], sizes = [8, 128], strides = [1, 1]} : vector<8x384xf32> to vector<8x128xf32>
    %674 = arith.addf %672, %673 : vector<8x128xf32>
    %675 = arith.negf %674 : vector<8x128xf32>
    %676 = math.exp %675 : vector<8x128xf32>
    %cst_225 = arith.constant 1.000000e+00 : f32
    %677 = vector.broadcast %cst_225 : f32 to vector<8x128xf32>
    %678 = arith.addf %677, %676 : vector<8x128xf32>
    %679 = arith.divf %677, %678 : vector<8x128xf32>
    %680 = vector.extract_strided_slice %660 {offsets = [0, 256], sizes = [8, 128], strides = [1, 1]} : vector<8x384xf32> to vector<8x128xf32>
    %681 = vector.extract_strided_slice %663 {offsets = [0, 256], sizes = [8, 128], strides = [1, 1]} : vector<8x384xf32> to vector<8x128xf32>
    %682 = arith.addf %681, %586 : vector<8x128xf32>
    %683 = arith.mulf %671, %682 : vector<8x128xf32>
    %684 = arith.addf %680, %683 : vector<8x128xf32>
    %685 = math.tanh %684 : vector<8x128xf32>
    %686 = arith.subf %654, %685 : vector<8x128xf32>
    %687 = arith.mulf %679, %686 : vector<8x128xf32>
    %688 = arith.addf %685, %687 : vector<8x128xf32>
    %689 = arith.index_cast %658 : i32 to index
    %c0_226 = arith.constant 0 : index
    %690 = vector.load %arg10[%689, %c0_226] : memref<64x128xf32, #tpu.memory_space<vmem>>, vector<8x128xf32>
    tpu.vector_store %arg10[%689, %c0_226], %688 {strides = array<i32>} : memref<64x128xf32, #tpu.memory_space<vmem>>, vector<8x128xf32>,
    %c3_i32_227 = arith.constant 3 : i32
    %c8_i32_228 = arith.constant 8 : i32
    %691 = arith.muli %c3_i32_227, %c8_i32_228 : i32
    %692 = tpu.assume_multiple %691, 8 : i32
    %693 = arith.index_cast %692 : i32 to index
    %c0_229 = arith.constant 0 : index
    %694 = vector.load %arg9[%693, %c0_229] : memref<64x384xf32, #tpu.memory_space<vmem>>, vector<8x384xf32>
    %c2_230 = arith.constant 2 : index
    %c0_231 = arith.constant 0 : index
    %c0_232 = arith.constant 0 : index
    %695 = vector.load %arg4[%c2_230, %c0_231, %c0_232] : memref<4x128x384xf32, #tpu.memory_space<vmem>>, vector<1x128x384xf32>
    %696 = vector.shape_cast %695 : vector<1x128x384xf32> to vector<128x384xf32>
    %cst_233 = arith.constant dense<0.000000e+00> : vector<8x384xf32>
    %697 = tpu.matmul %688, %696, %cst_233 {dimension_numbers = #tpu.dot_dimension_numbers<[1], [0], [0], [1], [0, 0, 1, 1], [], []>} : vector<8x128xf32>, vector<128x384xf32>, vector<8x384xf32> -> vector<8x384xf32>
    %698 = vector.extract_strided_slice %694 {offsets = [0, 0], sizes = [8, 128], strides = [1, 1]} : vector<8x384xf32> to vector<8x128xf32>
    %699 = vector.extract_strided_slice %697 {offsets = [0, 0], sizes = [8, 128], strides = [1, 1]} : vector<8x384xf32> to vector<8x128xf32>
    %700 = arith.addf %698, %699 : vector<8x128xf32>
    %701 = arith.negf %700 : vector<8x128xf32>
    %702 = math.exp %701 : vector<8x128xf32>
    %cst_234 = arith.constant 1.000000e+00 : f32
    %703 = vector.broadcast %cst_234 : f32 to vector<8x128xf32>
    %704 = arith.addf %703, %702 : vector<8x128xf32>
    %705 = arith.divf %703, %704 : vector<8x128xf32>
    %706 = vector.extract_strided_slice %694 {offsets = [0, 128], sizes = [8, 128], strides = [1, 1]} : vector<8x384xf32> to vector<8x128xf32>
    %707 = vector.extract_strided_slice %697 {offsets = [0, 128], sizes = [8, 128], strides = [1, 1]} : vector<8x384xf32> to vector<8x128xf32>
    %708 = arith.addf %706, %707 : vector<8x128xf32>
    %709 = arith.negf %708 : vector<8x128xf32>
    %710 = math.exp %709 : vector<8x128xf32>
    %cst_235 = arith.constant 1.000000e+00 : f32
    %711 = vector.broadcast %cst_235 : f32 to vector<8x128xf32>
    %712 = arith.addf %711, %710 : vector<8x128xf32>
    %713 = arith.divf %711, %712 : vector<8x128xf32>
    %714 = vector.extract_strided_slice %694 {offsets = [0, 256], sizes = [8, 128], strides = [1, 1]} : vector<8x384xf32> to vector<8x128xf32>
    %715 = vector.extract_strided_slice %697 {offsets = [0, 256], sizes = [8, 128], strides = [1, 1]} : vector<8x384xf32> to vector<8x128xf32>
    %716 = arith.addf %715, %586 : vector<8x128xf32>
    %717 = arith.mulf %705, %716 : vector<8x128xf32>
    %718 = arith.addf %714, %717 : vector<8x128xf32>
    %719 = math.tanh %718 : vector<8x128xf32>
    %720 = arith.subf %688, %719 : vector<8x128xf32>
    %721 = arith.mulf %713, %720 : vector<8x128xf32>
    %722 = arith.addf %719, %721 : vector<8x128xf32>
    %723 = arith.index_cast %692 : i32 to index
    %c0_236 = arith.constant 0 : index
    %724 = vector.load %arg10[%723, %c0_236] : memref<64x128xf32, #tpu.memory_space<vmem>>, vector<8x128xf32>
    tpu.vector_store %arg10[%723, %c0_236], %722 {strides = array<i32>} : memref<64x128xf32, #tpu.memory_space<vmem>>, vector<8x128xf32>,
    %c4_i32_237 = arith.constant 4 : i32
    %c8_i32_238 = arith.constant 8 : i32
    %725 = arith.muli %c4_i32_237, %c8_i32_238 : i32
    %726 = tpu.assume_multiple %725, 8 : i32
    %727 = arith.index_cast %726 : i32 to index
    %c0_239 = arith.constant 0 : index
    %728 = vector.load %arg9[%727, %c0_239] : memref<64x384xf32, #tpu.memory_space<vmem>>, vector<8x384xf32>
    %c2_240 = arith.constant 2 : index
    %c0_241 = arith.constant 0 : index
    %c0_242 = arith.constant 0 : index
    %729 = vector.load %arg4[%c2_240, %c0_241, %c0_242] : memref<4x128x384xf32, #tpu.memory_space<vmem>>, vector<1x128x384xf32>
    %730 = vector.shape_cast %729 : vector<1x128x384xf32> to vector<128x384xf32>
    %cst_243 = arith.constant dense<0.000000e+00> : vector<8x384xf32>
    %731 = tpu.matmul %722, %730, %cst_243 {dimension_numbers = #tpu.dot_dimension_numbers<[1], [0], [0], [1], [0, 0, 1, 1], [], []>} : vector<8x128xf32>, vector<128x384xf32>, vector<8x384xf32> -> vector<8x384xf32>
    %732 = vector.extract_strided_slice %728 {offsets = [0, 0], sizes = [8, 128], strides = [1, 1]} : vector<8x384xf32> to vector<8x128xf32>
    %733 = vector.extract_strided_slice %731 {offsets = [0, 0], sizes = [8, 128], strides = [1, 1]} : vector<8x384xf32> to vector<8x128xf32>
    %734 = arith.addf %732, %733 : vector<8x128xf32>
    %735 = arith.negf %734 : vector<8x128xf32>
    %736 = math.exp %735 : vector<8x128xf32>
    %cst_244 = arith.constant 1.000000e+00 : f32
    %737 = vector.broadcast %cst_244 : f32 to vector<8x128xf32>
    %738 = arith.addf %737, %736 : vector<8x128xf32>
    %739 = arith.divf %737, %738 : vector<8x128xf32>
    %740 = vector.extract_strided_slice %728 {offsets = [0, 128], sizes = [8, 128], strides = [1, 1]} : vector<8x384xf32> to vector<8x128xf32>
    %741 = vector.extract_strided_slice %731 {offsets = [0, 128], sizes = [8, 128], strides = [1, 1]} : vector<8x384xf32> to vector<8x128xf32>
    %742 = arith.addf %740, %741 : vector<8x128xf32>
    %743 = arith.negf %742 : vector<8x128xf32>
    %744 = math.exp %743 : vector<8x128xf32>
    %cst_245 = arith.constant 1.000000e+00 : f32
    %745 = vector.broadcast %cst_245 : f32 to vector<8x128xf32>
    %746 = arith.addf %745, %744 : vector<8x128xf32>
    %747 = arith.divf %745, %746 : vector<8x128xf32>
    %748 = vector.extract_strided_slice %728 {offsets = [0, 256], sizes = [8, 128], strides = [1, 1]} : vector<8x384xf32> to vector<8x128xf32>
    %749 = vector.extract_strided_slice %731 {offsets = [0, 256], sizes = [8, 128], strides = [1, 1]} : vector<8x384xf32> to vector<8x128xf32>
    %750 = arith.addf %749, %586 : vector<8x128xf32>
    %751 = arith.mulf %739, %750 : vector<8x128xf32>
    %752 = arith.addf %748, %751 : vector<8x128xf32>
    %753 = math.tanh %752 : vector<8x128xf32>
    %754 = arith.subf %722, %753 : vector<8x128xf32>
    %755 = arith.mulf %747, %754 : vector<8x128xf32>
    %756 = arith.addf %753, %755 : vector<8x128xf32>
    %757 = arith.index_cast %726 : i32 to index
    %c0_246 = arith.constant 0 : index
    %758 = vector.load %arg10[%757, %c0_246] : memref<64x128xf32, #tpu.memory_space<vmem>>, vector<8x128xf32>
    tpu.vector_store %arg10[%757, %c0_246], %756 {strides = array<i32>} : memref<64x128xf32, #tpu.memory_space<vmem>>, vector<8x128xf32>,
    %c5_i32_247 = arith.constant 5 : i32
    %c8_i32_248 = arith.constant 8 : i32
    %759 = arith.muli %c5_i32_247, %c8_i32_248 : i32
    %760 = tpu.assume_multiple %759, 8 : i32
    %761 = arith.index_cast %760 : i32 to index
    %c0_249 = arith.constant 0 : index
    %762 = vector.load %arg9[%761, %c0_249] : memref<64x384xf32, #tpu.memory_space<vmem>>, vector<8x384xf32>
    %c2_250 = arith.constant 2 : index
    %c0_251 = arith.constant 0 : index
    %c0_252 = arith.constant 0 : index
    %763 = vector.load %arg4[%c2_250, %c0_251, %c0_252] : memref<4x128x384xf32, #tpu.memory_space<vmem>>, vector<1x128x384xf32>
    %764 = vector.shape_cast %763 : vector<1x128x384xf32> to vector<128x384xf32>
    %cst_253 = arith.constant dense<0.000000e+00> : vector<8x384xf32>
    %765 = tpu.matmul %756, %764, %cst_253 {dimension_numbers = #tpu.dot_dimension_numbers<[1], [0], [0], [1], [0, 0, 1, 1], [], []>} : vector<8x128xf32>, vector<128x384xf32>, vector<8x384xf32> -> vector<8x384xf32>
    %766 = vector.extract_strided_slice %762 {offsets = [0, 0], sizes = [8, 128], strides = [1, 1]} : vector<8x384xf32> to vector<8x128xf32>
    %767 = vector.extract_strided_slice %765 {offsets = [0, 0], sizes = [8, 128], strides = [1, 1]} : vector<8x384xf32> to vector<8x128xf32>
    %768 = arith.addf %766, %767 : vector<8x128xf32>
    %769 = arith.negf %768 : vector<8x128xf32>
    %770 = math.exp %769 : vector<8x128xf32>
    %cst_254 = arith.constant 1.000000e+00 : f32
    %771 = vector.broadcast %cst_254 : f32 to vector<8x128xf32>
    %772 = arith.addf %771, %770 : vector<8x128xf32>
    %773 = arith.divf %771, %772 : vector<8x128xf32>
    %774 = vector.extract_strided_slice %762 {offsets = [0, 128], sizes = [8, 128], strides = [1, 1]} : vector<8x384xf32> to vector<8x128xf32>
    %775 = vector.extract_strided_slice %765 {offsets = [0, 128], sizes = [8, 128], strides = [1, 1]} : vector<8x384xf32> to vector<8x128xf32>
    %776 = arith.addf %774, %775 : vector<8x128xf32>
    %777 = arith.negf %776 : vector<8x128xf32>
    %778 = math.exp %777 : vector<8x128xf32>
    %cst_255 = arith.constant 1.000000e+00 : f32
    %779 = vector.broadcast %cst_255 : f32 to vector<8x128xf32>
    %780 = arith.addf %779, %778 : vector<8x128xf32>
    %781 = arith.divf %779, %780 : vector<8x128xf32>
    %782 = vector.extract_strided_slice %762 {offsets = [0, 256], sizes = [8, 128], strides = [1, 1]} : vector<8x384xf32> to vector<8x128xf32>
    %783 = vector.extract_strided_slice %765 {offsets = [0, 256], sizes = [8, 128], strides = [1, 1]} : vector<8x384xf32> to vector<8x128xf32>
    %784 = arith.addf %783, %586 : vector<8x128xf32>
    %785 = arith.mulf %773, %784 : vector<8x128xf32>
    %786 = arith.addf %782, %785 : vector<8x128xf32>
    %787 = math.tanh %786 : vector<8x128xf32>
    %788 = arith.subf %756, %787 : vector<8x128xf32>
    %789 = arith.mulf %781, %788 : vector<8x128xf32>
    %790 = arith.addf %787, %789 : vector<8x128xf32>
    %791 = arith.index_cast %760 : i32 to index
    %c0_256 = arith.constant 0 : index
    %792 = vector.load %arg10[%791, %c0_256] : memref<64x128xf32, #tpu.memory_space<vmem>>, vector<8x128xf32>
    tpu.vector_store %arg10[%791, %c0_256], %790 {strides = array<i32>} : memref<64x128xf32, #tpu.memory_space<vmem>>, vector<8x128xf32>,
    %c6_i32_257 = arith.constant 6 : i32
    %c8_i32_258 = arith.constant 8 : i32
    %793 = arith.muli %c6_i32_257, %c8_i32_258 : i32
    %794 = tpu.assume_multiple %793, 8 : i32
    %795 = arith.index_cast %794 : i32 to index
    %c0_259 = arith.constant 0 : index
    %796 = vector.load %arg9[%795, %c0_259] : memref<64x384xf32, #tpu.memory_space<vmem>>, vector<8x384xf32>
    %c2_260 = arith.constant 2 : index
    %c0_261 = arith.constant 0 : index
    %c0_262 = arith.constant 0 : index
    %797 = vector.load %arg4[%c2_260, %c0_261, %c0_262] : memref<4x128x384xf32, #tpu.memory_space<vmem>>, vector<1x128x384xf32>
    %798 = vector.shape_cast %797 : vector<1x128x384xf32> to vector<128x384xf32>
    %cst_263 = arith.constant dense<0.000000e+00> : vector<8x384xf32>
    %799 = tpu.matmul %790, %798, %cst_263 {dimension_numbers = #tpu.dot_dimension_numbers<[1], [0], [0], [1], [0, 0, 1, 1], [], []>} : vector<8x128xf32>, vector<128x384xf32>, vector<8x384xf32> -> vector<8x384xf32>
    %800 = vector.extract_strided_slice %796 {offsets = [0, 0], sizes = [8, 128], strides = [1, 1]} : vector<8x384xf32> to vector<8x128xf32>
    %801 = vector.extract_strided_slice %799 {offsets = [0, 0], sizes = [8, 128], strides = [1, 1]} : vector<8x384xf32> to vector<8x128xf32>
    %802 = arith.addf %800, %801 : vector<8x128xf32>
    %803 = arith.negf %802 : vector<8x128xf32>
    %804 = math.exp %803 : vector<8x128xf32>
    %cst_264 = arith.constant 1.000000e+00 : f32
    %805 = vector.broadcast %cst_264 : f32 to vector<8x128xf32>
    %806 = arith.addf %805, %804 : vector<8x128xf32>
    %807 = arith.divf %805, %806 : vector<8x128xf32>
    %808 = vector.extract_strided_slice %796 {offsets = [0, 128], sizes = [8, 128], strides = [1, 1]} : vector<8x384xf32> to vector<8x128xf32>
    %809 = vector.extract_strided_slice %799 {offsets = [0, 128], sizes = [8, 128], strides = [1, 1]} : vector<8x384xf32> to vector<8x128xf32>
    %810 = arith.addf %808, %809 : vector<8x128xf32>
    %811 = arith.negf %810 : vector<8x128xf32>
    %812 = math.exp %811 : vector<8x128xf32>
    %cst_265 = arith.constant 1.000000e+00 : f32
    %813 = vector.broadcast %cst_265 : f32 to vector<8x128xf32>
    %814 = arith.addf %813, %812 : vector<8x128xf32>
    %815 = arith.divf %813, %814 : vector<8x128xf32>
    %816 = vector.extract_strided_slice %796 {offsets = [0, 256], sizes = [8, 128], strides = [1, 1]} : vector<8x384xf32> to vector<8x128xf32>
    %817 = vector.extract_strided_slice %799 {offsets = [0, 256], sizes = [8, 128], strides = [1, 1]} : vector<8x384xf32> to vector<8x128xf32>
    %818 = arith.addf %817, %586 : vector<8x128xf32>
    %819 = arith.mulf %807, %818 : vector<8x128xf32>
    %820 = arith.addf %816, %819 : vector<8x128xf32>
    %821 = math.tanh %820 : vector<8x128xf32>
    %822 = arith.subf %790, %821 : vector<8x128xf32>
    %823 = arith.mulf %815, %822 : vector<8x128xf32>
    %824 = arith.addf %821, %823 : vector<8x128xf32>
    %825 = arith.index_cast %794 : i32 to index
    %c0_266 = arith.constant 0 : index
    %826 = vector.load %arg10[%825, %c0_266] : memref<64x128xf32, #tpu.memory_space<vmem>>, vector<8x128xf32>
    tpu.vector_store %arg10[%825, %c0_266], %824 {strides = array<i32>} : memref<64x128xf32, #tpu.memory_space<vmem>>, vector<8x128xf32>,
    %c7_i32_267 = arith.constant 7 : i32
    %c8_i32_268 = arith.constant 8 : i32
    %827 = arith.muli %c7_i32_267, %c8_i32_268 : i32
    %828 = tpu.assume_multiple %827, 8 : i32
    %829 = arith.index_cast %828 : i32 to index
    %c0_269 = arith.constant 0 : index
    %830 = vector.load %arg9[%829, %c0_269] : memref<64x384xf32, #tpu.memory_space<vmem>>, vector<8x384xf32>
    %c2_270 = arith.constant 2 : index
    %c0_271 = arith.constant 0 : index
    %c0_272 = arith.constant 0 : index
    %831 = vector.load %arg4[%c2_270, %c0_271, %c0_272] : memref<4x128x384xf32, #tpu.memory_space<vmem>>, vector<1x128x384xf32>
    %832 = vector.shape_cast %831 : vector<1x128x384xf32> to vector<128x384xf32>
    %cst_273 = arith.constant dense<0.000000e+00> : vector<8x384xf32>
    %833 = tpu.matmul %824, %832, %cst_273 {dimension_numbers = #tpu.dot_dimension_numbers<[1], [0], [0], [1], [0, 0, 1, 1], [], []>} : vector<8x128xf32>, vector<128x384xf32>, vector<8x384xf32> -> vector<8x384xf32>
    %834 = vector.extract_strided_slice %830 {offsets = [0, 0], sizes = [8, 128], strides = [1, 1]} : vector<8x384xf32> to vector<8x128xf32>
    %835 = vector.extract_strided_slice %833 {offsets = [0, 0], sizes = [8, 128], strides = [1, 1]} : vector<8x384xf32> to vector<8x128xf32>
    %836 = arith.addf %834, %835 : vector<8x128xf32>
    %837 = arith.negf %836 : vector<8x128xf32>
    %838 = math.exp %837 : vector<8x128xf32>
    %cst_274 = arith.constant 1.000000e+00 : f32
    %839 = vector.broadcast %cst_274 : f32 to vector<8x128xf32>
    %840 = arith.addf %839, %838 : vector<8x128xf32>
    %841 = arith.divf %839, %840 : vector<8x128xf32>
    %842 = vector.extract_strided_slice %830 {offsets = [0, 128], sizes = [8, 128], strides = [1, 1]} : vector<8x384xf32> to vector<8x128xf32>
    %843 = vector.extract_strided_slice %833 {offsets = [0, 128], sizes = [8, 128], strides = [1, 1]} : vector<8x384xf32> to vector<8x128xf32>
    %844 = arith.addf %842, %843 : vector<8x128xf32>
    %845 = arith.negf %844 : vector<8x128xf32>
    %846 = math.exp %845 : vector<8x128xf32>
    %cst_275 = arith.constant 1.000000e+00 : f32
    %847 = vector.broadcast %cst_275 : f32 to vector<8x128xf32>
    %848 = arith.addf %847, %846 : vector<8x128xf32>
    %849 = arith.divf %847, %848 : vector<8x128xf32>
    %850 = vector.extract_strided_slice %830 {offsets = [0, 256], sizes = [8, 128], strides = [1, 1]} : vector<8x384xf32> to vector<8x128xf32>
    %851 = vector.extract_strided_slice %833 {offsets = [0, 256], sizes = [8, 128], strides = [1, 1]} : vector<8x384xf32> to vector<8x128xf32>
    %852 = arith.addf %851, %586 : vector<8x128xf32>
    %853 = arith.mulf %841, %852 : vector<8x128xf32>
    %854 = arith.addf %850, %853 : vector<8x128xf32>
    %855 = math.tanh %854 : vector<8x128xf32>
    %856 = arith.subf %824, %855 : vector<8x128xf32>
    %857 = arith.mulf %849, %856 : vector<8x128xf32>
    %858 = arith.addf %855, %857 : vector<8x128xf32>
    %859 = arith.index_cast %828 : i32 to index
    %c0_276 = arith.constant 0 : index
    %860 = vector.load %arg10[%859, %c0_276] : memref<64x128xf32, #tpu.memory_space<vmem>>, vector<8x128xf32>
    tpu.vector_store %arg10[%859, %c0_276], %858 {strides = array<i32>} : memref<64x128xf32, #tpu.memory_space<vmem>>, vector<8x128xf32>,
    %c8_i32_277 = arith.constant 8 : i32
    %c2_278 = arith.constant 2 : index
    %c0_279 = arith.constant 0 : index
    %c0_280 = arith.constant 0 : index
    %861 = vector.load %arg8[%c2_278, %c0_279, %c0_280] : memref<4x8x128xf32, #tpu.memory_space<vmem>>, vector<1x8x128xf32>
    %862 = vector.shape_cast %861 : vector<1x8x128xf32> to vector<8x128xf32>
    %863 = vector.shape_cast %858 : vector<8x128xf32> to vector<1x8x128xf32>
    tpu.vector_store %arg8[%c2_278, %c0_279, %c0_280], %863 {strides = array<i32>} : memref<4x8x128xf32, #tpu.memory_space<vmem>>, vector<1x8x128xf32>,
    %c0_281 = arith.constant 0 : index
    %c0_282 = arith.constant 0 : index
    %864 = vector.load %arg10[%c0_281, %c0_282] : memref<64x128xf32, #tpu.memory_space<vmem>>, vector<64x128xf32>
    %c2_283 = arith.constant 2 : index
    %c0_284 = arith.constant 0 : index
    %c0_285 = arith.constant 0 : index
    %865 = vector.load %arg3[%c2_283, %c0_284, %c0_285] : memref<3x128x384xf32, #tpu.memory_space<vmem>>, vector<1x128x384xf32>
    %866 = vector.shape_cast %865 : vector<1x128x384xf32> to vector<128x384xf32>
    %cst_286 = arith.constant dense<0.000000e+00> : vector<64x384xf32>
    %867 = tpu.matmul %864, %866, %cst_286 {dimension_numbers = #tpu.dot_dimension_numbers<[1], [0], [0], [1], [0, 0, 1, 1], [], []>} : vector<64x128xf32>, vector<128x384xf32>, vector<64x384xf32> -> vector<64x384xf32>
    %c2_287 = arith.constant 2 : index
    %c0_288 = arith.constant 0 : index
    %c0_289 = arith.constant 0 : index
    %868 = vector.load %arg5[%c2_287, %c0_288, %c0_289] : memref<3x1x384xf32, #tpu.memory_space<vmem>>, vector<1x1x384xf32>
    %869 = vector.shape_cast %868 : vector<1x1x384xf32> to vector<1x384xf32>
    %870 = vector.broadcast %869 : vector<1x384xf32> to vector<64x384xf32>
    %871 = arith.addf %867, %870 : vector<64x384xf32>
    %c0_290 = arith.constant 0 : index
    %c0_291 = arith.constant 0 : index
    %872 = vector.load %arg9[%c0_290, %c0_291] : memref<64x384xf32, #tpu.memory_space<vmem>>, vector<64x384xf32>
    tpu.vector_store %arg9[%c0_290, %c0_291], %871 {strides = array<i32>} : memref<64x384xf32, #tpu.memory_space<vmem>>, vector<64x384xf32>,
    %c3 = arith.constant 3 : index
    %c0_292 = arith.constant 0 : index
    %c0_293 = arith.constant 0 : index
    %873 = vector.load %arg6[%c3, %c0_292, %c0_293] : memref<4x1x128xf32, #tpu.memory_space<vmem>>, vector<1x1x128xf32>
    %874 = vector.shape_cast %873 : vector<1x1x128xf32> to vector<1x128xf32>
    %875 = vector.shape_cast %874 : vector<1x128xf32> to vector<1x128xf32>
    %876 = vector.broadcast %875 : vector<1x128xf32> to vector<8x128xf32>
    %c3_294 = arith.constant 3 : index
    %c0_295 = arith.constant 0 : index
    %c0_296 = arith.constant 0 : index
    %877 = vector.load %arg8[%c3_294, %c0_295, %c0_296] : memref<4x8x128xf32, #tpu.memory_space<vmem>>, vector<1x8x128xf32>
    %878 = vector.shape_cast %877 : vector<1x8x128xf32> to vector<8x128xf32>
    %c0_i32_297 = arith.constant 0 : i32
    %c8_i32_298 = arith.constant 8 : i32
    %879 = arith.muli %c0_i32_297, %c8_i32_298 : i32
    %880 = tpu.assume_multiple %879, 8 : i32
    %881 = arith.index_cast %880 : i32 to index
    %c0_299 = arith.constant 0 : index
    %882 = vector.load %arg9[%881, %c0_299] : memref<64x384xf32, #tpu.memory_space<vmem>>, vector<8x384xf32>
    %c3_300 = arith.constant 3 : index
    %c0_301 = arith.constant 0 : index
    %c0_302 = arith.constant 0 : index
    %883 = vector.load %arg4[%c3_300, %c0_301, %c0_302] : memref<4x128x384xf32, #tpu.memory_space<vmem>>, vector<1x128x384xf32>
    %884 = vector.shape_cast %883 : vector<1x128x384xf32> to vector<128x384xf32>
    %cst_303 = arith.constant dense<0.000000e+00> : vector<8x384xf32>
    %885 = tpu.matmul %878, %884, %cst_303 {dimension_numbers = #tpu.dot_dimension_numbers<[1], [0], [0], [1], [0, 0, 1, 1], [], []>} : vector<8x128xf32>, vector<128x384xf32>, vector<8x384xf32> -> vector<8x384xf32>
    %886 = vector.extract_strided_slice %882 {offsets = [0, 0], sizes = [8, 128], strides = [1, 1]} : vector<8x384xf32> to vector<8x128xf32>
    %887 = vector.extract_strided_slice %885 {offsets = [0, 0], sizes = [8, 128], strides = [1, 1]} : vector<8x384xf32> to vector<8x128xf32>
    %888 = arith.addf %886, %887 : vector<8x128xf32>
    %889 = arith.negf %888 : vector<8x128xf32>
    %890 = math.exp %889 : vector<8x128xf32>
    %cst_304 = arith.constant 1.000000e+00 : f32
    %891 = vector.broadcast %cst_304 : f32 to vector<8x128xf32>
    %892 = arith.addf %891, %890 : vector<8x128xf32>
    %893 = arith.divf %891, %892 : vector<8x128xf32>
    %894 = vector.extract_strided_slice %882 {offsets = [0, 128], sizes = [8, 128], strides = [1, 1]} : vector<8x384xf32> to vector<8x128xf32>
    %895 = vector.extract_strided_slice %885 {offsets = [0, 128], sizes = [8, 128], strides = [1, 1]} : vector<8x384xf32> to vector<8x128xf32>
    %896 = arith.addf %894, %895 : vector<8x128xf32>
    %897 = arith.negf %896 : vector<8x128xf32>
    %898 = math.exp %897 : vector<8x128xf32>
    %cst_305 = arith.constant 1.000000e+00 : f32
    %899 = vector.broadcast %cst_305 : f32 to vector<8x128xf32>
    %900 = arith.addf %899, %898 : vector<8x128xf32>
    %901 = arith.divf %899, %900 : vector<8x128xf32>
    %902 = vector.extract_strided_slice %882 {offsets = [0, 256], sizes = [8, 128], strides = [1, 1]} : vector<8x384xf32> to vector<8x128xf32>
    %903 = vector.extract_strided_slice %885 {offsets = [0, 256], sizes = [8, 128], strides = [1, 1]} : vector<8x384xf32> to vector<8x128xf32>
    %904 = arith.addf %903, %876 : vector<8x128xf32>
    %905 = arith.mulf %893, %904 : vector<8x128xf32>
    %906 = arith.addf %902, %905 : vector<8x128xf32>
    %907 = math.tanh %906 : vector<8x128xf32>
    %908 = arith.subf %878, %907 : vector<8x128xf32>
    %909 = arith.mulf %901, %908 : vector<8x128xf32>
    %910 = arith.addf %907, %909 : vector<8x128xf32>
    %911 = arith.index_cast %880 : i32 to index
    %c0_306 = arith.constant 0 : index
    %912 = vector.load %arg7[%911, %c0_306] : memref<64x128xf32, #tpu.memory_space<vmem>>, vector<8x128xf32>
    tpu.vector_store %arg7[%911, %c0_306], %910 {strides = array<i32>} : memref<64x128xf32, #tpu.memory_space<vmem>>, vector<8x128xf32>,
    %c1_i32_307 = arith.constant 1 : i32
    %c8_i32_308 = arith.constant 8 : i32
    %913 = arith.muli %c1_i32_307, %c8_i32_308 : i32
    %914 = tpu.assume_multiple %913, 8 : i32
    %915 = arith.index_cast %914 : i32 to index
    %c0_309 = arith.constant 0 : index
    %916 = vector.load %arg9[%915, %c0_309] : memref<64x384xf32, #tpu.memory_space<vmem>>, vector<8x384xf32>
    %c3_310 = arith.constant 3 : index
    %c0_311 = arith.constant 0 : index
    %c0_312 = arith.constant 0 : index
    %917 = vector.load %arg4[%c3_310, %c0_311, %c0_312] : memref<4x128x384xf32, #tpu.memory_space<vmem>>, vector<1x128x384xf32>
    %918 = vector.shape_cast %917 : vector<1x128x384xf32> to vector<128x384xf32>
    %cst_313 = arith.constant dense<0.000000e+00> : vector<8x384xf32>
    %919 = tpu.matmul %910, %918, %cst_313 {dimension_numbers = #tpu.dot_dimension_numbers<[1], [0], [0], [1], [0, 0, 1, 1], [], []>} : vector<8x128xf32>, vector<128x384xf32>, vector<8x384xf32> -> vector<8x384xf32>
    %920 = vector.extract_strided_slice %916 {offsets = [0, 0], sizes = [8, 128], strides = [1, 1]} : vector<8x384xf32> to vector<8x128xf32>
    %921 = vector.extract_strided_slice %919 {offsets = [0, 0], sizes = [8, 128], strides = [1, 1]} : vector<8x384xf32> to vector<8x128xf32>
    %922 = arith.addf %920, %921 : vector<8x128xf32>
    %923 = arith.negf %922 : vector<8x128xf32>
    %924 = math.exp %923 : vector<8x128xf32>
    %cst_314 = arith.constant 1.000000e+00 : f32
    %925 = vector.broadcast %cst_314 : f32 to vector<8x128xf32>
    %926 = arith.addf %925, %924 : vector<8x128xf32>
    %927 = arith.divf %925, %926 : vector<8x128xf32>
    %928 = vector.extract_strided_slice %916 {offsets = [0, 128], sizes = [8, 128], strides = [1, 1]} : vector<8x384xf32> to vector<8x128xf32>
    %929 = vector.extract_strided_slice %919 {offsets = [0, 128], sizes = [8, 128], strides = [1, 1]} : vector<8x384xf32> to vector<8x128xf32>
    %930 = arith.addf %928, %929 : vector<8x128xf32>
    %931 = arith.negf %930 : vector<8x128xf32>
    %932 = math.exp %931 : vector<8x128xf32>
    %cst_315 = arith.constant 1.000000e+00 : f32
    %933 = vector.broadcast %cst_315 : f32 to vector<8x128xf32>
    %934 = arith.addf %933, %932 : vector<8x128xf32>
    %935 = arith.divf %933, %934 : vector<8x128xf32>
    %936 = vector.extract_strided_slice %916 {offsets = [0, 256], sizes = [8, 128], strides = [1, 1]} : vector<8x384xf32> to vector<8x128xf32>
    %937 = vector.extract_strided_slice %919 {offsets = [0, 256], sizes = [8, 128], strides = [1, 1]} : vector<8x384xf32> to vector<8x128xf32>
    %938 = arith.addf %937, %876 : vector<8x128xf32>
    %939 = arith.mulf %927, %938 : vector<8x128xf32>
    %940 = arith.addf %936, %939 : vector<8x128xf32>
    %941 = math.tanh %940 : vector<8x128xf32>
    %942 = arith.subf %910, %941 : vector<8x128xf32>
    %943 = arith.mulf %935, %942 : vector<8x128xf32>
    %944 = arith.addf %941, %943 : vector<8x128xf32>
    %945 = arith.index_cast %914 : i32 to index
    %c0_316 = arith.constant 0 : index
    %946 = vector.load %arg7[%945, %c0_316] : memref<64x128xf32, #tpu.memory_space<vmem>>, vector<8x128xf32>
    tpu.vector_store %arg7[%945, %c0_316], %944 {strides = array<i32>} : memref<64x128xf32, #tpu.memory_space<vmem>>, vector<8x128xf32>,
    %c2_i32_317 = arith.constant 2 : i32
    %c8_i32_318 = arith.constant 8 : i32
    %947 = arith.muli %c2_i32_317, %c8_i32_318 : i32
    %948 = tpu.assume_multiple %947, 8 : i32
    %949 = arith.index_cast %948 : i32 to index
    %c0_319 = arith.constant 0 : index
    %950 = vector.load %arg9[%949, %c0_319] : memref<64x384xf32, #tpu.memory_space<vmem>>, vector<8x384xf32>
    %c3_320 = arith.constant 3 : index
    %c0_321 = arith.constant 0 : index
    %c0_322 = arith.constant 0 : index
    %951 = vector.load %arg4[%c3_320, %c0_321, %c0_322] : memref<4x128x384xf32, #tpu.memory_space<vmem>>, vector<1x128x384xf32>
    %952 = vector.shape_cast %951 : vector<1x128x384xf32> to vector<128x384xf32>
    %cst_323 = arith.constant dense<0.000000e+00> : vector<8x384xf32>
    %953 = tpu.matmul %944, %952, %cst_323 {dimension_numbers = #tpu.dot_dimension_numbers<[1], [0], [0], [1], [0, 0, 1, 1], [], []>} : vector<8x128xf32>, vector<128x384xf32>, vector<8x384xf32> -> vector<8x384xf32>
    %954 = vector.extract_strided_slice %950 {offsets = [0, 0], sizes = [8, 128], strides = [1, 1]} : vector<8x384xf32> to vector<8x128xf32>
    %955 = vector.extract_strided_slice %953 {offsets = [0, 0], sizes = [8, 128], strides = [1, 1]} : vector<8x384xf32> to vector<8x128xf32>
    %956 = arith.addf %954, %955 : vector<8x128xf32>
    %957 = arith.negf %956 : vector<8x128xf32>
    %958 = math.exp %957 : vector<8x128xf32>
    %cst_324 = arith.constant 1.000000e+00 : f32
    %959 = vector.broadcast %cst_324 : f32 to vector<8x128xf32>
    %960 = arith.addf %959, %958 : vector<8x128xf32>
    %961 = arith.divf %959, %960 : vector<8x128xf32>
    %962 = vector.extract_strided_slice %950 {offsets = [0, 128], sizes = [8, 128], strides = [1, 1]} : vector<8x384xf32> to vector<8x128xf32>
    %963 = vector.extract_strided_slice %953 {offsets = [0, 128], sizes = [8, 128], strides = [1, 1]} : vector<8x384xf32> to vector<8x128xf32>
    %964 = arith.addf %962, %963 : vector<8x128xf32>
    %965 = arith.negf %964 : vector<8x128xf32>
    %966 = math.exp %965 : vector<8x128xf32>
    %cst_325 = arith.constant 1.000000e+00 : f32
    %967 = vector.broadcast %cst_325 : f32 to vector<8x128xf32>
    %968 = arith.addf %967, %966 : vector<8x128xf32>
    %969 = arith.divf %967, %968 : vector<8x128xf32>
    %970 = vector.extract_strided_slice %950 {offsets = [0, 256], sizes = [8, 128], strides = [1, 1]} : vector<8x384xf32> to vector<8x128xf32>
    %971 = vector.extract_strided_slice %953 {offsets = [0, 256], sizes = [8, 128], strides = [1, 1]} : vector<8x384xf32> to vector<8x128xf32>
    %972 = arith.addf %971, %876 : vector<8x128xf32>
    %973 = arith.mulf %961, %972 : vector<8x128xf32>
    %974 = arith.addf %970, %973 : vector<8x128xf32>
    %975 = math.tanh %974 : vector<8x128xf32>
    %976 = arith.subf %944, %975 : vector<8x128xf32>
    %977 = arith.mulf %969, %976 : vector<8x128xf32>
    %978 = arith.addf %975, %977 : vector<8x128xf32>
    %979 = arith.index_cast %948 : i32 to index
    %c0_326 = arith.constant 0 : index
    %980 = vector.load %arg7[%979, %c0_326] : memref<64x128xf32, #tpu.memory_space<vmem>>, vector<8x128xf32>
    tpu.vector_store %arg7[%979, %c0_326], %978 {strides = array<i32>} : memref<64x128xf32, #tpu.memory_space<vmem>>, vector<8x128xf32>,
    %c3_i32_327 = arith.constant 3 : i32
    %c8_i32_328 = arith.constant 8 : i32
    %981 = arith.muli %c3_i32_327, %c8_i32_328 : i32
    %982 = tpu.assume_multiple %981, 8 : i32
    %983 = arith.index_cast %982 : i32 to index
    %c0_329 = arith.constant 0 : index
    %984 = vector.load %arg9[%983, %c0_329] : memref<64x384xf32, #tpu.memory_space<vmem>>, vector<8x384xf32>
    %c3_330 = arith.constant 3 : index
    %c0_331 = arith.constant 0 : index
    %c0_332 = arith.constant 0 : index
    %985 = vector.load %arg4[%c3_330, %c0_331, %c0_332] : memref<4x128x384xf32, #tpu.memory_space<vmem>>, vector<1x128x384xf32>
    %986 = vector.shape_cast %985 : vector<1x128x384xf32> to vector<128x384xf32>
    %cst_333 = arith.constant dense<0.000000e+00> : vector<8x384xf32>
    %987 = tpu.matmul %978, %986, %cst_333 {dimension_numbers = #tpu.dot_dimension_numbers<[1], [0], [0], [1], [0, 0, 1, 1], [], []>} : vector<8x128xf32>, vector<128x384xf32>, vector<8x384xf32> -> vector<8x384xf32>
    %988 = vector.extract_strided_slice %984 {offsets = [0, 0], sizes = [8, 128], strides = [1, 1]} : vector<8x384xf32> to vector<8x128xf32>
    %989 = vector.extract_strided_slice %987 {offsets = [0, 0], sizes = [8, 128], strides = [1, 1]} : vector<8x384xf32> to vector<8x128xf32>
    %990 = arith.addf %988, %989 : vector<8x128xf32>
    %991 = arith.negf %990 : vector<8x128xf32>
    %992 = math.exp %991 : vector<8x128xf32>
    %cst_334 = arith.constant 1.000000e+00 : f32
    %993 = vector.broadcast %cst_334 : f32 to vector<8x128xf32>
    %994 = arith.addf %993, %992 : vector<8x128xf32>
    %995 = arith.divf %993, %994 : vector<8x128xf32>
    %996 = vector.extract_strided_slice %984 {offsets = [0, 128], sizes = [8, 128], strides = [1, 1]} : vector<8x384xf32> to vector<8x128xf32>
    %997 = vector.extract_strided_slice %987 {offsets = [0, 128], sizes = [8, 128], strides = [1, 1]} : vector<8x384xf32> to vector<8x128xf32>
    %998 = arith.addf %996, %997 : vector<8x128xf32>
    %999 = arith.negf %998 : vector<8x128xf32>
    %1000 = math.exp %999 : vector<8x128xf32>
    %cst_335 = arith.constant 1.000000e+00 : f32
    %1001 = vector.broadcast %cst_335 : f32 to vector<8x128xf32>
    %1002 = arith.addf %1001, %1000 : vector<8x128xf32>
    %1003 = arith.divf %1001, %1002 : vector<8x128xf32>
    %1004 = vector.extract_strided_slice %984 {offsets = [0, 256], sizes = [8, 128], strides = [1, 1]} : vector<8x384xf32> to vector<8x128xf32>
    %1005 = vector.extract_strided_slice %987 {offsets = [0, 256], sizes = [8, 128], strides = [1, 1]} : vector<8x384xf32> to vector<8x128xf32>
    %1006 = arith.addf %1005, %876 : vector<8x128xf32>
    %1007 = arith.mulf %995, %1006 : vector<8x128xf32>
    %1008 = arith.addf %1004, %1007 : vector<8x128xf32>
    %1009 = math.tanh %1008 : vector<8x128xf32>
    %1010 = arith.subf %978, %1009 : vector<8x128xf32>
    %1011 = arith.mulf %1003, %1010 : vector<8x128xf32>
    %1012 = arith.addf %1009, %1011 : vector<8x128xf32>
    %1013 = arith.index_cast %982 : i32 to index
    %c0_336 = arith.constant 0 : index
    %1014 = vector.load %arg7[%1013, %c0_336] : memref<64x128xf32, #tpu.memory_space<vmem>>, vector<8x128xf32>
    tpu.vector_store %arg7[%1013, %c0_336], %1012 {strides = array<i32>} : memref<64x128xf32, #tpu.memory_space<vmem>>, vector<8x128xf32>,
    %c4_i32_337 = arith.constant 4 : i32
    %c8_i32_338 = arith.constant 8 : i32
    %1015 = arith.muli %c4_i32_337, %c8_i32_338 : i32
    %1016 = tpu.assume_multiple %1015, 8 : i32
    %1017 = arith.index_cast %1016 : i32 to index
    %c0_339 = arith.constant 0 : index
    %1018 = vector.load %arg9[%1017, %c0_339] : memref<64x384xf32, #tpu.memory_space<vmem>>, vector<8x384xf32>
    %c3_340 = arith.constant 3 : index
    %c0_341 = arith.constant 0 : index
    %c0_342 = arith.constant 0 : index
    %1019 = vector.load %arg4[%c3_340, %c0_341, %c0_342] : memref<4x128x384xf32, #tpu.memory_space<vmem>>, vector<1x128x384xf32>
    %1020 = vector.shape_cast %1019 : vector<1x128x384xf32> to vector<128x384xf32>
    %cst_343 = arith.constant dense<0.000000e+00> : vector<8x384xf32>
    %1021 = tpu.matmul %1012, %1020, %cst_343 {dimension_numbers = #tpu.dot_dimension_numbers<[1], [0], [0], [1], [0, 0, 1, 1], [], []>} : vector<8x128xf32>, vector<128x384xf32>, vector<8x384xf32> -> vector<8x384xf32>
    %1022 = vector.extract_strided_slice %1018 {offsets = [0, 0], sizes = [8, 128], strides = [1, 1]} : vector<8x384xf32> to vector<8x128xf32>
    %1023 = vector.extract_strided_slice %1021 {offsets = [0, 0], sizes = [8, 128], strides = [1, 1]} : vector<8x384xf32> to vector<8x128xf32>
    %1024 = arith.addf %1022, %1023 : vector<8x128xf32>
    %1025 = arith.negf %1024 : vector<8x128xf32>
    %1026 = math.exp %1025 : vector<8x128xf32>
    %cst_344 = arith.constant 1.000000e+00 : f32
    %1027 = vector.broadcast %cst_344 : f32 to vector<8x128xf32>
    %1028 = arith.addf %1027, %1026 : vector<8x128xf32>
    %1029 = arith.divf %1027, %1028 : vector<8x128xf32>
    %1030 = vector.extract_strided_slice %1018 {offsets = [0, 128], sizes = [8, 128], strides = [1, 1]} : vector<8x384xf32> to vector<8x128xf32>
    %1031 = vector.extract_strided_slice %1021 {offsets = [0, 128], sizes = [8, 128], strides = [1, 1]} : vector<8x384xf32> to vector<8x128xf32>
    %1032 = arith.addf %1030, %1031 : vector<8x128xf32>
    %1033 = arith.negf %1032 : vector<8x128xf32>
    %1034 = math.exp %1033 : vector<8x128xf32>
    %cst_345 = arith.constant 1.000000e+00 : f32
    %1035 = vector.broadcast %cst_345 : f32 to vector<8x128xf32>
    %1036 = arith.addf %1035, %1034 : vector<8x128xf32>
    %1037 = arith.divf %1035, %1036 : vector<8x128xf32>
    %1038 = vector.extract_strided_slice %1018 {offsets = [0, 256], sizes = [8, 128], strides = [1, 1]} : vector<8x384xf32> to vector<8x128xf32>
    %1039 = vector.extract_strided_slice %1021 {offsets = [0, 256], sizes = [8, 128], strides = [1, 1]} : vector<8x384xf32> to vector<8x128xf32>
    %1040 = arith.addf %1039, %876 : vector<8x128xf32>
    %1041 = arith.mulf %1029, %1040 : vector<8x128xf32>
    %1042 = arith.addf %1038, %1041 : vector<8x128xf32>
    %1043 = math.tanh %1042 : vector<8x128xf32>
    %1044 = arith.subf %1012, %1043 : vector<8x128xf32>
    %1045 = arith.mulf %1037, %1044 : vector<8x128xf32>
    %1046 = arith.addf %1043, %1045 : vector<8x128xf32>
    %1047 = arith.index_cast %1016 : i32 to index
    %c0_346 = arith.constant 0 : index
    %1048 = vector.load %arg7[%1047, %c0_346] : memref<64x128xf32, #tpu.memory_space<vmem>>, vector<8x128xf32>
    tpu.vector_store %arg7[%1047, %c0_346], %1046 {strides = array<i32>} : memref<64x128xf32, #tpu.memory_space<vmem>>, vector<8x128xf32>,
    %c5_i32_347 = arith.constant 5 : i32
    %c8_i32_348 = arith.constant 8 : i32
    %1049 = arith.muli %c5_i32_347, %c8_i32_348 : i32
    %1050 = tpu.assume_multiple %1049, 8 : i32
    %1051 = arith.index_cast %1050 : i32 to index
    %c0_349 = arith.constant 0 : index
    %1052 = vector.load %arg9[%1051, %c0_349] : memref<64x384xf32, #tpu.memory_space<vmem>>, vector<8x384xf32>
    %c3_350 = arith.constant 3 : index
    %c0_351 = arith.constant 0 : index
    %c0_352 = arith.constant 0 : index
    %1053 = vector.load %arg4[%c3_350, %c0_351, %c0_352] : memref<4x128x384xf32, #tpu.memory_space<vmem>>, vector<1x128x384xf32>
    %1054 = vector.shape_cast %1053 : vector<1x128x384xf32> to vector<128x384xf32>
    %cst_353 = arith.constant dense<0.000000e+00> : vector<8x384xf32>
    %1055 = tpu.matmul %1046, %1054, %cst_353 {dimension_numbers = #tpu.dot_dimension_numbers<[1], [0], [0], [1], [0, 0, 1, 1], [], []>} : vector<8x128xf32>, vector<128x384xf32>, vector<8x384xf32> -> vector<8x384xf32>
    %1056 = vector.extract_strided_slice %1052 {offsets = [0, 0], sizes = [8, 128], strides = [1, 1]} : vector<8x384xf32> to vector<8x128xf32>
    %1057 = vector.extract_strided_slice %1055 {offsets = [0, 0], sizes = [8, 128], strides = [1, 1]} : vector<8x384xf32> to vector<8x128xf32>
    %1058 = arith.addf %1056, %1057 : vector<8x128xf32>
    %1059 = arith.negf %1058 : vector<8x128xf32>
    %1060 = math.exp %1059 : vector<8x128xf32>
    %cst_354 = arith.constant 1.000000e+00 : f32
    %1061 = vector.broadcast %cst_354 : f32 to vector<8x128xf32>
    %1062 = arith.addf %1061, %1060 : vector<8x128xf32>
    %1063 = arith.divf %1061, %1062 : vector<8x128xf32>
    %1064 = vector.extract_strided_slice %1052 {offsets = [0, 128], sizes = [8, 128], strides = [1, 1]} : vector<8x384xf32> to vector<8x128xf32>
    %1065 = vector.extract_strided_slice %1055 {offsets = [0, 128], sizes = [8, 128], strides = [1, 1]} : vector<8x384xf32> to vector<8x128xf32>
    %1066 = arith.addf %1064, %1065 : vector<8x128xf32>
    %1067 = arith.negf %1066 : vector<8x128xf32>
    %1068 = math.exp %1067 : vector<8x128xf32>
    %cst_355 = arith.constant 1.000000e+00 : f32
    %1069 = vector.broadcast %cst_355 : f32 to vector<8x128xf32>
    %1070 = arith.addf %1069, %1068 : vector<8x128xf32>
    %1071 = arith.divf %1069, %1070 : vector<8x128xf32>
    %1072 = vector.extract_strided_slice %1052 {offsets = [0, 256], sizes = [8, 128], strides = [1, 1]} : vector<8x384xf32> to vector<8x128xf32>
    %1073 = vector.extract_strided_slice %1055 {offsets = [0, 256], sizes = [8, 128], strides = [1, 1]} : vector<8x384xf32> to vector<8x128xf32>
    %1074 = arith.addf %1073, %876 : vector<8x128xf32>
    %1075 = arith.mulf %1063, %1074 : vector<8x128xf32>
    %1076 = arith.addf %1072, %1075 : vector<8x128xf32>
    %1077 = math.tanh %1076 : vector<8x128xf32>
    %1078 = arith.subf %1046, %1077 : vector<8x128xf32>
    %1079 = arith.mulf %1071, %1078 : vector<8x128xf32>
    %1080 = arith.addf %1077, %1079 : vector<8x128xf32>
    %1081 = arith.index_cast %1050 : i32 to index
    %c0_356 = arith.constant 0 : index
    %1082 = vector.load %arg7[%1081, %c0_356] : memref<64x128xf32, #tpu.memory_space<vmem>>, vector<8x128xf32>
    tpu.vector_store %arg7[%1081, %c0_356], %1080 {strides = array<i32>} : memref<64x128xf32, #tpu.memory_space<vmem>>, vector<8x128xf32>,
    %c6_i32_357 = arith.constant 6 : i32
    %c8_i32_358 = arith.constant 8 : i32
    %1083 = arith.muli %c6_i32_357, %c8_i32_358 : i32
    %1084 = tpu.assume_multiple %1083, 8 : i32
    %1085 = arith.index_cast %1084 : i32 to index
    %c0_359 = arith.constant 0 : index
    %1086 = vector.load %arg9[%1085, %c0_359] : memref<64x384xf32, #tpu.memory_space<vmem>>, vector<8x384xf32>
    %c3_360 = arith.constant 3 : index
    %c0_361 = arith.constant 0 : index
    %c0_362 = arith.constant 0 : index
    %1087 = vector.load %arg4[%c3_360, %c0_361, %c0_362] : memref<4x128x384xf32, #tpu.memory_space<vmem>>, vector<1x128x384xf32>
    %1088 = vector.shape_cast %1087 : vector<1x128x384xf32> to vector<128x384xf32>
    %cst_363 = arith.constant dense<0.000000e+00> : vector<8x384xf32>
    %1089 = tpu.matmul %1080, %1088, %cst_363 {dimension_numbers = #tpu.dot_dimension_numbers<[1], [0], [0], [1], [0, 0, 1, 1], [], []>} : vector<8x128xf32>, vector<128x384xf32>, vector<8x384xf32> -> vector<8x384xf32>
    %1090 = vector.extract_strided_slice %1086 {offsets = [0, 0], sizes = [8, 128], strides = [1, 1]} : vector<8x384xf32> to vector<8x128xf32>
    %1091 = vector.extract_strided_slice %1089 {offsets = [0, 0], sizes = [8, 128], strides = [1, 1]} : vector<8x384xf32> to vector<8x128xf32>
    %1092 = arith.addf %1090, %1091 : vector<8x128xf32>
    %1093 = arith.negf %1092 : vector<8x128xf32>
    %1094 = math.exp %1093 : vector<8x128xf32>
    %cst_364 = arith.constant 1.000000e+00 : f32
    %1095 = vector.broadcast %cst_364 : f32 to vector<8x128xf32>
    %1096 = arith.addf %1095, %1094 : vector<8x128xf32>
    %1097 = arith.divf %1095, %1096 : vector<8x128xf32>
    %1098 = vector.extract_strided_slice %1086 {offsets = [0, 128], sizes = [8, 128], strides = [1, 1]} : vector<8x384xf32> to vector<8x128xf32>
    %1099 = vector.extract_strided_slice %1089 {offsets = [0, 128], sizes = [8, 128], strides = [1, 1]} : vector<8x384xf32> to vector<8x128xf32>
    %1100 = arith.addf %1098, %1099 : vector<8x128xf32>
    %1101 = arith.negf %1100 : vector<8x128xf32>
    %1102 = math.exp %1101 : vector<8x128xf32>
    %cst_365 = arith.constant 1.000000e+00 : f32
    %1103 = vector.broadcast %cst_365 : f32 to vector<8x128xf32>
    %1104 = arith.addf %1103, %1102 : vector<8x128xf32>
    %1105 = arith.divf %1103, %1104 : vector<8x128xf32>
    %1106 = vector.extract_strided_slice %1086 {offsets = [0, 256], sizes = [8, 128], strides = [1, 1]} : vector<8x384xf32> to vector<8x128xf32>
    %1107 = vector.extract_strided_slice %1089 {offsets = [0, 256], sizes = [8, 128], strides = [1, 1]} : vector<8x384xf32> to vector<8x128xf32>
    %1108 = arith.addf %1107, %876 : vector<8x128xf32>
    %1109 = arith.mulf %1097, %1108 : vector<8x128xf32>
    %1110 = arith.addf %1106, %1109 : vector<8x128xf32>
    %1111 = math.tanh %1110 : vector<8x128xf32>
    %1112 = arith.subf %1080, %1111 : vector<8x128xf32>
    %1113 = arith.mulf %1105, %1112 : vector<8x128xf32>
    %1114 = arith.addf %1111, %1113 : vector<8x128xf32>
    %1115 = arith.index_cast %1084 : i32 to index
    %c0_366 = arith.constant 0 : index
    %1116 = vector.load %arg7[%1115, %c0_366] : memref<64x128xf32, #tpu.memory_space<vmem>>, vector<8x128xf32>
    tpu.vector_store %arg7[%1115, %c0_366], %1114 {strides = array<i32>} : memref<64x128xf32, #tpu.memory_space<vmem>>, vector<8x128xf32>,
    %c7_i32_367 = arith.constant 7 : i32
    %c8_i32_368 = arith.constant 8 : i32
    %1117 = arith.muli %c7_i32_367, %c8_i32_368 : i32
    %1118 = tpu.assume_multiple %1117, 8 : i32
    %1119 = arith.index_cast %1118 : i32 to index
    %c0_369 = arith.constant 0 : index
    %1120 = vector.load %arg9[%1119, %c0_369] : memref<64x384xf32, #tpu.memory_space<vmem>>, vector<8x384xf32>
    %c3_370 = arith.constant 3 : index
    %c0_371 = arith.constant 0 : index
    %c0_372 = arith.constant 0 : index
    %1121 = vector.load %arg4[%c3_370, %c0_371, %c0_372] : memref<4x128x384xf32, #tpu.memory_space<vmem>>, vector<1x128x384xf32>
    %1122 = vector.shape_cast %1121 : vector<1x128x384xf32> to vector<128x384xf32>
    %cst_373 = arith.constant dense<0.000000e+00> : vector<8x384xf32>
    %1123 = tpu.matmul %1114, %1122, %cst_373 {dimension_numbers = #tpu.dot_dimension_numbers<[1], [0], [0], [1], [0, 0, 1, 1], [], []>} : vector<8x128xf32>, vector<128x384xf32>, vector<8x384xf32> -> vector<8x384xf32>
    %1124 = vector.extract_strided_slice %1120 {offsets = [0, 0], sizes = [8, 128], strides = [1, 1]} : vector<8x384xf32> to vector<8x128xf32>
    %1125 = vector.extract_strided_slice %1123 {offsets = [0, 0], sizes = [8, 128], strides = [1, 1]} : vector<8x384xf32> to vector<8x128xf32>
    %1126 = arith.addf %1124, %1125 : vector<8x128xf32>
    %1127 = arith.negf %1126 : vector<8x128xf32>
    %1128 = math.exp %1127 : vector<8x128xf32>
    %cst_374 = arith.constant 1.000000e+00 : f32
    %1129 = vector.broadcast %cst_374 : f32 to vector<8x128xf32>
    %1130 = arith.addf %1129, %1128 : vector<8x128xf32>
    %1131 = arith.divf %1129, %1130 : vector<8x128xf32>
    %1132 = vector.extract_strided_slice %1120 {offsets = [0, 128], sizes = [8, 128], strides = [1, 1]} : vector<8x384xf32> to vector<8x128xf32>
    %1133 = vector.extract_strided_slice %1123 {offsets = [0, 128], sizes = [8, 128], strides = [1, 1]} : vector<8x384xf32> to vector<8x128xf32>
    %1134 = arith.addf %1132, %1133 : vector<8x128xf32>
    %1135 = arith.negf %1134 : vector<8x128xf32>
    %1136 = math.exp %1135 : vector<8x128xf32>
    %cst_375 = arith.constant 1.000000e+00 : f32
    %1137 = vector.broadcast %cst_375 : f32 to vector<8x128xf32>
    %1138 = arith.addf %1137, %1136 : vector<8x128xf32>
    %1139 = arith.divf %1137, %1138 : vector<8x128xf32>
    %1140 = vector.extract_strided_slice %1120 {offsets = [0, 256], sizes = [8, 128], strides = [1, 1]} : vector<8x384xf32> to vector<8x128xf32>
    %1141 = vector.extract_strided_slice %1123 {offsets = [0, 256], sizes = [8, 128], strides = [1, 1]} : vector<8x384xf32> to vector<8x128xf32>
    %1142 = arith.addf %1141, %876 : vector<8x128xf32>
    %1143 = arith.mulf %1131, %1142 : vector<8x128xf32>
    %1144 = arith.addf %1140, %1143 : vector<8x128xf32>
    %1145 = math.tanh %1144 : vector<8x128xf32>
    %1146 = arith.subf %1114, %1145 : vector<8x128xf32>
    %1147 = arith.mulf %1139, %1146 : vector<8x128xf32>
    %1148 = arith.addf %1145, %1147 : vector<8x128xf32>
    %1149 = arith.index_cast %1118 : i32 to index
    %c0_376 = arith.constant 0 : index
    %1150 = vector.load %arg7[%1149, %c0_376] : memref<64x128xf32, #tpu.memory_space<vmem>>, vector<8x128xf32>
    tpu.vector_store %arg7[%1149, %c0_376], %1148 {strides = array<i32>} : memref<64x128xf32, #tpu.memory_space<vmem>>, vector<8x128xf32>,
    %c8_i32_377 = arith.constant 8 : i32
    %c3_378 = arith.constant 3 : index
    %c0_379 = arith.constant 0 : index
    %c0_380 = arith.constant 0 : index
    %1151 = vector.load %arg8[%c3_378, %c0_379, %c0_380] : memref<4x8x128xf32, #tpu.memory_space<vmem>>, vector<1x8x128xf32>
    %1152 = vector.shape_cast %1151 : vector<1x8x128xf32> to vector<8x128xf32>
    %1153 = vector.shape_cast %1148 : vector<8x128xf32> to vector<1x8x128xf32>
    tpu.vector_store %arg8[%c3_378, %c0_379, %c0_380], %1153 {strides = array<i32>} : memref<4x8x128xf32, #tpu.memory_space<vmem>>, vector<1x8x128xf32>,
    return
  }
  func.func @transform_0(%arg0: i32) -> (i32, i32) {
    %c0_i32 = arith.constant 0 : i32
    %c0_i32_0 = arith.constant 0 : i32
    return %arg0, %c0_i32 : i32, i32
  }
  func.func @transform_1(%arg0: i32) -> (i32, i32, i32) {
    %c0_i32 = arith.constant 0 : i32
    %c0_i32_0 = arith.constant 0 : i32
    %c0_i32_1 = arith.constant 0 : i32
    %c0_i32_2 = arith.constant 0 : i32
    return %c0_i32, %c0_i32_0, %c0_i32_1 : i32, i32, i32
  }
  func.func @transform_2(%arg0: i32) -> (i32, i32, i32) {
    %c0_i32 = arith.constant 0 : i32
    %c0_i32_0 = arith.constant 0 : i32
    %c0_i32_1 = arith.constant 0 : i32
    %c0_i32_2 = arith.constant 0 : i32
    return %c0_i32, %c0_i32_0, %c0_i32_1 : i32, i32, i32
  }
  func.func @transform_3(%arg0: i32) -> (i32, i32, i32) {
    %c0_i32 = arith.constant 0 : i32
    %c0_i32_0 = arith.constant 0 : i32
    %c0_i32_1 = arith.constant 0 : i32
    %c0_i32_2 = arith.constant 0 : i32
    return %c0_i32, %c0_i32_0, %c0_i32_1 : i32, i32, i32
  }
  func.func @transform_4(%arg0: i32) -> (i32, i32, i32) {
    %c0_i32 = arith.constant 0 : i32
    %c0_i32_0 = arith.constant 0 : i32
    %c0_i32_1 = arith.constant 0 : i32
    %c0_i32_2 = arith.constant 0 : i32
    return %c0_i32, %c0_i32_0, %c0_i32_1 : i32, i32, i32
  }
  func.func @transform_5(%arg0: i32) -> (i32, i32, i32) {
    %c0_i32 = arith.constant 0 : i32
    %c0_i32_0 = arith.constant 0 : i32
    %c0_i32_1 = arith.constant 0 : i32
    %c0_i32_2 = arith.constant 0 : i32
    return %c0_i32, %c0_i32_0, %c0_i32_1 : i32, i32, i32
  }
  func.func @transform_6(%arg0: i32) -> (i32, i32) {
    %c0_i32 = arith.constant 0 : i32
    %c0_i32_0 = arith.constant 0 : i32
    return %arg0, %c0_i32 : i32, i32
  }
  func.func @transform_7(%arg0: i32) -> (i32, i32, i32) {
    %c0_i32 = arith.constant 0 : i32
    %c0_i32_0 = arith.constant 0 : i32
    %c0_i32_1 = arith.constant 0 : i32
    %c0_i32_2 = arith.constant 0 : i32
    return %c0_i32, %c0_i32_0, %c0_i32_1 : i32, i32, i32
  }
}

</mosaic_0001>

<llo_original>
// kernel: pt_gru_encoder_forward.1
$region0: #{pt_gru_encoder_forward.1}
  #allocation0 [shape = 'u32[]', space=smem, size = 0x4, offset = 0x4, fixed_abs, tag = 'smem constant byte address 0x4 - core index']
  #allocation1 [shape = 'u32[144,128]{1,0:T(1,128)}', space=vmem, size = 0x12000, scoped, tag = 'internal scratch']
  #allocation2 [shape = 'f32[64,384]{1,0:T(8,128)}', space=vmem, size = 0x18000, scoped, tag = 'scratch operand']
  #allocation3 [shape = 'f32[64,128]{1,0:T(8,128)}', space=vmem, size = 0x8000, scoped, tag = 'scratch operand']
  %s0 = inlined_call_operand.vmem [shape: f32[64,384], index: 0, kind: input, shape index: {}]
  %s1 = inlined_call_operand.vmem [shape: f32[4,8,128], index: 1, kind: input, shape index: {}]
  %s2 = inlined_call_operand.hbm [shape: f32[3,128,384], index: 2, kind: input, shape index: {}]
  %s3 = inlined_call_operand.hbm [shape: f32[4,128,384], index: 3, kind: input, shape index: {}]
  %s4 = inlined_call_operand.vmem [shape: f32[3,1,384], index: 4, kind: input, shape index: {}]
  %s5 = inlined_call_operand.vmem [shape: f32[4,1,128], index: 5, kind: input, shape index: {}]
  %s6 = inlined_call_operand.vmem [shape: f32[64,128], index: 6, kind: output, shape index: {0}]
  %s7 = inlined_call_operand.vmem [shape: f32[4,8,128], index: 7, kind: output, shape index: {1}]
  %8 = xla_tuple %s6, %s7
  %s9 = sld [smem:[#allocation0]]
  $region54: #{pt_gru_encoder_forward.1} parent=0
    _
  %s11 = ssub.s32 1, %s9
  %s12 = scalar_select 0, %s11, %s9
  $region1: #{pt_gru_encoder_forward.1} parent=0
    #allocation4 [shape = 'u8[589824]{0}', space=vmem, size = 0x90000, scoped, tag = 'input window, operand 2, single buffered']
    #allocation5 [shape = 's32[1]{0}', space=sflag, size = 0x4, scoped, tag = 'scoped memory for pt_gru_encoder_forward.1']
    #allocation6 [shape = 'u8[786432]{0}', space=vmem, size = 0xc0000, scoped, tag = 'input window, operand 3, single buffered']
    #allocation7 [shape = 's32[1]{0}', space=sflag, size = 0x4, scoped, tag = 'scoped memory for pt_gru_encoder_forward.1']
    %13 = vsyncpa [#allocation5], 0
    %14 = vsyncpa [#allocation7], 0
    // Predicated region
    $region2: #{pt_gru_encoder_forward.1} parent=1 // pred_check
      _
    $region3: #{pt_gru_encoder_forward.1} parent=1 // pred_check_branch
      %16 = sbr.rel (0) target = $region5
    $region4: #{pt_gru_encoder_forward.1} parent=1 // pred_region
      _
    $region5: #{pt_gru_encoder_forward.1} parent=1 // pred_fallthru
      _
    // Predicated region
    $region6: #{pt_gru_encoder_forward.1} parent=1 // pred_check
      _
    $region7: #{pt_gru_encoder_forward.1} parent=1 // pred_check_branch
      %18 = sbr.rel (0) target = $region9
    $region8: #{pt_gru_encoder_forward.1} parent=1 // pred_region
      _
    $region9: #{pt_gru_encoder_forward.1} parent=1 // pred_fallthru
      _
    // Predicated region
    $region10: #{pt_gru_encoder_forward.1} parent=1 // pred_check
      _
    $region11: #{pt_gru_encoder_forward.1} parent=1 // pred_check_branch
      %20 = sbr.rel (0) target = $region13
    $region12: #{pt_gru_encoder_forward.1} parent=1 // pred_region
      %s22 = ssub.s32 18432, 18432
      %23 = vsyncadd [#allocation5], %s22
      %s24 = sshll.u32 [#allocation4], 4
      %s25 = int_to_ptr.vmem [resolvable:$true] %s24
      %30 = dma.hbm_to_vmem [thread:$0]  %s2, 18432, %s25, [#allocation5], 384, 384, 24
    $region13: #{pt_gru_encoder_forward.1} parent=1 // pred_fallthru
      _
    // Predicated region
    $region14: #{pt_gru_encoder_forward.1} parent=1 // pred_check
      _
    $region15: #{pt_gru_encoder_forward.1} parent=1 // pred_check_branch
      %32 = sbr.rel (0) target = $region17
    $region16: #{pt_gru_encoder_forward.1} parent=1 // pred_region
      %s34 = ssub.s32 24576, 24576
      %35 = vsyncadd [#allocation7], %s34
      %s36 = sshll.u32 [#allocation6], 4
      %s37 = int_to_ptr.vmem [resolvable:$true] %s36
      %42 = dma.hbm_to_vmem [thread:$0]  %s3, 24576, %s37, [#allocation7], 384, 384, 24
    $region17: #{pt_gru_encoder_forward.1} parent=1 // pred_fallthru
      _
    // Predicated region
    $region18: #{pt_gru_encoder_forward.1} parent=1 // pred_check
      _
    $region19: #{pt_gru_encoder_forward.1} parent=1 // pred_check_branch
      %44 = sbr.rel (0) target = $region21
    $region20: #{pt_gru_encoder_forward.1} parent=1 // pred_region
      _
    $region21: #{pt_gru_encoder_forward.1} parent=1 // pred_fallthru
      _
    // Predicated region
    $region22: #{pt_gru_encoder_forward.1} parent=1 // pred_check
      _
    $region23: #{pt_gru_encoder_forward.1} parent=1 // pred_check_branch
      %46 = sbr.rel (0) target = $region25
    $region24: #{pt_gru_encoder_forward.1} parent=1 // pred_region
      _
    $region25: #{pt_gru_encoder_forward.1} parent=1 // pred_fallthru
      _
    // Predicated region
    $region26: #{pt_gru_encoder_forward.1} parent=1 // pred_check
      _
    $region27: #{pt_gru_encoder_forward.1} parent=1 // pred_check_branch
      %48 = sbr.rel (0) target = $region29
    $region28: #{pt_gru_encoder_forward.1} parent=1 // pred_region
      %49 = dma.done [#allocation5], 18432
    $region29: #{pt_gru_encoder_forward.1} parent=1 // pred_fallthru
      _
    // Predicated region
    $region30: #{pt_gru_encoder_forward.1} parent=1 // pred_check
      _
    $region31: #{pt_gru_encoder_forward.1} parent=1 // pred_check_branch
      %51 = sbr.rel (0) target = $region33
    $region32: #{pt_gru_encoder_forward.1} parent=1 // pred_region
      %52 = dma.done [#allocation7], 24576
    $region33: #{pt_gru_encoder_forward.1} parent=1 // pred_fallthru
      _
    %p53 = scmp.eq.s32.totalorder 0, 0
    // Predicated region
    $region34: #{pt_gru_encoder_forward.1} parent=1 // pred_check
      %p54 = pneg %p53
    $region35: #{pt_gru_encoder_forward.1} parent=1 // pred_check_branch
      %56 = sbr.rel (%p54) target = $region37
    $region36: #{pt_gru_encoder_forward.1} parent=1 // pred_region
      %v57 = vld [vmem:[%s1] sm:$0xff]
      %v58 = vld [vmem:[%s1 + $0x8] sm:$0xff]
      %v59 = vld [vmem:[%s1 + $0x10] sm:$0xff]
      %v60 = vld [vmem:[%s1 + $0x18] sm:$0xff]
      %61 = vst [vmem:[%s7] sm:$0xff] %v57
      %62 = vst [vmem:[%s7 + $0x8] sm:$0xff] %v58
      %63 = vst [vmem:[%s7 + $0x10] sm:$0xff] %v59
      %64 = vst [vmem:[%s7 + $0x18] sm:$0xff] %v60
    $region37: #{pt_gru_encoder_forward.1} parent=1 // pred_fallthru
      _
    %v65 = vld [vmem:[%s5] sm:$0x1]
    %v67 = vlaneseq
    %v68 = vshrl.u32 %v67, 7
    %v69 = vsub.s32 0, %v68
    %v70 = vrot.slane %v65, %v69
    %v72 = vld [vmem:[%s7] sm:$0xff]
    %s73 = smul.u32 0, 3
    %s74 = smul.addr %s73, 8
    %s75 = scalar_lea.vmem %s0, %s74
    %v76 = vld [vmem:[%s75] sm:$0xff]
    %v77 = vld [vmem:[%s75 + $0x8] sm:$0xff]
    %v78 = vld [vmem:[%s75 + $0x10] sm:$0xff]
    %v79 = vld [vmem:[#allocation6] sm:$0xff]
    %v80 = vld [vmem:[#allocation6 + $0x8] sm:$0xff]
    %v81 = vld [vmem:[#allocation6 + $0x10] sm:$0xff]
    %v82 = vld [vmem:[#allocation6 + $0x18] sm:$0xff]
    %v83 = vld [vmem:[#allocation6 + $0x20] sm:$0xff]
    %v84 = vld [vmem:[#allocation6 + $0x28] sm:$0xff]
    %v85 = vld [vmem:[#allocation6 + $0x30] sm:$0xff]
    %v86 = vld [vmem:[#allocation6 + $0x38] sm:$0xff]
    %v87 = vld [vmem:[#allocation6 + $0x40] sm:$0xff]
    %v88 = vld [vmem:[#allocation6 + $0x48] sm:$0xff]
    %v89 = vld [vmem:[#allocation6 + $0x50] sm:$0xff]
    %v90 = vld [vmem:[#allocation6 + $0x58] sm:$0xff]
    %v91 = vld [vmem:[#allocation6 + $0x60] sm:$0xff]
    %v92 = vld [vmem:[#allocation6 + $0x68] sm:$0xff]
    %v93 = vld [vmem:[#allocation6 + $0x70] sm:$0xff]
    %v94 = vld [vmem:[#allocation6 + $0x78] sm:$0xff]
    %v95 = vld [vmem:[#allocation6 + $0x80] sm:$0xff]
    %v96 = vld [vmem:[#allocation6 + $0x88] sm:$0xff]
    %v97 = vld [vmem:[#allocation6 + $0x90] sm:$0xff]
    %v98 = vld [vmem:[#allocation6 + $0x98] sm:$0xff]
    %v99 = vld [vmem:[#allocation6 + $0xa0] sm:$0xff]
    %v100 = vld [vmem:[#allocation6 + $0xa8] sm:$0xff]
    %v101 = vld [vmem:[#allocation6 + $0xb0] sm:$0xff]
    %v102 = vld [vmem:[#allocation6 + $0xb8] sm:$0xff]
    %v103 = vld [vmem:[#allocation6 + $0xc0] sm:$0xff]
    %v104 = vld [vmem:[#allocation6 + $0xc8] sm:$0xff]
    %v105 = vld [vmem:[#allocation6 + $0xd0] sm:$0xff]
    %v106 = vld [vmem:[#allocation6 + $0xd8] sm:$0xff]
    %v107 = vld [vmem:[#allocation6 + $0xe0] sm:$0xff]
    %v108 = vld [vmem:[#allocation6 + $0xe8] sm:$0xff]
    %v109 = vld [vmem:[#allocation6 + $0xf0] sm:$0xff]
    %v110 = vld [vmem:[#allocation6 + $0xf8] sm:$0xff]
    %v111 = vld [vmem:[#allocation6 + $0x100] sm:$0xff]
    %v112 = vld [vmem:[#allocation6 + $0x108] sm:$0xff]
    %v113 = vld [vmem:[#allocation6 + $0x110] sm:$0xff]
    %v114 = vld [vmem:[#allocation6 + $0x118] sm:$0xff]
    %v115 = vld [vmem:[#allocation6 + $0x120] sm:$0xff]
    %v116 = vld [vmem:[#allocation6 + $0x128] sm:$0xff]
    %v117 = vld [vmem:[#allocation6 + $0x130] sm:$0xff]
    %v118 = vld [vmem:[#allocation6 + $0x138] sm:$0xff]
    %v119 = vld [vmem:[#allocation6 + $0x140] sm:$0xff]
    %v120 = vld [vmem:[#allocation6 + $0x148] sm:$0xff]
    %v121 = vld [vmem:[#allocation6 + $0x150] sm:$0xff]
    %v122 = vld [vmem:[#allocation6 + $0x158] sm:$0xff]
    %v123 = vld [vmem:[#allocation6 + $0x160] sm:$0xff]
    %v124 = vld [vmem:[#allocation6 + $0x168] sm:$0xff]
    %v125 = vld [vmem:[#allocation6 + $0x170] sm:$0xff]
    %v126 = vld [vmem:[#allocation6 + $0x178] sm:$0xff]
    %127 = vmatprep.subr.mxu0 %v80
    %128 = vmatpush1.msra.mxu0 %v79
    %129 = vmatprep.subr.mxu0 %v83
    %130 = vmatpush1.msra.mxu0 %v82
    %131 = vmatprep.subr.mxu0 %v86
    %132 = vmatpush1.msra.mxu0 %v85
    %133 = vmatprep.subr.mxu0 %v89
    %134 = vmatpush1.msra.mxu0 %v88
    %135 = vmatprep.subr.mxu0 %v92
    %136 = vmatpush1.msra.mxu0 %v91
    %137 = vmatprep.subr.mxu0 %v95
    %138 = vmatpush1.msra.mxu0 %v94
    %139 = vmatprep.subr.mxu0 %v98
    %140 = vmatpush1.msra.mxu0 %v97
    %141 = vmatprep.subr.mxu0 %v101
    %142 = vmatpush1.msra.mxu0 %v100
    %143 = vmatprep.subr.mxu0 %v104
    %144 = vmatpush1.msra.mxu0 %v103
    %145 = vmatprep.subr.mxu0 %v107
    %146 = vmatpush1.msra.mxu0 %v106
    %147 = vmatprep.subr.mxu0 %v110
    %148 = vmatpush1.msra.mxu0 %v109
    %149 = vmatprep.subr.mxu0 %v113
    %150 = vmatpush1.msra.mxu0 %v112
    %151 = vmatprep.subr.mxu0 %v116
    %152 = vmatpush1.msra.mxu0 %v115
    %153 = vmatprep.subr.mxu0 %v119
    %154 = vmatpush1.msra.mxu0 %v118
    %155 = vmatprep.subr.mxu0 %v122
    %156 = vmatpush1.msra.mxu0 %v121
    %157 = vmatprep.subr.mxu0 %v125
    %158 = vmatpush1.msra.mxu0 %v124
    %159 = vmatprep.subr.mxu0 0.0
    %160 = vmatpush1.msra.mxu0 0.0
    %161 = vmatprep.subr.mxu0 0.0
    %162 = vmatpush1.msra.mxu0 0.0
    %163 = vmatprep.subr.mxu0 0.0
    %164 = vmatpush1.msra.mxu0 0.0
    %165 = vmatprep.subr.mxu0 0.0
    %166 = vmatpush1.msra.mxu0 0.0
    %167 = vmatprep.subr.mxu0 0.0
    %168 = vmatpush1.msra.mxu0 0.0
    %169 = vmatprep.subr.mxu0 0.0
    %170 = vmatpush1.msra.mxu0 0.0
    %171 = vmatprep.subr.mxu0 0.0
    %172 = vmatpush1.msra.mxu0 0.0
    %173 = vmatprep.subr.mxu0 0.0
    %174 = vmatpush1.msra.mxu0 0.0
    %175 = vmatprep.subr.mxu0 0.0
    %176 = vmatpush1.msra.mxu0 0.0
    %177 = vmatprep.subr.mxu0 0.0
    %178 = vmatpush1.msra.mxu0 0.0
    %179 = vmatprep.subr.mxu0 0.0
    %180 = vmatpush1.msra.mxu0 0.0
    %181 = vmatprep.subr.mxu0 0.0
    %182 = vmatpush1.msra.mxu0 0.0
    %183 = vmatprep.subr.mxu0 0.0
    %184 = vmatpush1.msra.mxu0 0.0
    %185 = vmatprep.subr.mxu0 0.0
    %186 = vmatpush1.msra.mxu0 0.0
    %187 = vmatprep.subr.mxu0 0.0
    %188 = vmatpush1.msra.mxu0 0.0
    %189 = vmatprep.subr.mxu0 0.0
    %190 = vmatpush1.msra.mxu0 0.0
    %191 = vmatprep.mubr.f32.mxu0 0.0
    %192 = vmatmul.mubr.f32.gmra.mrb[0].mxu0 %v72
    %v193 = vpop.f32.mrb[0].mxu0
    %v194 = vadd.f32 0.0, %v193
    %v195 = vpop.f32.mrb[0].mxu0
    %v196 = vadd.f32 0.0, %v195
    %197 = vdwg.mxu0
    %198 = vmatprep.subr.mxu0 0.0
    %199 = vmatpush1.msra.mxu0 %v81
    %200 = vmatprep.subr.mxu0 0.0
    %201 = vmatpush1.msra.mxu0 %v84
    %202 = vmatprep.subr.mxu0 0.0
    %203 = vmatpush1.msra.mxu0 %v87
    %204 = vmatprep.subr.mxu0 0.0
    %205 = vmatpush1.msra.mxu0 %v90
    %206 = vmatprep.subr.mxu0 0.0
    %207 = vmatpush1.msra.mxu0 %v93
    %208 = vmatprep.subr.mxu0 0.0
    %209 = vmatpush1.msra.mxu0 %v96
    %210 = vmatprep.subr.mxu0 0.0
    %211 = vmatpush1.msra.mxu0 %v99
    %212 = vmatprep.subr.mxu0 0.0
    %213 = vmatpush1.msra.mxu0 %v102
    %214 = vmatprep.subr.mxu0 0.0
    %215 = vmatpush1.msra.mxu0 %v105
    %216 = vmatprep.subr.mxu0 0.0
    %217 = vmatpush1.msra.mxu0 %v108
    %218 = vmatprep.subr.mxu0 0.0
    %219 = vmatpush1.msra.mxu0 %v111
    %220 = vmatprep.subr.mxu0 0.0
    %221 = vmatpush1.msra.mxu0 %v114
    %222 = vmatprep.subr.mxu0 0.0
    %223 = vmatpush1.msra.mxu0 %v117
    %224 = vmatprep.subr.mxu0 0.0
    %225 = vmatpush1.msra.mxu0 %v120
    %226 = vmatprep.subr.mxu0 0.0
    %227 = vmatpush1.msra.mxu0 %v123
    %228 = vmatprep.subr.mxu0 0.0
    %229 = vmatpush1.msra.mxu0 %v126
    %230 = vmatprep.subr.mxu0 0.0
    %231 = vmatpush1.msra.mxu0 0.0
    %232 = vmatprep.subr.mxu0 0.0
    %233 = vmatpush1.msra.mxu0 0.0
    %234 = vmatprep.subr.mxu0 0.0
    %235 = vmatpush1.msra.mxu0 0.0
    %236 = vmatprep.subr.mxu0 0.0
    %237 = vmatpush1.msra.mxu0 0.0
    %238 = vmatprep.subr.mxu0 0.0
    %239 = vmatpush1.msra.mxu0 0.0
    %240 = vmatprep.subr.mxu0 0.0
    %241 = vmatpush1.msra.mxu0 0.0
    %242 = vmatprep.subr.mxu0 0.0
    %243 = vmatpush1.msra.mxu0 0.0
    %244 = vmatprep.subr.mxu0 0.0
    %245 = vmatpush1.msra.mxu0 0.0
    %246 = vmatprep.subr.mxu0 0.0
    %247 = vmatpush1.msra.mxu0 0.0
    %248 = vmatprep.subr.mxu0 0.0
    %249 = vmatpush1.msra.mxu0 0.0
    %250 = vmatprep.subr.mxu0 0.0
    %251 = vmatpush1.msra.mxu0 0.0
    %252 = vmatprep.subr.mxu0 0.0
    %253 = vmatpush1.msra.mxu0 0.0
    %254 = vmatprep.subr.mxu0 0.0
    %255 = vmatpush1.msra.mxu0 0.0
    %256 = vmatprep.subr.mxu0 0.0
    %257 = vmatpush1.msra.mxu0 0.0
    %258 = vmatprep.subr.mxu0 0.0
    %259 = vmatpush1.msra.mxu0 0.0
    %260 = vmatprep.subr.mxu0 0.0
    %261 = vmatpush1.msra.mxu0 0.0
    %262 = vmatprep.mubr.f32.mxu0 0.0
    %263 = vmatmul.mubr.f32.gmra.mrb[0].mxu0 %v72
    %v264 = vpop.f32.mrb[0].mxu0
    %v265 = vadd.f32 0.0, %v264
    %v266 = vpop.f32.mrb[0].mxu0
    %267 = vdwg.mxu0
    %v268 = vadd.f32 %v76, %v194
    %v269 = vxor.u32 %v268, 2147483648
    %v270 = vmul.f32 %v269, 1.442695
    %v271 = vpow.pop %v270
    %v272 = vadd.f32 %v271, 1.0
    %v273 = vrcp.pop %v272
    %v274 = vmul.f32 1.0, %v273
    %v275 = vadd.f32 %v77, %v196
    %v276 = vxor.u32 %v275, 2147483648
    %v277 = vmul.f32 %v276, 1.442695
    %v278 = vpow.pop %v277
    %v279 = vadd.f32 %v278, 1.0
    %v280 = vrcp.pop %v279
    %v281 = vmul.f32 1.0, %v280
    %v282 = vadd.f32 %v265, %v70
    %v283 = vmul.f32 %v274, %v282
    %v284 = vadd.f32 %v78, %v283
    %v285 = vtanh.pop %v284
    %v286 = vsub.f32 %v72, %v285
    %v287 = vmul.f32 %v281, %v286
    %v288 = vadd.f32 %v285, %v287
    %289 = vst [vmem:[#allocation3] sm:$0xff] %v288
    %s290 = smul.u32 1, 3
    %s291 = smul.addr %s290, 8
    %s292 = scalar_lea.vmem %s0, %s291
    %v293 = vld [vmem:[%s292] sm:$0xff]
    %v294 = vld [vmem:[%s292 + $0x8] sm:$0xff]
    %v295 = vld [vmem:[%s292 + $0x10] sm:$0xff]
    %v296 = vld [vmem:[#allocation6] sm:$0xff]
    %v297 = vld [vmem:[#allocation6 + $0x8] sm:$0xff]
    %v298 = vld [vmem:[#allocation6 + $0x10] sm:$0xff]
    %v299 = vld [vmem:[#allocation6 + $0x18] sm:$0xff]
    %v300 = vld [vmem:[#allocation6 + $0x20] sm:$0xff]
    %v301 = vld [vmem:[#allocation6 + $0x28] sm:$0xff]
    %v302 = vld [vmem:[#allocation6 + $0x30] sm:$0xff]
    %v303 = vld [vmem:[#allocation6 + $0x38] sm:$0xff]
    %v304 = vld [vmem:[#allocation6 + $0x40] sm:$0xff]
    %v305 = vld [vmem:[#allocation6 + $0x48] sm:$0xff]
    %v306 = vld [vmem:[#allocation6 + $0x50] sm:$0xff]
    %v307 = vld [vmem:[#allocation6 + $0x58] sm:$0xff]
    %v308 = vld [vmem:[#allocation6 + $0x60] sm:$0xff]
    %v309 = vld [vmem:[#allocation6 + $0x68] sm:$0xff]
    %v310 = vld [vmem:[#allocation6 + $0x70] sm:$0xff]
    %v311 = vld [vmem:[#allocation6 + $0x78] sm:$0xff]
    %v312 = vld [vmem:[#allocation6 + $0x80] sm:$0xff]
    %v313 = vld [vmem:[#allocation6 + $0x88] sm:$0xff]
    %v314 = vld [vmem:[#allocation6 + $0x90] sm:$0xff]
    %v315 = vld [vmem:[#allocation6 + $0x98] sm:$0xff]
    %v316 = vld [vmem:[#allocation6 + $0xa0] sm:$0xff]
    %v317 = vld [vmem:[#allocation6 + $0xa8] sm:$0xff]
    %v318 = vld [vmem:[#allocation6 + $0xb0] sm:$0xff]
    %v319 = vld [vmem:[#allocation6 + $0xb8] sm:$0xff]
    %v320 = vld [vmem:[#allocation6 + $0xc0] sm:$0xff]
    %v321 = vld [vmem:[#allocation6 + $0xc8] sm:$0xff]
    %v322 = vld [vmem:[#allocation6 + $0xd0] sm:$0xff]
    %v323 = vld [vmem:[#allocation6 + $0xd8] sm:$0xff]
    %v324 = vld [vmem:[#allocation6 + $0xe0] sm:$0xff]
    %v325 = vld [vmem:[#allocation6 + $0xe8] sm:$0xff]
    %v326 = vld [vmem:[#allocation6 + $0xf0] sm:$0xff]
    %v327 = vld [vmem:[#allocation6 + $0xf8] sm:$0xff]
    %v328 = vld [vmem:[#allocation6 + $0x100] sm:$0xff]
    %v329 = vld [vmem:[#allocation6 + $0x108] sm:$0xff]
    %v330 = vld [vmem:[#allocation6 + $0x110] sm:$0xff]
    %v331 = vld [vmem:[#allocation6 + $0x118] sm:$0xff]
    %v332 = vld [vmem:[#allocation6 + $0x120] sm:$0xff]
    %v333 = vld [vmem:[#allocation6 + $0x128] sm:$0xff]
    %v334 = vld [vmem:[#allocation6 + $0x130] sm:$0xff]
    %v335 = vld [vmem:[#allocation6 + $0x138] sm:$0xff]
    %v336 = vld [vmem:[#allocation6 + $0x140] sm:$0xff]
    %v337 = vld [vmem:[#allocation6 + $0x148] sm:$0xff]
    %v338 = vld [vmem:[#allocation6 + $0x150] sm:$0xff]
    %v339 = vld [vmem:[#allocation6 + $0x158] sm:$0xff]
    %v340 = vld [vmem:[#allocation6 + $0x160] sm:$0xff]
    %v341 = vld [vmem:[#allocation6 + $0x168] sm:$0xff]
    %v342 = vld [vmem:[#allocation6 + $0x170] sm:$0xff]
    %v343 = vld [vmem:[#allocation6 + $0x178] sm:$0xff]
    %344 = vmatprep.subr.mxu0 %v297
    %345 = vmatpush1.msra.mxu0 %v296
    %346 = vmatprep.subr.mxu0 %v300
    %347 = vmatpush1.msra.mxu0 %v299
    %348 = vmatprep.subr.mxu0 %v303
    %349 = vmatpush1.msra.mxu0 %v302
    %350 = vmatprep.subr.mxu0 %v306
    %351 = vmatpush1.msra.mxu0 %v305
    %352 = vmatprep.subr.mxu0 %v309
    %353 = vmatpush1.msra.mxu0 %v308
    %354 = vmatprep.subr.mxu0 %v312
    %355 = vmatpush1.msra.mxu0 %v311
    %356 = vmatprep.subr.mxu0 %v315
    %357 = vmatpush1.msra.mxu0 %v314
    %358 = vmatprep.subr.mxu0 %v318
    %359 = vmatpush1.msra.mxu0 %v317
    %360 = vmatprep.subr.mxu0 %v321
    %361 = vmatpush1.msra.mxu0 %v320
    %362 = vmatprep.subr.mxu0 %v324
    %363 = vmatpush1.msra.mxu0 %v323
    %364 = vmatprep.subr.mxu0 %v327
    %365 = vmatpush1.msra.mxu0 %v326
    %366 = vmatprep.subr.mxu0 %v330
    %367 = vmatpush1.msra.mxu0 %v329
    %368 = vmatprep.subr.mxu0 %v333
    %369 = vmatpush1.msra.mxu0 %v332
    %370 = vmatprep.subr.mxu0 %v336
    %371 = vmatpush1.msra.mxu0 %v335
    %372 = vmatprep.subr.mxu0 %v339
    %373 = vmatpush1.msra.mxu0 %v338
    %374 = vmatprep.subr.mxu0 %v342
    %375 = vmatpush1.msra.mxu0 %v341
    %376 = vmatprep.subr.mxu0 0.0
    %377 = vmatpush1.msra.mxu0 0.0
    %378 = vmatprep.subr.mxu0 0.0
    %379 = vmatpush1.msra.mxu0 0.0
    %380 = vmatprep.subr.mxu0 0.0
    %381 = vmatpush1.msra.mxu0 0.0
    %382 = vmatprep.subr.mxu0 0.0
    %383 = vmatpush1.msra.mxu0 0.0
    %384 = vmatprep.subr.mxu0 0.0
    %385 = vmatpush1.msra.mxu0 0.0
    %386 = vmatprep.subr.mxu0 0.0
    %387 = vmatpush1.msra.mxu0 0.0
    %388 = vmatprep.subr.mxu0 0.0
    %389 = vmatpush1.msra.mxu0 0.0
    %390 = vmatprep.subr.mxu0 0.0
    %391 = vmatpush1.msra.mxu0 0.0
    %392 = vmatprep.subr.mxu0 0.0
    %393 = vmatpush1.msra.mxu0 0.0
    %394 = vmatprep.subr.mxu0 0.0
    %395 = vmatpush1.msra.mxu0 0.0
    %396 = vmatprep.subr.mxu0 0.0
    %397 = vmatpush1.msra.mxu0 0.0
    %398 = vmatprep.subr.mxu0 0.0
    %399 = vmatpush1.msra.mxu0 0.0
    %400 = vmatprep.subr.mxu0 0.0
    %401 = vmatpush1.msra.mxu0 0.0
    %402 = vmatprep.subr.mxu0 0.0
    %403 = vmatpush1.msra.mxu0 0.0
    %404 = vmatprep.subr.mxu0 0.0
    %405 = vmatpush1.msra.mxu0 0.0
    %406 = vmatprep.subr.mxu0 0.0
    %407 = vmatpush1.msra.mxu0 0.0
    %408 = vmatprep.mubr.f32.mxu0 0.0
    %409 = vmatmul.mubr.f32.gmra.mrb[0].mxu0 %v288
    %v410 = vpop.f32.mrb[0].mxu0
    %v411 = vadd.f32 0.0, %v410
    %v412 = vpop.f32.mrb[0].mxu0
    %v413 = vadd.f32 0.0, %v412
    %414 = vdwg.mxu0
    %415 = vmatprep.subr.mxu0 0.0
    %416 = vmatpush1.msra.mxu0 %v298
    %417 = vmatprep.subr.mxu0 0.0
    %418 = vmatpush1.msra.mxu0 %v301
    %419 = vmatprep.subr.mxu0 0.0
    %420 = vmatpush1.msra.mxu0 %v304
    %421 = vmatprep.subr.mxu0 0.0
    %422 = vmatpush1.msra.mxu0 %v307
    %423 = vmatprep.subr.mxu0 0.0
    %424 = vmatpush1.msra.mxu0 %v310
    %425 = vmatprep.subr.mxu0 0.0
    %426 = vmatpush1.msra.mxu0 %v313
    %427 = vmatprep.subr.mxu0 0.0
    %428 = vmatpush1.msra.mxu0 %v316
    %429 = vmatprep.subr.mxu0 0.0
    %430 = vmatpush1.msra.mxu0 %v319
    %431 = vmatprep.subr.mxu0 0.0
    %432 = vmatpush1.msra.mxu0 %v322
    %433 = vmatprep.subr.mxu0 0.0
    %434 = vmatpush1.msra.mxu0 %v325
    %435 = vmatprep.subr.mxu0 0.0
    %436 = vmatpush1.msra.mxu0 %v328
    %437 = vmatprep.subr.mxu0 0.0
    %438 = vmatpush1.msra.mxu0 %v331
    %439 = vmatprep.subr.mxu0 0.0
    %440 = vmatpush1.msra.mxu0 %v334
    %441 = vmatprep.subr.mxu0 0.0
    %442 = vmatpush1.msra.mxu0 %v337
    %443 = vmatprep.subr.mxu0 0.0
    %444 = vmatpush1.msra.mxu0 %v340
    %445 = vmatprep.subr.mxu0 0.0
    %446 = vmatpush1.msra.mxu0 %v343
    %447 = vmatprep.subr.mxu0 0.0
    %448 = vmatpush1.msra.mxu0 0.0
    %449 = vmatprep.subr.mxu0 0.0
    %450 = vmatpush1.msra.mxu0 0.0
    %451 = vmatprep.subr.mxu0 0.0
    %452 = vmatpush1.msra.mxu0 0.0
    %453 = vmatprep.subr.mxu0 0.0
    %454 = vmatpush1.msra.mxu0 0.0
    %455 = vmatprep.subr.mxu0 0.0
    %456 = vmatpush1.msra.mxu0 0.0
    %457 = vmatprep.subr.mxu0 0.0
    %458 = vmatpush1.msra.mxu0 0.0
    %459 = vmatprep.subr.mxu0 0.0
    %460 = vmatpush1.msra.mxu0 0.0
    %461 = vmatprep.subr.mxu0 0.0
    %462 = vmatpush1.msra.mxu0 0.0
    %463 = vmatprep.subr.mxu0 0.0
    %464 = vmatpush1.msra.mxu0 0.0
    %465 = vmatprep.subr.mxu0 0.0
    %466 = vmatpush1.msra.mxu0 0.0
    %467 = vmatprep.subr.mxu0 0.0
    %468 = vmatpush1.msra.mxu0 0.0
    %469 = vmatprep.subr.mxu0 0.0
    %470 = vmatpush1.msra.mxu0 0.0
    %471 = vmatprep.subr.mxu0 0.0
    %472 = vmatpush1.msra.mxu0 0.0
    %473 = vmatprep.subr.mxu0 0.0
    %474 = vmatpush1.msra.mxu0 0.0
    %475 = vmatprep.subr.mxu0 0.0
    %476 = vmatpush1.msra.mxu0 0.0
    %477 = vmatprep.subr.mxu0 0.0
    %478 = vmatpush1.msra.mxu0 0.0
    %479 = vmatprep.mubr.f32.mxu0 0.0
    %480 = vmatmul.mubr.f32.gmra.mrb[0].mxu0 %v288
    %v481 = vpop.f32.mrb[0].mxu0
    %v482 = vadd.f32 0.0, %v481
    %v483 = vpop.f32.mrb[0].mxu0
    %484 = vdwg.mxu0
    %v485 = vadd.f32 %v293, %v411
    %v486 = vxor.u32 %v485, 2147483648
    %v487 = vmul.f32 %v486, 1.442695
    %v488 = vpow.pop %v487
    %v489 = vadd.f32 %v488, 1.0
    %v490 = vrcp.pop %v489
    %v491 = vmul.f32 1.0, %v490
    %v492 = vadd.f32 %v294, %v413
    %v493 = vxor.u32 %v492, 2147483648
    %v494 = vmul.f32 %v493, 1.442695
    %v495 = vpow.pop %v494
    %v496 = vadd.f32 %v495, 1.0
    %v497 = vrcp.pop %v496
    %v498 = vmul.f32 1.0, %v497
    %v499 = vadd.f32 %v482, %v70
    %v500 = vmul.f32 %v491, %v499
    %v501 = vadd.f32 %v295, %v500
    %v502 = vtanh.pop %v501
    %v503 = vsub.f32 %v288, %v502
    %v504 = vmul.f32 %v498, %v503
    %v505 = vadd.f32 %v502, %v504
    %s506 = scalar_lea.vmem [#allocation3], 8
    %507 = vst [vmem:[%s506] sm:$0xff] %v505
    %s508 = smul.u32 2, 3
    %s509 = smul.addr %s508, 8
    %s510 = scalar_lea.vmem %s0, %s509
    %v511 = vld [vmem:[%s510] sm:$0xff]
    %v512 = vld [vmem:[%s510 + $0x8] sm:$0xff]
    %v513 = vld [vmem:[%s510 + $0x10] sm:$0xff]
    %v514 = vld [vmem:[#allocation6] sm:$0xff]
    %v515 = vld [vmem:[#allocation6 + $0x8] sm:$0xff]
    %v516 = vld [vmem:[#allocation6 + $0x10] sm:$0xff]
    %v517 = vld [vmem:[#allocation6 + $0x18] sm:$0xff]
    %v518 = vld [vmem:[#allocation6 + $0x20] sm:$0xff]
    %v519 = vld [vmem:[#allocation6 + $0x28] sm:$0xff]
    %v520 = vld [vmem:[#allocation6 + $0x30] sm:$0xff]
    %v521 = vld [vmem:[#allocation6 + $0x38] sm:$0xff]
    %v522 = vld [vmem:[#allocation6 + $0x40] sm:$0xff]
    %v523 = vld [vmem:[#allocation6 + $0x48] sm:$0xff]
    %v524 = vld [vmem:[#allocation6 + $0x50] sm:$0xff]
    %v525 = vld [vmem:[#allocation6 + $0x58] sm:$0xff]
    %v526 = vld [vmem:[#allocation6 + $0x60] sm:$0xff]
    %v527 = vld [vmem:[#allocation6 + $0x68] sm:$0xff]
    %v528 = vld [vmem:[#allocation6 + $0x70] sm:$0xff]
    %v529 = vld [vmem:[#allocation6 + $0x78] sm:$0xff]
    %v530 = vld [vmem:[#allocation6 + $0x80] sm:$0xff]
    %v531 = vld [vmem:[#allocation6 + $0x88] sm:$0xff]
    %v532 = vld [vmem:[#allocation6 + $0x90] sm:$0xff]
    %v533 = vld [vmem:[#allocation6 + $0x98] sm:$0xff]
    %v534 = vld [vmem:[#allocation6 + $0xa0] sm:$0xff]
    %v535 = vld [vmem:[#allocation6 + $0xa8] sm:$0xff]
    %v536 = vld [vmem:[#allocation6 + $0xb0] sm:$0xff]
    %v537 = vld [vmem:[#allocation6 + $0xb8] sm:$0xff]
    %v538 = vld [vmem:[#allocation6 + $0xc0] sm:$0xff]
    %v539 = vld [vmem:[#allocation6 + $0xc8] sm:$0xff]
    %v540 = vld [vmem:[#allocation6 + $0xd0] sm:$0xff]
    %v541 = vld [vmem:[#allocation6 + $0xd8] sm:$0xff]
    %v542 = vld [vmem:[#allocation6 + $0xe0] sm:$0xff]
    %v543 = vld [vmem:[#allocation6 + $0xe8] sm:$0xff]
    %v544 = vld [vmem:[#allocation6 + $0xf0] sm:$0xff]
    %v545 = vld [vmem:[#allocation6 + $0xf8] sm:$0xff]
    %v546 = vld [vmem:[#allocation6 + $0x100] sm:$0xff]
    %v547 = vld [vmem:[#allocation6 + $0x108] sm:$0xff]
    %v548 = vld [vmem:[#allocation6 + $0x110] sm:$0xff]
    %v549 = vld [vmem:[#allocation6 + $0x118] sm:$0xff]
    %v550 = vld [vmem:[#allocation6 + $0x120] sm:$0xff]
    %v551 = vld [vmem:[#allocation6 + $0x128] sm:$0xff]
    %v552 = vld [vmem:[#allocation6 + $0x130] sm:$0xff]
    %v553 = vld [vmem:[#allocation6 + $0x138] sm:$0xff]
    %v554 = vld [vmem:[#allocation6 + $0x140] sm:$0xff]
    %v555 = vld [vmem:[#allocation6 + $0x148] sm:$0xff]
    %v556 = vld [vmem:[#allocation6 + $0x150] sm:$0xff]
    %v557 = vld [vmem:[#allocation6 + $0x158] sm:$0xff]
    %v558 = vld [vmem:[#allocation6 + $0x160] sm:$0xff]
    %v559 = vld [vmem:[#allocation6 + $0x168] sm:$0xff]
    %v560 = vld [vmem:[#allocation6 + $0x170] sm:$0xff]
    %v561 = vld [vmem:[#allocation6 + $0x178] sm:$0xff]
    %562 = vmatprep.subr.mxu0 %v515
    %563 = vmatpush1.msra.mxu0 %v514
    %564 = vmatprep.subr.mxu0 %v518
    %565 = vmatpush1.msra.mxu0 %v517
    %566 = vmatprep.subr.mxu0 %v521
    %567 = vmatpush1.msra.mxu0 %v520
    %568 = vmatprep.subr.mxu0 %v524
    %569 = vmatpush1.msra.mxu0 %v523
    %570 = vmatprep.subr.mxu0 %v527
    %571 = vmatpush1.msra.mxu0 %v526
    %572 = vmatprep.subr.mxu0 %v530
    %573 = vmatpush1.msra.mxu0 %v529
    %574 = vmatprep.subr.mxu0 %v533
    %575 = vmatpush1.msra.mxu0 %v532
    %576 = vmatprep.subr.mxu0 %v536
    %577 = vmatpush1.msra.mxu0 %v535
    %578 = vmatprep.subr.mxu0 %v539
    %579 = vmatpush1.msra.mxu0 %v538
    %580 = vmatprep.subr.mxu0 %v542
    %581 = vmatpush1.msra.mxu0 %v541
    %582 = vmatprep.subr.mxu0 %v545
    %583 = vmatpush1.msra.mxu0 %v544
    %584 = vmatprep.subr.mxu0 %v548
    %585 = vmatpush1.msra.mxu0 %v547
    %586 = vmatprep.subr.mxu0 %v551
    %587 = vmatpush1.msra.mxu0 %v550
    %588 = vmatprep.subr.mxu0 %v554
    %589 = vmatpush1.msra.mxu0 %v553
    %590 = vmatprep.subr.mxu0 %v557
    %591 = vmatpush1.msra.mxu0 %v556
    %592 = vmatprep.subr.mxu0 %v560
    %593 = vmatpush1.msra.mxu0 %v559
    %594 = vmatprep.subr.mxu0 0.0
    %595 = vmatpush1.msra.mxu0 0.0
    %596 = vmatprep.subr.mxu0 0.0
    %597 = vmatpush1.msra.mxu0 0.0
    %598 = vmatprep.subr.mxu0 0.0
    %599 = vmatpush1.msra.mxu0 0.0
    %600 = vmatprep.subr.mxu0 0.0
    %601 = vmatpush1.msra.mxu0 0.0
    %602 = vmatprep.subr.mxu0 0.0
    %603 = vmatpush1.msra.mxu0 0.0
    %604 = vmatprep.subr.mxu0 0.0
    %605 = vmatpush1.msra.mxu0 0.0
    %606 = vmatprep.subr.mxu0 0.0
    %607 = vmatpush1.msra.mxu0 0.0
    %608 = vmatprep.subr.mxu0 0.0
    %609 = vmatpush1.msra.mxu0 0.0
    %610 = vmatprep.subr.mxu0 0.0
    %611 = vmatpush1.msra.mxu0 0.0
    %612 = vmatprep.subr.mxu0 0.0
    %613 = vmatpush1.msra.mxu0 0.0
    %614 = vmatprep.subr.mxu0 0.0
    %615 = vmatpush1.msra.mxu0 0.0
    %616 = vmatprep.subr.mxu0 0.0
    %617 = vmatpush1.msra.mxu0 0.0
    %618 = vmatprep.subr.mxu0 0.0
    %619 = vmatpush1.msra.mxu0 0.0
    %620 = vmatprep.subr.mxu0 0.0
    %621 = vmatpush1.msra.mxu0 0.0
    %622 = vmatprep.subr.mxu0 0.0
    %623 = vmatpush1.msra.mxu0 0.0
    %624 = vmatprep.subr.mxu0 0.0
    %625 = vmatpush1.msra.mxu0 0.0
    %626 = vmatprep.mubr.f32.mxu0 0.0
    %627 = vmatmul.mubr.f32.gmra.mrb[0].mxu0 %v505
    %v628 = vpop.f32.mrb[0].mxu0
    %v629 = vadd.f32 0.0, %v628
    %v630 = vpop.f32.mrb[0].mxu0
    %v631 = vadd.f32 0.0, %v630
    %632 = vdwg.mxu0
    %633 = vmatprep.subr.mxu0 0.0
    %634 = vmatpush1.msra.mxu0 %v516
    %635 = vmatprep.subr.mxu0 0.0
    %636 = vmatpush1.msra.mxu0 %v519
    %637 = vmatprep.subr.mxu0 0.0
    %638 = vmatpush1.msra.mxu0 %v522
    %639 = vmatprep.subr.mxu0 0.0
    %640 = vmatpush1.msra.mxu0 %v525
    %641 = vmatprep.subr.mxu0 0.0
    %642 = vmatpush1.msra.mxu0 %v528
    %643 = vmatprep.subr.mxu0 0.0
    %644 = vmatpush1.msra.mxu0 %v531
    %645 = vmatprep.subr.mxu0 0.0
    %646 = vmatpush1.msra.mxu0 %v534
    %647 = vmatprep.subr.mxu0 0.0
    %648 = vmatpush1.msra.mxu0 %v537
    %649 = vmatprep.subr.mxu0 0.0
    %650 = vmatpush1.msra.mxu0 %v540
    %651 = vmatprep.subr.mxu0 0.0
    %652 = vmatpush1.msra.mxu0 %v543
    %653 = vmatprep.subr.mxu0 0.0
    %654 = vmatpush1.msra.mxu0 %v546
    %655 = vmatprep.subr.mxu0 0.0
    %656 = vmatpush1.msra.mxu0 %v549
    %657 = vmatprep.subr.mxu0 0.0
    %658 = vmatpush1.msra.mxu0 %v552
    %659 = vmatprep.subr.mxu0 0.0
    %660 = vmatpush1.msra.mxu0 %v555
    %661 = vmatprep.subr.mxu0 0.0
    %662 = vmatpush1.msra.mxu0 %v558
    %663 = vmatprep.subr.mxu0 0.0
    %664 = vmatpush1.msra.mxu0 %v561
    %665 = vmatprep.subr.mxu0 0.0
    %666 = vmatpush1.msra.mxu0 0.0
    %667 = vmatprep.subr.mxu0 0.0
    %668 = vmatpush1.msra.mxu0 0.0
    %669 = vmatprep.subr.mxu0 0.0
    %670 = vmatpush1.msra.mxu0 0.0
    %671 = vmatprep.subr.mxu0 0.0
    %672 = vmatpush1.msra.mxu0 0.0
    %673 = vmatprep.subr.mxu0 0.0
    %674 = vmatpush1.msra.mxu0 0.0
    %675 = vmatprep.subr.mxu0 0.0
    %676 = vmatpush1.msra.mxu0 0.0
    %677 = vmatprep.subr.mxu0 0.0
    %678 = vmatpush1.msra.mxu0 0.0
    %679 = vmatprep.subr.mxu0 0.0
    %680 = vmatpush1.msra.mxu0 0.0
    %681 = vmatprep.subr.mxu0 0.0
    %682 = vmatpush1.msra.mxu0 0.0
    %683 = vmatprep.subr.mxu0 0.0
    %684 = vmatpush1.msra.mxu0 0.0
    %685 = vmatprep.subr.mxu0 0.0
    %686 = vmatpush1.msra.mxu0 0.0
    %687 = vmatprep.subr.mxu0 0.0
    %688 = vmatpush1.msra.mxu0 0.0
    %689 = vmatprep.subr.mxu0 0.0
    %690 = vmatpush1.msra.mxu0 0.0
    %691 = vmatprep.subr.mxu0 0.0
    %692 = vmatpush1.msra.mxu0 0.0
    %693 = vmatprep.subr.mxu0 0.0
    %694 = vmatpush1.msra.mxu0 0.0
    %695 = vmatprep.subr.mxu0 0.0
    %696 = vmatpush1.msra.mxu0 0.0
    %697 = vmatprep.mubr.f32.mxu0 0.0
    %698 = vmatmul.mubr.f32.gmra.mrb[0].mxu0 %v505
    %v699 = vpop.f32.mrb[0].mxu0
    %v700 = vadd.f32 0.0, %v699
    %v701 = vpop.f32.mrb[0].mxu0
    %702 = vdwg.mxu0
    %v703 = vadd.f32 %v511, %v629
    %v704 = vxor.u32 %v703, 2147483648
    %v705 = vmul.f32 %v704, 1.442695
    %v706 = vpow.pop %v705
    %v707 = vadd.f32 %v706, 1.0
    %v708 = vrcp.pop %v707
    %v709 = vmul.f32 1.0, %v708
    %v710 = vadd.f32 %v512, %v631
    %v711 = vxor.u32 %v710, 2147483648
    %v712 = vmul.f32 %v711, 1.442695
    %v713 = vpow.pop %v712
    %v714 = vadd.f32 %v713, 1.0
    %v715 = vrcp.pop %v714
    %v716 = vmul.f32 1.0, %v715
    %v717 = vadd.f32 %v700, %v70
    %v718 = vmul.f32 %v709, %v717
    %v719 = vadd.f32 %v513, %v718
    %v720 = vtanh.pop %v719
    %v721 = vsub.f32 %v505, %v720
    %v722 = vmul.f32 %v716, %v721
    %v723 = vadd.f32 %v720, %v722
    %s724 = scalar_lea.vmem [#allocation3], 16
    %725 = vst [vmem:[%s724] sm:$0xff] %v723
    %s726 = smul.u32 3, 3
    %s727 = smul.addr %s726, 8
    %s728 = scalar_lea.vmem %s0, %s727
    %v729 = vld [vmem:[%s728] sm:$0xff]
    %v730 = vld [vmem:[%s728 + $0x8] sm:$0xff]
    %v731 = vld [vmem:[%s728 + $0x10] sm:$0xff]
    %v732 = vld [vmem:[#allocation6] sm:$0xff]
    %v733 = vld [vmem:[#allocation6 + $0x8] sm:$0xff]
    %v734 = vld [vmem:[#allocation6 + $0x10] sm:$0xff]
    %v735 = vld [vmem:[#allocation6 + $0x18] sm:$0xff]
    %v736 = vld [vmem:[#allocation6 + $0x20] sm:$0xff]
    %v737 = vld [vmem:[#allocation6 + $0x28] sm:$0xff]
    %v738 = vld [vmem:[#allocation6 + $0x30] sm:$0xff]
    %v739 = vld [vmem:[#allocation6 + $0x38] sm:$0xff]
    %v740 = vld [vmem:[#allocation6 + $0x40] sm:$0xff]
    %v741 = vld [vmem:[#allocation6 + $0x48] sm:$0xff]
    %v742 = vld [vmem:[#allocation6 + $0x50] sm:$0xff]
    %v743 = vld [vmem:[#allocation6 + $0x58] sm:$0xff]
    %v744 = vld [vmem:[#allocation6 + $0x60] sm:$0xff]
    %v745 = vld [vmem:[#allocation6 + $0x68] sm:$0xff]
    %v746 = vld [vmem:[#allocation6 + $0x70] sm:$0xff]
    %v747 = vld [vmem:[#allocation6 + $0x78] sm:$0xff]
    %v748 = vld [vmem:[#allocation6 + $0x80] sm:$0xff]
    %v749 = vld [vmem:[#allocation6 + $0x88] sm:$0xff]
    %v750 = vld [vmem:[#allocation6 + $0x90] sm:$0xff]
    %v751 = vld [vmem:[#allocation6 + $0x98] sm:$0xff]
    %v752 = vld [vmem:[#allocation6 + $0xa0] sm:$0xff]
    %v753 = vld [vmem:[#allocation6 + $0xa8] sm:$0xff]
    %v754 = vld [vmem:[#allocation6 + $0xb0] sm:$0xff]
    %v755 = vld [vmem:[#allocation6 + $0xb8] sm:$0xff]
    %v756 = vld [vmem:[#allocation6 + $0xc0] sm:$0xff]
    %v757 = vld [vmem:[#allocation6 + $0xc8] sm:$0xff]
    %v758 = vld [vmem:[#allocation6 + $0xd0] sm:$0xff]
    %v759 = vld [vmem:[#allocation6 + $0xd8] sm:$0xff]
    %v760 = vld [vmem:[#allocation6 + $0xe0] sm:$0xff]
    %v761 = vld [vmem:[#allocation6 + $0xe8] sm:$0xff]
    %v762 = vld [vmem:[#allocation6 + $0xf0] sm:$0xff]
    %v763 = vld [vmem:[#allocation6 + $0xf8] sm:$0xff]
    %v764 = vld [vmem:[#allocation6 + $0x100] sm:$0xff]
    %v765 = vld [vmem:[#allocation6 + $0x108] sm:$0xff]
    %v766 = vld [vmem:[#allocation6 + $0x110] sm:$0xff]
    %v767 = vld [vmem:[#allocation6 + $0x118] sm:$0xff]
    %v768 = vld [vmem:[#allocation6 + $0x120] sm:$0xff]
    %v769 = vld [vmem:[#allocation6 + $0x128] sm:$0xff]
    %v770 = vld [vmem:[#allocation6 + $0x130] sm:$0xff]
    %v771 = vld [vmem:[#allocation6 + $0x138] sm:$0xff]
    %v772 = vld [vmem:[#allocation6 + $0x140] sm:$0xff]
    %v773 = vld [vmem:[#allocation6 + $0x148] sm:$0xff]
    %v774 = vld [vmem:[#allocation6 + $0x150] sm:$0xff]
    %v775 = vld [vmem:[#allocation6 + $0x158] sm:$0xff]
    %v776 = vld [vmem:[#allocation6 + $0x160] sm:$0xff]
    %v777 = vld [vmem:[#allocation6 + $0x168] sm:$0xff]
    %v778 = vld [vmem:[#allocation6 + $0x170] sm:$0xff]
    %v779 = vld [vmem:[#allocation6 + $0x178] sm:$0xff]
    %780 = vmatprep.subr.mxu0 %v733
    %781 = vmatpush1.msra.mxu0 %v732
    %782 = vmatprep.subr.mxu0 %v736
    %783 = vmatpush1.msra.mxu0 %v735
    %784 = vmatprep.subr.mxu0 %v739
    %785 = vmatpush1.msra.mxu0 %v738
    %786 = vmatprep.subr.mxu0 %v742
    %787 = vmatpush1.msra.mxu0 %v741
    %788 = vmatprep.subr.mxu0 %v745
    %789 = vmatpush1.msra.mxu0 %v744
    %790 = vmatprep.subr.mxu0 %v748
    %791 = vmatpush1.msra.mxu0 %v747
    %792 = vmatprep.subr.mxu0 %v751
    %793 = vmatpush1.msra.mxu0 %v750
    %794 = vmatprep.subr.mxu0 %v754
    %795 = vmatpush1.msra.mxu0 %v753
    %796 = vmatprep.subr.mxu0 %v757
    %797 = vmatpush1.msra.mxu0 %v756
    %798 = vmatprep.subr.mxu0 %v760
    %799 = vmatpush1.msra.mxu0 %v759
    %800 = vmatprep.subr.mxu0 %v763
    %801 = vmatpush1.msra.mxu0 %v762
    %802 = vmatprep.subr.mxu0 %v766
    %803 = vmatpush1.msra.mxu0 %v765
    %804 = vmatprep.subr.mxu0 %v769
    %805 = vmatpush1.msra.mxu0 %v768
    %806 = vmatprep.subr.mxu0 %v772
    %807 = vmatpush1.msra.mxu0 %v771
    %808 = vmatprep.subr.mxu0 %v775
    %809 = vmatpush1.msra.mxu0 %v774
    %810 = vmatprep.subr.mxu0 %v778
    %811 = vmatpush1.msra.mxu0 %v777
    %812 = vmatprep.subr.mxu0 0.0
    %813 = vmatpush1.msra.mxu0 0.0
    %814 = vmatprep.subr.mxu0 0.0
    %815 = vmatpush1.msra.mxu0 0.0
    %816 = vmatprep.subr.mxu0 0.0
    %817 = vmatpush1.msra.mxu0 0.0
    %818 = vmatprep.subr.mxu0 0.0
    %819 = vmatpush1.msra.mxu0 0.0
    %820 = vmatprep.subr.mxu0 0.0
    %821 = vmatpush1.msra.mxu0 0.0
    %822 = vmatprep.subr.mxu0 0.0
    %823 = vmatpush1.msra.mxu0 0.0
    %824 = vmatprep.subr.mxu0 0.0
    %825 = vmatpush1.msra.mxu0 0.0
    %826 = vmatprep.subr.mxu0 0.0
    %827 = vmatpush1.msra.mxu0 0.0
    %828 = vmatprep.subr.mxu0 0.0
    %829 = vmatpush1.msra.mxu0 0.0
    %830 = vmatprep.subr.mxu0 0.0
    %831 = vmatpush1.msra.mxu0 0.0
    %832 = vmatprep.subr.mxu0 0.0
    %833 = vmatpush1.msra.mxu0 0.0
    %834 = vmatprep.subr.mxu0 0.0
    %835 = vmatpush1.msra.mxu0 0.0
    %836 = vmatprep.subr.mxu0 0.0
    %837 = vmatpush1.msra.mxu0 0.0
    %838 = vmatprep.subr.mxu0 0.0
    %839 = vmatpush1.msra.mxu0 0.0
    %840 = vmatprep.subr.mxu0 0.0
    %841 = vmatpush1.msra.mxu0 0.0
    %842 = vmatprep.subr.mxu0 0.0
    %843 = vmatpush1.msra.mxu0 0.0
    %844 = vmatprep.mubr.f32.mxu0 0.0
    %845 = vmatmul.mubr.f32.gmra.mrb[0].mxu0 %v723
    %v846 = vpop.f32.mrb[0].mxu0
    %v847 = vadd.f32 0.0, %v846
    %v848 = vpop.f32.mrb[0].mxu0
    %v849 = vadd.f32 0.0, %v848
    %850 = vdwg.mxu0
    %851 = vmatprep.subr.mxu0 0.0
    %852 = vmatpush1.msra.mxu0 %v734
    %853 = vmatprep.subr.mxu0 0.0
    %854 = vmatpush1.msra.mxu0 %v737
    %855 = vmatprep.subr.mxu0 0.0
    %856 = vmatpush1.msra.mxu0 %v740
    %857 = vmatprep.subr.mxu0 0.0
    %858 = vmatpush1.msra.mxu0 %v743
    %859 = vmatprep.subr.mxu0 0.0
    %860 = vmatpush1.msra.mxu0 %v746
    %861 = vmatprep.subr.mxu0 0.0
    %862 = vmatpush1.msra.mxu0 %v749
    %863 = vmatprep.subr.mxu0 0.0
    %864 = vmatpush1.msra.mxu0 %v752
    %865 = vmatprep.subr.mxu0 0.0
    %866 = vmatpush1.msra.mxu0 %v755
    %867 = vmatprep.subr.mxu0 0.0
    %868 = vmatpush1.msra.mxu0 %v758
    %869 = vmatprep.subr.mxu0 0.0
    %870 = vmatpush1.msra.mxu0 %v761
    %871 = vmatprep.subr.mxu0 0.0
    %872 = vmatpush1.msra.mxu0 %v764
    %873 = vmatprep.subr.mxu0 0.0
    %874 = vmatpush1.msra.mxu0 %v767
    %875 = vmatprep.subr.mxu0 0.0
    %876 = vmatpush1.msra.mxu0 %v770
    %877 = vmatprep.subr.mxu0 0.0
    %878 = vmatpush1.msra.mxu0 %v773
    %879 = vmatprep.subr.mxu0 0.0
    %880 = vmatpush1.msra.mxu0 %v776
    %881 = vmatprep.subr.mxu0 0.0
    %882 = vmatpush1.msra.mxu0 %v779
    %883 = vmatprep.subr.mxu0 0.0
    %884 = vmatpush1.msra.mxu0 0.0
    %885 = vmatprep.subr.mxu0 0.0
    %886 = vmatpush1.msra.mxu0 0.0
    %887 = vmatprep.subr.mxu0 0.0
    %888 = vmatpush1.msra.mxu0 0.0
    %889 = vmatprep.subr.mxu0 0.0
    %890 = vmatpush1.msra.mxu0 0.0
    %891 = vmatprep.subr.mxu0 0.0
    %892 = vmatpush1.msra.mxu0 0.0
    %893 = vmatprep.subr.mxu0 0.0
    %894 = vmatpush1.msra.mxu0 0.0
    %895 = vmatprep.subr.mxu0 0.0
    %896 = vmatpush1.msra.mxu0 0.0
    %897 = vmatprep.subr.mxu0 0.0
    %898 = vmatpush1.msra.mxu0 0.0
    %899 = vmatprep.subr.mxu0 0.0
    %900 = vmatpush1.msra.mxu0 0.0
    %901 = vmatprep.subr.mxu0 0.0
    %902 = vmatpush1.msra.mxu0 0.0
    %903 = vmatprep.subr.mxu0 0.0
    %904 = vmatpush1.msra.mxu0 0.0
    %905 = vmatprep.subr.mxu0 0.0
    %906 = vmatpush1.msra.mxu0 0.0
    %907 = vmatprep.subr.mxu0 0.0
    %908 = vmatpush1.msra.mxu0 0.0
    %909 = vmatprep.subr.mxu0 0.0
    %910 = vmatpush1.msra.mxu0 0.0
    %911 = vmatprep.subr.mxu0 0.0
    %912 = vmatpush1.msra.mxu0 0.0
    %913 = vmatprep.subr.mxu0 0.0
    %914 = vmatpush1.msra.mxu0 0.0
    %915 = vmatprep.mubr.f32.mxu0 0.0
    %916 = vmatmul.mubr.f32.gmra.mrb[0].mxu0 %v723
    %v917 = vpop.f32.mrb[0].mxu0
    %v918 = vadd.f32 0.0, %v917
    %v919 = vpop.f32.mrb[0].mxu0
    %920 = vdwg.mxu0
    %v921 = vadd.f32 %v729, %v847
    %v922 = vxor.u32 %v921, 2147483648
    %v923 = vmul.f32 %v922, 1.442695
    %v924 = vpow.pop %v923
    %v925 = vadd.f32 %v924, 1.0
    %v926 = vrcp.pop %v925
    %v927 = vmul.f32 1.0, %v926
    %v928 = vadd.f32 %v730, %v849
    %v929 = vxor.u32 %v928, 2147483648
    %v930 = vmul.f32 %v929, 1.442695
    %v931 = vpow.pop %v930
    %v932 = vadd.f32 %v931, 1.0
    %v933 = vrcp.pop %v932
    %v934 = vmul.f32 1.0, %v933
    %v935 = vadd.f32 %v918, %v70
    %v936 = vmul.f32 %v927, %v935
    %v937 = vadd.f32 %v731, %v936
    %v938 = vtanh.pop %v937
    %v939 = vsub.f32 %v723, %v938
    %v940 = vmul.f32 %v934, %v939
    %v941 = vadd.f32 %v938, %v940
    %s942 = scalar_lea.vmem [#allocation3], 24
    %943 = vst [vmem:[%s942] sm:$0xff] %v941
    %s944 = smul.u32 4, 3
    %s945 = smul.addr %s944, 8
    %s946 = scalar_lea.vmem %s0, %s945
    %v947 = vld [vmem:[%s946] sm:$0xff]
    %v948 = vld [vmem:[%s946 + $0x8] sm:$0xff]
    %v949 = vld [vmem:[%s946 + $0x10] sm:$0xff]
    %v950 = vld [vmem:[#allocation6] sm:$0xff]
    %v951 = vld [vmem:[#allocation6 + $0x8] sm:$0xff]
    %v952 = vld [vmem:[#allocation6 + $0x10] sm:$0xff]
    %v953 = vld [vmem:[#allocation6 + $0x18] sm:$0xff]
    %v954 = vld [vmem:[#allocation6 + $0x20] sm:$0xff]
    %v955 = vld [vmem:[#allocation6 + $0x28] sm:$0xff]
    %v956 = vld [vmem:[#allocation6 + $0x30] sm:$0xff]
    %v957 = vld [vmem:[#allocation6 + $0x38] sm:$0xff]
    %v958 = vld [vmem:[#allocation6 + $0x40] sm:$0xff]
    %v959 = vld [vmem:[#allocation6 + $0x48] sm:$0xff]
    %v960 = vld [vmem:[#allocation6 + $0x50] sm:$0xff]
    %v961 = vld [vmem:[#allocation6 + $0x58] sm:$0xff]
    %v962 = vld [vmem:[#allocation6 + $0x60] sm:$0xff]
    %v963 = vld [vmem:[#allocation6 + $0x68] sm:$0xff]
    %v964 = vld [vmem:[#allocation6 + $0x70] sm:$0xff]
    %v965 = vld [vmem:[#allocation6 + $0x78] sm:$0xff]
    %v966 = vld [vmem:[#allocation6 + $0x80] sm:$0xff]
    %v967 = vld [vmem:[#allocation6 + $0x88] sm:$0xff]
    %v968 = vld [vmem:[#allocation6 + $0x90] sm:$0xff]
    %v969 = vld [vmem:[#allocation6 + $0x98] sm:$0xff]
    %v970 = vld [vmem:[#allocation6 + $0xa0] sm:$0xff]
    %v971 = vld [vmem:[#allocation6 + $0xa8] sm:$0xff]
    %v972 = vld [vmem:[#allocation6 + $0xb0] sm:$0xff]
    %v973 = vld [vmem:[#allocation6 + $0xb8] sm:$0xff]
    %v974 = vld [vmem:[#allocation6 + $0xc0] sm:$0xff]
    %v975 = vld [vmem:[#allocation6 + $0xc8] sm:$0xff]
    %v976 = vld [vmem:[#allocation6 + $0xd0] sm:$0xff]
    %v977 = vld [vmem:[#allocation6 + $0xd8] sm:$0xff]
    %v978 = vld [vmem:[#allocation6 + $0xe0] sm:$0xff]
    %v979 = vld [vmem:[#allocation6 + $0xe8] sm:$0xff]
    %v980 = vld [vmem:[#allocation6 + $0xf0] sm:$0xff]
    %v981 = vld [vmem:[#allocation6 + $0xf8] sm:$0xff]
    %v982 = vld [vmem:[#allocation6 + $0x100] sm:$0xff]
    %v983 = vld [vmem:[#allocation6 + $0x108] sm:$0xff]
    %v984 = vld [vmem:[#allocation6 + $0x110] sm:$0xff]
    %v985 = vld [vmem:[#allocation6 + $0x118] sm:$0xff]
    %v986 = vld [vmem:[#allocation6 + $0x120] sm:$0xff]
    %v987 = vld [vmem:[#allocation6 + $0x128] sm:$0xff]
    %v988 = vld [vmem:[#allocation6 + $0x130] sm:$0xff]
    %v989 = vld [vmem:[#allocation6 + $0x138] sm:$0xff]
    %v990 = vld [vmem:[#allocation6 + $0x140] sm:$0xff]
    %v991 = vld [vmem:[#allocation6 + $0x148] sm:$0xff]
    %v992 = vld [vmem:[#allocation6 + $0x150] sm:$0xff]
    %v993 = vld [vmem:[#allocation6 + $0x158] sm:$0xff]
    %v994 = vld [vmem:[#allocation6 + $0x160] sm:$0xff]
    %v995 = vld [vmem:[#allocation6 + $0x168] sm:$0xff]
    %v996 = vld [vmem:[#allocation6 + $0x170] sm:$0xff]
    %v997 = vld [vmem:[#allocation6 + $0x178] sm:$0xff]
    %998 = vmatprep.subr.mxu0 %v951
    %999 = vmatpush1.msra.mxu0 %v950
    %1000 = vmatprep.subr.mxu0 %v954
    %1001 = vmatpush1.msra.mxu0 %v953
    %1002 = vmatprep.subr.mxu0 %v957
    %1003 = vmatpush1.msra.mxu0 %v956
    %1004 = vmatprep.subr.mxu0 %v960
    %1005 = vmatpush1.msra.mxu0 %v959
    %1006 = vmatprep.subr.mxu0 %v963
    %1007 = vmatpush1.msra.mxu0 %v962
    %1008 = vmatprep.subr.mxu0 %v966
    %1009 = vmatpush1.msra.mxu0 %v965
    %1010 = vmatprep.subr.mxu0 %v969
    %1011 = vmatpush1.msra.mxu0 %v968
    %1012 = vmatprep.subr.mxu0 %v972
    %1013 = vmatpush1.msra.mxu0 %v971
    %1014 = vmatprep.subr.mxu0 %v975
    %1015 = vmatpush1.msra.mxu0 %v974
    %1016 = vmatprep.subr.mxu0 %v978
    %1017 = vmatpush1.msra.mxu0 %v977
    %1018 = vmatprep.subr.mxu0 %v981
    %1019 = vmatpush1.msra.mxu0 %v980
    %1020 = vmatprep.subr.mxu0 %v984
    %1021 = vmatpush1.msra.mxu0 %v983
    %1022 = vmatprep.subr.mxu0 %v987
    %1023 = vmatpush1.msra.mxu0 %v986
    %1024 = vmatprep.subr.mxu0 %v990
    %1025 = vmatpush1.msra.mxu0 %v989
    %1026 = vmatprep.subr.mxu0 %v993
    %1027 = vmatpush1.msra.mxu0 %v992
    %1028 = vmatprep.subr.mxu0 %v996
    %1029 = vmatpush1.msra.mxu0 %v995
    %1030 = vmatprep.subr.mxu0 0.0
    %1031 = vmatpush1.msra.mxu0 0.0
    %1032 = vmatprep.subr.mxu0 0.0
    %1033 = vmatpush1.msra.mxu0 0.0
    %1034 = vmatprep.subr.mxu0 0.0
    %1035 = vmatpush1.msra.mxu0 0.0
    %1036 = vmatprep.subr.mxu0 0.0
    %1037 = vmatpush1.msra.mxu0 0.0
    %1038 = vmatprep.subr.mxu0 0.0
    %1039 = vmatpush1.msra.mxu0 0.0
    %1040 = vmatprep.subr.mxu0 0.0
    %1041 = vmatpush1.msra.mxu0 0.0
    %1042 = vmatprep.subr.mxu0 0.0
    %1043 = vmatpush1.msra.mxu0 0.0
    %1044 = vmatprep.subr.mxu0 0.0
    %1045 = vmatpush1.msra.mxu0 0.0
    %1046 = vmatprep.subr.mxu0 0.0
    %1047 = vmatpush1.msra.mxu0 0.0
    %1048 = vmatprep.subr.mxu0 0.0
    %1049 = vmatpush1.msra.mxu0 0.0
    %1050 = vmatprep.subr.mxu0 0.0
    %1051 = vmatpush1.msra.mxu0 0.0
    %1052 = vmatprep.subr.mxu0 0.0
    %1053 = vmatpush1.msra.mxu0 0.0
    %1054 = vmatprep.subr.mxu0 0.0
    %1055 = vmatpush1.msra.mxu0 0.0
    %1056 = vmatprep.subr.mxu0 0.0
    %1057 = vmatpush1.msra.mxu0 0.0
    %1058 = vmatprep.subr.mxu0 0.0
    %1059 = vmatpush1.msra.mxu0 0.0
    %1060 = vmatprep.subr.mxu0 0.0
    %1061 = vmatpush1.msra.mxu0 0.0
    %1062 = vmatprep.mubr.f32.mxu0 0.0
    %1063 = vmatmul.mubr.f32.gmra.mrb[0].mxu0 %v941
    %v1064 = vpop.f32.mrb[0].mxu0
    %v1065 = vadd.f32 0.0, %v1064
    %v1066 = vpop.f32.mrb[0].mxu0
    %v1067 = vadd.f32 0.0, %v1066
    %1068 = vdwg.mxu0
    %1069 = vmatprep.subr.mxu0 0.0
    %1070 = vmatpush1.msra.mxu0 %v952
    %1071 = vmatprep.subr.mxu0 0.0
    %1072 = vmatpush1.msra.mxu0 %v955
    %1073 = vmatprep.subr.mxu0 0.0
    %1074 = vmatpush1.msra.mxu0 %v958
    %1075 = vmatprep.subr.mxu0 0.0
    %1076 = vmatpush1.msra.mxu0 %v961
    %1077 = vmatprep.subr.mxu0 0.0
    %1078 = vmatpush1.msra.mxu0 %v964
    %1079 = vmatprep.subr.mxu0 0.0
    %1080 = vmatpush1.msra.mxu0 %v967
    %1081 = vmatprep.subr.mxu0 0.0
    %1082 = vmatpush1.msra.mxu0 %v970
    %1083 = vmatprep.subr.mxu0 0.0
    %1084 = vmatpush1.msra.mxu0 %v973
    %1085 = vmatprep.subr.mxu0 0.0
    %1086 = vmatpush1.msra.mxu0 %v976
    %1087 = vmatprep.subr.mxu0 0.0
    %1088 = vmatpush1.msra.mxu0 %v979
    %1089 = vmatprep.subr.mxu0 0.0
    %1090 = vmatpush1.msra.mxu0 %v982
    %1091 = vmatprep.subr.mxu0 0.0
    %1092 = vmatpush1.msra.mxu0 %v985
    %1093 = vmatprep.subr.mxu0 0.0
    %1094 = vmatpush1.msra.mxu0 %v988
    %1095 = vmatprep.subr.mxu0 0.0
    %1096 = vmatpush1.msra.mxu0 %v991
    %1097 = vmatprep.subr.mxu0 0.0
    %1098 = vmatpush1.msra.mxu0 %v994
    %1099 = vmatprep.subr.mxu0 0.0
    %1100 = vmatpush1.msra.mxu0 %v997
    %1101 = vmatprep.subr.mxu0 0.0
    %1102 = vmatpush1.msra.mxu0 0.0
    %1103 = vmatprep.subr.mxu0 0.0
    %1104 = vmatpush1.msra.mxu0 0.0
    %1105 = vmatprep.subr.mxu0 0.0
    %1106 = vmatpush1.msra.mxu0 0.0
    %1107 = vmatprep.subr.mxu0 0.0
    %1108 = vmatpush1.msra.mxu0 0.0
    %1109 = vmatprep.subr.mxu0 0.0
    %1110 = vmatpush1.msra.mxu0 0.0
    %1111 = vmatprep.subr.mxu0 0.0
    %1112 = vmatpush1.msra.mxu0 0.0
    %1113 = vmatprep.subr.mxu0 0.0
    %1114 = vmatpush1.msra.mxu0 0.0
    %1115 = vmatprep.subr.mxu0 0.0
    %1116 = vmatpush1.msra.mxu0 0.0
    %1117 = vmatprep.subr.mxu0 0.0
    %1118 = vmatpush1.msra.mxu0 0.0
    %1119 = vmatprep.subr.mxu0 0.0
    %1120 = vmatpush1.msra.mxu0 0.0
    %1121 = vmatprep.subr.mxu0 0.0
    %1122 = vmatpush1.msra.mxu0 0.0
    %1123 = vmatprep.subr.mxu0 0.0
    %1124 = vmatpush1.msra.mxu0 0.0
    %1125 = vmatprep.subr.mxu0 0.0
    %1126 = vmatpush1.msra.mxu0 0.0
    %1127 = vmatprep.subr.mxu0 0.0
    %1128 = vmatpush1.msra.mxu0 0.0
    %1129 = vmatprep.subr.mxu0 0.0
    %1130 = vmatpush1.msra.mxu0 0.0
    %1131 = vmatprep.subr.mxu0 0.0
    %1132 = vmatpush1.msra.mxu0 0.0
    %1133 = vmatprep.mubr.f32.mxu0 0.0
    %1134 = vmatmul.mubr.f32.gmra.mrb[0].mxu0 %v941
    %v1135 = vpop.f32.mrb[0].mxu0
    %v1136 = vadd.f32 0.0, %v1135
    %v1137 = vpop.f32.mrb[0].mxu0
    %1138 = vdwg.mxu0
    %v1139 = vadd.f32 %v947, %v1065
    %v1140 = vxor.u32 %v1139, 2147483648
    %v1141 = vmul.f32 %v1140, 1.442695
    %v1142 = vpow.pop %v1141
    %v1143 = vadd.f32 %v1142, 1.0
    %v1144 = vrcp.pop %v1143
    %v1145 = vmul.f32 1.0, %v1144
    %v1146 = vadd.f32 %v948, %v1067
    %v1147 = vxor.u32 %v1146, 2147483648
    %v1148 = vmul.f32 %v1147, 1.442695
    %v1149 = vpow.pop %v1148
    %v1150 = vadd.f32 %v1149, 1.0
    %v1151 = vrcp.pop %v1150
    %v1152 = vmul.f32 1.0, %v1151
    %v1153 = vadd.f32 %v1136, %v70
    %v1154 = vmul.f32 %v1145, %v1153
    %v1155 = vadd.f32 %v949, %v1154
    %v1156 = vtanh.pop %v1155
    %v1157 = vsub.f32 %v941, %v1156
    %v1158 = vmul.f32 %v1152, %v1157
    %v1159 = vadd.f32 %v1156, %v1158
    %s1160 = scalar_lea.vmem [#allocation3], 32
    %1161 = vst [vmem:[%s1160] sm:$0xff] %v1159
    %s1162 = smul.u32 5, 3
    %s1163 = smul.addr %s1162, 8
    %s1164 = scalar_lea.vmem %s0, %s1163
    %v1165 = vld [vmem:[%s1164] sm:$0xff]
    %v1166 = vld [vmem:[%s1164 + $0x8] sm:$0xff]
    %v1167 = vld [vmem:[%s1164 + $0x10] sm:$0xff]
    %v1168 = vld [vmem:[#allocation6] sm:$0xff]
    %v1169 = vld [vmem:[#allocation6 + $0x8] sm:$0xff]
    %v1170 = vld [vmem:[#allocation6 + $0x10] sm:$0xff]
    %v1171 = vld [vmem:[#allocation6 + $0x18] sm:$0xff]
    %v1172 = vld [vmem:[#allocation6 + $0x20] sm:$0xff]
    %v1173 = vld [vmem:[#allocation6 + $0x28] sm:$0xff]
    %v1174 = vld [vmem:[#allocation6 + $0x30] sm:$0xff]
    %v1175 = vld [vmem:[#allocation6 + $0x38] sm:$0xff]
    %v1176 = vld [vmem:[#allocation6 + $0x40] sm:$0xff]
    %v1177 = vld [vmem:[#allocation6 + $0x48] sm:$0xff]
    %v1178 = vld [vmem:[#allocation6 + $0x50] sm:$0xff]
    %v1179 = vld [vmem:[#allocation6 + $0x58] sm:$0xff]
    %v1180 = vld [vmem:[#allocation6 + $0x60] sm:$0xff]
    %v1181 = vld [vmem:[#allocation6 + $0x68] sm:$0xff]
    %v1182 = vld [vmem:[#allocation6 + $0x70] sm:$0xff]
    %v1183 = vld [vmem:[#allocation6 + $0x78] sm:$0xff]
    %v1184 = vld [vmem:[#allocation6 + $0x80] sm:$0xff]
    %v1185 = vld [vmem:[#allocation6 + $0x88] sm:$0xff]
    %v1186 = vld [vmem:[#allocation6 + $0x90] sm:$0xff]
    %v1187 = vld [vmem:[#allocation6 + $0x98] sm:$0xff]
    %v1188 = vld [vmem:[#allocation6 + $0xa0] sm:$0xff]
    %v1189 = vld [vmem:[#allocation6 + $0xa8] sm:$0xff]
    %v1190 = vld [vmem:[#allocation6 + $0xb0] sm:$0xff]
    %v1191 = vld [vmem:[#allocation6 + $0xb8] sm:$0xff]
    %v1192 = vld [vmem:[#allocation6 + $0xc0] sm:$0xff]
    %v1193 = vld [vmem:[#allocation6 + $0xc8] sm:$0xff]
    %v1194 = vld [vmem:[#allocation6 + $0xd0] sm:$0xff]
    %v1195 = vld [vmem:[#allocation6 + $0xd8] sm:$0xff]
    %v1196 = vld [vmem:[#allocation6 + $0xe0] sm:$0xff]
    %v1197 = vld [vmem:[#allocation6 + $0xe8] sm:$0xff]
    %v1198 = vld [vmem:[#allocation6 + $0xf0] sm:$0xff]
    %v1199 = vld [vmem:[#allocation6 + $0xf8] sm:$0xff]
    %v1200 = vld [vmem:[#allocation6 + $0x100] sm:$0xff]
    %v1201 = vld [vmem:[#allocation6 + $0x108] sm:$0xff]
    %v1202 = vld [vmem:[#allocation6 + $0x110] sm:$0xff]
    %v1203 = vld [vmem:[#allocation6 + $0x118] sm:$0xff]
    %v1204 = vld [vmem:[#allocation6 + $0x120] sm:$0xff]
    %v1205 = vld [vmem:[#allocation6 + $0x128] sm:$0xff]
    %v1206 = vld [vmem:[#allocation6 + $0x130] sm:$0xff]
    %v1207 = vld [vmem:[#allocation6 + $0x138] sm:$0xff]
    %v1208 = vld [vmem:[#allocation6 + $0x140] sm:$0xff]
    %v1209 = vld [vmem:[#allocation6 + $0x148] sm:$0xff]
    %v1210 = vld [vmem:[#allocation6 + $0x150] sm:$0xff]
    %v1211 = vld [vmem:[#allocation6 + $0x158] sm:$0xff]
    %v1212 = vld [vmem:[#allocation6 + $0x160] sm:$0xff]
    %v1213 = vld [vmem:[#allocation6 + $0x168] sm:$0xff]
    %v1214 = vld [vmem:[#allocation6 + $0x170] sm:$0xff]
    %v1215 = vld [vmem:[#allocation6 + $0x178] sm:$0xff]
    %1216 = vmatprep.subr.mxu0 %v1169
    %1217 = vmatpush1.msra.mxu0 %v1168
    %1218 = vmatprep.subr.mxu0 %v1172
    %1219 = vmatpush1.msra.mxu0 %v1171
    %1220 = vmatprep.subr.mxu0 %v1175
    %1221 = vmatpush1.msra.mxu0 %v1174
    %1222 = vmatprep.subr.mxu0 %v1178
    %1223 = vmatpush1.msra.mxu0 %v1177
    %1224 = vmatprep.subr.mxu0 %v1181
    %1225 = vmatpush1.msra.mxu0 %v1180
    %1226 = vmatprep.subr.mxu0 %v1184
    %1227 = vmatpush1.msra.mxu0 %v1183
    %1228 = vmatprep.subr.mxu0 %v1187
    %1229 = vmatpush1.msra.mxu0 %v1186
    %1230 = vmatprep.subr.mxu0 %v1190
    %1231 = vmatpush1.msra.mxu0 %v1189
    %1232 = vmatprep.subr.mxu0 %v1193
    %1233 = vmatpush1.msra.mxu0 %v1192
    %1234 = vmatprep.subr.mxu0 %v1196
    %1235 = vmatpush1.msra.mxu0 %v1195
    %1236 = vmatprep.subr.mxu0 %v1199
    %1237 = vmatpush1.msra.mxu0 %v1198
    %1238 = vmatprep.subr.mxu0 %v1202
    %1239 = vmatpush1.msra.mxu0 %v1201
    %1240 = vmatprep.subr.mxu0 %v1205
    %1241 = vmatpush1.msra.mxu0 %v1204
    %1242 = vmatprep.subr.mxu0 %v1208
    %1243 = vmatpush1.msra.mxu0 %v1207
    %1244 = vmatprep.subr.mxu0 %v1211
    %1245 = vmatpush1.msra.mxu0 %v1210
    %1246 = vmatprep.subr.mxu0 %v1214
    %1247 = vmatpush1.msra.mxu0 %v1213
    %1248 = vmatprep.subr.mxu0 0.0
    %1249 = vmatpush1.msra.mxu0 0.0
    %1250 = vmatprep.subr.mxu0 0.0
    %1251 = vmatpush1.msra.mxu0 0.0
    %1252 = vmatprep.subr.mxu0 0.0
    %1253 = vmatpush1.msra.mxu0 0.0
    %1254 = vmatprep.subr.mxu0 0.0
    %1255 = vmatpush1.msra.mxu0 0.0
    %1256 = vmatprep.subr.mxu0 0.0
    %1257 = vmatpush1.msra.mxu0 0.0
    %1258 = vmatprep.subr.mxu0 0.0
    %1259 = vmatpush1.msra.mxu0 0.0
    %1260 = vmatprep.subr.mxu0 0.0
    %1261 = vmatpush1.msra.mxu0 0.0
    %1262 = vmatprep.subr.mxu0 0.0
    %1263 = vmatpush1.msra.mxu0 0.0
    %1264 = vmatprep.subr.mxu0 0.0
    %1265 = vmatpush1.msra.mxu0 0.0
    %1266 = vmatprep.subr.mxu0 0.0
    %1267 = vmatpush1.msra.mxu0 0.0
    %1268 = vmatprep.subr.mxu0 0.0
    %1269 = vmatpush1.msra.mxu0 0.0
    %1270 = vmatprep.subr.mxu0 0.0
    %1271 = vmatpush1.msra.mxu0 0.0
    %1272 = vmatprep.subr.mxu0 0.0
    %1273 = vmatpush1.msra.mxu0 0.0
    %1274 = vmatprep.subr.mxu0 0.0
    %1275 = vmatpush1.msra.mxu0 0.0
    %1276 = vmatprep.subr.mxu0 0.0
    %1277 = vmatpush1.msra.mxu0 0.0
    %1278 = vmatprep.subr.mxu0 0.0
    %1279 = vmatpush1.msra.mxu0 0.0
    %1280 = vmatprep.mubr.f32.mxu0 0.0
    %1281 = vmatmul.mubr.f32.gmra.mrb[0].mxu0 %v1159
    %v1282 = vpop.f32.mrb[0].mxu0
    %v1283 = vadd.f32 0.0, %v1282
    %v1284 = vpop.f32.mrb[0].mxu0
    %v1285 = vadd.f32 0.0, %v1284
    %1286 = vdwg.mxu0
    %1287 = vmatprep.subr.mxu0 0.0
    %1288 = vmatpush1.msra.mxu0 %v1170
    %1289 = vmatprep.subr.mxu0 0.0
    %1290 = vmatpush1.msra.mxu0 %v1173
    %1291 = vmatprep.subr.mxu0 0.0
    %1292 = vmatpush1.msra.mxu0 %v1176
    %1293 = vmatprep.subr.mxu0 0.0
    %1294 = vmatpush1.msra.mxu0 %v1179
    %1295 = vmatprep.subr.mxu0 0.0
    %1296 = vmatpush1.msra.mxu0 %v1182
    %1297 = vmatprep.subr.mxu0 0.0
    %1298 = vmatpush1.msra.mxu0 %v1185
    %1299 = vmatprep.subr.mxu0 0.0
    %1300 = vmatpush1.msra.mxu0 %v1188
    %1301 = vmatprep.subr.mxu0 0.0
    %1302 = vmatpush1.msra.mxu0 %v1191
    %1303 = vmatprep.subr.mxu0 0.0
    %1304 = vmatpush1.msra.mxu0 %v1194
    %1305 = vmatprep.subr.mxu0 0.0
    %1306 = vmatpush1.msra.mxu0 %v1197
    %1307 = vmatprep.subr.mxu0 0.0
    %1308 = vmatpush1.msra.mxu0 %v1200
    %1309 = vmatprep.subr.mxu0 0.0
    %1310 = vmatpush1.msra.mxu0 %v1203
    %1311 = vmatprep.subr.mxu0 0.0
    %1312 = vmatpush1.msra.mxu0 %v1206
    %1313 = vmatprep.subr.mxu0 0.0
    %1314 = vmatpush1.msra.mxu0 %v1209
    %1315 = vmatprep.subr.mxu0 0.0
    %1316 = vmatpush1.msra.mxu0 %v1212
    %1317 = vmatprep.subr.mxu0 0.0
    %1318 = vmatpush1.msra.mxu0 %v1215
    %1319 = vmatprep.subr.mxu0 0.0
    %1320 = vmatpush1.msra.mxu0 0.0
    %1321 = vmatprep.subr.mxu0 0.0
    %1322 = vmatpush1.msra.mxu0 0.0
    %1323 = vmatprep.subr.mxu0 0.0
    %1324 = vmatpush1.msra.mxu0 0.0
    %1325 = vmatprep.subr.mxu0 0.0
    %1326 = vmatpush1.msra.mxu0 0.0
    %1327 = vmatprep.subr.mxu0 0.0
    %1328 = vmatpush1.msra.mxu0 0.0
    %1329 = vmatprep.subr.mxu0 0.0
    %1330 = vmatpush1.msra.mxu0 0.0
    %1331 = vmatprep.subr.mxu0 0.0
    %1332 = vmatpush1.msra.mxu0 0.0
    %1333 = vmatprep.subr.mxu0 0.0
    %1334 = vmatpush1.msra.mxu0 0.0
    %1335 = vmatprep.subr.mxu0 0.0
    %1336 = vmatpush1.msra.mxu0 0.0
    %1337 = vmatprep.subr.mxu0 0.0
    %1338 = vmatpush1.msra.mxu0 0.0
    %1339 = vmatprep.subr.mxu0 0.0
    %1340 = vmatpush1.msra.mxu0 0.0
    %1341 = vmatprep.subr.mxu0 0.0
    %1342 = vmatpush1.msra.mxu0 0.0
    %1343 = vmatprep.subr.mxu0 0.0
    %1344 = vmatpush1.msra.mxu0 0.0
    %1345 = vmatprep.subr.mxu0 0.0
    %1346 = vmatpush1.msra.mxu0 0.0
    %1347 = vmatprep.subr.mxu0 0.0
    %1348 = vmatpush1.msra.mxu0 0.0
    %1349 = vmatprep.subr.mxu0 0.0
    %1350 = vmatpush1.msra.mxu0 0.0
    %1351 = vmatprep.mubr.f32.mxu0 0.0
    %1352 = vmatmul.mubr.f32.gmra.mrb[0].mxu0 %v1159
    %v1353 = vpop.f32.mrb[0].mxu0
    %v1354 = vadd.f32 0.0, %v1353
    %v1355 = vpop.f32.mrb[0].mxu0
    %1356 = vdwg.mxu0
    %v1357 = vadd.f32 %v1165, %v1283
    %v1358 = vxor.u32 %v1357, 2147483648
    %v1359 = vmul.f32 %v1358, 1.442695
    %v1360 = vpow.pop %v1359
    %v1361 = vadd.f32 %v1360, 1.0
    %v1362 = vrcp.pop %v1361
    %v1363 = vmul.f32 1.0, %v1362
    %v1364 = vadd.f32 %v1166, %v1285
    %v1365 = vxor.u32 %v1364, 2147483648
    %v1366 = vmul.f32 %v1365, 1.442695
    %v1367 = vpow.pop %v1366
    %v1368 = vadd.f32 %v1367, 1.0
    %v1369 = vrcp.pop %v1368
    %v1370 = vmul.f32 1.0, %v1369
    %v1371 = vadd.f32 %v1354, %v70
    %v1372 = vmul.f32 %v1363, %v1371
    %v1373 = vadd.f32 %v1167, %v1372
    %v1374 = vtanh.pop %v1373
    %v1375 = vsub.f32 %v1159, %v1374
    %v1376 = vmul.f32 %v1370, %v1375
    %v1377 = vadd.f32 %v1374, %v1376
    %s1378 = scalar_lea.vmem [#allocation3], 40
    %1379 = vst [vmem:[%s1378] sm:$0xff] %v1377
    %s1380 = smul.u32 6, 3
    %s1381 = smul.addr %s1380, 8
    %s1382 = scalar_lea.vmem %s0, %s1381
    %v1383 = vld [vmem:[%s1382] sm:$0xff]
    %v1384 = vld [vmem:[%s1382 + $0x8] sm:$0xff]
    %v1385 = vld [vmem:[%s1382 + $0x10] sm:$0xff]
    %v1386 = vld [vmem:[#allocation6] sm:$0xff]
    %v1387 = vld [vmem:[#allocation6 + $0x8] sm:$0xff]
    %v1388 = vld [vmem:[#allocation6 + $0x10] sm:$0xff]
    %v1389 = vld [vmem:[#allocation6 + $0x18] sm:$0xff]
    %v1390 = vld [vmem:[#allocation6 + $0x20] sm:$0xff]
    %v1391 = vld [vmem:[#allocation6 + $0x28] sm:$0xff]
    %v1392 = vld [vmem:[#allocation6 + $0x30] sm:$0xff]
    %v1393 = vld [vmem:[#allocation6 + $0x38] sm:$0xff]
    %v1394 = vld [vmem:[#allocation6 + $0x40] sm:$0xff]
    %v1395 = vld [vmem:[#allocation6 + $0x48] sm:$0xff]
    %v1396 = vld [vmem:[#allocation6 + $0x50] sm:$0xff]
    %v1397 = vld [vmem:[#allocation6 + $0x58] sm:$0xff]
    %v1398 = vld [vmem:[#allocation6 + $0x60] sm:$0xff]
    %v1399 = vld [vmem:[#allocation6 + $0x68] sm:$0xff]
    %v1400 = vld [vmem:[#allocation6 + $0x70] sm:$0xff]
    %v1401 = vld [vmem:[#allocation6 + $0x78] sm:$0xff]
    %v1402 = vld [vmem:[#allocation6 + $0x80] sm:$0xff]
    %v1403 = vld [vmem:[#allocation6 + $0x88] sm:$0xff]
    %v1404 = vld [vmem:[#allocation6 + $0x90] sm:$0xff]
    %v1405 = vld [vmem:[#allocation6 + $0x98] sm:$0xff]
    %v1406 = vld [vmem:[#allocation6 + $0xa0] sm:$0xff]
    %v1407 = vld [vmem:[#allocation6 + $0xa8] sm:$0xff]
    %v1408 = vld [vmem:[#allocation6 + $0xb0] sm:$0xff]
    %v1409 = vld [vmem:[#allocation6 + $0xb8] sm:$0xff]
    %v1410 = vld [vmem:[#allocation6 + $0xc0] sm:$0xff]
    %v1411 = vld [vmem:[#allocation6 + $0xc8] sm:$0xff]
    %v1412 = vld [vmem:[#allocation6 + $0xd0] sm:$0xff]
    %v1413 = vld [vmem:[#allocation6 + $0xd8] sm:$0xff]
    %v1414 = vld [vmem:[#allocation6 + $0xe0] sm:$0xff]
    %v1415 = vld [vmem:[#allocation6 + $0xe8] sm:$0xff]
    %v1416 = vld [vmem:[#allocation6 + $0xf0] sm:$0xff]
    %v1417 = vld [vmem:[#allocation6 + $0xf8] sm:$0xff]
    %v1418 = vld [vmem:[#allocation6 + $0x100] sm:$0xff]
    %v1419 = vld [vmem:[#allocation6 + $0x108] sm:$0xff]
    %v1420 = vld [vmem:[#allocation6 + $0x110] sm:$0xff]
    %v1421 = vld [vmem:[#allocation6 + $0x118] sm:$0xff]
    %v1422 = vld [vmem:[#allocation6 + $0x120] sm:$0xff]
    %v1423 = vld [vmem:[#allocation6 + $0x128] sm:$0xff]
    %v1424 = vld [vmem:[#allocation6 + $0x130] sm:$0xff]
    %v1425 = vld [vmem:[#allocation6 + $0x138] sm:$0xff]
    %v1426 = vld [vmem:[#allocation6 + $0x140] sm:$0xff]
    %v1427 = vld [vmem:[#allocation6 + $0x148] sm:$0xff]
    %v1428 = vld [vmem:[#allocation6 + $0x150] sm:$0xff]
    %v1429 = vld [vmem:[#allocation6 + $0x158] sm:$0xff]
    %v1430 = vld [vmem:[#allocation6 + $0x160] sm:$0xff]
    %v1431 = vld [vmem:[#allocation6 + $0x168] sm:$0xff]
    %v1432 = vld [vmem:[#allocation6 + $0x170] sm:$0xff]
    %v1433 = vld [vmem:[#allocation6 + $0x178] sm:$0xff]
    %1434 = vmatprep.subr.mxu0 %v1387
    %1435 = vmatpush1.msra.mxu0 %v1386
    %1436 = vmatprep.subr.mxu0 %v1390
    %1437 = vmatpush1.msra.mxu0 %v1389
    %1438 = vmatprep.subr.mxu0 %v1393
    %1439 = vmatpush1.msra.mxu0 %v1392
    %1440 = vmatprep.subr.mxu0 %v1396
    %1441 = vmatpush1.msra.mxu0 %v1395
    %1442 = vmatprep.subr.mxu0 %v1399
    %1443 = vmatpush1.msra.mxu0 %v1398
    %1444 = vmatprep.subr.mxu0 %v1402
    %1445 = vmatpush1.msra.mxu0 %v1401
    %1446 = vmatprep.subr.mxu0 %v1405
    %1447 = vmatpush1.msra.mxu0 %v1404
    %1448 = vmatprep.subr.mxu0 %v1408
    %1449 = vmatpush1.msra.mxu0 %v1407
    %1450 = vmatprep.subr.mxu0 %v1411
    %1451 = vmatpush1.msra.mxu0 %v1410
    %1452 = vmatprep.subr.mxu0 %v1414
    %1453 = vmatpush1.msra.mxu0 %v1413
    %1454 = vmatprep.subr.mxu0 %v1417
    %1455 = vmatpush1.msra.mxu0 %v1416
    %1456 = vmatprep.subr.mxu0 %v1420
    %1457 = vmatpush1.msra.mxu0 %v1419
    %1458 = vmatprep.subr.mxu0 %v1423
    %1459 = vmatpush1.msra.mxu0 %v1422
    %1460 = vmatprep.subr.mxu0 %v1426
    %1461 = vmatpush1.msra.mxu0 %v1425
    %1462 = vmatprep.subr.mxu0 %v1429
    %1463 = vmatpush1.msra.mxu0 %v1428
    %1464 = vmatprep.subr.mxu0 %v1432
    %1465 = vmatpush1.msra.mxu0 %v1431
    %1466 = vmatprep.subr.mxu0 0.0
    %1467 = vmatpush1.msra.mxu0 0.0
    %1468 = vmatprep.subr.mxu0 0.0
    %1469 = vmatpush1.msra.mxu0 0.0
    %1470 = vmatprep.subr.mxu0 0.0
    %1471 = vmatpush1.msra.mxu0 0.0
    %1472 = vmatprep.subr.mxu0 0.0
    %1473 = vmatpush1.msra.mxu0 0.0
    %1474 = vmatprep.subr.mxu0 0.0
    %1475 = vmatpush1.msra.mxu0 0.0
    %1476 = vmatprep.subr.mxu0 0.0
    %1477 = vmatpush1.msra.mxu0 0.0
    %1478 = vmatprep.subr.mxu0 0.0
    %1479 = vmatpush1.msra.mxu0 0.0
    %1480 = vmatprep.subr.mxu0 0.0
    %1481 = vmatpush1.msra.mxu0 0.0
    %1482 = vmatprep.subr.mxu0 0.0
    %1483 = vmatpush1.msra.mxu0 0.0
    %1484 = vmatprep.subr.mxu0 0.0
    %1485 = vmatpush1.msra.mxu0 0.0
    %1486 = vmatprep.subr.mxu0 0.0
    %1487 = vmatpush1.msra.mxu0 0.0
    %1488 = vmatprep.subr.mxu0 0.0
    %1489 = vmatpush1.msra.mxu0 0.0
    %1490 = vmatprep.subr.mxu0 0.0
    %1491 = vmatpush1.msra.mxu0 0.0
    %1492 = vmatprep.subr.mxu0 0.0
    %1493 = vmatpush1.msra.mxu0 0.0
    %1494 = vmatprep.subr.mxu0 0.0
    %1495 = vmatpush1.msra.mxu0 0.0
    %1496 = vmatprep.subr.mxu0 0.0
    %1497 = vmatpush1.msra.mxu0 0.0
    %1498 = vmatprep.mubr.f32.mxu0 0.0
    %1499 = vmatmul.mubr.f32.gmra.mrb[0].mxu0 %v1377
    %v1500 = vpop.f32.mrb[0].mxu0
    %v1501 = vadd.f32 0.0, %v1500
    %v1502 = vpop.f32.mrb[0].mxu0
    %v1503 = vadd.f32 0.0, %v1502
    %1504 = vdwg.mxu0
    %1505 = vmatprep.subr.mxu0 0.0
    %1506 = vmatpush1.msra.mxu0 %v1388
    %1507 = vmatprep.subr.mxu0 0.0
    %1508 = vmatpush1.msra.mxu0 %v1391
    %1509 = vmatprep.subr.mxu0 0.0
    %1510 = vmatpush1.msra.mxu0 %v1394
    %1511 = vmatprep.subr.mxu0 0.0
    %1512 = vmatpush1.msra.mxu0 %v1397
    %1513 = vmatprep.subr.mxu0 0.0
    %1514 = vmatpush1.msra.mxu0 %v1400
    %1515 = vmatprep.subr.mxu0 0.0
    %1516 = vmatpush1.msra.mxu0 %v1403
    %1517 = vmatprep.subr.mxu0 0.0
    %1518 = vmatpush1.msra.mxu0 %v1406
    %1519 = vmatprep.subr.mxu0 0.0
    %1520 = vmatpush1.msra.mxu0 %v1409
    %1521 = vmatprep.subr.mxu0 0.0
    %1522 = vmatpush1.msra.mxu0 %v1412
    %1523 = vmatprep.subr.mxu0 0.0
    %1524 = vmatpush1.msra.mxu0 %v1415
    %1525 = vmatprep.subr.mxu0 0.0
    %1526 = vmatpush1.msra.mxu0 %v1418
    %1527 = vmatprep.subr.mxu0 0.0
    %1528 = vmatpush1.msra.mxu0 %v1421
    %1529 = vmatprep.subr.mxu0 0.0
    %1530 = vmatpush1.msra.mxu0 %v1424
    %1531 = vmatprep.subr.mxu0 0.0
    %1532 = vmatpush1.msra.mxu0 %v1427
    %1533 = vmatprep.subr.mxu0 0.0
    %1534 = vmatpush1.msra.mxu0 %v1430
    %1535 = vmatprep.subr.mxu0 0.0
    %1536 = vmatpush1.msra.mxu0 %v1433
    %1537 = vmatprep.subr.mxu0 0.0
    %1538 = vmatpush1.msra.mxu0 0.0
    %1539 = vmatprep.subr.mxu0 0.0
    %1540 = vmatpush1.msra.mxu0 0.0
    %1541 = vmatprep.subr.mxu0 0.0
    %1542 = vmatpush1.msra.mxu0 0.0
    %1543 = vmatprep.subr.mxu0 0.0
    %1544 = vmatpush1.msra.mxu0 0.0
    %1545 = vmatprep.subr.mxu0 0.0
    %1546 = vmatpush1.msra.mxu0 0.0
    %1547 = vmatprep.subr.mxu0 0.0
    %1548 = vmatpush1.msra.mxu0 0.0
    %1549 = vmatprep.subr.mxu0 0.0
    %1550 = vmatpush1.msra.mxu0 0.0
    %1551 = vmatprep.subr.mxu0 0.0
    %1552 = vmatpush1.msra.mxu0 0.0
    %1553 = vmatprep.subr.mxu0 0.0
    %1554 = vmatpush1.msra.mxu0 0.0
    %1555 = vmatprep.subr.mxu0 0.0
    %1556 = vmatpush1.msra.mxu0 0.0
    %1557 = vmatprep.subr.mxu0 0.0
    %1558 = vmatpush1.msra.mxu0 0.0
    %1559 = vmatprep.subr.mxu0 0.0
    %1560 = vmatpush1.msra.mxu0 0.0
    %1561 = vmatprep.subr.mxu0 0.0
    %1562 = vmatpush1.msra.mxu0 0.0
    %1563 = vmatprep.subr.mxu0 0.0
    %1564 = vmatpush1.msra.mxu0 0.0
    %1565 = vmatprep.subr.mxu0 0.0
    %1566 = vmatpush1.msra.mxu0 0.0
    %1567 = vmatprep.subr.mxu0 0.0
    %1568 = vmatpush1.msra.mxu0 0.0
    %1569 = vmatprep.mubr.f32.mxu0 0.0
    %1570 = vmatmul.mubr.f32.gmra.mrb[0].mxu0 %v1377
    %v1571 = vpop.f32.mrb[0].mxu0
    %v1572 = vadd.f32 0.0, %v1571
    %v1573 = vpop.f32.mrb[0].mxu0
    %1574 = vdwg.mxu0
    %v1575 = vadd.f32 %v1383, %v1501
    %v1576 = vxor.u32 %v1575, 2147483648
    %v1577 = vmul.f32 %v1576, 1.442695
    %v1578 = vpow.pop %v1577
    %v1579 = vadd.f32 %v1578, 1.0
    %v1580 = vrcp.pop %v1579
    %v1581 = vmul.f32 1.0, %v1580
    %v1582 = vadd.f32 %v1384, %v1503
    %v1583 = vxor.u32 %v1582, 2147483648
    %v1584 = vmul.f32 %v1583, 1.442695
    %v1585 = vpow.pop %v1584
    %v1586 = vadd.f32 %v1585, 1.0
    %v1587 = vrcp.pop %v1586
    %v1588 = vmul.f32 1.0, %v1587
    %v1589 = vadd.f32 %v1572, %v70
    %v1590 = vmul.f32 %v1581, %v1589
    %v1591 = vadd.f32 %v1385, %v1590
    %v1592 = vtanh.pop %v1591
    %v1593 = vsub.f32 %v1377, %v1592
    %v1594 = vmul.f32 %v1588, %v1593
    %v1595 = vadd.f32 %v1592, %v1594
    %s1596 = scalar_lea.vmem [#allocation3], 48
    %1597 = vst [vmem:[%s1596] sm:$0xff] %v1595
    %s1598 = smul.u32 7, 3
    %s1599 = smul.addr %s1598, 8
    %s1600 = scalar_lea.vmem %s0, %s1599
    %v1601 = vld [vmem:[%s1600] sm:$0xff]
    %v1602 = vld [vmem:[%s1600 + $0x8] sm:$0xff]
    %v1603 = vld [vmem:[%s1600 + $0x10] sm:$0xff]
    %v1604 = vld [vmem:[#allocation6] sm:$0xff]
    %v1605 = vld [vmem:[#allocation6 + $0x8] sm:$0xff]
    %v1606 = vld [vmem:[#allocation6 + $0x10] sm:$0xff]
    %v1607 = vld [vmem:[#allocation6 + $0x18] sm:$0xff]
    %v1608 = vld [vmem:[#allocation6 + $0x20] sm:$0xff]
    %v1609 = vld [vmem:[#allocation6 + $0x28] sm:$0xff]
    %v1610 = vld [vmem:[#allocation6 + $0x30] sm:$0xff]
    %v1611 = vld [vmem:[#allocation6 + $0x38] sm:$0xff]
    %v1612 = vld [vmem:[#allocation6 + $0x40] sm:$0xff]
    %v1613 = vld [vmem:[#allocation6 + $0x48] sm:$0xff]
    %v1614 = vld [vmem:[#allocation6 + $0x50] sm:$0xff]
    %v1615 = vld [vmem:[#allocation6 + $0x58] sm:$0xff]
    %v1616 = vld [vmem:[#allocation6 + $0x60] sm:$0xff]
    %v1617 = vld [vmem:[#allocation6 + $0x68] sm:$0xff]
    %v1618 = vld [vmem:[#allocation6 + $0x70] sm:$0xff]
    %v1619 = vld [vmem:[#allocation6 + $0x78] sm:$0xff]
    %v1620 = vld [vmem:[#allocation6 + $0x80] sm:$0xff]
    %v1621 = vld [vmem:[#allocation6 + $0x88] sm:$0xff]
    %v1622 = vld [vmem:[#allocation6 + $0x90] sm:$0xff]
    %v1623 = vld [vmem:[#allocation6 + $0x98] sm:$0xff]
    %v1624 = vld [vmem:[#allocation6 + $0xa0] sm:$0xff]
    %v1625 = vld [vmem:[#allocation6 + $0xa8] sm:$0xff]
    %v1626 = vld [vmem:[#allocation6 + $0xb0] sm:$0xff]
    %v1627 = vld [vmem:[#allocation6 + $0xb8] sm:$0xff]
    %v1628 = vld [vmem:[#allocation6 + $0xc0] sm:$0xff]
    %v1629 = vld [vmem:[#allocation6 + $0xc8] sm:$0xff]
    %v1630 = vld [vmem:[#allocation6 + $0xd0] sm:$0xff]
    %v1631 = vld [vmem:[#allocation6 + $0xd8] sm:$0xff]
    %v1632 = vld [vmem:[#allocation6 + $0xe0] sm:$0xff]
    %v1633 = vld [vmem:[#allocation6 + $0xe8] sm:$0xff]
    %v1634 = vld [vmem:[#allocation6 + $0xf0] sm:$0xff]
    %v1635 = vld [vmem:[#allocation6 + $0xf8] sm:$0xff]
    %v1636 = vld [vmem:[#allocation6 + $0x100] sm:$0xff]
    %v1637 = vld [vmem:[#allocation6 + $0x108] sm:$0xff]
    %v1638 = vld [vmem:[#allocation6 + $0x110] sm:$0xff]
    %v1639 = vld [vmem:[#allocation6 + $0x118] sm:$0xff]
    %v1640 = vld [vmem:[#allocation6 + $0x120] sm:$0xff]
    %v1641 = vld [vmem:[#allocation6 + $0x128] sm:$0xff]
    %v1642 = vld [vmem:[#allocation6 + $0x130] sm:$0xff]
    %v1643 = vld [vmem:[#allocation6 + $0x138] sm:$0xff]
    %v1644 = vld [vmem:[#allocation6 + $0x140] sm:$0xff]
    %v1645 = vld [vmem:[#allocation6 + $0x148] sm:$0xff]
    %v1646 = vld [vmem:[#allocation6 + $0x150] sm:$0xff]
    %v1647 = vld [vmem:[#allocation6 + $0x158] sm:$0xff]
    %v1648 = vld [vmem:[#allocation6 + $0x160] sm:$0xff]
    %v1649 = vld [vmem:[#allocation6 + $0x168] sm:$0xff]
    %v1650 = vld [vmem:[#allocation6 + $0x170] sm:$0xff]
    %v1651 = vld [vmem:[#allocation6 + $0x178] sm:$0xff]
    %1652 = vmatprep.subr.mxu0 %v1605
    %1653 = vmatpush1.msra.mxu0 %v1604
    %1654 = vmatprep.subr.mxu0 %v1608
    %1655 = vmatpush1.msra.mxu0 %v1607
    %1656 = vmatprep.subr.mxu0 %v1611
    %1657 = vmatpush1.msra.mxu0 %v1610
    %1658 = vmatprep.subr.mxu0 %v1614
    %1659 = vmatpush1.msra.mxu0 %v1613
    %1660 = vmatprep.subr.mxu0 %v1617
    %1661 = vmatpush1.msra.mxu0 %v1616
    %1662 = vmatprep.subr.mxu0 %v1620
    %1663 = vmatpush1.msra.mxu0 %v1619
    %1664 = vmatprep.subr.mxu0 %v1623
    %1665 = vmatpush1.msra.mxu0 %v1622
    %1666 = vmatprep.subr.mxu0 %v1626
    %1667 = vmatpush1.msra.mxu0 %v1625
    %1668 = vmatprep.subr.mxu0 %v1629
    %1669 = vmatpush1.msra.mxu0 %v1628
    %1670 = vmatprep.subr.mxu0 %v1632
    %1671 = vmatpush1.msra.mxu0 %v1631
    %1672 = vmatprep.subr.mxu0 %v1635
    %1673 = vmatpush1.msra.mxu0 %v1634
    %1674 = vmatprep.subr.mxu0 %v1638
    %1675 = vmatpush1.msra.mxu0 %v1637
    %1676 = vmatprep.subr.mxu0 %v1641
    %1677 = vmatpush1.msra.mxu0 %v1640
    %1678 = vmatprep.subr.mxu0 %v1644
    %1679 = vmatpush1.msra.mxu0 %v1643
    %1680 = vmatprep.subr.mxu0 %v1647
    %1681 = vmatpush1.msra.mxu0 %v1646
    %1682 = vmatprep.subr.mxu0 %v1650
    %1683 = vmatpush1.msra.mxu0 %v1649
    %1684 = vmatprep.subr.mxu0 0.0
    %1685 = vmatpush1.msra.mxu0 0.0
    %1686 = vmatprep.subr.mxu0 0.0
    %1687 = vmatpush1.msra.mxu0 0.0
    %1688 = vmatprep.subr.mxu0 0.0
    %1689 = vmatpush1.msra.mxu0 0.0
    %1690 = vmatprep.subr.mxu0 0.0
    %1691 = vmatpush1.msra.mxu0 0.0
    %1692 = vmatprep.subr.mxu0 0.0
    %1693 = vmatpush1.msra.mxu0 0.0
    %1694 = vmatprep.subr.mxu0 0.0
    %1695 = vmatpush1.msra.mxu0 0.0
    %1696 = vmatprep.subr.mxu0 0.0
    %1697 = vmatpush1.msra.mxu0 0.0
    %1698 = vmatprep.subr.mxu0 0.0
    %1699 = vmatpush1.msra.mxu0 0.0
    %1700 = vmatprep.subr.mxu0 0.0
    %1701 = vmatpush1.msra.mxu0 0.0
    %1702 = vmatprep.subr.mxu0 0.0
    %1703 = vmatpush1.msra.mxu0 0.0
    %1704 = vmatprep.subr.mxu0 0.0
    %1705 = vmatpush1.msra.mxu0 0.0
    %1706 = vmatprep.subr.mxu0 0.0
    %1707 = vmatpush1.msra.mxu0 0.0
    %1708 = vmatprep.subr.mxu0 0.0
    %1709 = vmatpush1.msra.mxu0 0.0
    %1710 = vmatprep.subr.mxu0 0.0
    %1711 = vmatpush1.msra.mxu0 0.0
    %1712 = vmatprep.subr.mxu0 0.0
    %1713 = vmatpush1.msra.mxu0 0.0
    %1714 = vmatprep.subr.mxu0 0.0
    %1715 = vmatpush1.msra.mxu0 0.0
    %1716 = vmatprep.mubr.f32.mxu0 0.0
    %1717 = vmatmul.mubr.f32.gmra.mrb[0].mxu0 %v1595
    %v1718 = vpop.f32.mrb[0].mxu0
    %v1719 = vadd.f32 0.0, %v1718
    %v1720 = vpop.f32.mrb[0].mxu0
    %v1721 = vadd.f32 0.0, %v1720
    %1722 = vdwg.mxu0
    %1723 = vmatprep.subr.mxu0 0.0
    %1724 = vmatpush1.msra.mxu0 %v1606
    %1725 = vmatprep.subr.mxu0 0.0
    %1726 = vmatpush1.msra.mxu0 %v1609
    %1727 = vmatprep.subr.mxu0 0.0
    %1728 = vmatpush1.msra.mxu0 %v1612
    %1729 = vmatprep.subr.mxu0 0.0
    %1730 = vmatpush1.msra.mxu0 %v1615
    %1731 = vmatprep.subr.mxu0 0.0
    %1732 = vmatpush1.msra.mxu0 %v1618
    %1733 = vmatprep.subr.mxu0 0.0
    %1734 = vmatpush1.msra.mxu0 %v1621
    %1735 = vmatprep.subr.mxu0 0.0
    %1736 = vmatpush1.msra.mxu0 %v1624
    %1737 = vmatprep.subr.mxu0 0.0
    %1738 = vmatpush1.msra.mxu0 %v1627
    %1739 = vmatprep.subr.mxu0 0.0
    %1740 = vmatpush1.msra.mxu0 %v1630
    %1741 = vmatprep.subr.mxu0 0.0
    %1742 = vmatpush1.msra.mxu0 %v1633
    %1743 = vmatprep.subr.mxu0 0.0
    %1744 = vmatpush1.msra.mxu0 %v1636
    %1745 = vmatprep.subr.mxu0 0.0
    %1746 = vmatpush1.msra.mxu0 %v1639
    %1747 = vmatprep.subr.mxu0 0.0
    %1748 = vmatpush1.msra.mxu0 %v1642
    %1749 = vmatprep.subr.mxu0 0.0
    %1750 = vmatpush1.msra.mxu0 %v1645
    %1751 = vmatprep.subr.mxu0 0.0
    %1752 = vmatpush1.msra.mxu0 %v1648
    %1753 = vmatprep.subr.mxu0 0.0
    %1754 = vmatpush1.msra.mxu0 %v1651
    %1755 = vmatprep.subr.mxu0 0.0
    %1756 = vmatpush1.msra.mxu0 0.0
    %1757 = vmatprep.subr.mxu0 0.0
    %1758 = vmatpush1.msra.mxu0 0.0
    %1759 = vmatprep.subr.mxu0 0.0
    %1760 = vmatpush1.msra.mxu0 0.0
    %1761 = vmatprep.subr.mxu0 0.0
    %1762 = vmatpush1.msra.mxu0 0.0
    %1763 = vmatprep.subr.mxu0 0.0
    %1764 = vmatpush1.msra.mxu0 0.0
    %1765 = vmatprep.subr.mxu0 0.0
    %1766 = vmatpush1.msra.mxu0 0.0
    %1767 = vmatprep.subr.mxu0 0.0
    %1768 = vmatpush1.msra.mxu0 0.0
    %1769 = vmatprep.subr.mxu0 0.0
    %1770 = vmatpush1.msra.mxu0 0.0
    %1771 = vmatprep.subr.mxu0 0.0
    %1772 = vmatpush1.msra.mxu0 0.0
    %1773 = vmatprep.subr.mxu0 0.0
    %1774 = vmatpush1.msra.mxu0 0.0
    %1775 = vmatprep.subr.mxu0 0.0
    %1776 = vmatpush1.msra.mxu0 0.0
    %1777 = vmatprep.subr.mxu0 0.0
    %1778 = vmatpush1.msra.mxu0 0.0
    %1779 = vmatprep.subr.mxu0 0.0
    %1780 = vmatpush1.msra.mxu0 0.0
    %1781 = vmatprep.subr.mxu0 0.0
    %1782 = vmatpush1.msra.mxu0 0.0
    %1783 = vmatprep.subr.mxu0 0.0
    %1784 = vmatpush1.msra.mxu0 0.0
    %1785 = vmatprep.subr.mxu0 0.0
    %1786 = vmatpush1.msra.mxu0 0.0
    %1787 = vmatprep.mubr.f32.mxu0 0.0
    %1788 = vmatmul.mubr.f32.gmra.mrb[0].mxu0 %v1595
    %v1789 = vpop.f32.mrb[0].mxu0
    %v1790 = vadd.f32 0.0, %v1789
    %v1791 = vpop.f32.mrb[0].mxu0
    %1792 = vdwg.mxu0
    %v1793 = vadd.f32 %v1601, %v1719
    %v1794 = vxor.u32 %v1793, 2147483648
    %v1795 = vmul.f32 %v1794, 1.442695
    %v1796 = vpow.pop %v1795
    %v1797 = vadd.f32 %v1796, 1.0
    %v1798 = vrcp.pop %v1797
    %v1799 = vmul.f32 1.0, %v1798
    %v1800 = vadd.f32 %v1602, %v1721
    %v1801 = vxor.u32 %v1800, 2147483648
    %v1802 = vmul.f32 %v1801, 1.442695
    %v1803 = vpow.pop %v1802
    %v1804 = vadd.f32 %v1803, 1.0
    %v1805 = vrcp.pop %v1804
    %v1806 = vmul.f32 1.0, %v1805
    %v1807 = vadd.f32 %v1790, %v70
    %v1808 = vmul.f32 %v1799, %v1807
    %v1809 = vadd.f32 %v1603, %v1808
    %v1810 = vtanh.pop %v1809
    %v1811 = vsub.f32 %v1595, %v1810
    %v1812 = vmul.f32 %v1806, %v1811
    %v1813 = vadd.f32 %v1810, %v1812
    %s1814 = scalar_lea.vmem [#allocation3], 56
    %1815 = vst [vmem:[%s1814] sm:$0xff] %v1813
    %1816 = vst [vmem:[%s7] sm:$0xff] %v1813
    %v1817 = vld [vmem:[#allocation3] sm:$0xff]
    %v1818 = vld [vmem:[#allocation3 + $0x8] sm:$0xff]
    %v1819 = vld [vmem:[#allocation3 + $0x10] sm:$0xff]
    %v1820 = vld [vmem:[#allocation3 + $0x18] sm:$0xff]
    %v1821 = vld [vmem:[#allocation3 + $0x20] sm:$0xff]
    %v1822 = vld [vmem:[#allocation3 + $0x28] sm:$0xff]
    %v1823 = vld [vmem:[#allocation3 + $0x30] sm:$0xff]
    %v1824 = vld [vmem:[#allocation3 + $0x38] sm:$0xff]
    %v1825 = vld [vmem:[#allocation4] sm:$0xff]
    %v1826 = vld [vmem:[#allocation4 + $0x8] sm:$0xff]
    %v1827 = vld [vmem:[#allocation4 + $0x10] sm:$0xff]
    %v1828 = vld [vmem:[#allocation4 + $0x18] sm:$0xff]
    %v1829 = vld [vmem:[#allocation4 + $0x20] sm:$0xff]
    %v1830 = vld [vmem:[#allocation4 + $0x28] sm:$0xff]
    %v1831 = vld [vmem:[#allocation4 + $0x30] sm:$0xff]
    %v1832 = vld [vmem:[#allocation4 + $0x38] sm:$0xff]
    %v1833 = vld [vmem:[#allocation4 + $0x40] sm:$0xff]
    %v1834 = vld [vmem:[#allocation4 + $0x48] sm:$0xff]
    %v1835 = vld [vmem:[#allocation4 + $0x50] sm:$0xff]
    %v1836 = vld [vmem:[#allocation4 + $0x58] sm:$0xff]
    %v1837 = vld [vmem:[#allocation4 + $0x60] sm:$0xff]
    %v1838 = vld [vmem:[#allocation4 + $0x68] sm:$0xff]
    %v1839 = vld [vmem:[#allocation4 + $0x70] sm:$0xff]
    %v1840 = vld [vmem:[#allocation4 + $0x78] sm:$0xff]
    %v1841 = vld [vmem:[#allocation4 + $0x80] sm:$0xff]
    %v1842 = vld [vmem:[#allocation4 + $0x88] sm:$0xff]
    %v1843 = vld [vmem:[#allocation4 + $0x90] sm:$0xff]
    %v1844 = vld [vmem:[#allocation4 + $0x98] sm:$0xff]
    %v1845 = vld [vmem:[#allocation4 + $0xa0] sm:$0xff]
    %v1846 = vld [vmem:[#allocation4 + $0xa8] sm:$0xff]
    %v1847 = vld [vmem:[#allocation4 + $0xb0] sm:$0xff]
    %v1848 = vld [vmem:[#allocation4 + $0xb8] sm:$0xff]
    %v1849 = vld [vmem:[#allocation4 + $0xc0] sm:$0xff]
    %v1850 = vld [vmem:[#allocation4 + $0xc8] sm:$0xff]
    %v1851 = vld [vmem:[#allocation4 + $0xd0] sm:$0xff]
    %v1852 = vld [vmem:[#allocation4 + $0xd8] sm:$0xff]
    %v1853 = vld [vmem:[#allocation4 + $0xe0] sm:$0xff]
    %v1854 = vld [vmem:[#allocation4 + $0xe8] sm:$0xff]
    %v1855 = vld [vmem:[#allocation4 + $0xf0] sm:$0xff]
    %v1856 = vld [vmem:[#allocation4 + $0xf8] sm:$0xff]
    %v1857 = vld [vmem:[#allocation4 + $0x100] sm:$0xff]
    %v1858 = vld [vmem:[#allocation4 + $0x108] sm:$0xff]
    %v1859 = vld [vmem:[#allocation4 + $0x110] sm:$0xff]
    %v1860 = vld [vmem:[#allocation4 + $0x118] sm:$0xff]
    %v1861 = vld [vmem:[#allocation4 + $0x120] sm:$0xff]
    %v1862 = vld [vmem:[#allocation4 + $0x128] sm:$0xff]
    %v1863 = vld [vmem:[#allocation4 + $0x130] sm:$0xff]
    %v1864 = vld [vmem:[#allocation4 + $0x138] sm:$0xff]
    %v1865 = vld [vmem:[#allocation4 + $0x140] sm:$0xff]
    %v1866 = vld [vmem:[#allocation4 + $0x148] sm:$0xff]
    %v1867 = vld [vmem:[#allocation4 + $0x150] sm:$0xff]
    %v1868 = vld [vmem:[#allocation4 + $0x158] sm:$0xff]
    %v1869 = vld [vmem:[#allocation4 + $0x160] sm:$0xff]
    %v1870 = vld [vmem:[#allocation4 + $0x168] sm:$0xff]
    %v1871 = vld [vmem:[#allocation4 + $0x170] sm:$0xff]
    %v1872 = vld [vmem:[#allocation4 + $0x178] sm:$0xff]
    %v1873 = vld [vmem:[%s4] sm:$0x7]
    %v1875 = vlaneseq
    %v1876 = vshrl.u32 %v1875, 7
    %v1877 = vsub.s32 0, %v1876
    %v1878 = vrot.slane %v1873, %v1877
    %v1879 = vlaneseq
    %v1880 = vshrl.u32 %v1879, 7
    %v1881 = vsub.s32 1, %v1880
    %v1882 = vrot.slane %v1873, %v1881
    %v1883 = vlaneseq
    %v1884 = vshrl.u32 %v1883, 7
    %v1885 = vsub.s32 2, %v1884
    %v1886 = vrot.slane %v1873, %v1885
    %1890 = vmatprep.subr.mxu0 %v1826
    %1891 = vmatpush1.msra.mxu0 %v1825
    %1892 = vmatprep.subr.mxu0 %v1829
    %1893 = vmatpush1.msra.mxu0 %v1828
    %1894 = vmatprep.subr.mxu0 %v1832
    %1895 = vmatpush1.msra.mxu0 %v1831
    %1896 = vmatprep.subr.mxu0 %v1835
    %1897 = vmatpush1.msra.mxu0 %v1834
    %1898 = vmatprep.subr.mxu0 %v1838
    %1899 = vmatpush1.msra.mxu0 %v1837
    %1900 = vmatprep.subr.mxu0 %v1841
    %1901 = vmatpush1.msra.mxu0 %v1840
    %1902 = vmatprep.subr.mxu0 %v1844
    %1903 = vmatpush1.msra.mxu0 %v1843
    %1904 = vmatprep.subr.mxu0 %v1847
    %1905 = vmatpush1.msra.mxu0 %v1846
    %1906 = vmatprep.subr.mxu0 %v1850
    %1907 = vmatpush1.msra.mxu0 %v1849
    %1908 = vmatprep.subr.mxu0 %v1853
    %1909 = vmatpush1.msra.mxu0 %v1852
    %1910 = vmatprep.subr.mxu0 %v1856
    %1911 = vmatpush1.msra.mxu0 %v1855
    %1912 = vmatprep.subr.mxu0 %v1859
    %1913 = vmatpush1.msra.mxu0 %v1858
    %1914 = vmatprep.subr.mxu0 %v1862
    %1915 = vmatpush1.msra.mxu0 %v1861
    %1916 = vmatprep.subr.mxu0 %v1865
    %1917 = vmatpush1.msra.mxu0 %v1864
    %1918 = vmatprep.subr.mxu0 %v1868
    %1919 = vmatpush1.msra.mxu0 %v1867
    %1920 = vmatprep.subr.mxu0 %v1871
    %1921 = vmatpush1.msra.mxu0 %v1870
    %1922 = vmatprep.subr.mxu0 0.0
    %1923 = vmatpush1.msra.mxu0 0.0
    %1924 = vmatprep.subr.mxu0 0.0
    %1925 = vmatpush1.msra.mxu0 0.0
    %1926 = vmatprep.subr.mxu0 0.0
    %1927 = vmatpush1.msra.mxu0 0.0
    %1928 = vmatprep.subr.mxu0 0.0
    %1929 = vmatpush1.msra.mxu0 0.0
    %1930 = vmatprep.subr.mxu0 0.0
    %1931 = vmatpush1.msra.mxu0 0.0
    %1932 = vmatprep.subr.mxu0 0.0
    %1933 = vmatpush1.msra.mxu0 0.0
    %1934 = vmatprep.subr.mxu0 0.0
    %1935 = vmatpush1.msra.mxu0 0.0
    %1936 = vmatprep.subr.mxu0 0.0
    %1937 = vmatpush1.msra.mxu0 0.0
    %1938 = vmatprep.subr.mxu0 0.0
    %1939 = vmatpush1.msra.mxu0 0.0
    %1940 = vmatprep.subr.mxu0 0.0
    %1941 = vmatpush1.msra.mxu0 0.0
    %1942 = vmatprep.subr.mxu0 0.0
    %1943 = vmatpush1.msra.mxu0 0.0
    %1944 = vmatprep.subr.mxu0 0.0
    %1945 = vmatpush1.msra.mxu0 0.0
    %1946 = vmatprep.subr.mxu0 0.0
    %1947 = vmatpush1.msra.mxu0 0.0
    %1948 = vmatprep.subr.mxu0 0.0
    %1949 = vmatpush1.msra.mxu0 0.0
    %1950 = vmatprep.subr.mxu0 0.0
    %1951 = vmatpush1.msra.mxu0 0.0
    %1952 = vmatprep.subr.mxu0 0.0
    %1953 = vmatpush1.msra.mxu0 0.0
    %1954 = vmatprep.mubr.f32.mxu0 0.0
    %1955 = vmatmul.mubr.f32.gmra.mrb[0].mxu0 %v1817
    %v1956 = vpop.f32.mrb[0].mxu0
    %v1957 = vadd.f32 %v1878, %v1956
    %v1958 = vpop.f32.mrb[0].mxu0
    %v1959 = vadd.f32 %v1882, %v1958
    %1960 = vmatprep.mubr.f32.mxu0 0.0
    %1961 = vmatmul.mubr.f32.gmra.mrb[0].mxu0 %v1818
    %v1962 = vpop.f32.mrb[0].mxu0
    %v1963 = vadd.f32 %v1878, %v1962
    %v1964 = vpop.f32.mrb[0].mxu0
    %v1965 = vadd.f32 %v1882, %v1964
    %1966 = vmatprep.mubr.f32.mxu0 0.0
    %1967 = vmatmul.mubr.f32.gmra.mrb[0].mxu0 %v1819
    %v1968 = vpop.f32.mrb[0].mxu0
    %v1969 = vadd.f32 %v1878, %v1968
    %v1970 = vpop.f32.mrb[0].mxu0
    %v1971 = vadd.f32 %v1882, %v1970
    %1972 = vmatprep.mubr.f32.mxu0 0.0
    %1973 = vmatmul.mubr.f32.gmra.mrb[0].mxu0 %v1820
    %v1974 = vpop.f32.mrb[0].mxu0
    %v1975 = vadd.f32 %v1878, %v1974
    %v1976 = vpop.f32.mrb[0].mxu0
    %v1977 = vadd.f32 %v1882, %v1976
    %1978 = vmatprep.mubr.f32.mxu0 0.0
    %1979 = vmatmul.mubr.f32.gmra.mrb[0].mxu0 %v1821
    %v1980 = vpop.f32.mrb[0].mxu0
    %v1981 = vadd.f32 %v1878, %v1980
    %v1982 = vpop.f32.mrb[0].mxu0
    %v1983 = vadd.f32 %v1882, %v1982
    %1984 = vmatprep.mubr.f32.mxu0 0.0
    %1985 = vmatmul.mubr.f32.gmra.mrb[0].mxu0 %v1822
    %v1986 = vpop.f32.mrb[0].mxu0
    %v1987 = vadd.f32 %v1878, %v1986
    %v1988 = vpop.f32.mrb[0].mxu0
    %v1989 = vadd.f32 %v1882, %v1988
    %1990 = vmatprep.mubr.f32.mxu0 0.0
    %1991 = vmatmul.mubr.f32.gmra.mrb[0].mxu0 %v1823
    %v1992 = vpop.f32.mrb[0].mxu0
    %v1993 = vadd.f32 %v1878, %v1992
    %v1994 = vpop.f32.mrb[0].mxu0
    %v1995 = vadd.f32 %v1882, %v1994
    %1996 = vmatprep.mubr.f32.mxu0 0.0
    %1997 = vmatmul.mubr.f32.gmra.mrb[0].mxu0 %v1824
    %v1998 = vpop.f32.mrb[0].mxu0
    %v1999 = vadd.f32 %v1878, %v1998
    %v2000 = vpop.f32.mrb[0].mxu0
    %v2001 = vadd.f32 %v1882, %v2000
    %2002 = vdwg.mxu0
    %2003 = vmatprep.subr.mxu0 0.0
    %2004 = vmatpush1.msra.mxu0 %v1827
    %2005 = vmatprep.subr.mxu0 0.0
    %2006 = vmatpush1.msra.mxu0 %v1830
    %2007 = vmatprep.subr.mxu0 0.0
    %2008 = vmatpush1.msra.mxu0 %v1833
    %2009 = vmatprep.subr.mxu0 0.0
    %2010 = vmatpush1.msra.mxu0 %v1836
    %2011 = vmatprep.subr.mxu0 0.0
    %2012 = vmatpush1.msra.mxu0 %v1839
    %2013 = vmatprep.subr.mxu0 0.0
    %2014 = vmatpush1.msra.mxu0 %v1842
    %2015 = vmatprep.subr.mxu0 0.0
    %2016 = vmatpush1.msra.mxu0 %v1845
    %2017 = vmatprep.subr.mxu0 0.0
    %2018 = vmatpush1.msra.mxu0 %v1848
    %2019 = vmatprep.subr.mxu0 0.0
    %2020 = vmatpush1.msra.mxu0 %v1851
    %2021 = vmatprep.subr.mxu0 0.0
    %2022 = vmatpush1.msra.mxu0 %v1854
    %2023 = vmatprep.subr.mxu0 0.0
    %2024 = vmatpush1.msra.mxu0 %v1857
    %2025 = vmatprep.subr.mxu0 0.0
    %2026 = vmatpush1.msra.mxu0 %v1860
    %2027 = vmatprep.subr.mxu0 0.0
    %2028 = vmatpush1.msra.mxu0 %v1863
    %2029 = vmatprep.subr.mxu0 0.0
    %2030 = vmatpush1.msra.mxu0 %v1866
    %2031 = vmatprep.subr.mxu0 0.0
    %2032 = vmatpush1.msra.mxu0 %v1869
    %2033 = vmatprep.subr.mxu0 0.0
    %2034 = vmatpush1.msra.mxu0 %v1872
    %2035 = vmatprep.subr.mxu0 0.0
    %2036 = vmatpush1.msra.mxu0 0.0
    %2037 = vmatprep.subr.mxu0 0.0
    %2038 = vmatpush1.msra.mxu0 0.0
    %2039 = vmatprep.subr.mxu0 0.0
    %2040 = vmatpush1.msra.mxu0 0.0
    %2041 = vmatprep.subr.mxu0 0.0
    %2042 = vmatpush1.msra.mxu0 0.0
    %2043 = vmatprep.subr.mxu0 0.0
    %2044 = vmatpush1.msra.mxu0 0.0
    %2045 = vmatprep.subr.mxu0 0.0
    %2046 = vmatpush1.msra.mxu0 0.0
    %2047 = vmatprep.subr.mxu0 0.0
    %2048 = vmatpush1.msra.mxu0 0.0
    %2049 = vmatprep.subr.mxu0 0.0
    %2050 = vmatpush1.msra.mxu0 0.0
    %2051 = vmatprep.subr.mxu0 0.0
    %2052 = vmatpush1.msra.mxu0 0.0
    %2053 = vmatprep.subr.mxu0 0.0
    %2054 = vmatpush1.msra.mxu0 0.0
    %2055 = vmatprep.subr.mxu0 0.0
    %2056 = vmatpush1.msra.mxu0 0.0
    %2057 = vmatprep.subr.mxu0 0.0
    %2058 = vmatpush1.msra.mxu0 0.0
    %2059 = vmatprep.subr.mxu0 0.0
    %2060 = vmatpush1.msra.mxu0 0.0
    %2061 = vmatprep.subr.mxu0 0.0
    %2062 = vmatpush1.msra.mxu0 0.0
    %2063 = vmatprep.subr.mxu0 0.0
    %2064 = vmatpush1.msra.mxu0 0.0
    %2065 = vmatprep.subr.mxu0 0.0
    %2066 = vmatpush1.msra.mxu0 0.0
    %2067 = vmatprep.mubr.f32.mxu0 0.0
    %2068 = vmatmul.mubr.f32.gmra.mrb[0].mxu0 %v1817
    %v2069 = vpop.f32.mrb[0].mxu0
    %v2070 = vadd.f32 %v1886, %v2069
    %v2071 = vpop.f32.mrb[0].mxu0
    %2072 = vmatprep.mubr.f32.mxu0 0.0
    %2073 = vmatmul.mubr.f32.gmra.mrb[0].mxu0 %v1818
    %v2074 = vpop.f32.mrb[0].mxu0
    %v2075 = vadd.f32 %v1886, %v2074
    %v2076 = vpop.f32.mrb[0].mxu0
    %2077 = vmatprep.mubr.f32.mxu0 0.0
    %2078 = vmatmul.mubr.f32.gmra.mrb[0].mxu0 %v1819
    %v2079 = vpop.f32.mrb[0].mxu0
    %v2080 = vadd.f32 %v1886, %v2079
    %v2081 = vpop.f32.mrb[0].mxu0
    %2082 = vmatprep.mubr.f32.mxu0 0.0
    %2083 = vmatmul.mubr.f32.gmra.mrb[0].mxu0 %v1820
    %v2084 = vpop.f32.mrb[0].mxu0
    %v2085 = vadd.f32 %v1886, %v2084
    %v2086 = vpop.f32.mrb[0].mxu0
    %2087 = vmatprep.mubr.f32.mxu0 0.0
    %2088 = vmatmul.mubr.f32.gmra.mrb[0].mxu0 %v1821
    %v2089 = vpop.f32.mrb[0].mxu0
    %v2090 = vadd.f32 %v1886, %v2089
    %v2091 = vpop.f32.mrb[0].mxu0
    %2092 = vmatprep.mubr.f32.mxu0 0.0
    %2093 = vmatmul.mubr.f32.gmra.mrb[0].mxu0 %v1822
    %v2094 = vpop.f32.mrb[0].mxu0
    %v2095 = vadd.f32 %v1886, %v2094
    %v2096 = vpop.f32.mrb[0].mxu0
    %2097 = vmatprep.mubr.f32.mxu0 0.0
    %2098 = vmatmul.mubr.f32.gmra.mrb[0].mxu0 %v1823
    %v2099 = vpop.f32.mrb[0].mxu0
    %v2100 = vadd.f32 %v1886, %v2099
    %v2101 = vpop.f32.mrb[0].mxu0
    %2102 = vmatprep.mubr.f32.mxu0 0.0
    %2103 = vmatmul.mubr.f32.gmra.mrb[0].mxu0 %v1824
    %v2104 = vpop.f32.mrb[0].mxu0
    %v2105 = vadd.f32 %v1886, %v2104
    %v2106 = vpop.f32.mrb[0].mxu0
    %2107 = vdwg.mxu0
    %2108 = vst [vmem:[#allocation2] sm:$0xff] %v1957
    %2109 = vst [vmem:[#allocation2 + $0x8] sm:$0xff] %v1959
    %2110 = vst [vmem:[#allocation2 + $0x10] sm:$0xff] %v2070
    %2111 = vst [vmem:[#allocation2 + $0x18] sm:$0xff] %v1963
    %2112 = vst [vmem:[#allocation2 + $0x20] sm:$0xff] %v1965
    %2113 = vst [vmem:[#allocation2 + $0x28] sm:$0xff] %v2075
    %2114 = vst [vmem:[#allocation2 + $0x30] sm:$0xff] %v1969
    %2115 = vst [vmem:[#allocation2 + $0x38] sm:$0xff] %v1971
    %2116 = vst [vmem:[#allocation2 + $0x40] sm:$0xff] %v2080
    %2117 = vst [vmem:[#allocation2 + $0x48] sm:$0xff] %v1975
    %2118 = vst [vmem:[#allocation2 + $0x50] sm:$0xff] %v1977
    %2119 = vst [vmem:[#allocation2 + $0x58] sm:$0xff] %v2085
    %2120 = vst [vmem:[#allocation2 + $0x60] sm:$0xff] %v1981
    %2121 = vst [vmem:[#allocation2 + $0x68] sm:$0xff] %v1983
    %2122 = vst [vmem:[#allocation2 + $0x70] sm:$0xff] %v2090
    %2123 = vst [vmem:[#allocation2 + $0x78] sm:$0xff] %v1987
    %2124 = vst [vmem:[#allocation2 + $0x80] sm:$0xff] %v1989
    %2125 = vst [vmem:[#allocation2 + $0x88] sm:$0xff] %v2095
    %2126 = vst [vmem:[#allocation2 + $0x90] sm:$0xff] %v1993
    %2127 = vst [vmem:[#allocation2 + $0x98] sm:$0xff] %v1995
    %2128 = vst [vmem:[#allocation2 + $0xa0] sm:$0xff] %v2100
    %2129 = vst [vmem:[#allocation2 + $0xa8] sm:$0xff] %v1999
    %2130 = vst [vmem:[#allocation2 + $0xb0] sm:$0xff] %v2001
    %2131 = vst [vmem:[#allocation2 + $0xb8] sm:$0xff] %v2105
    %s2132 = scalar_lea.vmem %s5, 1
    %v2133 = vld [vmem:[%s2132] sm:$0x1]
    %v2135 = vlaneseq
    %v2136 = vshrl.u32 %v2135, 7
    %v2137 = vsub.s32 0, %v2136
    %v2138 = vrot.slane %v2133, %v2137
    %s2140 = scalar_lea.vmem %s7, 8
    %v2141 = vld [vmem:[%s2140] sm:$0xff]
    %s2142 = smul.addr %s73, 8
    %s2143 = scalar_lea.vmem [#allocation2], %s2142
    %v2144 = vld [vmem:[%s2143] sm:$0xff]
    %v2145 = vld [vmem:[%s2143 + $0x8] sm:$0xff]
    %v2146 = vld [vmem:[%s2143 + $0x10] sm:$0xff]
    %s2147 = scalar_lea.vmem [#allocation6], 384
    %v2148 = vld [vmem:[%s2147] sm:$0xff]
    %v2149 = vld [vmem:[%s2147 + $0x8] sm:$0xff]
    %v2150 = vld [vmem:[%s2147 + $0x10] sm:$0xff]
    %v2151 = vld [vmem:[%s2147 + $0x18] sm:$0xff]
    %v2152 = vld [vmem:[%s2147 + $0x20] sm:$0xff]
    %v2153 = vld [vmem:[%s2147 + $0x28] sm:$0xff]
    %v2154 = vld [vmem:[%s2147 + $0x30] sm:$0xff]
    %v2155 = vld [vmem:[%s2147 + $0x38] sm:$0xff]
    %v2156 = vld [vmem:[%s2147 + $0x40] sm:$0xff]
    %v2157 = vld [vmem:[%s2147 + $0x48] sm:$0xff]
    %v2158 = vld [vmem:[%s2147 + $0x50] sm:$0xff]
    %v2159 = vld [vmem:[%s2147 + $0x58] sm:$0xff]
    %v2160 = vld [vmem:[%s2147 + $0x60] sm:$0xff]
    %v2161 = vld [vmem:[%s2147 + $0x68] sm:$0xff]
    %v2162 = vld [vmem:[%s2147 + $0x70] sm:$0xff]
    %v2163 = vld [vmem:[%s2147 + $0x78] sm:$0xff]
    %v2164 = vld [vmem:[%s2147 + $0x80] sm:$0xff]
    %v2165 = vld [vmem:[%s2147 + $0x88] sm:$0xff]
    %v2166 = vld [vmem:[%s2147 + $0x90] sm:$0xff]
    %v2167 = vld [vmem:[%s2147 + $0x98] sm:$0xff]
    %v2168 = vld [vmem:[%s2147 + $0xa0] sm:$0xff]
    %v2169 = vld [vmem:[%s2147 + $0xa8] sm:$0xff]
    %v2170 = vld [vmem:[%s2147 + $0xb0] sm:$0xff]
    %v2171 = vld [vmem:[%s2147 + $0xb8] sm:$0xff]
    %v2172 = vld [vmem:[%s2147 + $0xc0] sm:$0xff]
    %v2173 = vld [vmem:[%s2147 + $0xc8] sm:$0xff]
    %v2174 = vld [vmem:[%s2147 + $0xd0] sm:$0xff]
    %v2175 = vld [vmem:[%s2147 + $0xd8] sm:$0xff]
    %v2176 = vld [vmem:[%s2147 + $0xe0] sm:$0xff]
    %v2177 = vld [vmem:[%s2147 + $0xe8] sm:$0xff]
    %v2178 = vld [vmem:[%s2147 + $0xf0] sm:$0xff]
    %v2179 = vld [vmem:[%s2147 + $0xf8] sm:$0xff]
    %v2180 = vld [vmem:[%s2147 + $0x100] sm:$0xff]
    %v2181 = vld [vmem:[%s2147 + $0x108] sm:$0xff]
    %v2182 = vld [vmem:[%s2147 + $0x110] sm:$0xff]
    %v2183 = vld [vmem:[%s2147 + $0x118] sm:$0xff]
    %v2184 = vld [vmem:[%s2147 + $0x120] sm:$0xff]
    %v2185 = vld [vmem:[%s2147 + $0x128] sm:$0xff]
    %v2186 = vld [vmem:[%s2147 + $0x130] sm:$0xff]
    %v2187 = vld [vmem:[%s2147 + $0x138] sm:$0xff]
    %v2188 = vld [vmem:[%s2147 + $0x140] sm:$0xff]
    %v2189 = vld [vmem:[%s2147 + $0x148] sm:$0xff]
    %v2190 = vld [vmem:[%s2147 + $0x150] sm:$0xff]
    %v2191 = vld [vmem:[%s2147 + $0x158] sm:$0xff]
    %v2192 = vld [vmem:[%s2147 + $0x160] sm:$0xff]
    %v2193 = vld [vmem:[%s2147 + $0x168] sm:$0xff]
    %v2194 = vld [vmem:[%s2147 + $0x170] sm:$0xff]
    %v2195 = vld [vmem:[%s2147 + $0x178] sm:$0xff]
    %2196 = vmatprep.subr.mxu0 %v2149
    %2197 = vmatpush1.msra.mxu0 %v2148
    %2198 = vmatprep.subr.mxu0 %v2152
    %2199 = vmatpush1.msra.mxu0 %v2151
    %2200 = vmatprep.subr.mxu0 %v2155
    %2201 = vmatpush1.msra.mxu0 %v2154
    %2202 = vmatprep.subr.mxu0 %v2158
    %2203 = vmatpush1.msra.mxu0 %v2157
    %2204 = vmatprep.subr.mxu0 %v2161
    %2205 = vmatpush1.msra.mxu0 %v2160
    %2206 = vmatprep.subr.mxu0 %v2164
    %2207 = vmatpush1.msra.mxu0 %v2163
    %2208 = vmatprep.subr.mxu0 %v2167
    %2209 = vmatpush1.msra.mxu0 %v2166
    %2210 = vmatprep.subr.mxu0 %v2170
    %2211 = vmatpush1.msra.mxu0 %v2169
    %2212 = vmatprep.subr.mxu0 %v2173
    %2213 = vmatpush1.msra.mxu0 %v2172
    %2214 = vmatprep.subr.mxu0 %v2176
    %2215 = vmatpush1.msra.mxu0 %v2175
    %2216 = vmatprep.subr.mxu0 %v2179
    %2217 = vmatpush1.msra.mxu0 %v2178
    %2218 = vmatprep.subr.mxu0 %v2182
    %2219 = vmatpush1.msra.mxu0 %v2181
    %2220 = vmatprep.subr.mxu0 %v2185
    %2221 = vmatpush1.msra.mxu0 %v2184
    %2222 = vmatprep.subr.mxu0 %v2188
    %2223 = vmatpush1.msra.mxu0 %v2187
    %2224 = vmatprep.subr.mxu0 %v2191
    %2225 = vmatpush1.msra.mxu0 %v2190
    %2226 = vmatprep.subr.mxu0 %v2194
    %2227 = vmatpush1.msra.mxu0 %v2193
    %2228 = vmatprep.subr.mxu0 0.0
    %2229 = vmatpush1.msra.mxu0 0.0
    %2230 = vmatprep.subr.mxu0 0.0
    %2231 = vmatpush1.msra.mxu0 0.0
    %2232 = vmatprep.subr.mxu0 0.0
    %2233 = vmatpush1.msra.mxu0 0.0
    %2234 = vmatprep.subr.mxu0 0.0
    %2235 = vmatpush1.msra.mxu0 0.0
    %2236 = vmatprep.subr.mxu0 0.0
    %2237 = vmatpush1.msra.mxu0 0.0
    %2238 = vmatprep.subr.mxu0 0.0
    %2239 = vmatpush1.msra.mxu0 0.0
    %2240 = vmatprep.subr.mxu0 0.0
    %2241 = vmatpush1.msra.mxu0 0.0
    %2242 = vmatprep.subr.mxu0 0.0
    %2243 = vmatpush1.msra.mxu0 0.0
    %2244 = vmatprep.subr.mxu0 0.0
    %2245 = vmatpush1.msra.mxu0 0.0
    %2246 = vmatprep.subr.mxu0 0.0
    %2247 = vmatpush1.msra.mxu0 0.0
    %2248 = vmatprep.subr.mxu0 0.0
    %2249 = vmatpush1.msra.mxu0 0.0
    %2250 = vmatprep.subr.mxu0 0.0
    %2251 = vmatpush1.msra.mxu0 0.0
    %2252 = vmatprep.subr.mxu0 0.0
    %2253 = vmatpush1.msra.mxu0 0.0
    %2254 = vmatprep.subr.mxu0 0.0
    %2255 = vmatpush1.msra.mxu0 0.0
    %2256 = vmatprep.subr.mxu0 0.0
    %2257 = vmatpush1.msra.mxu0 0.0
    %2258 = vmatprep.subr.mxu0 0.0
    %2259 = vmatpush1.msra.mxu0 0.0
    %2260 = vmatprep.mubr.f32.mxu0 0.0
    %2261 = vmatmul.mubr.f32.gmra.mrb[0].mxu0 %v2141
    %v2262 = vpop.f32.mrb[0].mxu0
    %v2263 = vadd.f32 0.0, %v2262
    %v2264 = vpop.f32.mrb[0].mxu0
    %v2265 = vadd.f32 0.0, %v2264
    %2266 = vdwg.mxu0
    %2267 = vmatprep.subr.mxu0 0.0
    %2268 = vmatpush1.msra.mxu0 %v2150
    %2269 = vmatprep.subr.mxu0 0.0
    %2270 = vmatpush1.msra.mxu0 %v2153
    %2271 = vmatprep.subr.mxu0 0.0
    %2272 = vmatpush1.msra.mxu0 %v2156
    %2273 = vmatprep.subr.mxu0 0.0
    %2274 = vmatpush1.msra.mxu0 %v2159
    %2275 = vmatprep.subr.mxu0 0.0
    %2276 = vmatpush1.msra.mxu0 %v2162
    %2277 = vmatprep.subr.mxu0 0.0
    %2278 = vmatpush1.msra.mxu0 %v2165
    %2279 = vmatprep.subr.mxu0 0.0
    %2280 = vmatpush1.msra.mxu0 %v2168
    %2281 = vmatprep.subr.mxu0 0.0
    %2282 = vmatpush1.msra.mxu0 %v2171
    %2283 = vmatprep.subr.mxu0 0.0
    %2284 = vmatpush1.msra.mxu0 %v2174
    %2285 = vmatprep.subr.mxu0 0.0
    %2286 = vmatpush1.msra.mxu0 %v2177
    %2287 = vmatprep.subr.mxu0 0.0
    %2288 = vmatpush1.msra.mxu0 %v2180
    %2289 = vmatprep.subr.mxu0 0.0
    %2290 = vmatpush1.msra.mxu0 %v2183
    %2291 = vmatprep.subr.mxu0 0.0
    %2292 = vmatpush1.msra.mxu0 %v2186
    %2293 = vmatprep.subr.mxu0 0.0
    %2294 = vmatpush1.msra.mxu0 %v2189
    %2295 = vmatprep.subr.mxu0 0.0
    %2296 = vmatpush1.msra.mxu0 %v2192
    %2297 = vmatprep.subr.mxu0 0.0
    %2298 = vmatpush1.msra.mxu0 %v2195
    %2299 = vmatprep.subr.mxu0 0.0
    %2300 = vmatpush1.msra.mxu0 0.0
    %2301 = vmatprep.subr.mxu0 0.0
    %2302 = vmatpush1.msra.mxu0 0.0
    %2303 = vmatprep.subr.mxu0 0.0
    %2304 = vmatpush1.msra.mxu0 0.0
    %2305 = vmatprep.subr.mxu0 0.0
    %2306 = vmatpush1.msra.mxu0 0.0
    %2307 = vmatprep.subr.mxu0 0.0
    %2308 = vmatpush1.msra.mxu0 0.0
    %2309 = vmatprep.subr.mxu0 0.0
    %2310 = vmatpush1.msra.mxu0 0.0
    %2311 = vmatprep.subr.mxu0 0.0
    %2312 = vmatpush1.msra.mxu0 0.0
    %2313 = vmatprep.subr.mxu0 0.0
    %2314 = vmatpush1.msra.mxu0 0.0
    %2315 = vmatprep.subr.mxu0 0.0
    %2316 = vmatpush1.msra.mxu0 0.0
    %2317 = vmatprep.subr.mxu0 0.0
    %2318 = vmatpush1.msra.mxu0 0.0
    %2319 = vmatprep.subr.mxu0 0.0
    %2320 = vmatpush1.msra.mxu0 0.0
    %2321 = vmatprep.subr.mxu0 0.0
    %2322 = vmatpush1.msra.mxu0 0.0
    %2323 = vmatprep.subr.mxu0 0.0
    %2324 = vmatpush1.msra.mxu0 0.0
    %2325 = vmatprep.subr.mxu0 0.0
    %2326 = vmatpush1.msra.mxu0 0.0
    %2327 = vmatprep.subr.mxu0 0.0
    %2328 = vmatpush1.msra.mxu0 0.0
    %2329 = vmatprep.subr.mxu0 0.0
    %2330 = vmatpush1.msra.mxu0 0.0
    %2331 = vmatprep.mubr.f32.mxu0 0.0
    %2332 = vmatmul.mubr.f32.gmra.mrb[0].mxu0 %v2141
    %v2333 = vpop.f32.mrb[0].mxu0
    %v2334 = vadd.f32 0.0, %v2333
    %v2335 = vpop.f32.mrb[0].mxu0
    %2336 = vdwg.mxu0
    %v2337 = vadd.f32 %v2144, %v2263
    %v2338 = vxor.u32 %v2337, 2147483648
    %v2339 = vmul.f32 %v2338, 1.442695
    %v2340 = vpow.pop %v2339
    %v2341 = vadd.f32 %v2340, 1.0
    %v2342 = vrcp.pop %v2341
    %v2343 = vmul.f32 1.0, %v2342
    %v2344 = vadd.f32 %v2145, %v2265
    %v2345 = vxor.u32 %v2344, 2147483648
    %v2346 = vmul.f32 %v2345, 1.442695
    %v2347 = vpow.pop %v2346
    %v2348 = vadd.f32 %v2347, 1.0
    %v2349 = vrcp.pop %v2348
    %v2350 = vmul.f32 1.0, %v2349
    %v2351 = vadd.f32 %v2334, %v2138
    %v2352 = vmul.f32 %v2343, %v2351
    %v2353 = vadd.f32 %v2146, %v2352
    %v2354 = vtanh.pop %v2353
    %v2355 = vsub.f32 %v2141, %v2354
    %v2356 = vmul.f32 %v2350, %v2355
    %v2357 = vadd.f32 %v2354, %v2356
    %2358 = vst [vmem:[#allocation3] sm:$0xff] %v2357
    %s2359 = smul.addr %s290, 8
    %s2360 = scalar_lea.vmem [#allocation2], %s2359
    %v2361 = vld [vmem:[%s2360] sm:$0xff]
    %v2362 = vld [vmem:[%s2360 + $0x8] sm:$0xff]
    %v2363 = vld [vmem:[%s2360 + $0x10] sm:$0xff]
    %v2364 = vld [vmem:[%s2147] sm:$0xff]
    %v2365 = vld [vmem:[%s2147 + $0x8] sm:$0xff]
    %v2366 = vld [vmem:[%s2147 + $0x10] sm:$0xff]
    %v2367 = vld [vmem:[%s2147 + $0x18] sm:$0xff]
    %v2368 = vld [vmem:[%s2147 + $0x20] sm:$0xff]
    %v2369 = vld [vmem:[%s2147 + $0x28] sm:$0xff]
    %v2370 = vld [vmem:[%s2147 + $0x30] sm:$0xff]
    %v2371 = vld [vmem:[%s2147 + $0x38] sm:$0xff]
    %v2372 = vld [vmem:[%s2147 + $0x40] sm:$0xff]
    %v2373 = vld [vmem:[%s2147 + $0x48] sm:$0xff]
    %v2374 = vld [vmem:[%s2147 + $0x50] sm:$0xff]
    %v2375 = vld [vmem:[%s2147 + $0x58] sm:$0xff]
    %v2376 = vld [vmem:[%s2147 + $0x60] sm:$0xff]
    %v2377 = vld [vmem:[%s2147 + $0x68] sm:$0xff]
    %v2378 = vld [vmem:[%s2147 + $0x70] sm:$0xff]
    %v2379 = vld [vmem:[%s2147 + $0x78] sm:$0xff]
    %v2380 = vld [vmem:[%s2147 + $0x80] sm:$0xff]
    %v2381 = vld [vmem:[%s2147 + $0x88] sm:$0xff]
    %v2382 = vld [vmem:[%s2147 + $0x90] sm:$0xff]
    %v2383 = vld [vmem:[%s2147 + $0x98] sm:$0xff]
    %v2384 = vld [vmem:[%s2147 + $0xa0] sm:$0xff]
    %v2385 = vld [vmem:[%s2147 + $0xa8] sm:$0xff]
    %v2386 = vld [vmem:[%s2147 + $0xb0] sm:$0xff]
    %v2387 = vld [vmem:[%s2147 + $0xb8] sm:$0xff]
    %v2388 = vld [vmem:[%s2147 + $0xc0] sm:$0xff]
    %v2389 = vld [vmem:[%s2147 + $0xc8] sm:$0xff]
    %v2390 = vld [vmem:[%s2147 + $0xd0] sm:$0xff]
    %v2391 = vld [vmem:[%s2147 + $0xd8] sm:$0xff]
    %v2392 = vld [vmem:[%s2147 + $0xe0] sm:$0xff]
    %v2393 = vld [vmem:[%s2147 + $0xe8] sm:$0xff]
    %v2394 = vld [vmem:[%s2147 + $0xf0] sm:$0xff]
    %v2395 = vld [vmem:[%s2147 + $0xf8] sm:$0xff]
    %v2396 = vld [vmem:[%s2147 + $0x100] sm:$0xff]
    %v2397 = vld [vmem:[%s2147 + $0x108] sm:$0xff]
    %v2398 = vld [vmem:[%s2147 + $0x110] sm:$0xff]
    %v2399 = vld [vmem:[%s2147 + $0x118] sm:$0xff]
    %v2400 = vld [vmem:[%s2147 + $0x120] sm:$0xff]
    %v2401 = vld [vmem:[%s2147 + $0x128] sm:$0xff]
    %v2402 = vld [vmem:[%s2147 + $0x130] sm:$0xff]
    %v2403 = vld [vmem:[%s2147 + $0x138] sm:$0xff]
    %v2404 = vld [vmem:[%s2147 + $0x140] sm:$0xff]
    %v2405 = vld [vmem:[%s2147 + $0x148] sm:$0xff]
    %v2406 = vld [vmem:[%s2147 + $0x150] sm:$0xff]
    %v2407 = vld [vmem:[%s2147 + $0x158] sm:$0xff]
    %v2408 = vld [vmem:[%s2147 + $0x160] sm:$0xff]
    %v2409 = vld [vmem:[%s2147 + $0x168] sm:$0xff]
    %v2410 = vld [vmem:[%s2147 + $0x170] sm:$0xff]
    %v2411 = vld [vmem:[%s2147 + $0x178] sm:$0xff]
    %2412 = vmatprep.subr.mxu0 %v2365
    %2413 = vmatpush1.msra.mxu0 %v2364
    %2414 = vmatprep.subr.mxu0 %v2368
    %2415 = vmatpush1.msra.mxu0 %v2367
    %2416 = vmatprep.subr.mxu0 %v2371
    %2417 = vmatpush1.msra.mxu0 %v2370
    %2418 = vmatprep.subr.mxu0 %v2374
    %2419 = vmatpush1.msra.mxu0 %v2373
    %2420 = vmatprep.subr.mxu0 %v2377
    %2421 = vmatpush1.msra.mxu0 %v2376
    %2422 = vmatprep.subr.mxu0 %v2380
    %2423 = vmatpush1.msra.mxu0 %v2379
    %2424 = vmatprep.subr.mxu0 %v2383
    %2425 = vmatpush1.msra.mxu0 %v2382
    %2426 = vmatprep.subr.mxu0 %v2386
    %2427 = vmatpush1.msra.mxu0 %v2385
    %2428 = vmatprep.subr.mxu0 %v2389
    %2429 = vmatpush1.msra.mxu0 %v2388
    %2430 = vmatprep.subr.mxu0 %v2392
    %2431 = vmatpush1.msra.mxu0 %v2391
    %2432 = vmatprep.subr.mxu0 %v2395
    %2433 = vmatpush1.msra.mxu0 %v2394
    %2434 = vmatprep.subr.mxu0 %v2398
    %2435 = vmatpush1.msra.mxu0 %v2397
    %2436 = vmatprep.subr.mxu0 %v2401
    %2437 = vmatpush1.msra.mxu0 %v2400
    %2438 = vmatprep.subr.mxu0 %v2404
    %2439 = vmatpush1.msra.mxu0 %v2403
    %2440 = vmatprep.subr.mxu0 %v2407
    %2441 = vmatpush1.msra.mxu0 %v2406
    %2442 = vmatprep.subr.mxu0 %v2410
    %2443 = vmatpush1.msra.mxu0 %v2409
    %2444 = vmatprep.subr.mxu0 0.0
    %2445 = vmatpush1.msra.mxu0 0.0
    %2446 = vmatprep.subr.mxu0 0.0
    %2447 = vmatpush1.msra.mxu0 0.0
    %2448 = vmatprep.subr.mxu0 0.0
    %2449 = vmatpush1.msra.mxu0 0.0
    %2450 = vmatprep.subr.mxu0 0.0
    %2451 = vmatpush1.msra.mxu0 0.0
    %2452 = vmatprep.subr.mxu0 0.0
    %2453 = vmatpush1.msra.mxu0 0.0
    %2454 = vmatprep.subr.mxu0 0.0
    %2455 = vmatpush1.msra.mxu0 0.0
    %2456 = vmatprep.subr.mxu0 0.0
    %2457 = vmatpush1.msra.mxu0 0.0
    %2458 = vmatprep.subr.mxu0 0.0
    %2459 = vmatpush1.msra.mxu0 0.0
    %2460 = vmatprep.subr.mxu0 0.0
    %2461 = vmatpush1.msra.mxu0 0.0
    %2462 = vmatprep.subr.mxu0 0.0
    %2463 = vmatpush1.msra.mxu0 0.0
    %2464 = vmatprep.subr.mxu0 0.0
    %2465 = vmatpush1.msra.mxu0 0.0
    %2466 = vmatprep.subr.mxu0 0.0
    %2467 = vmatpush1.msra.mxu0 0.0
    %2468 = vmatprep.subr.mxu0 0.0
    %2469 = vmatpush1.msra.mxu0 0.0
    %2470 = vmatprep.subr.mxu0 0.0
    %2471 = vmatpush1.msra.mxu0 0.0
    %2472 = vmatprep.subr.mxu0 0.0
    %2473 = vmatpush1.msra.mxu0 0.0
    %2474 = vmatprep.subr.mxu0 0.0
    %2475 = vmatpush1.msra.mxu0 0.0
    %2476 = vmatprep.mubr.f32.mxu0 0.0
    %2477 = vmatmul.mubr.f32.gmra.mrb[0].mxu0 %v2357
    %v2478 = vpop.f32.mrb[0].mxu0
    %v2479 = vadd.f32 0.0, %v2478
    %v2480 = vpop.f32.mrb[0].mxu0
    %v2481 = vadd.f32 0.0, %v2480
    %2482 = vdwg.mxu0
    %2483 = vmatprep.subr.mxu0 0.0
    %2484 = vmatpush1.msra.mxu0 %v2366
    %2485 = vmatprep.subr.mxu0 0.0
    %2486 = vmatpush1.msra.mxu0 %v2369
    %2487 = vmatprep.subr.mxu0 0.0
    %2488 = vmatpush1.msra.mxu0 %v2372
    %2489 = vmatprep.subr.mxu0 0.0
    %2490 = vmatpush1.msra.mxu0 %v2375
    %2491 = vmatprep.subr.mxu0 0.0
    %2492 = vmatpush1.msra.mxu0 %v2378
    %2493 = vmatprep.subr.mxu0 0.0
    %2494 = vmatpush1.msra.mxu0 %v2381
    %2495 = vmatprep.subr.mxu0 0.0
    %2496 = vmatpush1.msra.mxu0 %v2384
    %2497 = vmatprep.subr.mxu0 0.0
    %2498 = vmatpush1.msra.mxu0 %v2387
    %2499 = vmatprep.subr.mxu0 0.0
    %2500 = vmatpush1.msra.mxu0 %v2390
    %2501 = vmatprep.subr.mxu0 0.0
    %2502 = vmatpush1.msra.mxu0 %v2393
    %2503 = vmatprep.subr.mxu0 0.0
    %2504 = vmatpush1.msra.mxu0 %v2396
    %2505 = vmatprep.subr.mxu0 0.0
    %2506 = vmatpush1.msra.mxu0 %v2399
    %2507 = vmatprep.subr.mxu0 0.0
    %2508 = vmatpush1.msra.mxu0 %v2402
    %2509 = vmatprep.subr.mxu0 0.0
    %2510 = vmatpush1.msra.mxu0 %v2405
    %2511 = vmatprep.subr.mxu0 0.0
    %2512 = vmatpush1.msra.mxu0 %v2408
    %2513 = vmatprep.subr.mxu0 0.0
    %2514 = vmatpush1.msra.mxu0 %v2411
    %2515 = vmatprep.subr.mxu0 0.0
    %2516 = vmatpush1.msra.mxu0 0.0
    %2517 = vmatprep.subr.mxu0 0.0
    %2518 = vmatpush1.msra.mxu0 0.0
    %2519 = vmatprep.subr.mxu0 0.0
    %2520 = vmatpush1.msra.mxu0 0.0
    %2521 = vmatprep.subr.mxu0 0.0
    %2522 = vmatpush1.msra.mxu0 0.0
    %2523 = vmatprep.subr.mxu0 0.0
    %2524 = vmatpush1.msra.mxu0 0.0
    %2525 = vmatprep.subr.mxu0 0.0
    %2526 = vmatpush1.msra.mxu0 0.0
    %2527 = vmatprep.subr.mxu0 0.0
    %2528 = vmatpush1.msra.mxu0 0.0
    %2529 = vmatprep.subr.mxu0 0.0
    %2530 = vmatpush1.msra.mxu0 0.0
    %2531 = vmatprep.subr.mxu0 0.0
    %2532 = vmatpush1.msra.mxu0 0.0
    %2533 = vmatprep.subr.mxu0 0.0
    %2534 = vmatpush1.msra.mxu0 0.0
    %2535 = vmatprep.subr.mxu0 0.0
    %2536 = vmatpush1.msra.mxu0 0.0
    %2537 = vmatprep.subr.mxu0 0.0
    %2538 = vmatpush1.msra.mxu0 0.0
    %2539 = vmatprep.subr.mxu0 0.0
    %2540 = vmatpush1.msra.mxu0 0.0
    %2541 = vmatprep.subr.mxu0 0.0
    %2542 = vmatpush1.msra.mxu0 0.0
    %2543 = vmatprep.subr.mxu0 0.0
    %2544 = vmatpush1.msra.mxu0 0.0
    %2545 = vmatprep.subr.mxu0 0.0
    %2546 = vmatpush1.msra.mxu0 0.0
    %2547 = vmatprep.mubr.f32.mxu0 0.0
    %2548 = vmatmul.mubr.f32.gmra.mrb[0].mxu0 %v2357
    %v2549 = vpop.f32.mrb[0].mxu0
    %v2550 = vadd.f32 0.0, %v2549
    %v2551 = vpop.f32.mrb[0].mxu0
    %2552 = vdwg.mxu0
    %v2553 = vadd.f32 %v2361, %v2479
    %v2554 = vxor.u32 %v2553, 2147483648
    %v2555 = vmul.f32 %v2554, 1.442695
    %v2556 = vpow.pop %v2555
    %v2557 = vadd.f32 %v2556, 1.0
    %v2558 = vrcp.pop %v2557
    %v2559 = vmul.f32 1.0, %v2558
    %v2560 = vadd.f32 %v2362, %v2481
    %v2561 = vxor.u32 %v2560, 2147483648
    %v2562 = vmul.f32 %v2561, 1.442695
    %v2563 = vpow.pop %v2562
    %v2564 = vadd.f32 %v2563, 1.0
    %v2565 = vrcp.pop %v2564
    %v2566 = vmul.f32 1.0, %v2565
    %v2567 = vadd.f32 %v2550, %v2138
    %v2568 = vmul.f32 %v2559, %v2567
    %v2569 = vadd.f32 %v2363, %v2568
    %v2570 = vtanh.pop %v2569
    %v2571 = vsub.f32 %v2357, %v2570
    %v2572 = vmul.f32 %v2566, %v2571
    %v2573 = vadd.f32 %v2570, %v2572
    %2574 = vst [vmem:[%s506] sm:$0xff] %v2573
    %s2575 = smul.addr %s508, 8
    %s2576 = scalar_lea.vmem [#allocation2], %s2575
    %v2577 = vld [vmem:[%s2576] sm:$0xff]
    %v2578 = vld [vmem:[%s2576 + $0x8] sm:$0xff]
    %v2579 = vld [vmem:[%s2576 + $0x10] sm:$0xff]
    %v2580 = vld [vmem:[%s2147] sm:$0xff]
    %v2581 = vld [vmem:[%s2147 + $0x8] sm:$0xff]
    %v2582 = vld [vmem:[%s2147 + $0x10] sm:$0xff]
    %v2583 = vld [vmem:[%s2147 + $0x18] sm:$0xff]
    %v2584 = vld [vmem:[%s2147 + $0x20] sm:$0xff]
    %v2585 = vld [vmem:[%s2147 + $0x28] sm:$0xff]
    %v2586 = vld [vmem:[%s2147 + $0x30] sm:$0xff]
    %v2587 = vld [vmem:[%s2147 + $0x38] sm:$0xff]
    %v2588 = vld [vmem:[%s2147 + $0x40] sm:$0xff]
    %v2589 = vld [vmem:[%s2147 + $0x48] sm:$0xff]
    %v2590 = vld [vmem:[%s2147 + $0x50] sm:$0xff]
    %v2591 = vld [vmem:[%s2147 + $0x58] sm:$0xff]
    %v2592 = vld [vmem:[%s2147 + $0x60] sm:$0xff]
    %v2593 = vld [vmem:[%s2147 + $0x68] sm:$0xff]
    %v2594 = vld [vmem:[%s2147 + $0x70] sm:$0xff]
    %v2595 = vld [vmem:[%s2147 + $0x78] sm:$0xff]
    %v2596 = vld [vmem:[%s2147 + $0x80] sm:$0xff]
    %v2597 = vld [vmem:[%s2147 + $0x88] sm:$0xff]
    %v2598 = vld [vmem:[%s2147 + $0x90] sm:$0xff]
    %v2599 = vld [vmem:[%s2147 + $0x98] sm:$0xff]
    %v2600 = vld [vmem:[%s2147 + $0xa0] sm:$0xff]
    %v2601 = vld [vmem:[%s2147 + $0xa8] sm:$0xff]
    %v2602 = vld [vmem:[%s2147 + $0xb0] sm:$0xff]
    %v2603 = vld [vmem:[%s2147 + $0xb8] sm:$0xff]
    %v2604 = vld [vmem:[%s2147 + $0xc0] sm:$0xff]
    %v2605 = vld [vmem:[%s2147 + $0xc8] sm:$0xff]
    %v2606 = vld [vmem:[%s2147 + $0xd0] sm:$0xff]
    %v2607 = vld [vmem:[%s2147 + $0xd8] sm:$0xff]
    %v2608 = vld [vmem:[%s2147 + $0xe0] sm:$0xff]
    %v2609 = vld [vmem:[%s2147 + $0xe8] sm:$0xff]
    %v2610 = vld [vmem:[%s2147 + $0xf0] sm:$0xff]
    %v2611 = vld [vmem:[%s2147 + $0xf8] sm:$0xff]
    %v2612 = vld [vmem:[%s2147 + $0x100] sm:$0xff]
    %v2613 = vld [vmem:[%s2147 + $0x108] sm:$0xff]
    %v2614 = vld [vmem:[%s2147 + $0x110] sm:$0xff]
    %v2615 = vld [vmem:[%s2147 + $0x118] sm:$0xff]
    %v2616 = vld [vmem:[%s2147 + $0x120] sm:$0xff]
    %v2617 = vld [vmem:[%s2147 + $0x128] sm:$0xff]
    %v2618 = vld [vmem:[%s2147 + $0x130] sm:$0xff]
    %v2619 = vld [vmem:[%s2147 + $0x138] sm:$0xff]
    %v2620 = vld [vmem:[%s2147 + $0x140] sm:$0xff]
    %v2621 = vld [vmem:[%s2147 + $0x148] sm:$0xff]
    %v2622 = vld [vmem:[%s2147 + $0x150] sm:$0xff]
    %v2623 = vld [vmem:[%s2147 + $0x158] sm:$0xff]
    %v2624 = vld [vmem:[%s2147 + $0x160] sm:$0xff]
    %v2625 = vld [vmem:[%s2147 + $0x168] sm:$0xff]
    %v2626 = vld [vmem:[%s2147 + $0x170] sm:$0xff]
    %v2627 = vld [vmem:[%s2147 + $0x178] sm:$0xff]
    %2628 = vmatprep.subr.mxu0 %v2581
    %2629 = vmatpush1.msra.mxu0 %v2580
    %2630 = vmatprep.subr.mxu0 %v2584
    %2631 = vmatpush1.msra.mxu0 %v2583
    %2632 = vmatprep.subr.mxu0 %v2587
    %2633 = vmatpush1.msra.mxu0 %v2586
    %2634 = vmatprep.subr.mxu0 %v2590
    %2635 = vmatpush1.msra.mxu0 %v2589
    %2636 = vmatprep.subr.mxu0 %v2593
    %2637 = vmatpush1.msra.mxu0 %v2592
    %2638 = vmatprep.subr.mxu0 %v2596
    %2639 = vmatpush1.msra.mxu0 %v2595
    %2640 = vmatprep.subr.mxu0 %v2599
    %2641 = vmatpush1.msra.mxu0 %v2598
    %2642 = vmatprep.subr.mxu0 %v2602
    %2643 = vmatpush1.msra.mxu0 %v2601
    %2644 = vmatprep.subr.mxu0 %v2605
    %2645 = vmatpush1.msra.mxu0 %v2604
    %2646 = vmatprep.subr.mxu0 %v2608
    %2647 = vmatpush1.msra.mxu0 %v2607
    %2648 = vmatprep.subr.mxu0 %v2611
    %2649 = vmatpush1.msra.mxu0 %v2610
    %2650 = vmatprep.subr.mxu0 %v2614
    %2651 = vmatpush1.msra.mxu0 %v2613
    %2652 = vmatprep.subr.mxu0 %v2617
    %2653 = vmatpush1.msra.mxu0 %v2616
    %2654 = vmatprep.subr.mxu0 %v2620
    %2655 = vmatpush1.msra.mxu0 %v2619
    %2656 = vmatprep.subr.mxu0 %v2623
    %2657 = vmatpush1.msra.mxu0 %v2622
    %2658 = vmatprep.subr.mxu0 %v2626
    %2659 = vmatpush1.msra.mxu0 %v2625
    %2660 = vmatprep.subr.mxu0 0.0
    %2661 = vmatpush1.msra.mxu0 0.0
    %2662 = vmatprep.subr.mxu0 0.0
    %2663 = vmatpush1.msra.mxu0 0.0
    %2664 = vmatprep.subr.mxu0 0.0
    %2665 = vmatpush1.msra.mxu0 0.0
    %2666 = vmatprep.subr.mxu0 0.0
    %2667 = vmatpush1.msra.mxu0 0.0
    %2668 = vmatprep.subr.mxu0 0.0
    %2669 = vmatpush1.msra.mxu0 0.0
    %2670 = vmatprep.subr.mxu0 0.0
    %2671 = vmatpush1.msra.mxu0 0.0
    %2672 = vmatprep.subr.mxu0 0.0
    %2673 = vmatpush1.msra.mxu0 0.0
    %2674 = vmatprep.subr.mxu0 0.0
    %2675 = vmatpush1.msra.mxu0 0.0
    %2676 = vmatprep.subr.mxu0 0.0
    %2677 = vmatpush1.msra.mxu0 0.0
    %2678 = vmatprep.subr.mxu0 0.0
    %2679 = vmatpush1.msra.mxu0 0.0
    %2680 = vmatprep.subr.mxu0 0.0
    %2681 = vmatpush1.msra.mxu0 0.0
    %2682 = vmatprep.subr.mxu0 0.0
    %2683 = vmatpush1.msra.mxu0 0.0
    %2684 = vmatprep.subr.mxu0 0.0
    %2685 = vmatpush1.msra.mxu0 0.0
    %2686 = vmatprep.subr.mxu0 0.0
    %2687 = vmatpush1.msra.mxu0 0.0
    %2688 = vmatprep.subr.mxu0 0.0
    %2689 = vmatpush1.msra.mxu0 0.0
    %2690 = vmatprep.subr.mxu0 0.0
    %2691 = vmatpush1.msra.mxu0 0.0
    %2692 = vmatprep.mubr.f32.mxu0 0.0
    %2693 = vmatmul.mubr.f32.gmra.mrb[0].mxu0 %v2573
    %v2694 = vpop.f32.mrb[0].mxu0
    %v2695 = vadd.f32 0.0, %v2694
    %v2696 = vpop.f32.mrb[0].mxu0
    %v2697 = vadd.f32 0.0, %v2696
    %2698 = vdwg.mxu0
    %2699 = vmatprep.subr.mxu0 0.0
    %2700 = vmatpush1.msra.mxu0 %v2582
    %2701 = vmatprep.subr.mxu0 0.0
    %2702 = vmatpush1.msra.mxu0 %v2585
    %2703 = vmatprep.subr.mxu0 0.0
    %2704 = vmatpush1.msra.mxu0 %v2588
    %2705 = vmatprep.subr.mxu0 0.0
    %2706 = vmatpush1.msra.mxu0 %v2591
    %2707 = vmatprep.subr.mxu0 0.0
    %2708 = vmatpush1.msra.mxu0 %v2594
    %2709 = vmatprep.subr.mxu0 0.0
    %2710 = vmatpush1.msra.mxu0 %v2597
    %2711 = vmatprep.subr.mxu0 0.0
    %2712 = vmatpush1.msra.mxu0 %v2600
    %2713 = vmatprep.subr.mxu0 0.0
    %2714 = vmatpush1.msra.mxu0 %v2603
    %2715 = vmatprep.subr.mxu0 0.0
    %2716 = vmatpush1.msra.mxu0 %v2606
    %2717 = vmatprep.subr.mxu0 0.0
    %2718 = vmatpush1.msra.mxu0 %v2609
    %2719 = vmatprep.subr.mxu0 0.0
    %2720 = vmatpush1.msra.mxu0 %v2612
    %2721 = vmatprep.subr.mxu0 0.0
    %2722 = vmatpush1.msra.mxu0 %v2615
    %2723 = vmatprep.subr.mxu0 0.0
    %2724 = vmatpush1.msra.mxu0 %v2618
    %2725 = vmatprep.subr.mxu0 0.0
    %2726 = vmatpush1.msra.mxu0 %v2621
    %2727 = vmatprep.subr.mxu0 0.0
    %2728 = vmatpush1.msra.mxu0 %v2624
    %2729 = vmatprep.subr.mxu0 0.0
    %2730 = vmatpush1.msra.mxu0 %v2627
    %2731 = vmatprep.subr.mxu0 0.0
    %2732 = vmatpush1.msra.mxu0 0.0
    %2733 = vmatprep.subr.mxu0 0.0
    %2734 = vmatpush1.msra.mxu0 0.0
    %2735 = vmatprep.subr.mxu0 0.0
    %2736 = vmatpush1.msra.mxu0 0.0
    %2737 = vmatprep.subr.mxu0 0.0
    %2738 = vmatpush1.msra.mxu0 0.0
    %2739 = vmatprep.subr.mxu0 0.0
    %2740 = vmatpush1.msra.mxu0 0.0
    %2741 = vmatprep.subr.mxu0 0.0
    %2742 = vmatpush1.msra.mxu0 0.0
    %2743 = vmatprep.subr.mxu0 0.0
    %2744 = vmatpush1.msra.mxu0 0.0
    %2745 = vmatprep.subr.mxu0 0.0
    %2746 = vmatpush1.msra.mxu0 0.0
    %2747 = vmatprep.subr.mxu0 0.0
    %2748 = vmatpush1.msra.mxu0 0.0
    %2749 = vmatprep.subr.mxu0 0.0
    %2750 = vmatpush1.msra.mxu0 0.0
    %2751 = vmatprep.subr.mxu0 0.0
    %2752 = vmatpush1.msra.mxu0 0.0
    %2753 = vmatprep.subr.mxu0 0.0
    %2754 = vmatpush1.msra.mxu0 0.0
    %2755 = vmatprep.subr.mxu0 0.0
    %2756 = vmatpush1.msra.mxu0 0.0
    %2757 = vmatprep.subr.mxu0 0.0
    %2758 = vmatpush1.msra.mxu0 0.0
    %2759 = vmatprep.subr.mxu0 0.0
    %2760 = vmatpush1.msra.mxu0 0.0
    %2761 = vmatprep.subr.mxu0 0.0
    %2762 = vmatpush1.msra.mxu0 0.0
    %2763 = vmatprep.mubr.f32.mxu0 0.0
    %2764 = vmatmul.mubr.f32.gmra.mrb[0].mxu0 %v2573
    %v2765 = vpop.f32.mrb[0].mxu0
    %v2766 = vadd.f32 0.0, %v2765
    %v2767 = vpop.f32.mrb[0].mxu0
    %2768 = vdwg.mxu0
    %v2769 = vadd.f32 %v2577, %v2695
    %v2770 = vxor.u32 %v2769, 2147483648
    %v2771 = vmul.f32 %v2770, 1.442695
    %v2772 = vpow.pop %v2771
    %v2773 = vadd.f32 %v2772, 1.0
    %v2774 = vrcp.pop %v2773
    %v2775 = vmul.f32 1.0, %v2774
    %v2776 = vadd.f32 %v2578, %v2697
    %v2777 = vxor.u32 %v2776, 2147483648
    %v2778 = vmul.f32 %v2777, 1.442695
    %v2779 = vpow.pop %v2778
    %v2780 = vadd.f32 %v2779, 1.0
    %v2781 = vrcp.pop %v2780
    %v2782 = vmul.f32 1.0, %v2781
    %v2783 = vadd.f32 %v2766, %v2138
    %v2784 = vmul.f32 %v2775, %v2783
    %v2785 = vadd.f32 %v2579, %v2784
    %v2786 = vtanh.pop %v2785
    %v2787 = vsub.f32 %v2573, %v2786
    %v2788 = vmul.f32 %v2782, %v2787
    %v2789 = vadd.f32 %v2786, %v2788
    %2790 = vst [vmem:[%s724] sm:$0xff] %v2789
    %s2791 = smul.addr %s726, 8
    %s2792 = scalar_lea.vmem [#allocation2], %s2791
    %v2793 = vld [vmem:[%s2792] sm:$0xff]
    %v2794 = vld [vmem:[%s2792 + $0x8] sm:$0xff]
    %v2795 = vld [vmem:[%s2792 + $0x10] sm:$0xff]
    %v2796 = vld [vmem:[%s2147] sm:$0xff]
    %v2797 = vld [vmem:[%s2147 + $0x8] sm:$0xff]
    %v2798 = vld [vmem:[%s2147 + $0x10] sm:$0xff]
    %v2799 = vld [vmem:[%s2147 + $0x18] sm:$0xff]
    %v2800 = vld [vmem:[%s2147 + $0x20] sm:$0xff]
    %v2801 = vld [vmem:[%s2147 + $0x28] sm:$0xff]
    %v2802 = vld [vmem:[%s2147 + $0x30] sm:$0xff]
    %v2803 = vld [vmem:[%s2147 + $0x38] sm:$0xff]
    %v2804 = vld [vmem:[%s2147 + $0x40] sm:$0xff]
    %v2805 = vld [vmem:[%s2147 + $0x48] sm:$0xff]
    %v2806 = vld [vmem:[%s2147 + $0x50] sm:$0xff]
    %v2807 = vld [vmem:[%s2147 + $0x58] sm:$0xff]
    %v2808 = vld [vmem:[%s2147 + $0x60] sm:$0xff]
    %v2809 = vld [vmem:[%s2147 + $0x68] sm:$0xff]
    %v2810 = vld [vmem:[%s2147 + $0x70] sm:$0xff]
    %v2811 = vld [vmem:[%s2147 + $0x78] sm:$0xff]
    %v2812 = vld [vmem:[%s2147 + $0x80] sm:$0xff]
    %v2813 = vld [vmem:[%s2147 + $0x88] sm:$0xff]
    %v2814 = vld [vmem:[%s2147 + $0x90] sm:$0xff]
    %v2815 = vld [vmem:[%s2147 + $0x98] sm:$0xff]
    %v2816 = vld [vmem:[%s2147 + $0xa0] sm:$0xff]
    %v2817 = vld [vmem:[%s2147 + $0xa8] sm:$0xff]
    %v2818 = vld [vmem:[%s2147 + $0xb0] sm:$0xff]
    %v2819 = vld [vmem:[%s2147 + $0xb8] sm:$0xff]
    %v2820 = vld [vmem:[%s2147 + $0xc0] sm:$0xff]
    %v2821 = vld [vmem:[%s2147 + $0xc8] sm:$0xff]
    %v2822 = vld [vmem:[%s2147 + $0xd0] sm:$0xff]
    %v2823 = vld [vmem:[%s2147 + $0xd8] sm:$0xff]
    %v2824 = vld [vmem:[%s2147 + $0xe0] sm:$0xff]
    %v2825 = vld [vmem:[%s2147 + $0xe8] sm:$0xff]
    %v2826 = vld [vmem:[%s2147 + $0xf0] sm:$0xff]
    %v2827 = vld [vmem:[%s2147 + $0xf8] sm:$0xff]
    %v2828 = vld [vmem:[%s2147 + $0x100] sm:$0xff]
    %v2829 = vld [vmem:[%s2147 + $0x108] sm:$0xff]
    %v2830 = vld [vmem:[%s2147 + $0x110] sm:$0xff]
    %v2831 = vld [vmem:[%s2147 + $0x118] sm:$0xff]
    %v2832 = vld [vmem:[%s2147 + $0x120] sm:$0xff]
    %v2833 = vld [vmem:[%s2147 + $0x128] sm:$0xff]
    %v2834 = vld [vmem:[%s2147 + $0x130] sm:$0xff]
    %v2835 = vld [vmem:[%s2147 + $0x138] sm:$0xff]
    %v2836 = vld [vmem:[%s2147 + $0x140] sm:$0xff]
    %v2837 = vld [vmem:[%s2147 + $0x148] sm:$0xff]
    %v2838 = vld [vmem:[%s2147 + $0x150] sm:$0xff]
    %v2839 = vld [vmem:[%s2147 + $0x158] sm:$0xff]
    %v2840 = vld [vmem:[%s2147 + $0x160] sm:$0xff]
    %v2841 = vld [vmem:[%s2147 + $0x168] sm:$0xff]
    %v2842 = vld [vmem:[%s2147 + $0x170] sm:$0xff]
    %v2843 = vld [vmem:[%s2147 + $0x178] sm:$0xff]
    %2844 = vmatprep.subr.mxu0 %v2797
    %2845 = vmatpush1.msra.mxu0 %v2796
    %2846 = vmatprep.subr.mxu0 %v2800
    %2847 = vmatpush1.msra.mxu0 %v2799
    %2848 = vmatprep.subr.mxu0 %v2803
    %2849 = vmatpush1.msra.mxu0 %v2802
    %2850 = vmatprep.subr.mxu0 %v2806
    %2851 = vmatpush1.msra.mxu0 %v2805
    %2852 = vmatprep.subr.mxu0 %v2809
    %2853 = vmatpush1.msra.mxu0 %v2808
    %2854 = vmatprep.subr.mxu0 %v2812
    %2855 = vmatpush1.msra.mxu0 %v2811
    %2856 = vmatprep.subr.mxu0 %v2815
    %2857 = vmatpush1.msra.mxu0 %v2814
    %2858 = vmatprep.subr.mxu0 %v2818
    %2859 = vmatpush1.msra.mxu0 %v2817
    %2860 = vmatprep.subr.mxu0 %v2821
    %2861 = vmatpush1.msra.mxu0 %v2820
    %2862 = vmatprep.subr.mxu0 %v2824
    %2863 = vmatpush1.msra.mxu0 %v2823
    %2864 = vmatprep.subr.mxu0 %v2827
    %2865 = vmatpush1.msra.mxu0 %v2826
    %2866 = vmatprep.subr.mxu0 %v2830
    %2867 = vmatpush1.msra.mxu0 %v2829
    %2868 = vmatprep.subr.mxu0 %v2833
    %2869 = vmatpush1.msra.mxu0 %v2832
    %2870 = vmatprep.subr.mxu0 %v2836
    %2871 = vmatpush1.msra.mxu0 %v2835
    %2872 = vmatprep.subr.mxu0 %v2839
    %2873 = vmatpush1.msra.mxu0 %v2838
    %2874 = vmatprep.subr.mxu0 %v2842
    %2875 = vmatpush1.msra.mxu0 %v2841
    %2876 = vmatprep.subr.mxu0 0.0
    %2877 = vmatpush1.msra.mxu0 0.0
    %2878 = vmatprep.subr.mxu0 0.0
    %2879 = vmatpush1.msra.mxu0 0.0
    %2880 = vmatprep.subr.mxu0 0.0
    %2881 = vmatpush1.msra.mxu0 0.0
    %2882 = vmatprep.subr.mxu0 0.0
    %2883 = vmatpush1.msra.mxu0 0.0
    %2884 = vmatprep.subr.mxu0 0.0
    %2885 = vmatpush1.msra.mxu0 0.0
    %2886 = vmatprep.subr.mxu0 0.0
    %2887 = vmatpush1.msra.mxu0 0.0
    %2888 = vmatprep.subr.mxu0 0.0
    %2889 = vmatpush1.msra.mxu0 0.0
    %2890 = vmatprep.subr.mxu0 0.0
    %2891 = vmatpush1.msra.mxu0 0.0
    %2892 = vmatprep.subr.mxu0 0.0
    %2893 = vmatpush1.msra.mxu0 0.0
    %2894 = vmatprep.subr.mxu0 0.0
    %2895 = vmatpush1.msra.mxu0 0.0
    %2896 = vmatprep.subr.mxu0 0.0
    %2897 = vmatpush1.msra.mxu0 0.0
    %2898 = vmatprep.subr.mxu0 0.0
    %2899 = vmatpush1.msra.mxu0 0.0
    %2900 = vmatprep.subr.mxu0 0.0
    %2901 = vmatpush1.msra.mxu0 0.0
    %2902 = vmatprep.subr.mxu0 0.0
    %2903 = vmatpush1.msra.mxu0 0.0
    %2904 = vmatprep.subr.mxu0 0.0
    %2905 = vmatpush1.msra.mxu0 0.0
    %2906 = vmatprep.subr.mxu0 0.0
    %2907 = vmatpush1.msra.mxu0 0.0
    %2908 = vmatprep.mubr.f32.mxu0 0.0
    %2909 = vmatmul.mubr.f32.gmra.mrb[0].mxu0 %v2789
    %v2910 = vpop.f32.mrb[0].mxu0
    %v2911 = vadd.f32 0.0, %v2910
    %v2912 = vpop.f32.mrb[0].mxu0
    %v2913 = vadd.f32 0.0, %v2912
    %2914 = vdwg.mxu0
    %2915 = vmatprep.subr.mxu0 0.0
    %2916 = vmatpush1.msra.mxu0 %v2798
    %2917 = vmatprep.subr.mxu0 0.0
    %2918 = vmatpush1.msra.mxu0 %v2801
    %2919 = vmatprep.subr.mxu0 0.0
    %2920 = vmatpush1.msra.mxu0 %v2804
    %2921 = vmatprep.subr.mxu0 0.0
    %2922 = vmatpush1.msra.mxu0 %v2807
    %2923 = vmatprep.subr.mxu0 0.0
    %2924 = vmatpush1.msra.mxu0 %v2810
    %2925 = vmatprep.subr.mxu0 0.0
    %2926 = vmatpush1.msra.mxu0 %v2813
    %2927 = vmatprep.subr.mxu0 0.0
    %2928 = vmatpush1.msra.mxu0 %v2816
    %2929 = vmatprep.subr.mxu0 0.0
    %2930 = vmatpush1.msra.mxu0 %v2819
    %2931 = vmatprep.subr.mxu0 0.0
    %2932 = vmatpush1.msra.mxu0 %v2822
    %2933 = vmatprep.subr.mxu0 0.0
    %2934 = vmatpush1.msra.mxu0 %v2825
    %2935 = vmatprep.subr.mxu0 0.0
    %2936 = vmatpush1.msra.mxu0 %v2828
    %2937 = vmatprep.subr.mxu0 0.0
    %2938 = vmatpush1.msra.mxu0 %v2831
    %2939 = vmatprep.subr.mxu0 0.0
    %2940 = vmatpush1.msra.mxu0 %v2834
    %2941 = vmatprep.subr.mxu0 0.0
    %2942 = vmatpush1.msra.mxu0 %v2837
    %2943 = vmatprep.subr.mxu0 0.0
    %2944 = vmatpush1.msra.mxu0 %v2840
    %2945 = vmatprep.subr.mxu0 0.0
    %2946 = vmatpush1.msra.mxu0 %v2843
    %2947 = vmatprep.subr.mxu0 0.0
    %2948 = vmatpush1.msra.mxu0 0.0
    %2949 = vmatprep.subr.mxu0 0.0
    %2950 = vmatpush1.msra.mxu0 0.0
    %2951 = vmatprep.subr.mxu0 0.0
    %2952 = vmatpush1.msra.mxu0 0.0
    %2953 = vmatprep.subr.mxu0 0.0
    %2954 = vmatpush1.msra.mxu0 0.0
    %2955 = vmatprep.subr.mxu0 0.0
    %2956 = vmatpush1.msra.mxu0 0.0
    %2957 = vmatprep.subr.mxu0 0.0
    %2958 = vmatpush1.msra.mxu0 0.0
    %2959 = vmatprep.subr.mxu0 0.0
    %2960 = vmatpush1.msra.mxu0 0.0
    %2961 = vmatprep.subr.mxu0 0.0
    %2962 = vmatpush1.msra.mxu0 0.0
    %2963 = vmatprep.subr.mxu0 0.0
    %2964 = vmatpush1.msra.mxu0 0.0
    %2965 = vmatprep.subr.mxu0 0.0
    %2966 = vmatpush1.msra.mxu0 0.0
    %2967 = vmatprep.subr.mxu0 0.0
    %2968 = vmatpush1.msra.mxu0 0.0
    %2969 = vmatprep.subr.mxu0 0.0
    %2970 = vmatpush1.msra.mxu0 0.0
    %2971 = vmatprep.subr.mxu0 0.0
    %2972 = vmatpush1.msra.mxu0 0.0
    %2973 = vmatprep.subr.mxu0 0.0
    %2974 = vmatpush1.msra.mxu0 0.0
    %2975 = vmatprep.subr.mxu0 0.0
    %2976 = vmatpush1.msra.mxu0 0.0
    %2977 = vmatprep.subr.mxu0 0.0
    %2978 = vmatpush1.msra.mxu0 0.0
    %2979 = vmatprep.mubr.f32.mxu0 0.0
    %2980 = vmatmul.mubr.f32.gmra.mrb[0].mxu0 %v2789
    %v2981 = vpop.f32.mrb[0].mxu0
    %v2982 = vadd.f32 0.0, %v2981
    %v2983 = vpop.f32.mrb[0].mxu0
    %2984 = vdwg.mxu0
    %v2985 = vadd.f32 %v2793, %v2911
    %v2986 = vxor.u32 %v2985, 2147483648
    %v2987 = vmul.f32 %v2986, 1.442695
    %v2988 = vpow.pop %v2987
    %v2989 = vadd.f32 %v2988, 1.0
    %v2990 = vrcp.pop %v2989
    %v2991 = vmul.f32 1.0, %v2990
    %v2992 = vadd.f32 %v2794, %v2913
    %v2993 = vxor.u32 %v2992, 2147483648
    %v2994 = vmul.f32 %v2993, 1.442695
    %v2995 = vpow.pop %v2994
    %v2996 = vadd.f32 %v2995, 1.0
    %v2997 = vrcp.pop %v2996
    %v2998 = vmul.f32 1.0, %v2997
    %v2999 = vadd.f32 %v2982, %v2138
    %v3000 = vmul.f32 %v2991, %v2999
    %v3001 = vadd.f32 %v2795, %v3000
    %v3002 = vtanh.pop %v3001
    %v3003 = vsub.f32 %v2789, %v3002
    %v3004 = vmul.f32 %v2998, %v3003
    %v3005 = vadd.f32 %v3002, %v3004
    %3006 = vst [vmem:[%s942] sm:$0xff] %v3005
    %s3007 = smul.addr %s944, 8
    %s3008 = scalar_lea.vmem [#allocation2], %s3007
    %v3009 = vld [vmem:[%s3008] sm:$0xff]
    %v3010 = vld [vmem:[%s3008 + $0x8] sm:$0xff]
    %v3011 = vld [vmem:[%s3008 + $0x10] sm:$0xff]
    %v3012 = vld [vmem:[%s2147] sm:$0xff]
    %v3013 = vld [vmem:[%s2147 + $0x8] sm:$0xff]
    %v3014 = vld [vmem:[%s2147 + $0x10] sm:$0xff]
    %v3015 = vld [vmem:[%s2147 + $0x18] sm:$0xff]
    %v3016 = vld [vmem:[%s2147 + $0x20] sm:$0xff]
    %v3017 = vld [vmem:[%s2147 + $0x28] sm:$0xff]
    %v3018 = vld [vmem:[%s2147 + $0x30] sm:$0xff]
    %v3019 = vld [vmem:[%s2147 + $0x38] sm:$0xff]
    %v3020 = vld [vmem:[%s2147 + $0x40] sm:$0xff]
    %v3021 = vld [vmem:[%s2147 + $0x48] sm:$0xff]
    %v3022 = vld [vmem:[%s2147 + $0x50] sm:$0xff]
    %v3023 = vld [vmem:[%s2147 + $0x58] sm:$0xff]
    %v3024 = vld [vmem:[%s2147 + $0x60] sm:$0xff]
    %v3025 = vld [vmem:[%s2147 + $0x68] sm:$0xff]
    %v3026 = vld [vmem:[%s2147 + $0x70] sm:$0xff]
    %v3027 = vld [vmem:[%s2147 + $0x78] sm:$0xff]
    %v3028 = vld [vmem:[%s2147 + $0x80] sm:$0xff]
    %v3029 = vld [vmem:[%s2147 + $0x88] sm:$0xff]
    %v3030 = vld [vmem:[%s2147 + $0x90] sm:$0xff]
    %v3031 = vld [vmem:[%s2147 + $0x98] sm:$0xff]
    %v3032 = vld [vmem:[%s2147 + $0xa0] sm:$0xff]
    %v3033 = vld [vmem:[%s2147 + $0xa8] sm:$0xff]
    %v3034 = vld [vmem:[%s2147 + $0xb0] sm:$0xff]
    %v3035 = vld [vmem:[%s2147 + $0xb8] sm:$0xff]
    %v3036 = vld [vmem:[%s2147 + $0xc0] sm:$0xff]
    %v3037 = vld [vmem:[%s2147 + $0xc8] sm:$0xff]
    %v3038 = vld [vmem:[%s2147 + $0xd0] sm:$0xff]
    %v3039 = vld [vmem:[%s2147 + $0xd8] sm:$0xff]
    %v3040 = vld [vmem:[%s2147 + $0xe0] sm:$0xff]
    %v3041 = vld [vmem:[%s2147 + $0xe8] sm:$0xff]
    %v3042 = vld [vmem:[%s2147 + $0xf0] sm:$0xff]
    %v3043 = vld [vmem:[%s2147 + $0xf8] sm:$0xff]
    %v3044 = vld [vmem:[%s2147 + $0x100] sm:$0xff]
    %v3045 = vld [vmem:[%s2147 + $0x108] sm:$0xff]
    %v3046 = vld [vmem:[%s2147 + $0x110] sm:$0xff]
    %v3047 = vld [vmem:[%s2147 + $0x118] sm:$0xff]
    %v3048 = vld [vmem:[%s2147 + $0x120] sm:$0xff]
    %v3049 = vld [vmem:[%s2147 + $0x128] sm:$0xff]
    %v3050 = vld [vmem:[%s2147 + $0x130] sm:$0xff]
    %v3051 = vld [vmem:[%s2147 + $0x138] sm:$0xff]
    %v3052 = vld [vmem:[%s2147 + $0x140] sm:$0xff]
    %v3053 = vld [vmem:[%s2147 + $0x148] sm:$0xff]
    %v3054 = vld [vmem:[%s2147 + $0x150] sm:$0xff]
    %v3055 = vld [vmem:[%s2147 + $0x158] sm:$0xff]
    %v3056 = vld [vmem:[%s2147 + $0x160] sm:$0xff]
    %v3057 = vld [vmem:[%s2147 + $0x168] sm:$0xff]
    %v3058 = vld [vmem:[%s2147 + $0x170] sm:$0xff]
    %v3059 = vld [vmem:[%s2147 + $0x178] sm:$0xff]
    %3060 = vmatprep.subr.mxu0 %v3013
    %3061 = vmatpush1.msra.mxu0 %v3012
    %3062 = vmatprep.subr.mxu0 %v3016
    %3063 = vmatpush1.msra.mxu0 %v3015
    %3064 = vmatprep.subr.mxu0 %v3019
    %3065 = vmatpush1.msra.mxu0 %v3018
    %3066 = vmatprep.subr.mxu0 %v3022
    %3067 = vmatpush1.msra.mxu0 %v3021
    %3068 = vmatprep.subr.mxu0 %v3025
    %3069 = vmatpush1.msra.mxu0 %v3024
    %3070 = vmatprep.subr.mxu0 %v3028
    %3071 = vmatpush1.msra.mxu0 %v3027
    %3072 = vmatprep.subr.mxu0 %v3031
    %3073 = vmatpush1.msra.mxu0 %v3030
    %3074 = vmatprep.subr.mxu0 %v3034
    %3075 = vmatpush1.msra.mxu0 %v3033
    %3076 = vmatprep.subr.mxu0 %v3037
    %3077 = vmatpush1.msra.mxu0 %v3036
    %3078 = vmatprep.subr.mxu0 %v3040
    %3079 = vmatpush1.msra.mxu0 %v3039
    %3080 = vmatprep.subr.mxu0 %v3043
    %3081 = vmatpush1.msra.mxu0 %v3042
    %3082 = vmatprep.subr.mxu0 %v3046
    %3083 = vmatpush1.msra.mxu0 %v3045
    %3084 = vmatprep.subr.mxu0 %v3049
    %3085 = vmatpush1.msra.mxu0 %v3048
    %3086 = vmatprep.subr.mxu0 %v3052
    %3087 = vmatpush1.msra.mxu0 %v3051
    %3088 = vmatprep.subr.mxu0 %v3055
    %3089 = vmatpush1.msra.mxu0 %v3054
    %3090 = vmatprep.subr.mxu0 %v3058
    %3091 = vmatpush1.msra.mxu0 %v3057
    %3092 = vmatprep.subr.mxu0 0.0
    %3093 = vmatpush1.msra.mxu0 0.0
    %3094 = vmatprep.subr.mxu0 0.0
    %3095 = vmatpush1.msra.mxu0 0.0
    %3096 = vmatprep.subr.mxu0 0.0
    %3097 = vmatpush1.msra.mxu0 0.0
    %3098 = vmatprep.subr.mxu0 0.0
    %3099 = vmatpush1.msra.mxu0 0.0
    %3100 = vmatprep.subr.mxu0 0.0
    %3101 = vmatpush1.msra.mxu0 0.0
    %3102 = vmatprep.subr.mxu0 0.0
    %3103 = vmatpush1.msra.mxu0 0.0
    %3104 = vmatprep.subr.mxu0 0.0
    %3105 = vmatpush1.msra.mxu0 0.0
    %3106 = vmatprep.subr.mxu0 0.0
    %3107 = vmatpush1.msra.mxu0 0.0
    %3108 = vmatprep.subr.mxu0 0.0
    %3109 = vmatpush1.msra.mxu0 0.0
    %3110 = vmatprep.subr.mxu0 0.0
    %3111 = vmatpush1.msra.mxu0 0.0
    %3112 = vmatprep.subr.mxu0 0.0
    %3113 = vmatpush1.msra.mxu0 0.0
    %3114 = vmatprep.subr.mxu0 0.0
    %3115 = vmatpush1.msra.mxu0 0.0
    %3116 = vmatprep.subr.mxu0 0.0
    %3117 = vmatpush1.msra.mxu0 0.0
    %3118 = vmatprep.subr.mxu0 0.0
    %3119 = vmatpush1.msra.mxu0 0.0
    %3120 = vmatprep.subr.mxu0 0.0
    %3121 = vmatpush1.msra.mxu0 0.0
    %3122 = vmatprep.subr.mxu0 0.0
    %3123 = vmatpush1.msra.mxu0 0.0
    %3124 = vmatprep.mubr.f32.mxu0 0.0
    %3125 = vmatmul.mubr.f32.gmra.mrb[0].mxu0 %v3005
    %v3126 = vpop.f32.mrb[0].mxu0
    %v3127 = vadd.f32 0.0, %v3126
    %v3128 = vpop.f32.mrb[0].mxu0
    %v3129 = vadd.f32 0.0, %v3128
    %3130 = vdwg.mxu0
    %3131 = vmatprep.subr.mxu0 0.0
    %3132 = vmatpush1.msra.mxu0 %v3014
    %3133 = vmatprep.subr.mxu0 0.0
    %3134 = vmatpush1.msra.mxu0 %v3017
    %3135 = vmatprep.subr.mxu0 0.0
    %3136 = vmatpush1.msra.mxu0 %v3020
    %3137 = vmatprep.subr.mxu0 0.0
    %3138 = vmatpush1.msra.mxu0 %v3023
    %3139 = vmatprep.subr.mxu0 0.0
    %3140 = vmatpush1.msra.mxu0 %v3026
    %3141 = vmatprep.subr.mxu0 0.0
    %3142 = vmatpush1.msra.mxu0 %v3029
    %3143 = vmatprep.subr.mxu0 0.0
    %3144 = vmatpush1.msra.mxu0 %v3032
    %3145 = vmatprep.subr.mxu0 0.0
    %3146 = vmatpush1.msra.mxu0 %v3035
    %3147 = vmatprep.subr.mxu0 0.0
    %3148 = vmatpush1.msra.mxu0 %v3038
    %3149 = vmatprep.subr.mxu0 0.0
    %3150 = vmatpush1.msra.mxu0 %v3041
    %3151 = vmatprep.subr.mxu0 0.0
    %3152 = vmatpush1.msra.mxu0 %v3044
    %3153 = vmatprep.subr.mxu0 0.0
    %3154 = vmatpush1.msra.mxu0 %v3047
    %3155 = vmatprep.subr.mxu0 0.0
    %3156 = vmatpush1.msra.mxu0 %v3050
    %3157 = vmatprep.subr.mxu0 0.0
    %3158 = vmatpush1.msra.mxu0 %v3053
    %3159 = vmatprep.subr.mxu0 0.0
    %3160 = vmatpush1.msra.mxu0 %v3056
    %3161 = vmatprep.subr.mxu0 0.0
    %3162 = vmatpush1.msra.mxu0 %v3059
    %3163 = vmatprep.subr.mxu0 0.0
    %3164 = vmatpush1.msra.mxu0 0.0
    %3165 = vmatprep.subr.mxu0 0.0
    %3166 = vmatpush1.msra.mxu0 0.0
    %3167 = vmatprep.subr.mxu0 0.0
    %3168 = vmatpush1.msra.mxu0 0.0
    %3169 = vmatprep.subr.mxu0 0.0
    %3170 = vmatpush1.msra.mxu0 0.0
    %3171 = vmatprep.subr.mxu0 0.0
    %3172 = vmatpush1.msra.mxu0 0.0
    %3173 = vmatprep.subr.mxu0 0.0
    %3174 = vmatpush1.msra.mxu0 0.0
    %3175 = vmatprep.subr.mxu0 0.0
    %3176 = vmatpush1.msra.mxu0 0.0
    %3177 = vmatprep.subr.mxu0 0.0
    %3178 = vmatpush1.msra.mxu0 0.0
    %3179 = vmatprep.subr.mxu0 0.0
    %3180 = vmatpush1.msra.mxu0 0.0
    %3181 = vmatprep.subr.mxu0 0.0
    %3182 = vmatpush1.msra.mxu0 0.0
    %3183 = vmatprep.subr.mxu0 0.0
    %3184 = vmatpush1.msra.mxu0 0.0
    %3185 = vmatprep.subr.mxu0 0.0
    %3186 = vmatpush1.msra.mxu0 0.0
    %3187 = vmatprep.subr.mxu0 0.0
    %3188 = vmatpush1.msra.mxu0 0.0
    %3189 = vmatprep.subr.mxu0 0.0
    %3190 = vmatpush1.msra.mxu0 0.0
    %3191 = vmatprep.subr.mxu0 0.0
    %3192 = vmatpush1.msra.mxu0 0.0
    %3193 = vmatprep.subr.mxu0 0.0
    %3194 = vmatpush1.msra.mxu0 0.0
    %3195 = vmatprep.mubr.f32.mxu0 0.0
    %3196 = vmatmul.mubr.f32.gmra.mrb[0].mxu0 %v3005
    %v3197 = vpop.f32.mrb[0].mxu0
    %v3198 = vadd.f32 0.0, %v3197
    %v3199 = vpop.f32.mrb[0].mxu0
    %3200 = vdwg.mxu0
    %v3201 = vadd.f32 %v3009, %v3127
    %v3202 = vxor.u32 %v3201, 2147483648
    %v3203 = vmul.f32 %v3202, 1.442695
    %v3204 = vpow.pop %v3203
    %v3205 = vadd.f32 %v3204, 1.0
    %v3206 = vrcp.pop %v3205
    %v3207 = vmul.f32 1.0, %v3206
    %v3208 = vadd.f32 %v3010, %v3129
    %v3209 = vxor.u32 %v3208, 2147483648
    %v3210 = vmul.f32 %v3209, 1.442695
    %v3211 = vpow.pop %v3210
    %v3212 = vadd.f32 %v3211, 1.0
    %v3213 = vrcp.pop %v3212
    %v3214 = vmul.f32 1.0, %v3213
    %v3215 = vadd.f32 %v3198, %v2138
    %v3216 = vmul.f32 %v3207, %v3215
    %v3217 = vadd.f32 %v3011, %v3216
    %v3218 = vtanh.pop %v3217
    %v3219 = vsub.f32 %v3005, %v3218
    %v3220 = vmul.f32 %v3214, %v3219
    %v3221 = vadd.f32 %v3218, %v3220
    %3222 = vst [vmem:[%s1160] sm:$0xff] %v3221
    %s3223 = smul.addr %s1162, 8
    %s3224 = scalar_lea.vmem [#allocation2], %s3223
    %v3225 = vld [vmem:[%s3224] sm:$0xff]
    %v3226 = vld [vmem:[%s3224 + $0x8] sm:$0xff]
    %v3227 = vld [vmem:[%s3224 + $0x10] sm:$0xff]
    %v3228 = vld [vmem:[%s2147] sm:$0xff]
    %v3229 = vld [vmem:[%s2147 + $0x8] sm:$0xff]
    %v3230 = vld [vmem:[%s2147 + $0x10] sm:$0xff]
    %v3231 = vld [vmem:[%s2147 + $0x18] sm:$0xff]
    %v3232 = vld [vmem:[%s2147 + $0x20] sm:$0xff]
    %v3233 = vld [vmem:[%s2147 + $0x28] sm:$0xff]
    %v3234 = vld [vmem:[%s2147 + $0x30] sm:$0xff]
    %v3235 = vld [vmem:[%s2147 + $0x38] sm:$0xff]
    %v3236 = vld [vmem:[%s2147 + $0x40] sm:$0xff]
    %v3237 = vld [vmem:[%s2147 + $0x48] sm:$0xff]
    %v3238 = vld [vmem:[%s2147 + $0x50] sm:$0xff]
    %v3239 = vld [vmem:[%s2147 + $0x58] sm:$0xff]
    %v3240 = vld [vmem:[%s2147 + $0x60] sm:$0xff]
    %v3241 = vld [vmem:[%s2147 + $0x68] sm:$0xff]
    %v3242 = vld [vmem:[%s2147 + $0x70] sm:$0xff]
    %v3243 = vld [vmem:[%s2147 + $0x78] sm:$0xff]
    %v3244 = vld [vmem:[%s2147 + $0x80] sm:$0xff]
    %v3245 = vld [vmem:[%s2147 + $0x88] sm:$0xff]
    %v3246 = vld [vmem:[%s2147 + $0x90] sm:$0xff]
    %v3247 = vld [vmem:[%s2147 + $0x98] sm:$0xff]
    %v3248 = vld [vmem:[%s2147 + $0xa0] sm:$0xff]
    %v3249 = vld [vmem:[%s2147 + $0xa8] sm:$0xff]
    %v3250 = vld [vmem:[%s2147 + $0xb0] sm:$0xff]
    %v3251 = vld [vmem:[%s2147 + $0xb8] sm:$0xff]
    %v3252 = vld [vmem:[%s2147 + $0xc0] sm:$0xff]
    %v3253 = vld [vmem:[%s2147 + $0xc8] sm:$0xff]
    %v3254 = vld [vmem:[%s2147 + $0xd0] sm:$0xff]
    %v3255 = vld [vmem:[%s2147 + $0xd8] sm:$0xff]
    %v3256 = vld [vmem:[%s2147 + $0xe0] sm:$0xff]
    %v3257 = vld [vmem:[%s2147 + $0xe8] sm:$0xff]
    %v3258 = vld [vmem:[%s2147 + $0xf0] sm:$0xff]
    %v3259 = vld [vmem:[%s2147 + $0xf8] sm:$0xff]
    %v3260 = vld [vmem:[%s2147 + $0x100] sm:$0xff]
    %v3261 = vld [vmem:[%s2147 + $0x108] sm:$0xff]
    %v3262 = vld [vmem:[%s2147 + $0x110] sm:$0xff]
    %v3263 = vld [vmem:[%s2147 + $0x118] sm:$0xff]
    %v3264 = vld [vmem:[%s2147 + $0x120] sm:$0xff]
    %v3265 = vld [vmem:[%s2147 + $0x128] sm:$0xff]
    %v3266 = vld [vmem:[%s2147 + $0x130] sm:$0xff]
    %v3267 = vld [vmem:[%s2147 + $0x138] sm:$0xff]
    %v3268 = vld [vmem:[%s2147 + $0x140] sm:$0xff]
    %v3269 = vld [vmem:[%s2147 + $0x148] sm:$0xff]
    %v3270 = vld [vmem:[%s2147 + $0x150] sm:$0xff]
    %v3271 = vld [vmem:[%s2147 + $0x158] sm:$0xff]
    %v3272 = vld [vmem:[%s2147 + $0x160] sm:$0xff]
    %v3273 = vld [vmem:[%s2147 + $0x168] sm:$0xff]
    %v3274 = vld [vmem:[%s2147 + $0x170] sm:$0xff]
    %v3275 = vld [vmem:[%s2147 + $0x178] sm:$0xff]
    %3276 = vmatprep.subr.mxu0 %v3229
    %3277 = vmatpush1.msra.mxu0 %v3228
    %3278 = vmatprep.subr.mxu0 %v3232
    %3279 = vmatpush1.msra.mxu0 %v3231
    %3280 = vmatprep.subr.mxu0 %v3235
    %3281 = vmatpush1.msra.mxu0 %v3234
    %3282 = vmatprep.subr.mxu0 %v3238
    %3283 = vmatpush1.msra.mxu0 %v3237
    %3284 = vmatprep.subr.mxu0 %v3241
    %3285 = vmatpush1.msra.mxu0 %v3240
    %3286 = vmatprep.subr.mxu0 %v3244
    %3287 = vmatpush1.msra.mxu0 %v3243
    %3288 = vmatprep.subr.mxu0 %v3247
    %3289 = vmatpush1.msra.mxu0 %v3246
    %3290 = vmatprep.subr.mxu0 %v3250
    %3291 = vmatpush1.msra.mxu0 %v3249
    %3292 = vmatprep.subr.mxu0 %v3253
    %3293 = vmatpush1.msra.mxu0 %v3252
    %3294 = vmatprep.subr.mxu0 %v3256
    %3295 = vmatpush1.msra.mxu0 %v3255
    %3296 = vmatprep.subr.mxu0 %v3259
    %3297 = vmatpush1.msra.mxu0 %v3258
    %3298 = vmatprep.subr.mxu0 %v3262
    %3299 = vmatpush1.msra.mxu0 %v3261
    %3300 = vmatprep.subr.mxu0 %v3265
    %3301 = vmatpush1.msra.mxu0 %v3264
    %3302 = vmatprep.subr.mxu0 %v3268
    %3303 = vmatpush1.msra.mxu0 %v3267
    %3304 = vmatprep.subr.mxu0 %v3271
    %3305 = vmatpush1.msra.mxu0 %v3270
    %3306 = vmatprep.subr.mxu0 %v3274
    %3307 = vmatpush1.msra.mxu0 %v3273
    %3308 = vmatprep.subr.mxu0 0.0
    %3309 = vmatpush1.msra.mxu0 0.0
    %3310 = vmatprep.subr.mxu0 0.0
    %3311 = vmatpush1.msra.mxu0 0.0
    %3312 = vmatprep.subr.mxu0 0.0
    %3313 = vmatpush1.msra.mxu0 0.0
    %3314 = vmatprep.subr.mxu0 0.0
    %3315 = vmatpush1.msra.mxu0 0.0
    %3316 = vmatprep.subr.mxu0 0.0
    %3317 = vmatpush1.msra.mxu0 0.0
    %3318 = vmatprep.subr.mxu0 0.0
    %3319 = vmatpush1.msra.mxu0 0.0
    %3320 = vmatprep.subr.mxu0 0.0
    %3321 = vmatpush1.msra.mxu0 0.0
    %3322 = vmatprep.subr.mxu0 0.0
    %3323 = vmatpush1.msra.mxu0 0.0
    %3324 = vmatprep.subr.mxu0 0.0
    %3325 = vmatpush1.msra.mxu0 0.0
    %3326 = vmatprep.subr.mxu0 0.0
    %3327 = vmatpush1.msra.mxu0 0.0
    %3328 = vmatprep.subr.mxu0 0.0
    %3329 = vmatpush1.msra.mxu0 0.0
    %3330 = vmatprep.subr.mxu0 0.0
    %3331 = vmatpush1.msra.mxu0 0.0
    %3332 = vmatprep.subr.mxu0 0.0
    %3333 = vmatpush1.msra.mxu0 0.0
    %3334 = vmatprep.subr.mxu0 0.0
    %3335 = vmatpush1.msra.mxu0 0.0
    %3336 = vmatprep.subr.mxu0 0.0
    %3337 = vmatpush1.msra.mxu0 0.0
    %3338 = vmatprep.subr.mxu0 0.0
    %3339 = vmatpush1.msra.mxu0 0.0
    %3340 = vmatprep.mubr.f32.mxu0 0.0
    %3341 = vmatmul.mubr.f32.gmra.mrb[0].mxu0 %v3221
    %v3342 = vpop.f32.mrb[0].mxu0
    %v3343 = vadd.f32 0.0, %v3342
    %v3344 = vpop.f32.mrb[0].mxu0
    %v3345 = vadd.f32 0.0, %v3344
    %3346 = vdwg.mxu0
    %3347 = vmatprep.subr.mxu0 0.0
    %3348 = vmatpush1.msra.mxu0 %v3230
    %3349 = vmatprep.subr.mxu0 0.0
    %3350 = vmatpush1.msra.mxu0 %v3233
    %3351 = vmatprep.subr.mxu0 0.0
    %3352 = vmatpush1.msra.mxu0 %v3236
    %3353 = vmatprep.subr.mxu0 0.0
    %3354 = vmatpush1.msra.mxu0 %v3239
    %3355 = vmatprep.subr.mxu0 0.0
    %3356 = vmatpush1.msra.mxu0 %v3242
    %3357 = vmatprep.subr.mxu0 0.0
    %3358 = vmatpush1.msra.mxu0 %v3245
    %3359 = vmatprep.subr.mxu0 0.0
    %3360 = vmatpush1.msra.mxu0 %v3248
    %3361 = vmatprep.subr.mxu0 0.0
    %3362 = vmatpush1.msra.mxu0 %v3251
    %3363 = vmatprep.subr.mxu0 0.0
    %3364 = vmatpush1.msra.mxu0 %v3254
    %3365 = vmatprep.subr.mxu0 0.0
    %3366 = vmatpush1.msra.mxu0 %v3257
    %3367 = vmatprep.subr.mxu0 0.0
    %3368 = vmatpush1.msra.mxu0 %v3260
    %3369 = vmatprep.subr.mxu0 0.0
    %3370 = vmatpush1.msra.mxu0 %v3263
    %3371 = vmatprep.subr.mxu0 0.0
    %3372 = vmatpush1.msra.mxu0 %v3266
    %3373 = vmatprep.subr.mxu0 0.0
    %3374 = vmatpush1.msra.mxu0 %v3269
    %3375 = vmatprep.subr.mxu0 0.0
    %3376 = vmatpush1.msra.mxu0 %v3272
    %3377 = vmatprep.subr.mxu0 0.0
    %3378 = vmatpush1.msra.mxu0 %v3275
    %3379 = vmatprep.subr.mxu0 0.0
    %3380 = vmatpush1.msra.mxu0 0.0
    %3381 = vmatprep.subr.mxu0 0.0
    %3382 = vmatpush1.msra.mxu0 0.0
    %3383 = vmatprep.subr.mxu0 0.0
    %3384 = vmatpush1.msra.mxu0 0.0
    %3385 = vmatprep.subr.mxu0 0.0
    %3386 = vmatpush1.msra.mxu0 0.0
    %3387 = vmatprep.subr.mxu0 0.0
    %3388 = vmatpush1.msra.mxu0 0.0
    %3389 = vmatprep.subr.mxu0 0.0
    %3390 = vmatpush1.msra.mxu0 0.0
    %3391 = vmatprep.subr.mxu0 0.0
    %3392 = vmatpush1.msra.mxu0 0.0
    %3393 = vmatprep.subr.mxu0 0.0
    %3394 = vmatpush1.msra.mxu0 0.0
    %3395 = vmatprep.subr.mxu0 0.0
    %3396 = vmatpush1.msra.mxu0 0.0
    %3397 = vmatprep.subr.mxu0 0.0
    %3398 = vmatpush1.msra.mxu0 0.0
    %3399 = vmatprep.subr.mxu0 0.0
    %3400 = vmatpush1.msra.mxu0 0.0
    %3401 = vmatprep.subr.mxu0 0.0
    %3402 = vmatpush1.msra.mxu0 0.0
    %3403 = vmatprep.subr.mxu0 0.0
    %3404 = vmatpush1.msra.mxu0 0.0
    %3405 = vmatprep.subr.mxu0 0.0
    %3406 = vmatpush1.msra.mxu0 0.0
    %3407 = vmatprep.subr.mxu0 0.0
    %3408 = vmatpush1.msra.mxu0 0.0
    %3409 = vmatprep.subr.mxu0 0.0
    %3410 = vmatpush1.msra.mxu0 0.0
    %3411 = vmatprep.mubr.f32.mxu0 0.0
    %3412 = vmatmul.mubr.f32.gmra.mrb[0].mxu0 %v3221
    %v3413 = vpop.f32.mrb[0].mxu0
    %v3414 = vadd.f32 0.0, %v3413
    %v3415 = vpop.f32.mrb[0].mxu0
    %3416 = vdwg.mxu0
    %v3417 = vadd.f32 %v3225, %v3343
    %v3418 = vxor.u32 %v3417, 2147483648
    %v3419 = vmul.f32 %v3418, 1.442695
    %v3420 = vpow.pop %v3419
    %v3421 = vadd.f32 %v3420, 1.0
    %v3422 = vrcp.pop %v3421
    %v3423 = vmul.f32 1.0, %v3422
    %v3424 = vadd.f32 %v3226, %v3345
    %v3425 = vxor.u32 %v3424, 2147483648
    %v3426 = vmul.f32 %v3425, 1.442695
    %v3427 = vpow.pop %v3426
    %v3428 = vadd.f32 %v3427, 1.0
    %v3429 = vrcp.pop %v3428
    %v3430 = vmul.f32 1.0, %v3429
    %v3431 = vadd.f32 %v3414, %v2138
    %v3432 = vmul.f32 %v3423, %v3431
    %v3433 = vadd.f32 %v3227, %v3432
    %v3434 = vtanh.pop %v3433
    %v3435 = vsub.f32 %v3221, %v3434
    %v3436 = vmul.f32 %v3430, %v3435
    %v3437 = vadd.f32 %v3434, %v3436
    %3438 = vst [vmem:[%s1378] sm:$0xff] %v3437
    %s3439 = smul.addr %s1380, 8
    %s3440 = scalar_lea.vmem [#allocation2], %s3439
    %v3441 = vld [vmem:[%s3440] sm:$0xff]
    %v3442 = vld [vmem:[%s3440 + $0x8] sm:$0xff]
    %v3443 = vld [vmem:[%s3440 + $0x10] sm:$0xff]
    %v3444 = vld [vmem:[%s2147] sm:$0xff]
    %v3445 = vld [vmem:[%s2147 + $0x8] sm:$0xff]
    %v3446 = vld [vmem:[%s2147 + $0x10] sm:$0xff]
    %v3447 = vld [vmem:[%s2147 + $0x18] sm:$0xff]
    %v3448 = vld [vmem:[%s2147 + $0x20] sm:$0xff]
    %v3449 = vld [vmem:[%s2147 + $0x28] sm:$0xff]
    %v3450 = vld [vmem:[%s2147 + $0x30] sm:$0xff]
    %v3451 = vld [vmem:[%s2147 + $0x38] sm:$0xff]
    %v3452 = vld [vmem:[%s2147 + $0x40] sm:$0xff]
    %v3453 = vld [vmem:[%s2147 + $0x48] sm:$0xff]
    %v3454 = vld [vmem:[%s2147 + $0x50] sm:$0xff]
    %v3455 = vld [vmem:[%s2147 + $0x58] sm:$0xff]
    %v3456 = vld [vmem:[%s2147 + $0x60] sm:$0xff]
    %v3457 = vld [vmem:[%s2147 + $0x68] sm:$0xff]
    %v3458 = vld [vmem:[%s2147 + $0x70] sm:$0xff]
    %v3459 = vld [vmem:[%s2147 + $0x78] sm:$0xff]
    %v3460 = vld [vmem:[%s2147 + $0x80] sm:$0xff]
    %v3461 = vld [vmem:[%s2147 + $0x88] sm:$0xff]
    %v3462 = vld [vmem:[%s2147 + $0x90] sm:$0xff]
    %v3463 = vld [vmem:[%s2147 + $0x98] sm:$0xff]
    %v3464 = vld [vmem:[%s2147 + $0xa0] sm:$0xff]
    %v3465 = vld [vmem:[%s2147 + $0xa8] sm:$0xff]
    %v3466 = vld [vmem:[%s2147 + $0xb0] sm:$0xff]
    %v3467 = vld [vmem:[%s2147 + $0xb8] sm:$0xff]
    %v3468 = vld [vmem:[%s2147 + $0xc0] sm:$0xff]
    %v3469 = vld [vmem:[%s2147 + $0xc8] sm:$0xff]
    %v3470 = vld [vmem:[%s2147 + $0xd0] sm:$0xff]
    %v3471 = vld [vmem:[%s2147 + $0xd8] sm:$0xff]
    %v3472 = vld [vmem:[%s2147 + $0xe0] sm:$0xff]
    %v3473 = vld [vmem:[%s2147 + $0xe8] sm:$0xff]
    %v3474 = vld [vmem:[%s2147 + $0xf0] sm:$0xff]
    %v3475 = vld [vmem:[%s2147 + $0xf8] sm:$0xff]
    %v3476 = vld [vmem:[%s2147 + $0x100] sm:$0xff]
    %v3477 = vld [vmem:[%s2147 + $0x108] sm:$0xff]
    %v3478 = vld [vmem:[%s2147 + $0x110] sm:$0xff]
    %v3479 = vld [vmem:[%s2147 + $0x118] sm:$0xff]
    %v3480 = vld [vmem:[%s2147 + $0x120] sm:$0xff]
    %v3481 = vld [vmem:[%s2147 + $0x128] sm:$0xff]
    %v3482 = vld [vmem:[%s2147 + $0x130] sm:$0xff]
    %v3483 = vld [vmem:[%s2147 + $0x138] sm:$0xff]
    %v3484 = vld [vmem:[%s2147 + $0x140] sm:$0xff]
    %v3485 = vld [vmem:[%s2147 + $0x148] sm:$0xff]
    %v3486 = vld [vmem:[%s2147 + $0x150] sm:$0xff]
    %v3487 = vld [vmem:[%s2147 + $0x158] sm:$0xff]
    %v3488 = vld [vmem:[%s2147 + $0x160] sm:$0xff]
    %v3489 = vld [vmem:[%s2147 + $0x168] sm:$0xff]
    %v3490 = vld [vmem:[%s2147 + $0x170] sm:$0xff]
    %v3491 = vld [vmem:[%s2147 + $0x178] sm:$0xff]
    %3492 = vmatprep.subr.mxu0 %v3445
    %3493 = vmatpush1.msra.mxu0 %v3444
    %3494 = vmatprep.subr.mxu0 %v3448
    %3495 = vmatpush1.msra.mxu0 %v3447
    %3496 = vmatprep.subr.mxu0 %v3451
    %3497 = vmatpush1.msra.mxu0 %v3450
    %3498 = vmatprep.subr.mxu0 %v3454
    %3499 = vmatpush1.msra.mxu0 %v3453
    %3500 = vmatprep.subr.mxu0 %v3457
    %3501 = vmatpush1.msra.mxu0 %v3456
    %3502 = vmatprep.subr.mxu0 %v3460
    %3503 = vmatpush1.msra.mxu0 %v3459
    %3504 = vmatprep.subr.mxu0 %v3463
    %3505 = vmatpush1.msra.mxu0 %v3462
    %3506 = vmatprep.subr.mxu0 %v3466
    %3507 = vmatpush1.msra.mxu0 %v3465
    %3508 = vmatprep.subr.mxu0 %v3469
    %3509 = vmatpush1.msra.mxu0 %v3468
    %3510 = vmatprep.subr.mxu0 %v3472
    %3511 = vmatpush1.msra.mxu0 %v3471
    %3512 = vmatprep.subr.mxu0 %v3475
    %3513 = vmatpush1.msra.mxu0 %v3474
    %3514 = vmatprep.subr.mxu0 %v3478
    %3515 = vmatpush1.msra.mxu0 %v3477
    %3516 = vmatprep.subr.mxu0 %v3481
    %3517 = vmatpush1.msra.mxu0 %v3480
    %3518 = vmatprep.subr.mxu0 %v3484
    %3519 = vmatpush1.msra.mxu0 %v3483
    %3520 = vmatprep.subr.mxu0 %v3487
    %3521 = vmatpush1.msra.mxu0 %v3486
    %3522 = vmatprep.subr.mxu0 %v3490
    %3523 = vmatpush1.msra.mxu0 %v3489
    %3524 = vmatprep.subr.mxu0 0.0
    %3525 = vmatpush1.msra.mxu0 0.0
    %3526 = vmatprep.subr.mxu0 0.0
    %3527 = vmatpush1.msra.mxu0 0.0
    %3528 = vmatprep.subr.mxu0 0.0
    %3529 = vmatpush1.msra.mxu0 0.0
    %3530 = vmatprep.subr.mxu0 0.0
    %3531 = vmatpush1.msra.mxu0 0.0
    %3532 = vmatprep.subr.mxu0 0.0
    %3533 = vmatpush1.msra.mxu0 0.0
    %3534 = vmatprep.subr.mxu0 0.0
    %3535 = vmatpush1.msra.mxu0 0.0
    %3536 = vmatprep.subr.mxu0 0.0
    %3537 = vmatpush1.msra.mxu0 0.0
    %3538 = vmatprep.subr.mxu0 0.0
    %3539 = vmatpush1.msra.mxu0 0.0
    %3540 = vmatprep.subr.mxu0 0.0
    %3541 = vmatpush1.msra.mxu0 0.0
    %3542 = vmatprep.subr.mxu0 0.0
    %3543 = vmatpush1.msra.mxu0 0.0
    %3544 = vmatprep.subr.mxu0 0.0
    %3545 = vmatpush1.msra.mxu0 0.0
    %3546 = vmatprep.subr.mxu0 0.0
    %3547 = vmatpush1.msra.mxu0 0.0
    %3548 = vmatprep.subr.mxu0 0.0
    %3549 = vmatpush1.msra.mxu0 0.0
    %3550 = vmatprep.subr.mxu0 0.0
    %3551 = vmatpush1.msra.mxu0 0.0
    %3552 = vmatprep.subr.mxu0 0.0
    %3553 = vmatpush1.msra.mxu0 0.0
    %3554 = vmatprep.subr.mxu0 0.0
    %3555 = vmatpush1.msra.mxu0 0.0
    %3556 = vmatprep.mubr.f32.mxu0 0.0
    %3557 = vmatmul.mubr.f32.gmra.mrb[0].mxu0 %v3437
    %v3558 = vpop.f32.mrb[0].mxu0
    %v3559 = vadd.f32 0.0, %v3558
    %v3560 = vpop.f32.mrb[0].mxu0
    %v3561 = vadd.f32 0.0, %v3560
    %3562 = vdwg.mxu0
    %3563 = vmatprep.subr.mxu0 0.0
    %3564 = vmatpush1.msra.mxu0 %v3446
    %3565 = vmatprep.subr.mxu0 0.0
    %3566 = vmatpush1.msra.mxu0 %v3449
    %3567 = vmatprep.subr.mxu0 0.0
    %3568 = vmatpush1.msra.mxu0 %v3452
    %3569 = vmatprep.subr.mxu0 0.0
    %3570 = vmatpush1.msra.mxu0 %v3455
    %3571 = vmatprep.subr.mxu0 0.0
    %3572 = vmatpush1.msra.mxu0 %v3458
    %3573 = vmatprep.subr.mxu0 0.0
    %3574 = vmatpush1.msra.mxu0 %v3461
    %3575 = vmatprep.subr.mxu0 0.0
    %3576 = vmatpush1.msra.mxu0 %v3464
    %3577 = vmatprep.subr.mxu0 0.0
    %3578 = vmatpush1.msra.mxu0 %v3467
    %3579 = vmatprep.subr.mxu0 0.0
    %3580 = vmatpush1.msra.mxu0 %v3470
    %3581 = vmatprep.subr.mxu0 0.0
    %3582 = vmatpush1.msra.mxu0 %v3473
    %3583 = vmatprep.subr.mxu0 0.0
    %3584 = vmatpush1.msra.mxu0 %v3476
    %3585 = vmatprep.subr.mxu0 0.0
    %3586 = vmatpush1.msra.mxu0 %v3479
    %3587 = vmatprep.subr.mxu0 0.0
    %3588 = vmatpush1.msra.mxu0 %v3482
    %3589 = vmatprep.subr.mxu0 0.0
    %3590 = vmatpush1.msra.mxu0 %v3485
    %3591 = vmatprep.subr.mxu0 0.0
    %3592 = vmatpush1.msra.mxu0 %v3488
    %3593 = vmatprep.subr.mxu0 0.0
    %3594 = vmatpush1.msra.mxu0 %v3491
    %3595 = vmatprep.subr.mxu0 0.0
    %3596 = vmatpush1.msra.mxu0 0.0
    %3597 = vmatprep.subr.mxu0 0.0
    %3598 = vmatpush1.msra.mxu0 0.0
    %3599 = vmatprep.subr.mxu0 0.0
    %3600 = vmatpush1.msra.mxu0 0.0
    %3601 = vmatprep.subr.mxu0 0.0
    %3602 = vmatpush1.msra.mxu0 0.0
    %3603 = vmatprep.subr.mxu0 0.0
    %3604 = vmatpush1.msra.mxu0 0.0
    %3605 = vmatprep.subr.mxu0 0.0
    %3606 = vmatpush1.msra.mxu0 0.0
    %3607 = vmatprep.subr.mxu0 0.0
    %3608 = vmatpush1.msra.mxu0 0.0
    %3609 = vmatprep.subr.mxu0 0.0
    %3610 = vmatpush1.msra.mxu0 0.0
    %3611 = vmatprep.subr.mxu0 0.0
    %3612 = vmatpush1.msra.mxu0 0.0
    %3613 = vmatprep.subr.mxu0 0.0
    %3614 = vmatpush1.msra.mxu0 0.0
    %3615 = vmatprep.subr.mxu0 0.0
    %3616 = vmatpush1.msra.mxu0 0.0
    %3617 = vmatprep.subr.mxu0 0.0
    %3618 = vmatpush1.msra.mxu0 0.0
    %3619 = vmatprep.subr.mxu0 0.0
    %3620 = vmatpush1.msra.mxu0 0.0
    %3621 = vmatprep.subr.mxu0 0.0
    %3622 = vmatpush1.msra.mxu0 0.0
    %3623 = vmatprep.subr.mxu0 0.0
    %3624 = vmatpush1.msra.mxu0 0.0
    %3625 = vmatprep.subr.mxu0 0.0
    %3626 = vmatpush1.msra.mxu0 0.0
    %3627 = vmatprep.mubr.f32.mxu0 0.0
    %3628 = vmatmul.mubr.f32.gmra.mrb[0].mxu0 %v3437
    %v3629 = vpop.f32.mrb[0].mxu0
    %v3630 = vadd.f32 0.0, %v3629
    %v3631 = vpop.f32.mrb[0].mxu0
    %3632 = vdwg.mxu0
    %v3633 = vadd.f32 %v3441, %v3559
    %v3634 = vxor.u32 %v3633, 2147483648
    %v3635 = vmul.f32 %v3634, 1.442695
    %v3636 = vpow.pop %v3635
    %v3637 = vadd.f32 %v3636, 1.0
    %v3638 = vrcp.pop %v3637
    %v3639 = vmul.f32 1.0, %v3638
    %v3640 = vadd.f32 %v3442, %v3561
    %v3641 = vxor.u32 %v3640, 2147483648
    %v3642 = vmul.f32 %v3641, 1.442695
    %v3643 = vpow.pop %v3642
    %v3644 = vadd.f32 %v3643, 1.0
    %v3645 = vrcp.pop %v3644
    %v3646 = vmul.f32 1.0, %v3645
    %v3647 = vadd.f32 %v3630, %v2138
    %v3648 = vmul.f32 %v3639, %v3647
    %v3649 = vadd.f32 %v3443, %v3648
    %v3650 = vtanh.pop %v3649
    %v3651 = vsub.f32 %v3437, %v3650
    %v3652 = vmul.f32 %v3646, %v3651
    %v3653 = vadd.f32 %v3650, %v3652
    %3654 = vst [vmem:[%s1596] sm:$0xff] %v3653
    %s3655 = smul.addr %s1598, 8
    %s3656 = scalar_lea.vmem [#allocation2], %s3655
    %v3657 = vld [vmem:[%s3656] sm:$0xff]
    %v3658 = vld [vmem:[%s3656 + $0x8] sm:$0xff]
    %v3659 = vld [vmem:[%s3656 + $0x10] sm:$0xff]
    %v3660 = vld [vmem:[%s2147] sm:$0xff]
    %v3661 = vld [vmem:[%s2147 + $0x8] sm:$0xff]
    %v3662 = vld [vmem:[%s2147 + $0x10] sm:$0xff]
    %v3663 = vld [vmem:[%s2147 + $0x18] sm:$0xff]
    %v3664 = vld [vmem:[%s2147 + $0x20] sm:$0xff]
    %v3665 = vld [vmem:[%s2147 + $0x28] sm:$0xff]
    %v3666 = vld [vmem:[%s2147 + $0x30] sm:$0xff]
    %v3667 = vld [vmem:[%s2147 + $0x38] sm:$0xff]
    %v3668 = vld [vmem:[%s2147 + $0x40] sm:$0xff]
    %v3669 = vld [vmem:[%s2147 + $0x48] sm:$0xff]
    %v3670 = vld [vmem:[%s2147 + $0x50] sm:$0xff]
    %v3671 = vld [vmem:[%s2147 + $0x58] sm:$0xff]
    %v3672 = vld [vmem:[%s2147 + $0x60] sm:$0xff]
    %v3673 = vld [vmem:[%s2147 + $0x68] sm:$0xff]
    %v3674 = vld [vmem:[%s2147 + $0x70] sm:$0xff]
    %v3675 = vld [vmem:[%s2147 + $0x78] sm:$0xff]
    %v3676 = vld [vmem:[%s2147 + $0x80] sm:$0xff]
    %v3677 = vld [vmem:[%s2147 + $0x88] sm:$0xff]
    %v3678 = vld [vmem:[%s2147 + $0x90] sm:$0xff]
    %v3679 = vld [vmem:[%s2147 + $0x98] sm:$0xff]
    %v3680 = vld [vmem:[%s2147 + $0xa0] sm:$0xff]
    %v3681 = vld [vmem:[%s2147 + $0xa8] sm:$0xff]
    %v3682 = vld [vmem:[%s2147 + $0xb0] sm:$0xff]
    %v3683 = vld [vmem:[%s2147 + $0xb8] sm:$0xff]
    %v3684 = vld [vmem:[%s2147 + $0xc0] sm:$0xff]
    %v3685 = vld [vmem:[%s2147 + $0xc8] sm:$0xff]
    %v3686 = vld [vmem:[%s2147 + $0xd0] sm:$0xff]
    %v3687 = vld [vmem:[%s2147 + $0xd8] sm:$0xff]
    %v3688 = vld [vmem:[%s2147 + $0xe0] sm:$0xff]
    %v3689 = vld [vmem:[%s2147 + $0xe8] sm:$0xff]
    %v3690 = vld [vmem:[%s2147 + $0xf0] sm:$0xff]
    %v3691 = vld [vmem:[%s2147 + $0xf8] sm:$0xff]
    %v3692 = vld [vmem:[%s2147 + $0x100] sm:$0xff]
    %v3693 = vld [vmem:[%s2147 + $0x108] sm:$0xff]
    %v3694 = vld [vmem:[%s2147 + $0x110] sm:$0xff]
    %v3695 = vld [vmem:[%s2147 + $0x118] sm:$0xff]
    %v3696 = vld [vmem:[%s2147 + $0x120] sm:$0xff]
    %v3697 = vld [vmem:[%s2147 + $0x128] sm:$0xff]
    %v3698 = vld [vmem:[%s2147 + $0x130] sm:$0xff]
    %v3699 = vld [vmem:[%s2147 + $0x138] sm:$0xff]
    %v3700 = vld [vmem:[%s2147 + $0x140] sm:$0xff]
    %v3701 = vld [vmem:[%s2147 + $0x148] sm:$0xff]
    %v3702 = vld [vmem:[%s2147 + $0x150] sm:$0xff]
    %v3703 = vld [vmem:[%s2147 + $0x158] sm:$0xff]
    %v3704 = vld [vmem:[%s2147 + $0x160] sm:$0xff]
    %v3705 = vld [vmem:[%s2147 + $0x168] sm:$0xff]
    %v3706 = vld [vmem:[%s2147 + $0x170] sm:$0xff]
    %v3707 = vld [vmem:[%s2147 + $0x178] sm:$0xff]
    %3708 = vmatprep.subr.mxu0 %v3661
    %3709 = vmatpush1.msra.mxu0 %v3660
    %3710 = vmatprep.subr.mxu0 %v3664
    %3711 = vmatpush1.msra.mxu0 %v3663
    %3712 = vmatprep.subr.mxu0 %v3667
    %3713 = vmatpush1.msra.mxu0 %v3666
    %3714 = vmatprep.subr.mxu0 %v3670
    %3715 = vmatpush1.msra.mxu0 %v3669
    %3716 = vmatprep.subr.mxu0 %v3673
    %3717 = vmatpush1.msra.mxu0 %v3672
    %3718 = vmatprep.subr.mxu0 %v3676
    %3719 = vmatpush1.msra.mxu0 %v3675
    %3720 = vmatprep.subr.mxu0 %v3679
    %3721 = vmatpush1.msra.mxu0 %v3678
    %3722 = vmatprep.subr.mxu0 %v3682
    %3723 = vmatpush1.msra.mxu0 %v3681
    %3724 = vmatprep.subr.mxu0 %v3685
    %3725 = vmatpush1.msra.mxu0 %v3684
    %3726 = vmatprep.subr.mxu0 %v3688
    %3727 = vmatpush1.msra.mxu0 %v3687
    %3728 = vmatprep.subr.mxu0 %v3691
    %3729 = vmatpush1.msra.mxu0 %v3690
    %3730 = vmatprep.subr.mxu0 %v3694
    %3731 = vmatpush1.msra.mxu0 %v3693
    %3732 = vmatprep.subr.mxu0 %v3697
    %3733 = vmatpush1.msra.mxu0 %v3696
    %3734 = vmatprep.subr.mxu0 %v3700
    %3735 = vmatpush1.msra.mxu0 %v3699
    %3736 = vmatprep.subr.mxu0 %v3703
    %3737 = vmatpush1.msra.mxu0 %v3702
    %3738 = vmatprep.subr.mxu0 %v3706
    %3739 = vmatpush1.msra.mxu0 %v3705
    %3740 = vmatprep.subr.mxu0 0.0
    %3741 = vmatpush1.msra.mxu0 0.0
    %3742 = vmatprep.subr.mxu0 0.0
    %3743 = vmatpush1.msra.mxu0 0.0
    %3744 = vmatprep.subr.mxu0 0.0
    %3745 = vmatpush1.msra.mxu0 0.0
    %3746 = vmatprep.subr.mxu0 0.0
    %3747 = vmatpush1.msra.mxu0 0.0
    %3748 = vmatprep.subr.mxu0 0.0
    %3749 = vmatpush1.msra.mxu0 0.0
    %3750 = vmatprep.subr.mxu0 0.0
    %3751 = vmatpush1.msra.mxu0 0.0
    %3752 = vmatprep.subr.mxu0 0.0
    %3753 = vmatpush1.msra.mxu0 0.0
    %3754 = vmatprep.subr.mxu0 0.0
    %3755 = vmatpush1.msra.mxu0 0.0
    %3756 = vmatprep.subr.mxu0 0.0
    %3757 = vmatpush1.msra.mxu0 0.0
    %3758 = vmatprep.subr.mxu0 0.0
    %3759 = vmatpush1.msra.mxu0 0.0
    %3760 = vmatprep.subr.mxu0 0.0
    %3761 = vmatpush1.msra.mxu0 0.0
    %3762 = vmatprep.subr.mxu0 0.0
    %3763 = vmatpush1.msra.mxu0 0.0
    %3764 = vmatprep.subr.mxu0 0.0
    %3765 = vmatpush1.msra.mxu0 0.0
    %3766 = vmatprep.subr.mxu0 0.0
    %3767 = vmatpush1.msra.mxu0 0.0
    %3768 = vmatprep.subr.mxu0 0.0
    %3769 = vmatpush1.msra.mxu0 0.0
    %3770 = vmatprep.subr.mxu0 0.0
    %3771 = vmatpush1.msra.mxu0 0.0
    %3772 = vmatprep.mubr.f32.mxu0 0.0
    %3773 = vmatmul.mubr.f32.gmra.mrb[0].mxu0 %v3653
    %v3774 = vpop.f32.mrb[0].mxu0
    %v3775 = vadd.f32 0.0, %v3774
    %v3776 = vpop.f32.mrb[0].mxu0
    %v3777 = vadd.f32 0.0, %v3776
    %3778 = vdwg.mxu0
    %3779 = vmatprep.subr.mxu0 0.0
    %3780 = vmatpush1.msra.mxu0 %v3662
    %3781 = vmatprep.subr.mxu0 0.0
    %3782 = vmatpush1.msra.mxu0 %v3665
    %3783 = vmatprep.subr.mxu0 0.0
    %3784 = vmatpush1.msra.mxu0 %v3668
    %3785 = vmatprep.subr.mxu0 0.0
    %3786 = vmatpush1.msra.mxu0 %v3671
    %3787 = vmatprep.subr.mxu0 0.0
    %3788 = vmatpush1.msra.mxu0 %v3674
    %3789 = vmatprep.subr.mxu0 0.0
    %3790 = vmatpush1.msra.mxu0 %v3677
    %3791 = vmatprep.subr.mxu0 0.0
    %3792 = vmatpush1.msra.mxu0 %v3680
    %3793 = vmatprep.subr.mxu0 0.0
    %3794 = vmatpush1.msra.mxu0 %v3683
    %3795 = vmatprep.subr.mxu0 0.0
    %3796 = vmatpush1.msra.mxu0 %v3686
    %3797 = vmatprep.subr.mxu0 0.0
    %3798 = vmatpush1.msra.mxu0 %v3689
    %3799 = vmatprep.subr.mxu0 0.0
    %3800 = vmatpush1.msra.mxu0 %v3692
    %3801 = vmatprep.subr.mxu0 0.0
    %3802 = vmatpush1.msra.mxu0 %v3695
    %3803 = vmatprep.subr.mxu0 0.0
    %3804 = vmatpush1.msra.mxu0 %v3698
    %3805 = vmatprep.subr.mxu0 0.0
    %3806 = vmatpush1.msra.mxu0 %v3701
    %3807 = vmatprep.subr.mxu0 0.0
    %3808 = vmatpush1.msra.mxu0 %v3704
    %3809 = vmatprep.subr.mxu0 0.0
    %3810 = vmatpush1.msra.mxu0 %v3707
    %3811 = vmatprep.subr.mxu0 0.0
    %3812 = vmatpush1.msra.mxu0 0.0
    %3813 = vmatprep.subr.mxu0 0.0
    %3814 = vmatpush1.msra.mxu0 0.0
    %3815 = vmatprep.subr.mxu0 0.0
    %3816 = vmatpush1.msra.mxu0 0.0
    %3817 = vmatprep.subr.mxu0 0.0
    %3818 = vmatpush1.msra.mxu0 0.0
    %3819 = vmatprep.subr.mxu0 0.0
    %3820 = vmatpush1.msra.mxu0 0.0
    %3821 = vmatprep.subr.mxu0 0.0
    %3822 = vmatpush1.msra.mxu0 0.0
    %3823 = vmatprep.subr.mxu0 0.0
    %3824 = vmatpush1.msra.mxu0 0.0
    %3825 = vmatprep.subr.mxu0 0.0
    %3826 = vmatpush1.msra.mxu0 0.0
    %3827 = vmatprep.subr.mxu0 0.0
    %3828 = vmatpush1.msra.mxu0 0.0
    %3829 = vmatprep.subr.mxu0 0.0
    %3830 = vmatpush1.msra.mxu0 0.0
    %3831 = vmatprep.subr.mxu0 0.0
    %3832 = vmatpush1.msra.mxu0 0.0
    %3833 = vmatprep.subr.mxu0 0.0
    %3834 = vmatpush1.msra.mxu0 0.0
    %3835 = vmatprep.subr.mxu0 0.0
    %3836 = vmatpush1.msra.mxu0 0.0
    %3837 = vmatprep.subr.mxu0 0.0
    %3838 = vmatpush1.msra.mxu0 0.0
    %3839 = vmatprep.subr.mxu0 0.0
    %3840 = vmatpush1.msra.mxu0 0.0
    %3841 = vmatprep.subr.mxu0 0.0
    %3842 = vmatpush1.msra.mxu0 0.0
    %3843 = vmatprep.mubr.f32.mxu0 0.0
    %3844 = vmatmul.mubr.f32.gmra.mrb[0].mxu0 %v3653
    %v3845 = vpop.f32.mrb[0].mxu0
    %v3846 = vadd.f32 0.0, %v3845
    %v3847 = vpop.f32.mrb[0].mxu0
    %3848 = vdwg.mxu0
    %v3849 = vadd.f32 %v3657, %v3775
    %v3850 = vxor.u32 %v3849, 2147483648
    %v3851 = vmul.f32 %v3850, 1.442695
    %v3852 = vpow.pop %v3851
    %v3853 = vadd.f32 %v3852, 1.0
    %v3854 = vrcp.pop %v3853
    %v3855 = vmul.f32 1.0, %v3854
    %v3856 = vadd.f32 %v3658, %v3777
    %v3857 = vxor.u32 %v3856, 2147483648
    %v3858 = vmul.f32 %v3857, 1.442695
    %v3859 = vpow.pop %v3858
    %v3860 = vadd.f32 %v3859, 1.0
    %v3861 = vrcp.pop %v3860
    %v3862 = vmul.f32 1.0, %v3861
    %v3863 = vadd.f32 %v3846, %v2138
    %v3864 = vmul.f32 %v3855, %v3863
    %v3865 = vadd.f32 %v3659, %v3864
    %v3866 = vtanh.pop %v3865
    %v3867 = vsub.f32 %v3653, %v3866
    %v3868 = vmul.f32 %v3862, %v3867
    %v3869 = vadd.f32 %v3866, %v3868
    %3870 = vst [vmem:[%s1814] sm:$0xff] %v3869
    %3871 = vst [vmem:[%s2140] sm:$0xff] %v3869
    %v3872 = vld [vmem:[#allocation3] sm:$0xff]
    %v3873 = vld [vmem:[#allocation3 + $0x8] sm:$0xff]
    %v3874 = vld [vmem:[#allocation3 + $0x10] sm:$0xff]
    %v3875 = vld [vmem:[#allocation3 + $0x18] sm:$0xff]
    %v3876 = vld [vmem:[#allocation3 + $0x20] sm:$0xff]
    %v3877 = vld [vmem:[#allocation3 + $0x28] sm:$0xff]
    %v3878 = vld [vmem:[#allocation3 + $0x30] sm:$0xff]
    %v3879 = vld [vmem:[#allocation3 + $0x38] sm:$0xff]
    %s3880 = scalar_lea.vmem [#allocation4], 384
    %v3881 = vld [vmem:[%s3880] sm:$0xff]
    %v3882 = vld [vmem:[%s3880 + $0x8] sm:$0xff]
    %v3883 = vld [vmem:[%s3880 + $0x10] sm:$0xff]
    %v3884 = vld [vmem:[%s3880 + $0x18] sm:$0xff]
    %v3885 = vld [vmem:[%s3880 + $0x20] sm:$0xff]
    %v3886 = vld [vmem:[%s3880 + $0x28] sm:$0xff]
    %v3887 = vld [vmem:[%s3880 + $0x30] sm:$0xff]
    %v3888 = vld [vmem:[%s3880 + $0x38] sm:$0xff]
    %v3889 = vld [vmem:[%s3880 + $0x40] sm:$0xff]
    %v3890 = vld [vmem:[%s3880 + $0x48] sm:$0xff]
    %v3891 = vld [vmem:[%s3880 + $0x50] sm:$0xff]
    %v3892 = vld [vmem:[%s3880 + $0x58] sm:$0xff]
    %v3893 = vld [vmem:[%s3880 + $0x60] sm:$0xff]
    %v3894 = vld [vmem:[%s3880 + $0x68] sm:$0xff]
    %v3895 = vld [vmem:[%s3880 + $0x70] sm:$0xff]
    %v3896 = vld [vmem:[%s3880 + $0x78] sm:$0xff]
    %v3897 = vld [vmem:[%s3880 + $0x80] sm:$0xff]
    %v3898 = vld [vmem:[%s3880 + $0x88] sm:$0xff]
    %v3899 = vld [vmem:[%s3880 + $0x90] sm:$0xff]
    %v3900 = vld [vmem:[%s3880 + $0x98] sm:$0xff]
    %v3901 = vld [vmem:[%s3880 + $0xa0] sm:$0xff]
    %v3902 = vld [vmem:[%s3880 + $0xa8] sm:$0xff]
    %v3903 = vld [vmem:[%s3880 + $0xb0] sm:$0xff]
    %v3904 = vld [vmem:[%s3880 + $0xb8] sm:$0xff]
    %v3905 = vld [vmem:[%s3880 + $0xc0] sm:$0xff]
    %v3906 = vld [vmem:[%s3880 + $0xc8] sm:$0xff]
    %v3907 = vld [vmem:[%s3880 + $0xd0] sm:$0xff]
    %v3908 = vld [vmem:[%s3880 + $0xd8] sm:$0xff]
    %v3909 = vld [vmem:[%s3880 + $0xe0] sm:$0xff]
    %v3910 = vld [vmem:[%s3880 + $0xe8] sm:$0xff]
    %v3911 = vld [vmem:[%s3880 + $0xf0] sm:$0xff]
    %v3912 = vld [vmem:[%s3880 + $0xf8] sm:$0xff]
    %v3913 = vld [vmem:[%s3880 + $0x100] sm:$0xff]
    %v3914 = vld [vmem:[%s3880 + $0x108] sm:$0xff]
    %v3915 = vld [vmem:[%s3880 + $0x110] sm:$0xff]
    %v3916 = vld [vmem:[%s3880 + $0x118] sm:$0xff]
    %v3917 = vld [vmem:[%s3880 + $0x120] sm:$0xff]
    %v3918 = vld [vmem:[%s3880 + $0x128] sm:$0xff]
    %v3919 = vld [vmem:[%s3880 + $0x130] sm:$0xff]
    %v3920 = vld [vmem:[%s3880 + $0x138] sm:$0xff]
    %v3921 = vld [vmem:[%s3880 + $0x140] sm:$0xff]
    %v3922 = vld [vmem:[%s3880 + $0x148] sm:$0xff]
    %v3923 = vld [vmem:[%s3880 + $0x150] sm:$0xff]
    %v3924 = vld [vmem:[%s3880 + $0x158] sm:$0xff]
    %v3925 = vld [vmem:[%s3880 + $0x160] sm:$0xff]
    %v3926 = vld [vmem:[%s3880 + $0x168] sm:$0xff]
    %v3927 = vld [vmem:[%s3880 + $0x170] sm:$0xff]
    %v3928 = vld [vmem:[%s3880 + $0x178] sm:$0xff]
    %s3929 = scalar_lea.vmem %s4, 3
    %v3930 = vld [vmem:[%s3929] sm:$0x7]
    %v3932 = vlaneseq
    %v3933 = vshrl.u32 %v3932, 7
    %v3934 = vsub.s32 0, %v3933
    %v3935 = vrot.slane %v3930, %v3934
    %v3936 = vlaneseq
    %v3937 = vshrl.u32 %v3936, 7
    %v3938 = vsub.s32 1, %v3937
    %v3939 = vrot.slane %v3930, %v3938
    %v3940 = vlaneseq
    %v3941 = vshrl.u32 %v3940, 7
    %v3942 = vsub.s32 2, %v3941
    %v3943 = vrot.slane %v3930, %v3942
    %3947 = vmatprep.subr.mxu0 %v3882
    %3948 = vmatpush1.msra.mxu0 %v3881
    %3949 = vmatprep.subr.mxu0 %v3885
    %3950 = vmatpush1.msra.mxu0 %v3884
    %3951 = vmatprep.subr.mxu0 %v3888
    %3952 = vmatpush1.msra.mxu0 %v3887
    %3953 = vmatprep.subr.mxu0 %v3891
    %3954 = vmatpush1.msra.mxu0 %v3890
    %3955 = vmatprep.subr.mxu0 %v3894
    %3956 = vmatpush1.msra.mxu0 %v3893
    %3957 = vmatprep.subr.mxu0 %v3897
    %3958 = vmatpush1.msra.mxu0 %v3896
    %3959 = vmatprep.subr.mxu0 %v3900
    %3960 = vmatpush1.msra.mxu0 %v3899
    %3961 = vmatprep.subr.mxu0 %v3903
    %3962 = vmatpush1.msra.mxu0 %v3902
    %3963 = vmatprep.subr.mxu0 %v3906
    %3964 = vmatpush1.msra.mxu0 %v3905
    %3965 = vmatprep.subr.mxu0 %v3909
    %3966 = vmatpush1.msra.mxu0 %v3908
    %3967 = vmatprep.subr.mxu0 %v3912
    %3968 = vmatpush1.msra.mxu0 %v3911
    %3969 = vmatprep.subr.mxu0 %v3915
    %3970 = vmatpush1.msra.mxu0 %v3914
    %3971 = vmatprep.subr.mxu0 %v3918
    %3972 = vmatpush1.msra.mxu0 %v3917
    %3973 = vmatprep.subr.mxu0 %v3921
    %3974 = vmatpush1.msra.mxu0 %v3920
    %3975 = vmatprep.subr.mxu0 %v3924
    %3976 = vmatpush1.msra.mxu0 %v3923
    %3977 = vmatprep.subr.mxu0 %v3927
    %3978 = vmatpush1.msra.mxu0 %v3926
    %3979 = vmatprep.subr.mxu0 0.0
    %3980 = vmatpush1.msra.mxu0 0.0
    %3981 = vmatprep.subr.mxu0 0.0
    %3982 = vmatpush1.msra.mxu0 0.0
    %3983 = vmatprep.subr.mxu0 0.0
    %3984 = vmatpush1.msra.mxu0 0.0
    %3985 = vmatprep.subr.mxu0 0.0
    %3986 = vmatpush1.msra.mxu0 0.0
    %3987 = vmatprep.subr.mxu0 0.0
    %3988 = vmatpush1.msra.mxu0 0.0
    %3989 = vmatprep.subr.mxu0 0.0
    %3990 = vmatpush1.msra.mxu0 0.0
    %3991 = vmatprep.subr.mxu0 0.0
    %3992 = vmatpush1.msra.mxu0 0.0
    %3993 = vmatprep.subr.mxu0 0.0
    %3994 = vmatpush1.msra.mxu0 0.0
    %3995 = vmatprep.subr.mxu0 0.0
    %3996 = vmatpush1.msra.mxu0 0.0
    %3997 = vmatprep.subr.mxu0 0.0
    %3998 = vmatpush1.msra.mxu0 0.0
    %3999 = vmatprep.subr.mxu0 0.0
    %4000 = vmatpush1.msra.mxu0 0.0
    %4001 = vmatprep.subr.mxu0 0.0
    %4002 = vmatpush1.msra.mxu0 0.0
    %4003 = vmatprep.subr.mxu0 0.0
    %4004 = vmatpush1.msra.mxu0 0.0
    %4005 = vmatprep.subr.mxu0 0.0
    %4006 = vmatpush1.msra.mxu0 0.0
    %4007 = vmatprep.subr.mxu0 0.0
    %4008 = vmatpush1.msra.mxu0 0.0
    %4009 = vmatprep.subr.mxu0 0.0
    %4010 = vmatpush1.msra.mxu0 0.0
    %4011 = vmatprep.mubr.f32.mxu0 0.0
    %4012 = vmatmul.mubr.f32.gmra.mrb[0].mxu0 %v3872
    %v4013 = vpop.f32.mrb[0].mxu0
    %v4014 = vadd.f32 %v3935, %v4013
    %v4015 = vpop.f32.mrb[0].mxu0
    %v4016 = vadd.f32 %v3939, %v4015
    %4017 = vmatprep.mubr.f32.mxu0 0.0
    %4018 = vmatmul.mubr.f32.gmra.mrb[0].mxu0 %v3873
    %v4019 = vpop.f32.mrb[0].mxu0
    %v4020 = vadd.f32 %v3935, %v4019
    %v4021 = vpop.f32.mrb[0].mxu0
    %v4022 = vadd.f32 %v3939, %v4021
    %4023 = vmatprep.mubr.f32.mxu0 0.0
    %4024 = vmatmul.mubr.f32.gmra.mrb[0].mxu0 %v3874
    %v4025 = vpop.f32.mrb[0].mxu0
    %v4026 = vadd.f32 %v3935, %v4025
    %v4027 = vpop.f32.mrb[0].mxu0
    %v4028 = vadd.f32 %v3939, %v4027
    %4029 = vmatprep.mubr.f32.mxu0 0.0
    %4030 = vmatmul.mubr.f32.gmra.mrb[0].mxu0 %v3875
    %v4031 = vpop.f32.mrb[0].mxu0
    %v4032 = vadd.f32 %v3935, %v4031
    %v4033 = vpop.f32.mrb[0].mxu0
    %v4034 = vadd.f32 %v3939, %v4033
    %4035 = vmatprep.mubr.f32.mxu0 0.0
    %4036 = vmatmul.mubr.f32.gmra.mrb[0].mxu0 %v3876
    %v4037 = vpop.f32.mrb[0].mxu0
    %v4038 = vadd.f32 %v3935, %v4037
    %v4039 = vpop.f32.mrb[0].mxu0
    %v4040 = vadd.f32 %v3939, %v4039
    %4041 = vmatprep.mubr.f32.mxu0 0.0
    %4042 = vmatmul.mubr.f32.gmra.mrb[0].mxu0 %v3877
    %v4043 = vpop.f32.mrb[0].mxu0
    %v4044 = vadd.f32 %v3935, %v4043
    %v4045 = vpop.f32.mrb[0].mxu0
    %v4046 = vadd.f32 %v3939, %v4045
    %4047 = vmatprep.mubr.f32.mxu0 0.0
    %4048 = vmatmul.mubr.f32.gmra.mrb[0].mxu0 %v3878
    %v4049 = vpop.f32.mrb[0].mxu0
    %v4050 = vadd.f32 %v3935, %v4049
    %v4051 = vpop.f32.mrb[0].mxu0
    %v4052 = vadd.f32 %v3939, %v4051
    %4053 = vmatprep.mubr.f32.mxu0 0.0
    %4054 = vmatmul.mubr.f32.gmra.mrb[0].mxu0 %v3879
    %v4055 = vpop.f32.mrb[0].mxu0
    %v4056 = vadd.f32 %v3935, %v4055
    %v4057 = vpop.f32.mrb[0].mxu0
    %v4058 = vadd.f32 %v3939, %v4057
    %4059 = vdwg.mxu0
    %4060 = vmatprep.subr.mxu0 0.0
    %4061 = vmatpush1.msra.mxu0 %v3883
    %4062 = vmatprep.subr.mxu0 0.0
    %4063 = vmatpush1.msra.mxu0 %v3886
    %4064 = vmatprep.subr.mxu0 0.0
    %4065 = vmatpush1.msra.mxu0 %v3889
    %4066 = vmatprep.subr.mxu0 0.0
    %4067 = vmatpush1.msra.mxu0 %v3892
    %4068 = vmatprep.subr.mxu0 0.0
    %4069 = vmatpush1.msra.mxu0 %v3895
    %4070 = vmatprep.subr.mxu0 0.0
    %4071 = vmatpush1.msra.mxu0 %v3898
    %4072 = vmatprep.subr.mxu0 0.0
    %4073 = vmatpush1.msra.mxu0 %v3901
    %4074 = vmatprep.subr.mxu0 0.0
    %4075 = vmatpush1.msra.mxu0 %v3904
    %4076 = vmatprep.subr.mxu0 0.0
    %4077 = vmatpush1.msra.mxu0 %v3907
    %4078 = vmatprep.subr.mxu0 0.0
    %4079 = vmatpush1.msra.mxu0 %v3910
    %4080 = vmatprep.subr.mxu0 0.0
    %4081 = vmatpush1.msra.mxu0 %v3913
    %4082 = vmatprep.subr.mxu0 0.0
    %4083 = vmatpush1.msra.mxu0 %v3916
    %4084 = vmatprep.subr.mxu0 0.0
    %4085 = vmatpush1.msra.mxu0 %v3919
    %4086 = vmatprep.subr.mxu0 0.0
    %4087 = vmatpush1.msra.mxu0 %v3922
    %4088 = vmatprep.subr.mxu0 0.0
    %4089 = vmatpush1.msra.mxu0 %v3925
    %4090 = vmatprep.subr.mxu0 0.0
    %4091 = vmatpush1.msra.mxu0 %v3928
    %4092 = vmatprep.subr.mxu0 0.0
    %4093 = vmatpush1.msra.mxu0 0.0
    %4094 = vmatprep.subr.mxu0 0.0
    %4095 = vmatpush1.msra.mxu0 0.0
    %4096 = vmatprep.subr.mxu0 0.0
    %4097 = vmatpush1.msra.mxu0 0.0
    %4098 = vmatprep.subr.mxu0 0.0
    %4099 = vmatpush1.msra.mxu0 0.0
    %4100 = vmatprep.subr.mxu0 0.0
    %4101 = vmatpush1.msra.mxu0 0.0
    %4102 = vmatprep.subr.mxu0 0.0
    %4103 = vmatpush1.msra.mxu0 0.0
    %4104 = vmatprep.subr.mxu0 0.0
    %4105 = vmatpush1.msra.mxu0 0.0
    %4106 = vmatprep.subr.mxu0 0.0
    %4107 = vmatpush1.msra.mxu0 0.0
    %4108 = vmatprep.subr.mxu0 0.0
    %4109 = vmatpush1.msra.mxu0 0.0
    %4110 = vmatprep.subr.mxu0 0.0
    %4111 = vmatpush1.msra.mxu0 0.0
    %4112 = vmatprep.subr.mxu0 0.0
    %4113 = vmatpush1.msra.mxu0 0.0
    %4114 = vmatprep.subr.mxu0 0.0
    %4115 = vmatpush1.msra.mxu0 0.0
    %4116 = vmatprep.subr.mxu0 0.0
    %4117 = vmatpush1.msra.mxu0 0.0
    %4118 = vmatprep.subr.mxu0 0.0
    %4119 = vmatpush1.msra.mxu0 0.0
    %4120 = vmatprep.subr.mxu0 0.0
    %4121 = vmatpush1.msra.mxu0 0.0
    %4122 = vmatprep.subr.mxu0 0.0
    %4123 = vmatpush1.msra.mxu0 0.0
    %4124 = vmatprep.mubr.f32.mxu0 0.0
    %4125 = vmatmul.mubr.f32.gmra.mrb[0].mxu0 %v3872
    %v4126 = vpop.f32.mrb[0].mxu0
    %v4127 = vadd.f32 %v3943, %v4126
    %v4128 = vpop.f32.mrb[0].mxu0
    %4129 = vmatprep.mubr.f32.mxu0 0.0
    %4130 = vmatmul.mubr.f32.gmra.mrb[0].mxu0 %v3873
    %v4131 = vpop.f32.mrb[0].mxu0
    %v4132 = vadd.f32 %v3943, %v4131
    %v4133 = vpop.f32.mrb[0].mxu0
    %4134 = vmatprep.mubr.f32.mxu0 0.0
    %4135 = vmatmul.mubr.f32.gmra.mrb[0].mxu0 %v3874
    %v4136 = vpop.f32.mrb[0].mxu0
    %v4137 = vadd.f32 %v3943, %v4136
    %v4138 = vpop.f32.mrb[0].mxu0
    %4139 = vmatprep.mubr.f32.mxu0 0.0
    %4140 = vmatmul.mubr.f32.gmra.mrb[0].mxu0 %v3875
    %v4141 = vpop.f32.mrb[0].mxu0
    %v4142 = vadd.f32 %v3943, %v4141
    %v4143 = vpop.f32.mrb[0].mxu0
    %4144 = vmatprep.mubr.f32.mxu0 0.0
    %4145 = vmatmul.mubr.f32.gmra.mrb[0].mxu0 %v3876
    %v4146 = vpop.f32.mrb[0].mxu0
    %v4147 = vadd.f32 %v3943, %v4146
    %v4148 = vpop.f32.mrb[0].mxu0
    %4149 = vmatprep.mubr.f32.mxu0 0.0
    %4150 = vmatmul.mubr.f32.gmra.mrb[0].mxu0 %v3877
    %v4151 = vpop.f32.mrb[0].mxu0
    %v4152 = vadd.f32 %v3943, %v4151
    %v4153 = vpop.f32.mrb[0].mxu0
    %4154 = vmatprep.mubr.f32.mxu0 0.0
    %4155 = vmatmul.mubr.f32.gmra.mrb[0].mxu0 %v3878
    %v4156 = vpop.f32.mrb[0].mxu0
    %v4157 = vadd.f32 %v3943, %v4156
    %v4158 = vpop.f32.mrb[0].mxu0
    %4159 = vmatprep.mubr.f32.mxu0 0.0
    %4160 = vmatmul.mubr.f32.gmra.mrb[0].mxu0 %v3879
    %v4161 = vpop.f32.mrb[0].mxu0
    %v4162 = vadd.f32 %v3943, %v4161
    %v4163 = vpop.f32.mrb[0].mxu0
    %4164 = vdwg.mxu0
    %4165 = vst [vmem:[#allocation2] sm:$0xff] %v4014
    %4166 = vst [vmem:[#allocation2 + $0x8] sm:$0xff] %v4016
    %4167 = vst [vmem:[#allocation2 + $0x10] sm:$0xff] %v4127
    %4168 = vst [vmem:[#allocation2 + $0x18] sm:$0xff] %v4020
    %4169 = vst [vmem:[#allocation2 + $0x20] sm:$0xff] %v4022
    %4170 = vst [vmem:[#allocation2 + $0x28] sm:$0xff] %v4132
    %4171 = vst [vmem:[#allocation2 + $0x30] sm:$0xff] %v4026
    %4172 = vst [vmem:[#allocation2 + $0x38] sm:$0xff] %v4028
    %4173 = vst [vmem:[#allocation2 + $0x40] sm:$0xff] %v4137
    %4174 = vst [vmem:[#allocation2 + $0x48] sm:$0xff] %v4032
    %4175 = vst [vmem:[#allocation2 + $0x50] sm:$0xff] %v4034
    %4176 = vst [vmem:[#allocation2 + $0x58] sm:$0xff] %v4142
    %4177 = vst [vmem:[#allocation2 + $0x60] sm:$0xff] %v4038
    %4178 = vst [vmem:[#allocation2 + $0x68] sm:$0xff] %v4040
    %4179 = vst [vmem:[#allocation2 + $0x70] sm:$0xff] %v4147
    %4180 = vst [vmem:[#allocation2 + $0x78] sm:$0xff] %v4044
    %4181 = vst [vmem:[#allocation2 + $0x80] sm:$0xff] %v4046
    %4182 = vst [vmem:[#allocation2 + $0x88] sm:$0xff] %v4152
    %4183 = vst [vmem:[#allocation2 + $0x90] sm:$0xff] %v4050
    %4184 = vst [vmem:[#allocation2 + $0x98] sm:$0xff] %v4052
    %4185 = vst [vmem:[#allocation2 + $0xa0] sm:$0xff] %v4157
    %4186 = vst [vmem:[#allocation2 + $0xa8] sm:$0xff] %v4056
    %4187 = vst [vmem:[#allocation2 + $0xb0] sm:$0xff] %v4058
    %4188 = vst [vmem:[#allocation2 + $0xb8] sm:$0xff] %v4162
    %s4189 = scalar_lea.vmem %s5, 2
    %v4190 = vld [vmem:[%s4189] sm:$0x1]
    %v4192 = vlaneseq
    %v4193 = vshrl.u32 %v4192, 7
    %v4194 = vsub.s32 0, %v4193
    %v4195 = vrot.slane %v4190, %v4194
    %s4197 = scalar_lea.vmem %s7, 16
    %v4198 = vld [vmem:[%s4197] sm:$0xff]
    %v4199 = vld [vmem:[%s2143] sm:$0xff]
    %v4200 = vld [vmem:[%s2143 + $0x8] sm:$0xff]
    %v4201 = vld [vmem:[%s2143 + $0x10] sm:$0xff]
    %s4202 = scalar_lea.vmem [#allocation6], 768
    %v4203 = vld [vmem:[%s4202] sm:$0xff]
    %v4204 = vld [vmem:[%s4202 + $0x8] sm:$0xff]
    %v4205 = vld [vmem:[%s4202 + $0x10] sm:$0xff]
    %v4206 = vld [vmem:[%s4202 + $0x18] sm:$0xff]
    %v4207 = vld [vmem:[%s4202 + $0x20] sm:$0xff]
    %v4208 = vld [vmem:[%s4202 + $0x28] sm:$0xff]
    %v4209 = vld [vmem:[%s4202 + $0x30] sm:$0xff]
    %v4210 = vld [vmem:[%s4202 + $0x38] sm:$0xff]
    %v4211 = vld [vmem:[%s4202 + $0x40] sm:$0xff]
    %v4212 = vld [vmem:[%s4202 + $0x48] sm:$0xff]
    %v4213 = vld [vmem:[%s4202 + $0x50] sm:$0xff]
    %v4214 = vld [vmem:[%s4202 + $0x58] sm:$0xff]
    %v4215 = vld [vmem:[%s4202 + $0x60] sm:$0xff]
    %v4216 = vld [vmem:[%s4202 + $0x68] sm:$0xff]
    %v4217 = vld [vmem:[%s4202 + $0x70] sm:$0xff]
    %v4218 = vld [vmem:[%s4202 + $0x78] sm:$0xff]
    %v4219 = vld [vmem:[%s4202 + $0x80] sm:$0xff]
    %v4220 = vld [vmem:[%s4202 + $0x88] sm:$0xff]
    %v4221 = vld [vmem:[%s4202 + $0x90] sm:$0xff]
    %v4222 = vld [vmem:[%s4202 + $0x98] sm:$0xff]
    %v4223 = vld [vmem:[%s4202 + $0xa0] sm:$0xff]
    %v4224 = vld [vmem:[%s4202 + $0xa8] sm:$0xff]
    %v4225 = vld [vmem:[%s4202 + $0xb0] sm:$0xff]
    %v4226 = vld [vmem:[%s4202 + $0xb8] sm:$0xff]
    %v4227 = vld [vmem:[%s4202 + $0xc0] sm:$0xff]
    %v4228 = vld [vmem:[%s4202 + $0xc8] sm:$0xff]
    %v4229 = vld [vmem:[%s4202 + $0xd0] sm:$0xff]
    %v4230 = vld [vmem:[%s4202 + $0xd8] sm:$0xff]
    %v4231 = vld [vmem:[%s4202 + $0xe0] sm:$0xff]
    %v4232 = vld [vmem:[%s4202 + $0xe8] sm:$0xff]
    %v4233 = vld [vmem:[%s4202 + $0xf0] sm:$0xff]
    %v4234 = vld [vmem:[%s4202 + $0xf8] sm:$0xff]
    %v4235 = vld [vmem:[%s4202 + $0x100] sm:$0xff]
    %v4236 = vld [vmem:[%s4202 + $0x108] sm:$0xff]
    %v4237 = vld [vmem:[%s4202 + $0x110] sm:$0xff]
    %v4238 = vld [vmem:[%s4202 + $0x118] sm:$0xff]
    %v4239 = vld [vmem:[%s4202 + $0x120] sm:$0xff]
    %v4240 = vld [vmem:[%s4202 + $0x128] sm:$0xff]
    %v4241 = vld [vmem:[%s4202 + $0x130] sm:$0xff]
    %v4242 = vld [vmem:[%s4202 + $0x138] sm:$0xff]
    %v4243 = vld [vmem:[%s4202 + $0x140] sm:$0xff]
    %v4244 = vld [vmem:[%s4202 + $0x148] sm:$0xff]
    %v4245 = vld [vmem:[%s4202 + $0x150] sm:$0xff]
    %v4246 = vld [vmem:[%s4202 + $0x158] sm:$0xff]
    %v4247 = vld [vmem:[%s4202 + $0x160] sm:$0xff]
    %v4248 = vld [vmem:[%s4202 + $0x168] sm:$0xff]
    %v4249 = vld [vmem:[%s4202 + $0x170] sm:$0xff]
    %v4250 = vld [vmem:[%s4202 + $0x178] sm:$0xff]
    %4251 = vmatprep.subr.mxu0 %v4204
    %4252 = vmatpush1.msra.mxu0 %v4203
    %4253 = vmatprep.subr.mxu0 %v4207
    %4254 = vmatpush1.msra.mxu0 %v4206
    %4255 = vmatprep.subr.mxu0 %v4210
    %4256 = vmatpush1.msra.mxu0 %v4209
    %4257 = vmatprep.subr.mxu0 %v4213
    %4258 = vmatpush1.msra.mxu0 %v4212
    %4259 = vmatprep.subr.mxu0 %v4216
    %4260 = vmatpush1.msra.mxu0 %v4215
    %4261 = vmatprep.subr.mxu0 %v4219
    %4262 = vmatpush1.msra.mxu0 %v4218
    %4263 = vmatprep.subr.mxu0 %v4222
    %4264 = vmatpush1.msra.mxu0 %v4221
    %4265 = vmatprep.subr.mxu0 %v4225
    %4266 = vmatpush1.msra.mxu0 %v4224
    %4267 = vmatprep.subr.mxu0 %v4228
    %4268 = vmatpush1.msra.mxu0 %v4227
    %4269 = vmatprep.subr.mxu0 %v4231
    %4270 = vmatpush1.msra.mxu0 %v4230
    %4271 = vmatprep.subr.mxu0 %v4234
    %4272 = vmatpush1.msra.mxu0 %v4233
    %4273 = vmatprep.subr.mxu0 %v4237
    %4274 = vmatpush1.msra.mxu0 %v4236
    %4275 = vmatprep.subr.mxu0 %v4240
    %4276 = vmatpush1.msra.mxu0 %v4239
    %4277 = vmatprep.subr.mxu0 %v4243
    %4278 = vmatpush1.msra.mxu0 %v4242
    %4279 = vmatprep.subr.mxu0 %v4246
    %4280 = vmatpush1.msra.mxu0 %v4245
    %4281 = vmatprep.subr.mxu0 %v4249
    %4282 = vmatpush1.msra.mxu0 %v4248
    %4283 = vmatprep.subr.mxu0 0.0
    %4284 = vmatpush1.msra.mxu0 0.0
    %4285 = vmatprep.subr.mxu0 0.0
    %4286 = vmatpush1.msra.mxu0 0.0
    %4287 = vmatprep.subr.mxu0 0.0
    %4288 = vmatpush1.msra.mxu0 0.0
    %4289 = vmatprep.subr.mxu0 0.0
    %4290 = vmatpush1.msra.mxu0 0.0
    %4291 = vmatprep.subr.mxu0 0.0
    %4292 = vmatpush1.msra.mxu0 0.0
    %4293 = vmatprep.subr.mxu0 0.0
    %4294 = vmatpush1.msra.mxu0 0.0
    %4295 = vmatprep.subr.mxu0 0.0
    %4296 = vmatpush1.msra.mxu0 0.0
    %4297 = vmatprep.subr.mxu0 0.0
    %4298 = vmatpush1.msra.mxu0 0.0
    %4299 = vmatprep.subr.mxu0 0.0
    %4300 = vmatpush1.msra.mxu0 0.0
    %4301 = vmatprep.subr.mxu0 0.0
    %4302 = vmatpush1.msra.mxu0 0.0
    %4303 = vmatprep.subr.mxu0 0.0
    %4304 = vmatpush1.msra.mxu0 0.0
    %4305 = vmatprep.subr.mxu0 0.0
    %4306 = vmatpush1.msra.mxu0 0.0
    %4307 = vmatprep.subr.mxu0 0.0
    %4308 = vmatpush1.msra.mxu0 0.0
    %4309 = vmatprep.subr.mxu0 0.0
    %4310 = vmatpush1.msra.mxu0 0.0
    %4311 = vmatprep.subr.mxu0 0.0
    %4312 = vmatpush1.msra.mxu0 0.0
    %4313 = vmatprep.subr.mxu0 0.0
    %4314 = vmatpush1.msra.mxu0 0.0
    %4315 = vmatprep.mubr.f32.mxu0 0.0
    %4316 = vmatmul.mubr.f32.gmra.mrb[0].mxu0 %v4198
    %v4317 = vpop.f32.mrb[0].mxu0
    %v4318 = vadd.f32 0.0, %v4317
    %v4319 = vpop.f32.mrb[0].mxu0
    %v4320 = vadd.f32 0.0, %v4319
    %4321 = vdwg.mxu0
    %4322 = vmatprep.subr.mxu0 0.0
    %4323 = vmatpush1.msra.mxu0 %v4205
    %4324 = vmatprep.subr.mxu0 0.0
    %4325 = vmatpush1.msra.mxu0 %v4208
    %4326 = vmatprep.subr.mxu0 0.0
    %4327 = vmatpush1.msra.mxu0 %v4211
    %4328 = vmatprep.subr.mxu0 0.0
    %4329 = vmatpush1.msra.mxu0 %v4214
    %4330 = vmatprep.subr.mxu0 0.0
    %4331 = vmatpush1.msra.mxu0 %v4217
    %4332 = vmatprep.subr.mxu0 0.0
    %4333 = vmatpush1.msra.mxu0 %v4220
    %4334 = vmatprep.subr.mxu0 0.0
    %4335 = vmatpush1.msra.mxu0 %v4223
    %4336 = vmatprep.subr.mxu0 0.0
    %4337 = vmatpush1.msra.mxu0 %v4226
    %4338 = vmatprep.subr.mxu0 0.0
    %4339 = vmatpush1.msra.mxu0 %v4229
    %4340 = vmatprep.subr.mxu0 0.0
    %4341 = vmatpush1.msra.mxu0 %v4232
    %4342 = vmatprep.subr.mxu0 0.0
    %4343 = vmatpush1.msra.mxu0 %v4235
    %4344 = vmatprep.subr.mxu0 0.0
    %4345 = vmatpush1.msra.mxu0 %v4238
    %4346 = vmatprep.subr.mxu0 0.0
    %4347 = vmatpush1.msra.mxu0 %v4241
    %4348 = vmatprep.subr.mxu0 0.0
    %4349 = vmatpush1.msra.mxu0 %v4244
    %4350 = vmatprep.subr.mxu0 0.0
    %4351 = vmatpush1.msra.mxu0 %v4247
    %4352 = vmatprep.subr.mxu0 0.0
    %4353 = vmatpush1.msra.mxu0 %v4250
    %4354 = vmatprep.subr.mxu0 0.0
    %4355 = vmatpush1.msra.mxu0 0.0
    %4356 = vmatprep.subr.mxu0 0.0
    %4357 = vmatpush1.msra.mxu0 0.0
    %4358 = vmatprep.subr.mxu0 0.0
    %4359 = vmatpush1.msra.mxu0 0.0
    %4360 = vmatprep.subr.mxu0 0.0
    %4361 = vmatpush1.msra.mxu0 0.0
    %4362 = vmatprep.subr.mxu0 0.0
    %4363 = vmatpush1.msra.mxu0 0.0
    %4364 = vmatprep.subr.mxu0 0.0
    %4365 = vmatpush1.msra.mxu0 0.0
    %4366 = vmatprep.subr.mxu0 0.0
    %4367 = vmatpush1.msra.mxu0 0.0
    %4368 = vmatprep.subr.mxu0 0.0
    %4369 = vmatpush1.msra.mxu0 0.0
    %4370 = vmatprep.subr.mxu0 0.0
    %4371 = vmatpush1.msra.mxu0 0.0
    %4372 = vmatprep.subr.mxu0 0.0
    %4373 = vmatpush1.msra.mxu0 0.0
    %4374 = vmatprep.subr.mxu0 0.0
    %4375 = vmatpush1.msra.mxu0 0.0
    %4376 = vmatprep.subr.mxu0 0.0
    %4377 = vmatpush1.msra.mxu0 0.0
    %4378 = vmatprep.subr.mxu0 0.0
    %4379 = vmatpush1.msra.mxu0 0.0
    %4380 = vmatprep.subr.mxu0 0.0
    %4381 = vmatpush1.msra.mxu0 0.0
    %4382 = vmatprep.subr.mxu0 0.0
    %4383 = vmatpush1.msra.mxu0 0.0
    %4384 = vmatprep.subr.mxu0 0.0
    %4385 = vmatpush1.msra.mxu0 0.0
    %4386 = vmatprep.mubr.f32.mxu0 0.0
    %4387 = vmatmul.mubr.f32.gmra.mrb[0].mxu0 %v4198
    %v4388 = vpop.f32.mrb[0].mxu0
    %v4389 = vadd.f32 0.0, %v4388
    %v4390 = vpop.f32.mrb[0].mxu0
    %4391 = vdwg.mxu0
    %v4392 = vadd.f32 %v4199, %v4318
    %v4393 = vxor.u32 %v4392, 2147483648
    %v4394 = vmul.f32 %v4393, 1.442695
    %v4395 = vpow.pop %v4394
    %v4396 = vadd.f32 %v4395, 1.0
    %v4397 = vrcp.pop %v4396
    %v4398 = vmul.f32 1.0, %v4397
    %v4399 = vadd.f32 %v4200, %v4320
    %v4400 = vxor.u32 %v4399, 2147483648
    %v4401 = vmul.f32 %v4400, 1.442695
    %v4402 = vpow.pop %v4401
    %v4403 = vadd.f32 %v4402, 1.0
    %v4404 = vrcp.pop %v4403
    %v4405 = vmul.f32 1.0, %v4404
    %v4406 = vadd.f32 %v4389, %v4195
    %v4407 = vmul.f32 %v4398, %v4406
    %v4408 = vadd.f32 %v4201, %v4407
    %v4409 = vtanh.pop %v4408
    %v4410 = vsub.f32 %v4198, %v4409
    %v4411 = vmul.f32 %v4405, %v4410
    %v4412 = vadd.f32 %v4409, %v4411
    %4413 = vst [vmem:[#allocation3] sm:$0xff] %v4412
    %v4414 = vld [vmem:[%s2360] sm:$0xff]
    %v4415 = vld [vmem:[%s2360 + $0x8] sm:$0xff]
    %v4416 = vld [vmem:[%s2360 + $0x10] sm:$0xff]
    %v4417 = vld [vmem:[%s4202] sm:$0xff]
    %v4418 = vld [vmem:[%s4202 + $0x8] sm:$0xff]
    %v4419 = vld [vmem:[%s4202 + $0x10] sm:$0xff]
    %v4420 = vld [vmem:[%s4202 + $0x18] sm:$0xff]
    %v4421 = vld [vmem:[%s4202 + $0x20] sm:$0xff]
    %v4422 = vld [vmem:[%s4202 + $0x28] sm:$0xff]
    %v4423 = vld [vmem:[%s4202 + $0x30] sm:$0xff]
    %v4424 = vld [vmem:[%s4202 + $0x38] sm:$0xff]
    %v4425 = vld [vmem:[%s4202 + $0x40] sm:$0xff]
    %v4426 = vld [vmem:[%s4202 + $0x48] sm:$0xff]
    %v4427 = vld [vmem:[%s4202 + $0x50] sm:$0xff]
    %v4428 = vld [vmem:[%s4202 + $0x58] sm:$0xff]
    %v4429 = vld [vmem:[%s4202 + $0x60] sm:$0xff]
    %v4430 = vld [vmem:[%s4202 + $0x68] sm:$0xff]
    %v4431 = vld [vmem:[%s4202 + $0x70] sm:$0xff]
    %v4432 = vld [vmem:[%s4202 + $0x78] sm:$0xff]
    %v4433 = vld [vmem:[%s4202 + $0x80] sm:$0xff]
    %v4434 = vld [vmem:[%s4202 + $0x88] sm:$0xff]
    %v4435 = vld [vmem:[%s4202 + $0x90] sm:$0xff]
    %v4436 = vld [vmem:[%s4202 + $0x98] sm:$0xff]
    %v4437 = vld [vmem:[%s4202 + $0xa0] sm:$0xff]
    %v4438 = vld [vmem:[%s4202 + $0xa8] sm:$0xff]
    %v4439 = vld [vmem:[%s4202 + $0xb0] sm:$0xff]
    %v4440 = vld [vmem:[%s4202 + $0xb8] sm:$0xff]
    %v4441 = vld [vmem:[%s4202 + $0xc0] sm:$0xff]
    %v4442 = vld [vmem:[%s4202 + $0xc8] sm:$0xff]
    %v4443 = vld [vmem:[%s4202 + $0xd0] sm:$0xff]
    %v4444 = vld [vmem:[%s4202 + $0xd8] sm:$0xff]
    %v4445 = vld [vmem:[%s4202 + $0xe0] sm:$0xff]
    %v4446 = vld [vmem:[%s4202 + $0xe8] sm:$0xff]
    %v4447 = vld [vmem:[%s4202 + $0xf0] sm:$0xff]
    %v4448 = vld [vmem:[%s4202 + $0xf8] sm:$0xff]
    %v4449 = vld [vmem:[%s4202 + $0x100] sm:$0xff]
    %v4450 = vld [vmem:[%s4202 + $0x108] sm:$0xff]
    %v4451 = vld [vmem:[%s4202 + $0x110] sm:$0xff]
    %v4452 = vld [vmem:[%s4202 + $0x118] sm:$0xff]
    %v4453 = vld [vmem:[%s4202 + $0x120] sm:$0xff]
    %v4454 = vld [vmem:[%s4202 + $0x128] sm:$0xff]
    %v4455 = vld [vmem:[%s4202 + $0x130] sm:$0xff]
    %v4456 = vld [vmem:[%s4202 + $0x138] sm:$0xff]
    %v4457 = vld [vmem:[%s4202 + $0x140] sm:$0xff]
    %v4458 = vld [vmem:[%s4202 + $0x148] sm:$0xff]
    %v4459 = vld [vmem:[%s4202 + $0x150] sm:$0xff]
    %v4460 = vld [vmem:[%s4202 + $0x158] sm:$0xff]
    %v4461 = vld [vmem:[%s4202 + $0x160] sm:$0xff]
    %v4462 = vld [vmem:[%s4202 + $0x168] sm:$0xff]
    %v4463 = vld [vmem:[%s4202 + $0x170] sm:$0xff]
    %v4464 = vld [vmem:[%s4202 + $0x178] sm:$0xff]
    %4465 = vmatprep.subr.mxu0 %v4418
    %4466 = vmatpush1.msra.mxu0 %v4417
    %4467 = vmatprep.subr.mxu0 %v4421
    %4468 = vmatpush1.msra.mxu0 %v4420
    %4469 = vmatprep.subr.mxu0 %v4424
    %4470 = vmatpush1.msra.mxu0 %v4423
    %4471 = vmatprep.subr.mxu0 %v4427
    %4472 = vmatpush1.msra.mxu0 %v4426
    %4473 = vmatprep.subr.mxu0 %v4430
    %4474 = vmatpush1.msra.mxu0 %v4429
    %4475 = vmatprep.subr.mxu0 %v4433
    %4476 = vmatpush1.msra.mxu0 %v4432
    %4477 = vmatprep.subr.mxu0 %v4436
    %4478 = vmatpush1.msra.mxu0 %v4435
    %4479 = vmatprep.subr.mxu0 %v4439
    %4480 = vmatpush1.msra.mxu0 %v4438
    %4481 = vmatprep.subr.mxu0 %v4442
    %4482 = vmatpush1.msra.mxu0 %v4441
    %4483 = vmatprep.subr.mxu0 %v4445
    %4484 = vmatpush1.msra.mxu0 %v4444
    %4485 = vmatprep.subr.mxu0 %v4448
    %4486 = vmatpush1.msra.mxu0 %v4447
    %4487 = vmatprep.subr.mxu0 %v4451
    %4488 = vmatpush1.msra.mxu0 %v4450
    %4489 = vmatprep.subr.mxu0 %v4454
    %4490 = vmatpush1.msra.mxu0 %v4453
    %4491 = vmatprep.subr.mxu0 %v4457
    %4492 = vmatpush1.msra.mxu0 %v4456
    %4493 = vmatprep.subr.mxu0 %v4460
    %4494 = vmatpush1.msra.mxu0 %v4459
    %4495 = vmatprep.subr.mxu0 %v4463
    %4496 = vmatpush1.msra.mxu0 %v4462
    %4497 = vmatprep.subr.mxu0 0.0
    %4498 = vmatpush1.msra.mxu0 0.0
    %4499 = vmatprep.subr.mxu0 0.0
    %4500 = vmatpush1.msra.mxu0 0.0
    %4501 = vmatprep.subr.mxu0 0.0
    %4502 = vmatpush1.msra.mxu0 0.0
    %4503 = vmatprep.subr.mxu0 0.0
    %4504 = vmatpush1.msra.mxu0 0.0
    %4505 = vmatprep.subr.mxu0 0.0
    %4506 = vmatpush1.msra.mxu0 0.0
    %4507 = vmatprep.subr.mxu0 0.0
    %4508 = vmatpush1.msra.mxu0 0.0
    %4509 = vmatprep.subr.mxu0 0.0
    %4510 = vmatpush1.msra.mxu0 0.0
    %4511 = vmatprep.subr.mxu0 0.0
    %4512 = vmatpush1.msra.mxu0 0.0
    %4513 = vmatprep.subr.mxu0 0.0
    %4514 = vmatpush1.msra.mxu0 0.0
    %4515 = vmatprep.subr.mxu0 0.0
    %4516 = vmatpush1.msra.mxu0 0.0
    %4517 = vmatprep.subr.mxu0 0.0
    %4518 = vmatpush1.msra.mxu0 0.0
    %4519 = vmatprep.subr.mxu0 0.0
    %4520 = vmatpush1.msra.mxu0 0.0
    %4521 = vmatprep.subr.mxu0 0.0
    %4522 = vmatpush1.msra.mxu0 0.0
    %4523 = vmatprep.subr.mxu0 0.0
    %4524 = vmatpush1.msra.mxu0 0.0
    %4525 = vmatprep.subr.mxu0 0.0
    %4526 = vmatpush1.msra.mxu0 0.0
    %4527 = vmatprep.subr.mxu0 0.0
    %4528 = vmatpush1.msra.mxu0 0.0
    %4529 = vmatprep.mubr.f32.mxu0 0.0
    %4530 = vmatmul.mubr.f32.gmra.mrb[0].mxu0 %v4412
    %v4531 = vpop.f32.mrb[0].mxu0
    %v4532 = vadd.f32 0.0, %v4531
    %v4533 = vpop.f32.mrb[0].mxu0
    %v4534 = vadd.f32 0.0, %v4533
    %4535 = vdwg.mxu0
    %4536 = vmatprep.subr.mxu0 0.0
    %4537 = vmatpush1.msra.mxu0 %v4419
    %4538 = vmatprep.subr.mxu0 0.0
    %4539 = vmatpush1.msra.mxu0 %v4422
    %4540 = vmatprep.subr.mxu0 0.0
    %4541 = vmatpush1.msra.mxu0 %v4425
    %4542 = vmatprep.subr.mxu0 0.0
    %4543 = vmatpush1.msra.mxu0 %v4428
    %4544 = vmatprep.subr.mxu0 0.0
    %4545 = vmatpush1.msra.mxu0 %v4431
    %4546 = vmatprep.subr.mxu0 0.0
    %4547 = vmatpush1.msra.mxu0 %v4434
    %4548 = vmatprep.subr.mxu0 0.0
    %4549 = vmatpush1.msra.mxu0 %v4437
    %4550 = vmatprep.subr.mxu0 0.0
    %4551 = vmatpush1.msra.mxu0 %v4440
    %4552 = vmatprep.subr.mxu0 0.0
    %4553 = vmatpush1.msra.mxu0 %v4443
    %4554 = vmatprep.subr.mxu0 0.0
    %4555 = vmatpush1.msra.mxu0 %v4446
    %4556 = vmatprep.subr.mxu0 0.0
    %4557 = vmatpush1.msra.mxu0 %v4449
    %4558 = vmatprep.subr.mxu0 0.0
    %4559 = vmatpush1.msra.mxu0 %v4452
    %4560 = vmatprep.subr.mxu0 0.0
    %4561 = vmatpush1.msra.mxu0 %v4455
    %4562 = vmatprep.subr.mxu0 0.0
    %4563 = vmatpush1.msra.mxu0 %v4458
    %4564 = vmatprep.subr.mxu0 0.0
    %4565 = vmatpush1.msra.mxu0 %v4461
    %4566 = vmatprep.subr.mxu0 0.0
    %4567 = vmatpush1.msra.mxu0 %v4464
    %4568 = vmatprep.subr.mxu0 0.0
    %4569 = vmatpush1.msra.mxu0 0.0
    %4570 = vmatprep.subr.mxu0 0.0
    %4571 = vmatpush1.msra.mxu0 0.0
    %4572 = vmatprep.subr.mxu0 0.0
    %4573 = vmatpush1.msra.mxu0 0.0
    %4574 = vmatprep.subr.mxu0 0.0
    %4575 = vmatpush1.msra.mxu0 0.0
    %4576 = vmatprep.subr.mxu0 0.0
    %4577 = vmatpush1.msra.mxu0 0.0
    %4578 = vmatprep.subr.mxu0 0.0
    %4579 = vmatpush1.msra.mxu0 0.0
    %4580 = vmatprep.subr.mxu0 0.0
    %4581 = vmatpush1.msra.mxu0 0.0
    %4582 = vmatprep.subr.mxu0 0.0
    %4583 = vmatpush1.msra.mxu0 0.0
    %4584 = vmatprep.subr.mxu0 0.0
    %4585 = vmatpush1.msra.mxu0 0.0
    %4586 = vmatprep.subr.mxu0 0.0
    %4587 = vmatpush1.msra.mxu0 0.0
    %4588 = vmatprep.subr.mxu0 0.0
    %4589 = vmatpush1.msra.mxu0 0.0
    %4590 = vmatprep.subr.mxu0 0.0
    %4591 = vmatpush1.msra.mxu0 0.0
    %4592 = vmatprep.subr.mxu0 0.0
    %4593 = vmatpush1.msra.mxu0 0.0
    %4594 = vmatprep.subr.mxu0 0.0
    %4595 = vmatpush1.msra.mxu0 0.0
    %4596 = vmatprep.subr.mxu0 0.0
    %4597 = vmatpush1.msra.mxu0 0.0
    %4598 = vmatprep.subr.mxu0 0.0
    %4599 = vmatpush1.msra.mxu0 0.0
    %4600 = vmatprep.mubr.f32.mxu0 0.0
    %4601 = vmatmul.mubr.f32.gmra.mrb[0].mxu0 %v4412
    %v4602 = vpop.f32.mrb[0].mxu0
    %v4603 = vadd.f32 0.0, %v4602
    %v4604 = vpop.f32.mrb[0].mxu0
    %4605 = vdwg.mxu0
    %v4606 = vadd.f32 %v4414, %v4532
    %v4607 = vxor.u32 %v4606, 2147483648
    %v4608 = vmul.f32 %v4607, 1.442695
    %v4609 = vpow.pop %v4608
    %v4610 = vadd.f32 %v4609, 1.0
    %v4611 = vrcp.pop %v4610
    %v4612 = vmul.f32 1.0, %v4611
    %v4613 = vadd.f32 %v4415, %v4534
    %v4614 = vxor.u32 %v4613, 2147483648
    %v4615 = vmul.f32 %v4614, 1.442695
    %v4616 = vpow.pop %v4615
    %v4617 = vadd.f32 %v4616, 1.0
    %v4618 = vrcp.pop %v4617
    %v4619 = vmul.f32 1.0, %v4618
    %v4620 = vadd.f32 %v4603, %v4195
    %v4621 = vmul.f32 %v4612, %v4620
    %v4622 = vadd.f32 %v4416, %v4621
    %v4623 = vtanh.pop %v4622
    %v4624 = vsub.f32 %v4412, %v4623
    %v4625 = vmul.f32 %v4619, %v4624
    %v4626 = vadd.f32 %v4623, %v4625
    %4627 = vst [vmem:[%s506] sm:$0xff] %v4626
    %v4628 = vld [vmem:[%s2576] sm:$0xff]
    %v4629 = vld [vmem:[%s2576 + $0x8] sm:$0xff]
    %v4630 = vld [vmem:[%s2576 + $0x10] sm:$0xff]
    %v4631 = vld [vmem:[%s4202] sm:$0xff]
    %v4632 = vld [vmem:[%s4202 + $0x8] sm:$0xff]
    %v4633 = vld [vmem:[%s4202 + $0x10] sm:$0xff]
    %v4634 = vld [vmem:[%s4202 + $0x18] sm:$0xff]
    %v4635 = vld [vmem:[%s4202 + $0x20] sm:$0xff]
    %v4636 = vld [vmem:[%s4202 + $0x28] sm:$0xff]
    %v4637 = vld [vmem:[%s4202 + $0x30] sm:$0xff]
    %v4638 = vld [vmem:[%s4202 + $0x38] sm:$0xff]
    %v4639 = vld [vmem:[%s4202 + $0x40] sm:$0xff]
    %v4640 = vld [vmem:[%s4202 + $0x48] sm:$0xff]
    %v4641 = vld [vmem:[%s4202 + $0x50] sm:$0xff]
    %v4642 = vld [vmem:[%s4202 + $0x58] sm:$0xff]
    %v4643 = vld [vmem:[%s4202 + $0x60] sm:$0xff]
    %v4644 = vld [vmem:[%s4202 + $0x68] sm:$0xff]
    %v4645 = vld [vmem:[%s4202 + $0x70] sm:$0xff]
    %v4646 = vld [vmem:[%s4202 + $0x78] sm:$0xff]
    %v4647 = vld [vmem:[%s4202 + $0x80] sm:$0xff]
    %v4648 = vld [vmem:[%s4202 + $0x88] sm:$0xff]
    %v4649 = vld [vmem:[%s4202 + $0x90] sm:$0xff]
    %v4650 = vld [vmem:[%s4202 + $0x98] sm:$0xff]
    %v4651 = vld [vmem:[%s4202 + $0xa0] sm:$0xff]
    %v4652 = vld [vmem:[%s4202 + $0xa8] sm:$0xff]
    %v4653 = vld [vmem:[%s4202 + $0xb0] sm:$0xff]
    %v4654 = vld [vmem:[%s4202 + $0xb8] sm:$0xff]
    %v4655 = vld [vmem:[%s4202 + $0xc0] sm:$0xff]
    %v4656 = vld [vmem:[%s4202 + $0xc8] sm:$0xff]
    %v4657 = vld [vmem:[%s4202 + $0xd0] sm:$0xff]
    %v4658 = vld [vmem:[%s4202 + $0xd8] sm:$0xff]
    %v4659 = vld [vmem:[%s4202 + $0xe0] sm:$0xff]
    %v4660 = vld [vmem:[%s4202 + $0xe8] sm:$0xff]
    %v4661 = vld [vmem:[%s4202 + $0xf0] sm:$0xff]
    %v4662 = vld [vmem:[%s4202 + $0xf8] sm:$0xff]
    %v4663 = vld [vmem:[%s4202 + $0x100] sm:$0xff]
    %v4664 = vld [vmem:[%s4202 + $0x108] sm:$0xff]
    %v4665 = vld [vmem:[%s4202 + $0x110] sm:$0xff]
    %v4666 = vld [vmem:[%s4202 + $0x118] sm:$0xff]
    %v4667 = vld [vmem:[%s4202 + $0x120] sm:$0xff]
    %v4668 = vld [vmem:[%s4202 + $0x128] sm:$0xff]
    %v4669 = vld [vmem:[%s4202 + $0x130] sm:$0xff]
    %v4670 = vld [vmem:[%s4202 + $0x138] sm:$0xff]
    %v4671 = vld [vmem:[%s4202 + $0x140] sm:$0xff]
    %v4672 = vld [vmem:[%s4202 + $0x148] sm:$0xff]
    %v4673 = vld [vmem:[%s4202 + $0x150] sm:$0xff]
    %v4674 = vld [vmem:[%s4202 + $0x158] sm:$0xff]
    %v4675 = vld [vmem:[%s4202 + $0x160] sm:$0xff]
    %v4676 = vld [vmem:[%s4202 + $0x168] sm:$0xff]
    %v4677 = vld [vmem:[%s4202 + $0x170] sm:$0xff]
    %v4678 = vld [vmem:[%s4202 + $0x178] sm:$0xff]
    %4679 = vmatprep.subr.mxu0 %v4632
    %4680 = vmatpush1.msra.mxu0 %v4631
    %4681 = vmatprep.subr.mxu0 %v4635
    %4682 = vmatpush1.msra.mxu0 %v4634
    %4683 = vmatprep.subr.mxu0 %v4638
    %4684 = vmatpush1.msra.mxu0 %v4637
    %4685 = vmatprep.subr.mxu0 %v4641
    %4686 = vmatpush1.msra.mxu0 %v4640
    %4687 = vmatprep.subr.mxu0 %v4644
    %4688 = vmatpush1.msra.mxu0 %v4643
    %4689 = vmatprep.subr.mxu0 %v4647
    %4690 = vmatpush1.msra.mxu0 %v4646
    %4691 = vmatprep.subr.mxu0 %v4650
    %4692 = vmatpush1.msra.mxu0 %v4649
    %4693 = vmatprep.subr.mxu0 %v4653
    %4694 = vmatpush1.msra.mxu0 %v4652
    %4695 = vmatprep.subr.mxu0 %v4656
    %4696 = vmatpush1.msra.mxu0 %v4655
    %4697 = vmatprep.subr.mxu0 %v4659
    %4698 = vmatpush1.msra.mxu0 %v4658
    %4699 = vmatprep.subr.mxu0 %v4662
    %4700 = vmatpush1.msra.mxu0 %v4661
    %4701 = vmatprep.subr.mxu0 %v4665
    %4702 = vmatpush1.msra.mxu0 %v4664
    %4703 = vmatprep.subr.mxu0 %v4668
    %4704 = vmatpush1.msra.mxu0 %v4667
    %4705 = vmatprep.subr.mxu0 %v4671
    %4706 = vmatpush1.msra.mxu0 %v4670
    %4707 = vmatprep.subr.mxu0 %v4674
    %4708 = vmatpush1.msra.mxu0 %v4673
    %4709 = vmatprep.subr.mxu0 %v4677
    %4710 = vmatpush1.msra.mxu0 %v4676
    %4711 = vmatprep.subr.mxu0 0.0
    %4712 = vmatpush1.msra.mxu0 0.0
    %4713 = vmatprep.subr.mxu0 0.0
    %4714 = vmatpush1.msra.mxu0 0.0
    %4715 = vmatprep.subr.mxu0 0.0
    %4716 = vmatpush1.msra.mxu0 0.0
    %4717 = vmatprep.subr.mxu0 0.0
    %4718 = vmatpush1.msra.mxu0 0.0
    %4719 = vmatprep.subr.mxu0 0.0
    %4720 = vmatpush1.msra.mxu0 0.0
    %4721 = vmatprep.subr.mxu0 0.0
    %4722 = vmatpush1.msra.mxu0 0.0
    %4723 = vmatprep.subr.mxu0 0.0
    %4724 = vmatpush1.msra.mxu0 0.0
    %4725 = vmatprep.subr.mxu0 0.0
    %4726 = vmatpush1.msra.mxu0 0.0
    %4727 = vmatprep.subr.mxu0 0.0
    %4728 = vmatpush1.msra.mxu0 0.0
    %4729 = vmatprep.subr.mxu0 0.0
    %4730 = vmatpush1.msra.mxu0 0.0
    %4731 = vmatprep.subr.mxu0 0.0
    %4732 = vmatpush1.msra.mxu0 0.0
    %4733 = vmatprep.subr.mxu0 0.0
    %4734 = vmatpush1.msra.mxu0 0.0
    %4735 = vmatprep.subr.mxu0 0.0
    %4736 = vmatpush1.msra.mxu0 0.0
    %4737 = vmatprep.subr.mxu0 0.0
    %4738 = vmatpush1.msra.mxu0 0.0
    %4739 = vmatprep.subr.mxu0 0.0
    %4740 = vmatpush1.msra.mxu0 0.0
    %4741 = vmatprep.subr.mxu0 0.0
    %4742 = vmatpush1.msra.mxu0 0.0
    %4743 = vmatprep.mubr.f32.mxu0 0.0
    %4744 = vmatmul.mubr.f32.gmra.mrb[0].mxu0 %v4626
    %v4745 = vpop.f32.mrb[0].mxu0
    %v4746 = vadd.f32 0.0, %v4745
    %v4747 = vpop.f32.mrb[0].mxu0
    %v4748 = vadd.f32 0.0, %v4747
    %4749 = vdwg.mxu0
    %4750 = vmatprep.subr.mxu0 0.0
    %4751 = vmatpush1.msra.mxu0 %v4633
    %4752 = vmatprep.subr.mxu0 0.0
    %4753 = vmatpush1.msra.mxu0 %v4636
    %4754 = vmatprep.subr.mxu0 0.0
    %4755 = vmatpush1.msra.mxu0 %v4639
    %4756 = vmatprep.subr.mxu0 0.0
    %4757 = vmatpush1.msra.mxu0 %v4642
    %4758 = vmatprep.subr.mxu0 0.0
    %4759 = vmatpush1.msra.mxu0 %v4645
    %4760 = vmatprep.subr.mxu0 0.0
    %4761 = vmatpush1.msra.mxu0 %v4648
    %4762 = vmatprep.subr.mxu0 0.0
    %4763 = vmatpush1.msra.mxu0 %v4651
    %4764 = vmatprep.subr.mxu0 0.0
    %4765 = vmatpush1.msra.mxu0 %v4654
    %4766 = vmatprep.subr.mxu0 0.0
    %4767 = vmatpush1.msra.mxu0 %v4657
    %4768 = vmatprep.subr.mxu0 0.0
    %4769 = vmatpush1.msra.mxu0 %v4660
    %4770 = vmatprep.subr.mxu0 0.0
    %4771 = vmatpush1.msra.mxu0 %v4663
    %4772 = vmatprep.subr.mxu0 0.0
    %4773 = vmatpush1.msra.mxu0 %v4666
    %4774 = vmatprep.subr.mxu0 0.0
    %4775 = vmatpush1.msra.mxu0 %v4669
    %4776 = vmatprep.subr.mxu0 0.0
    %4777 = vmatpush1.msra.mxu0 %v4672
    %4778 = vmatprep.subr.mxu0 0.0
    %4779 = vmatpush1.msra.mxu0 %v4675
    %4780 = vmatprep.subr.mxu0 0.0
    %4781 = vmatpush1.msra.mxu0 %v4678
    %4782 = vmatprep.subr.mxu0 0.0
    %4783 = vmatpush1.msra.mxu0 0.0
    %4784 = vmatprep.subr.mxu0 0.0
    %4785 = vmatpush1.msra.mxu0 0.0
    %4786 = vmatprep.subr.mxu0 0.0
    %4787 = vmatpush1.msra.mxu0 0.0
    %4788 = vmatprep.subr.mxu0 0.0
    %4789 = vmatpush1.msra.mxu0 0.0
    %4790 = vmatprep.subr.mxu0 0.0
    %4791 = vmatpush1.msra.mxu0 0.0
    %4792 = vmatprep.subr.mxu0 0.0
    %4793 = vmatpush1.msra.mxu0 0.0
    %4794 = vmatprep.subr.mxu0 0.0
    %4795 = vmatpush1.msra.mxu0 0.0
    %4796 = vmatprep.subr.mxu0 0.0
    %4797 = vmatpush1.msra.mxu0 0.0
    %4798 = vmatprep.subr.mxu0 0.0
    %4799 = vmatpush1.msra.mxu0 0.0
    %4800 = vmatprep.subr.mxu0 0.0
    %4801 = vmatpush1.msra.mxu0 0.0
    %4802 = vmatprep.subr.mxu0 0.0
    %4803 = vmatpush1.msra.mxu0 0.0
    %4804 = vmatprep.subr.mxu0 0.0
    %4805 = vmatpush1.msra.mxu0 0.0
    %4806 = vmatprep.subr.mxu0 0.0
    %4807 = vmatpush1.msra.mxu0 0.0
    %4808 = vmatprep.subr.mxu0 0.0
    %4809 = vmatpush1.msra.mxu0 0.0
    %4810 = vmatprep.subr.mxu0 0.0
    %4811 = vmatpush1.msra.mxu0 0.0
    %4812 = vmatprep.subr.mxu0 0.0
    %4813 = vmatpush1.msra.mxu0 0.0
    %4814 = vmatprep.mubr.f32.mxu0 0.0
    %4815 = vmatmul.mubr.f32.gmra.mrb[0].mxu0 %v4626
    %v4816 = vpop.f32.mrb[0].mxu0
    %v4817 = vadd.f32 0.0, %v4816
    %v4818 = vpop.f32.mrb[0].mxu0
    %4819 = vdwg.mxu0
    %v4820 = vadd.f32 %v4628, %v4746
    %v4821 = vxor.u32 %v4820, 2147483648
    %v4822 = vmul.f32 %v4821, 1.442695
    %v4823 = vpow.pop %v4822
    %v4824 = vadd.f32 %v4823, 1.0
    %v4825 = vrcp.pop %v4824
    %v4826 = vmul.f32 1.0, %v4825
    %v4827 = vadd.f32 %v4629, %v4748
    %v4828 = vxor.u32 %v4827, 2147483648
    %v4829 = vmul.f32 %v4828, 1.442695
    %v4830 = vpow.pop %v4829
    %v4831 = vadd.f32 %v4830, 1.0
    %v4832 = vrcp.pop %v4831
    %v4833 = vmul.f32 1.0, %v4832
    %v4834 = vadd.f32 %v4817, %v4195
    %v4835 = vmul.f32 %v4826, %v4834
    %v4836 = vadd.f32 %v4630, %v4835
    %v4837 = vtanh.pop %v4836
    %v4838 = vsub.f32 %v4626, %v4837
    %v4839 = vmul.f32 %v4833, %v4838
    %v4840 = vadd.f32 %v4837, %v4839
    %4841 = vst [vmem:[%s724] sm:$0xff] %v4840
    %v4842 = vld [vmem:[%s2792] sm:$0xff]
    %v4843 = vld [vmem:[%s2792 + $0x8] sm:$0xff]
    %v4844 = vld [vmem:[%s2792 + $0x10] sm:$0xff]
    %v4845 = vld [vmem:[%s4202] sm:$0xff]
    %v4846 = vld [vmem:[%s4202 + $0x8] sm:$0xff]
    %v4847 = vld [vmem:[%s4202 + $0x10] sm:$0xff]
    %v4848 = vld [vmem:[%s4202 + $0x18] sm:$0xff]
    %v4849 = vld [vmem:[%s4202 + $0x20] sm:$0xff]
    %v4850 = vld [vmem:[%s4202 + $0x28] sm:$0xff]
    %v4851 = vld [vmem:[%s4202 + $0x30] sm:$0xff]
    %v4852 = vld [vmem:[%s4202 + $0x38] sm:$0xff]
    %v4853 = vld [vmem:[%s4202 + $0x40] sm:$0xff]
    %v4854 = vld [vmem:[%s4202 + $0x48] sm:$0xff]
    %v4855 = vld [vmem:[%s4202 + $0x50] sm:$0xff]
    %v4856 = vld [vmem:[%s4202 + $0x58] sm:$0xff]
    %v4857 = vld [vmem:[%s4202 + $0x60] sm:$0xff]
    %v4858 = vld [vmem:[%s4202 + $0x68] sm:$0xff]
    %v4859 = vld [vmem:[%s4202 + $0x70] sm:$0xff]
    %v4860 = vld [vmem:[%s4202 + $0x78] sm:$0xff]
    %v4861 = vld [vmem:[%s4202 + $0x80] sm:$0xff]
    %v4862 = vld [vmem:[%s4202 + $0x88] sm:$0xff]
    %v4863 = vld [vmem:[%s4202 + $0x90] sm:$0xff]
    %v4864 = vld [vmem:[%s4202 + $0x98] sm:$0xff]
    %v4865 = vld [vmem:[%s4202 + $0xa0] sm:$0xff]
    %v4866 = vld [vmem:[%s4202 + $0xa8] sm:$0xff]
    %v4867 = vld [vmem:[%s4202 + $0xb0] sm:$0xff]
    %v4868 = vld [vmem:[%s4202 + $0xb8] sm:$0xff]
    %v4869 = vld [vmem:[%s4202 + $0xc0] sm:$0xff]
    %v4870 = vld [vmem:[%s4202 + $0xc8] sm:$0xff]
    %v4871 = vld [vmem:[%s4202 + $0xd0] sm:$0xff]
    %v4872 = vld [vmem:[%s4202 + $0xd8] sm:$0xff]
    %v4873 = vld [vmem:[%s4202 + $0xe0] sm:$0xff]
    %v4874 = vld [vmem:[%s4202 + $0xe8] sm:$0xff]
    %v4875 = vld [vmem:[%s4202 + $0xf0] sm:$0xff]
    %v4876 = vld [vmem:[%s4202 + $0xf8] sm:$0xff]
    %v4877 = vld [vmem:[%s4202 + $0x100] sm:$0xff]
    %v4878 = vld [vmem:[%s4202 + $0x108] sm:$0xff]
    %v4879 = vld [vmem:[%s4202 + $0x110] sm:$0xff]
    %v4880 = vld [vmem:[%s4202 + $0x118] sm:$0xff]
    %v4881 = vld [vmem:[%s4202 + $0x120] sm:$0xff]
    %v4882 = vld [vmem:[%s4202 + $0x128] sm:$0xff]
    %v4883 = vld [vmem:[%s4202 + $0x130] sm:$0xff]
    %v4884 = vld [vmem:[%s4202 + $0x138] sm:$0xff]
    %v4885 = vld [vmem:[%s4202 + $0x140] sm:$0xff]
    %v4886 = vld [vmem:[%s4202 + $0x148] sm:$0xff]
    %v4887 = vld [vmem:[%s4202 + $0x150] sm:$0xff]
    %v4888 = vld [vmem:[%s4202 + $0x158] sm:$0xff]
    %v4889 = vld [vmem:[%s4202 + $0x160] sm:$0xff]
    %v4890 = vld [vmem:[%s4202 + $0x168] sm:$0xff]
    %v4891 = vld [vmem:[%s4202 + $0x170] sm:$0xff]
    %v4892 = vld [vmem:[%s4202 + $0x178] sm:$0xff]
    %4893 = vmatprep.subr.mxu0 %v4846
    %4894 = vmatpush1.msra.mxu0 %v4845
    %4895 = vmatprep.subr.mxu0 %v4849
    %4896 = vmatpush1.msra.mxu0 %v4848
    %4897 = vmatprep.subr.mxu0 %v4852
    %4898 = vmatpush1.msra.mxu0 %v4851
    %4899 = vmatprep.subr.mxu0 %v4855
    %4900 = vmatpush1.msra.mxu0 %v4854
    %4901 = vmatprep.subr.mxu0 %v4858
    %4902 = vmatpush1.msra.mxu0 %v4857
    %4903 = vmatprep.subr.mxu0 %v4861
    %4904 = vmatpush1.msra.mxu0 %v4860
    %4905 = vmatprep.subr.mxu0 %v4864
    %4906 = vmatpush1.msra.mxu0 %v4863
    %4907 = vmatprep.subr.mxu0 %v4867
    %4908 = vmatpush1.msra.mxu0 %v4866
    %4909 = vmatprep.subr.mxu0 %v4870
    %4910 = vmatpush1.msra.mxu0 %v4869
    %4911 = vmatprep.subr.mxu0 %v4873
    %4912 = vmatpush1.msra.mxu0 %v4872
    %4913 = vmatprep.subr.mxu0 %v4876
    %4914 = vmatpush1.msra.mxu0 %v4875
    %4915 = vmatprep.subr.mxu0 %v4879
    %4916 = vmatpush1.msra.mxu0 %v4878
    %4917 = vmatprep.subr.mxu0 %v4882
    %4918 = vmatpush1.msra.mxu0 %v4881
    %4919 = vmatprep.subr.mxu0 %v4885
    %4920 = vmatpush1.msra.mxu0 %v4884
    %4921 = vmatprep.subr.mxu0 %v4888
    %4922 = vmatpush1.msra.mxu0 %v4887
    %4923 = vmatprep.subr.mxu0 %v4891
    %4924 = vmatpush1.msra.mxu0 %v4890
    %4925 = vmatprep.subr.mxu0 0.0
    %4926 = vmatpush1.msra.mxu0 0.0
    %4927 = vmatprep.subr.mxu0 0.0
    %4928 = vmatpush1.msra.mxu0 0.0
    %4929 = vmatprep.subr.mxu0 0.0
    %4930 = vmatpush1.msra.mxu0 0.0
    %4931 = vmatprep.subr.mxu0 0.0
    %4932 = vmatpush1.msra.mxu0 0.0
    %4933 = vmatprep.subr.mxu0 0.0
    %4934 = vmatpush1.msra.mxu0 0.0
    %4935 = vmatprep.subr.mxu0 0.0
    %4936 = vmatpush1.msra.mxu0 0.0
    %4937 = vmatprep.subr.mxu0 0.0
    %4938 = vmatpush1.msra.mxu0 0.0
    %4939 = vmatprep.subr.mxu0 0.0
    %4940 = vmatpush1.msra.mxu0 0.0
    %4941 = vmatprep.subr.mxu0 0.0
    %4942 = vmatpush1.msra.mxu0 0.0
    %4943 = vmatprep.subr.mxu0 0.0
    %4944 = vmatpush1.msra.mxu0 0.0
    %4945 = vmatprep.subr.mxu0 0.0
    %4946 = vmatpush1.msra.mxu0 0.0
    %4947 = vmatprep.subr.mxu0 0.0
    %4948 = vmatpush1.msra.mxu0 0.0
    %4949 = vmatprep.subr.mxu0 0.0
    %4950 = vmatpush1.msra.mxu0 0.0
    %4951 = vmatprep.subr.mxu0 0.0
    %4952 = vmatpush1.msra.mxu0 0.0
    %4953 = vmatprep.subr.mxu0 0.0
    %4954 = vmatpush1.msra.mxu0 0.0
    %4955 = vmatprep.subr.mxu0 0.0
    %4956 = vmatpush1.msra.mxu0 0.0
    %4957 = vmatprep.mubr.f32.mxu0 0.0
    %4958 = vmatmul.mubr.f32.gmra.mrb[0].mxu0 %v4840
    %v4959 = vpop.f32.mrb[0].mxu0
    %v4960 = vadd.f32 0.0, %v4959
    %v4961 = vpop.f32.mrb[0].mxu0
    %v4962 = vadd.f32 0.0, %v4961
    %4963 = vdwg.mxu0
    %4964 = vmatprep.subr.mxu0 0.0
    %4965 = vmatpush1.msra.mxu0 %v4847
    %4966 = vmatprep.subr.mxu0 0.0
    %4967 = vmatpush1.msra.mxu0 %v4850
    %4968 = vmatprep.subr.mxu0 0.0
    %4969 = vmatpush1.msra.mxu0 %v4853
    %4970 = vmatprep.subr.mxu0 0.0
    %4971 = vmatpush1.msra.mxu0 %v4856
    %4972 = vmatprep.subr.mxu0 0.0
    %4973 = vmatpush1.msra.mxu0 %v4859
    %4974 = vmatprep.subr.mxu0 0.0
    %4975 = vmatpush1.msra.mxu0 %v4862
    %4976 = vmatprep.subr.mxu0 0.0
    %4977 = vmatpush1.msra.mxu0 %v4865
    %4978 = vmatprep.subr.mxu0 0.0
    %4979 = vmatpush1.msra.mxu0 %v4868
    %4980 = vmatprep.subr.mxu0 0.0
    %4981 = vmatpush1.msra.mxu0 %v4871
    %4982 = vmatprep.subr.mxu0 0.0
    %4983 = vmatpush1.msra.mxu0 %v4874
    %4984 = vmatprep.subr.mxu0 0.0
    %4985 = vmatpush1.msra.mxu0 %v4877
    %4986 = vmatprep.subr.mxu0 0.0
    %4987 = vmatpush1.msra.mxu0 %v4880
    %4988 = vmatprep.subr.mxu0 0.0
    %4989 = vmatpush1.msra.mxu0 %v4883
    %4990 = vmatprep.subr.mxu0 0.0
    %4991 = vmatpush1.msra.mxu0 %v4886
    %4992 = vmatprep.subr.mxu0 0.0
    %4993 = vmatpush1.msra.mxu0 %v4889
    %4994 = vmatprep.subr.mxu0 0.0
    %4995 = vmatpush1.msra.mxu0 %v4892
    %4996 = vmatprep.subr.mxu0 0.0
    %4997 = vmatpush1.msra.mxu0 0.0
    %4998 = vmatprep.subr.mxu0 0.0
    %4999 = vmatpush1.msra.mxu0 0.0
    %5000 = vmatprep.subr.mxu0 0.0
    %5001 = vmatpush1.msra.mxu0 0.0
    %5002 = vmatprep.subr.mxu0 0.0
    %5003 = vmatpush1.msra.mxu0 0.0
    %5004 = vmatprep.subr.mxu0 0.0
    %5005 = vmatpush1.msra.mxu0 0.0
    %5006 = vmatprep.subr.mxu0 0.0
    %5007 = vmatpush1.msra.mxu0 0.0
    %5008 = vmatprep.subr.mxu0 0.0
    %5009 = vmatpush1.msra.mxu0 0.0
    %5010 = vmatprep.subr.mxu0 0.0
    %5011 = vmatpush1.msra.mxu0 0.0
    %5012 = vmatprep.subr.mxu0 0.0
    %5013 = vmatpush1.msra.mxu0 0.0
    %5014 = vmatprep.subr.mxu0 0.0
    %5015 = vmatpush1.msra.mxu0 0.0
    %5016 = vmatprep.subr.mxu0 0.0
    %5017 = vmatpush1.msra.mxu0 0.0
    %5018 = vmatprep.subr.mxu0 0.0
    %5019 = vmatpush1.msra.mxu0 0.0
    %5020 = vmatprep.subr.mxu0 0.0
    %5021 = vmatpush1.msra.mxu0 0.0
    %5022 = vmatprep.subr.mxu0 0.0
    %5023 = vmatpush1.msra.mxu0 0.0
    %5024 = vmatprep.subr.mxu0 0.0
    %5025 = vmatpush1.msra.mxu0 0.0
    %5026 = vmatprep.subr.mxu0 0.0
    %5027 = vmatpush1.msra.mxu0 0.0
    %5028 = vmatprep.mubr.f32.mxu0 0.0
    %5029 = vmatmul.mubr.f32.gmra.mrb[0].mxu0 %v4840
    %v5030 = vpop.f32.mrb[0].mxu0
    %v5031 = vadd.f32 0.0, %v5030
    %v5032 = vpop.f32.mrb[0].mxu0
    %5033 = vdwg.mxu0
    %v5034 = vadd.f32 %v4842, %v4960
    %v5035 = vxor.u32 %v5034, 2147483648
    %v5036 = vmul.f32 %v5035, 1.442695
    %v5037 = vpow.pop %v5036
    %v5038 = vadd.f32 %v5037, 1.0
    %v5039 = vrcp.pop %v5038
    %v5040 = vmul.f32 1.0, %v5039
    %v5041 = vadd.f32 %v4843, %v4962
    %v5042 = vxor.u32 %v5041, 2147483648
    %v5043 = vmul.f32 %v5042, 1.442695
    %v5044 = vpow.pop %v5043
    %v5045 = vadd.f32 %v5044, 1.0
    %v5046 = vrcp.pop %v5045
    %v5047 = vmul.f32 1.0, %v5046
    %v5048 = vadd.f32 %v5031, %v4195
    %v5049 = vmul.f32 %v5040, %v5048
    %v5050 = vadd.f32 %v4844, %v5049
    %v5051 = vtanh.pop %v5050
    %v5052 = vsub.f32 %v4840, %v5051
    %v5053 = vmul.f32 %v5047, %v5052
    %v5054 = vadd.f32 %v5051, %v5053
    %5055 = vst [vmem:[%s942] sm:$0xff] %v5054
    %v5056 = vld [vmem:[%s3008] sm:$0xff]
    %v5057 = vld [vmem:[%s3008 + $0x8] sm:$0xff]
    %v5058 = vld [vmem:[%s3008 + $0x10] sm:$0xff]
    %v5059 = vld [vmem:[%s4202] sm:$0xff]
    %v5060 = vld [vmem:[%s4202 + $0x8] sm:$0xff]
    %v5061 = vld [vmem:[%s4202 + $0x10] sm:$0xff]
    %v5062 = vld [vmem:[%s4202 + $0x18] sm:$0xff]
    %v5063 = vld [vmem:[%s4202 + $0x20] sm:$0xff]
    %v5064 = vld [vmem:[%s4202 + $0x28] sm:$0xff]
    %v5065 = vld [vmem:[%s4202 + $0x30] sm:$0xff]
    %v5066 = vld [vmem:[%s4202 + $0x38] sm:$0xff]
    %v5067 = vld [vmem:[%s4202 + $0x40] sm:$0xff]
    %v5068 = vld [vmem:[%s4202 + $0x48] sm:$0xff]
    %v5069 = vld [vmem:[%s4202 + $0x50] sm:$0xff]
    %v5070 = vld [vmem:[%s4202 + $0x58] sm:$0xff]
    %v5071 = vld [vmem:[%s4202 + $0x60] sm:$0xff]
    %v5072 = vld [vmem:[%s4202 + $0x68] sm:$0xff]
    %v5073 = vld [vmem:[%s4202 + $0x70] sm:$0xff]
    %v5074 = vld [vmem:[%s4202 + $0x78] sm:$0xff]
    %v5075 = vld [vmem:[%s4202 + $0x80] sm:$0xff]
    %v5076 = vld [vmem:[%s4202 + $0x88] sm:$0xff]
    %v5077 = vld [vmem:[%s4202 + $0x90] sm:$0xff]
    %v5078 = vld [vmem:[%s4202 + $0x98] sm:$0xff]
    %v5079 = vld [vmem:[%s4202 + $0xa0] sm:$0xff]
    %v5080 = vld [vmem:[%s4202 + $0xa8] sm:$0xff]
    %v5081 = vld [vmem:[%s4202 + $0xb0] sm:$0xff]
    %v5082 = vld [vmem:[%s4202 + $0xb8] sm:$0xff]
    %v5083 = vld [vmem:[%s4202 + $0xc0] sm:$0xff]
    %v5084 = vld [vmem:[%s4202 + $0xc8] sm:$0xff]
    %v5085 = vld [vmem:[%s4202 + $0xd0] sm:$0xff]
    %v5086 = vld [vmem:[%s4202 + $0xd8] sm:$0xff]
    %v5087 = vld [vmem:[%s4202 + $0xe0] sm:$0xff]
    %v5088 = vld [vmem:[%s4202 + $0xe8] sm:$0xff]
    %v5089 = vld [vmem:[%s4202 + $0xf0] sm:$0xff]
    %v5090 = vld [vmem:[%s4202 + $0xf8] sm:$0xff]
    %v5091 = vld [vmem:[%s4202 + $0x100] sm:$0xff]
    %v5092 = vld [vmem:[%s4202 + $0x108] sm:$0xff]
    %v5093 = vld [vmem:[%s4202 + $0x110] sm:$0xff]
    %v5094 = vld [vmem:[%s4202 + $0x118] sm:$0xff]
    %v5095 = vld [vmem:[%s4202 + $0x120] sm:$0xff]
    %v5096 = vld [vmem:[%s4202 + $0x128] sm:$0xff]
    %v5097 = vld [vmem:[%s4202 + $0x130] sm:$0xff]
    %v5098 = vld [vmem:[%s4202 + $0x138] sm:$0xff]
    %v5099 = vld [vmem:[%s4202 + $0x140] sm:$0xff]
    %v5100 = vld [vmem:[%s4202 + $0x148] sm:$0xff]
    %v5101 = vld [vmem:[%s4202 + $0x150] sm:$0xff]
    %v5102 = vld [vmem:[%s4202 + $0x158] sm:$0xff]
    %v5103 = vld [vmem:[%s4202 + $0x160] sm:$0xff]
    %v5104 = vld [vmem:[%s4202 + $0x168] sm:$0xff]
    %v5105 = vld [vmem:[%s4202 + $0x170] sm:$0xff]
    %v5106 = vld [vmem:[%s4202 + $0x178] sm:$0xff]
    %5107 = vmatprep.subr.mxu0 %v5060
    %5108 = vmatpush1.msra.mxu0 %v5059
    %5109 = vmatprep.subr.mxu0 %v5063
    %5110 = vmatpush1.msra.mxu0 %v5062
    %5111 = vmatprep.subr.mxu0 %v5066
    %5112 = vmatpush1.msra.mxu0 %v5065
    %5113 = vmatprep.subr.mxu0 %v5069
    %5114 = vmatpush1.msra.mxu0 %v5068
    %5115 = vmatprep.subr.mxu0 %v5072
    %5116 = vmatpush1.msra.mxu0 %v5071
    %5117 = vmatprep.subr.mxu0 %v5075
    %5118 = vmatpush1.msra.mxu0 %v5074
    %5119 = vmatprep.subr.mxu0 %v5078
    %5120 = vmatpush1.msra.mxu0 %v5077
    %5121 = vmatprep.subr.mxu0 %v5081
    %5122 = vmatpush1.msra.mxu0 %v5080
    %5123 = vmatprep.subr.mxu0 %v5084
    %5124 = vmatpush1.msra.mxu0 %v5083
    %5125 = vmatprep.subr.mxu0 %v5087
    %5126 = vmatpush1.msra.mxu0 %v5086
    %5127 = vmatprep.subr.mxu0 %v5090
    %5128 = vmatpush1.msra.mxu0 %v5089
    %5129 = vmatprep.subr.mxu0 %v5093
    %5130 = vmatpush1.msra.mxu0 %v5092
    %5131 = vmatprep.subr.mxu0 %v5096
    %5132 = vmatpush1.msra.mxu0 %v5095
    %5133 = vmatprep.subr.mxu0 %v5099
    %5134 = vmatpush1.msra.mxu0 %v5098
    %5135 = vmatprep.subr.mxu0 %v5102
    %5136 = vmatpush1.msra.mxu0 %v5101
    %5137 = vmatprep.subr.mxu0 %v5105
    %5138 = vmatpush1.msra.mxu0 %v5104
    %5139 = vmatprep.subr.mxu0 0.0
    %5140 = vmatpush1.msra.mxu0 0.0
    %5141 = vmatprep.subr.mxu0 0.0
    %5142 = vmatpush1.msra.mxu0 0.0
    %5143 = vmatprep.subr.mxu0 0.0
    %5144 = vmatpush1.msra.mxu0 0.0
    %5145 = vmatprep.subr.mxu0 0.0
    %5146 = vmatpush1.msra.mxu0 0.0
    %5147 = vmatprep.subr.mxu0 0.0
    %5148 = vmatpush1.msra.mxu0 0.0
    %5149 = vmatprep.subr.mxu0 0.0
    %5150 = vmatpush1.msra.mxu0 0.0
    %5151 = vmatprep.subr.mxu0 0.0
    %5152 = vmatpush1.msra.mxu0 0.0
    %5153 = vmatprep.subr.mxu0 0.0
    %5154 = vmatpush1.msra.mxu0 0.0
    %5155 = vmatprep.subr.mxu0 0.0
    %5156 = vmatpush1.msra.mxu0 0.0
    %5157 = vmatprep.subr.mxu0 0.0
    %5158 = vmatpush1.msra.mxu0 0.0
    %5159 = vmatprep.subr.mxu0 0.0
    %5160 = vmatpush1.msra.mxu0 0.0
    %5161 = vmatprep.subr.mxu0 0.0
    %5162 = vmatpush1.msra.mxu0 0.0
    %5163 = vmatprep.subr.mxu0 0.0
    %5164 = vmatpush1.msra.mxu0 0.0
    %5165 = vmatprep.subr.mxu0 0.0
    %5166 = vmatpush1.msra.mxu0 0.0
    %5167 = vmatprep.subr.mxu0 0.0
    %5168 = vmatpush1.msra.mxu0 0.0
    %5169 = vmatprep.subr.mxu0 0.0
    %5170 = vmatpush1.msra.mxu0 0.0
    %5171 = vmatprep.mubr.f32.mxu0 0.0
    %5172 = vmatmul.mubr.f32.gmra.mrb[0].mxu0 %v5054
    %v5173 = vpop.f32.mrb[0].mxu0
    %v5174 = vadd.f32 0.0, %v5173
    %v5175 = vpop.f32.mrb[0].mxu0
    %v5176 = vadd.f32 0.0, %v5175
    %5177 = vdwg.mxu0
    %5178 = vmatprep.subr.mxu0 0.0
    %5179 = vmatpush1.msra.mxu0 %v5061
    %5180 = vmatprep.subr.mxu0 0.0
    %5181 = vmatpush1.msra.mxu0 %v5064
    %5182 = vmatprep.subr.mxu0 0.0
    %5183 = vmatpush1.msra.mxu0 %v5067
    %5184 = vmatprep.subr.mxu0 0.0
    %5185 = vmatpush1.msra.mxu0 %v5070
    %5186 = vmatprep.subr.mxu0 0.0
    %5187 = vmatpush1.msra.mxu0 %v5073
    %5188 = vmatprep.subr.mxu0 0.0
    %5189 = vmatpush1.msra.mxu0 %v5076
    %5190 = vmatprep.subr.mxu0 0.0
    %5191 = vmatpush1.msra.mxu0 %v5079
    %5192 = vmatprep.subr.mxu0 0.0
    %5193 = vmatpush1.msra.mxu0 %v5082
    %5194 = vmatprep.subr.mxu0 0.0
    %5195 = vmatpush1.msra.mxu0 %v5085
    %5196 = vmatprep.subr.mxu0 0.0
    %5197 = vmatpush1.msra.mxu0 %v5088
    %5198 = vmatprep.subr.mxu0 0.0
    %5199 = vmatpush1.msra.mxu0 %v5091
    %5200 = vmatprep.subr.mxu0 0.0
    %5201 = vmatpush1.msra.mxu0 %v5094
    %5202 = vmatprep.subr.mxu0 0.0
    %5203 = vmatpush1.msra.mxu0 %v5097
    %5204 = vmatprep.subr.mxu0 0.0
    %5205 = vmatpush1.msra.mxu0 %v5100
    %5206 = vmatprep.subr.mxu0 0.0
    %5207 = vmatpush1.msra.mxu0 %v5103
    %5208 = vmatprep.subr.mxu0 0.0
    %5209 = vmatpush1.msra.mxu0 %v5106
    %5210 = vmatprep.subr.mxu0 0.0
    %5211 = vmatpush1.msra.mxu0 0.0
    %5212 = vmatprep.subr.mxu0 0.0
    %5213 = vmatpush1.msra.mxu0 0.0
    %5214 = vmatprep.subr.mxu0 0.0
    %5215 = vmatpush1.msra.mxu0 0.0
    %5216 = vmatprep.subr.mxu0 0.0
    %5217 = vmatpush1.msra.mxu0 0.0
    %5218 = vmatprep.subr.mxu0 0.0
    %5219 = vmatpush1.msra.mxu0 0.0
    %5220 = vmatprep.subr.mxu0 0.0
    %5221 = vmatpush1.msra.mxu0 0.0
    %5222 = vmatprep.subr.mxu0 0.0
    %5223 = vmatpush1.msra.mxu0 0.0
    %5224 = vmatprep.subr.mxu0 0.0
    %5225 = vmatpush1.msra.mxu0 0.0
    %5226 = vmatprep.subr.mxu0 0.0
    %5227 = vmatpush1.msra.mxu0 0.0
    %5228 = vmatprep.subr.mxu0 0.0
    %5229 = vmatpush1.msra.mxu0 0.0
    %5230 = vmatprep.subr.mxu0 0.0
    %5231 = vmatpush1.msra.mxu0 0.0
    %5232 = vmatprep.subr.mxu0 0.0
    %5233 = vmatpush1.msra.mxu0 0.0
    %5234 = vmatprep.subr.mxu0 0.0
    %5235 = vmatpush1.msra.mxu0 0.0
    %5236 = vmatprep.subr.mxu0 0.0
    %5237 = vmatpush1.msra.mxu0 0.0
    %5238 = vmatprep.subr.mxu0 0.0
    %5239 = vmatpush1.msra.mxu0 0.0
    %5240 = vmatprep.subr.mxu0 0.0
    %5241 = vmatpush1.msra.mxu0 0.0
    %5242 = vmatprep.mubr.f32.mxu0 0.0
    %5243 = vmatmul.mubr.f32.gmra.mrb[0].mxu0 %v5054
    %v5244 = vpop.f32.mrb[0].mxu0
    %v5245 = vadd.f32 0.0, %v5244
    %v5246 = vpop.f32.mrb[0].mxu0
    %5247 = vdwg.mxu0
    %v5248 = vadd.f32 %v5056, %v5174
    %v5249 = vxor.u32 %v5248, 2147483648
    %v5250 = vmul.f32 %v5249, 1.442695
    %v5251 = vpow.pop %v5250
    %v5252 = vadd.f32 %v5251, 1.0
    %v5253 = vrcp.pop %v5252
    %v5254 = vmul.f32 1.0, %v5253
    %v5255 = vadd.f32 %v5057, %v5176
    %v5256 = vxor.u32 %v5255, 2147483648
    %v5257 = vmul.f32 %v5256, 1.442695
    %v5258 = vpow.pop %v5257
    %v5259 = vadd.f32 %v5258, 1.0
    %v5260 = vrcp.pop %v5259
    %v5261 = vmul.f32 1.0, %v5260
    %v5262 = vadd.f32 %v5245, %v4195
    %v5263 = vmul.f32 %v5254, %v5262
    %v5264 = vadd.f32 %v5058, %v5263
    %v5265 = vtanh.pop %v5264
    %v5266 = vsub.f32 %v5054, %v5265
    %v5267 = vmul.f32 %v5261, %v5266
    %v5268 = vadd.f32 %v5265, %v5267
    %5269 = vst [vmem:[%s1160] sm:$0xff] %v5268
    %v5270 = vld [vmem:[%s3224] sm:$0xff]
    %v5271 = vld [vmem:[%s3224 + $0x8] sm:$0xff]
    %v5272 = vld [vmem:[%s3224 + $0x10] sm:$0xff]
    %v5273 = vld [vmem:[%s4202] sm:$0xff]
    %v5274 = vld [vmem:[%s4202 + $0x8] sm:$0xff]
    %v5275 = vld [vmem:[%s4202 + $0x10] sm:$0xff]
    %v5276 = vld [vmem:[%s4202 + $0x18] sm:$0xff]
    %v5277 = vld [vmem:[%s4202 + $0x20] sm:$0xff]
    %v5278 = vld [vmem:[%s4202 + $0x28] sm:$0xff]
    %v5279 = vld [vmem:[%s4202 + $0x30] sm:$0xff]
    %v5280 = vld [vmem:[%s4202 + $0x38] sm:$0xff]
    %v5281 = vld [vmem:[%s4202 + $0x40] sm:$0xff]
    %v5282 = vld [vmem:[%s4202 + $0x48] sm:$0xff]
    %v5283 = vld [vmem:[%s4202 + $0x50] sm:$0xff]
    %v5284 = vld [vmem:[%s4202 + $0x58] sm:$0xff]
    %v5285 = vld [vmem:[%s4202 + $0x60] sm:$0xff]
    %v5286 = vld [vmem:[%s4202 + $0x68] sm:$0xff]
    %v5287 = vld [vmem:[%s4202 + $0x70] sm:$0xff]
    %v5288 = vld [vmem:[%s4202 + $0x78] sm:$0xff]
    %v5289 = vld [vmem:[%s4202 + $0x80] sm:$0xff]
    %v5290 = vld [vmem:[%s4202 + $0x88] sm:$0xff]
    %v5291 = vld [vmem:[%s4202 + $0x90] sm:$0xff]
    %v5292 = vld [vmem:[%s4202 + $0x98] sm:$0xff]
    %v5293 = vld [vmem:[%s4202 + $0xa0] sm:$0xff]
    %v5294 = vld [vmem:[%s4202 + $0xa8] sm:$0xff]
    %v5295 = vld [vmem:[%s4202 + $0xb0] sm:$0xff]
    %v5296 = vld [vmem:[%s4202 + $0xb8] sm:$0xff]
    %v5297 = vld [vmem:[%s4202 + $0xc0] sm:$0xff]
    %v5298 = vld [vmem:[%s4202 + $0xc8] sm:$0xff]
    %v5299 = vld [vmem:[%s4202 + $0xd0] sm:$0xff]
    %v5300 = vld [vmem:[%s4202 + $0xd8] sm:$0xff]
    %v5301 = vld [vmem:[%s4202 + $0xe0] sm:$0xff]
    %v5302 = vld [vmem:[%s4202 + $0xe8] sm:$0xff]
    %v5303 = vld [vmem:[%s4202 + $0xf0] sm:$0xff]
    %v5304 = vld [vmem:[%s4202 + $0xf8] sm:$0xff]
    %v5305 = vld [vmem:[%s4202 + $0x100] sm:$0xff]
    %v5306 = vld [vmem:[%s4202 + $0x108] sm:$0xff]
    %v5307 = vld [vmem:[%s4202 + $0x110] sm:$0xff]
    %v5308 = vld [vmem:[%s4202 + $0x118] sm:$0xff]
    %v5309 = vld [vmem:[%s4202 + $0x120] sm:$0xff]
    %v5310 = vld [vmem:[%s4202 + $0x128] sm:$0xff]
    %v5311 = vld [vmem:[%s4202 + $0x130] sm:$0xff]
    %v5312 = vld [vmem:[%s4202 + $0x138] sm:$0xff]
    %v5313 = vld [vmem:[%s4202 + $0x140] sm:$0xff]
    %v5314 = vld [vmem:[%s4202 + $0x148] sm:$0xff]
    %v5315 = vld [vmem:[%s4202 + $0x150] sm:$0xff]
    %v5316 = vld [vmem:[%s4202 + $0x158] sm:$0xff]
    %v5317 = vld [vmem:[%s4202 + $0x160] sm:$0xff]
    %v5318 = vld [vmem:[%s4202 + $0x168] sm:$0xff]
    %v5319 = vld [vmem:[%s4202 + $0x170] sm:$0xff]
    %v5320 = vld [vmem:[%s4202 + $0x178] sm:$0xff]
    %5321 = vmatprep.subr.mxu0 %v5274
    %5322 = vmatpush1.msra.mxu0 %v5273
    %5323 = vmatprep.subr.mxu0 %v5277
    %5324 = vmatpush1.msra.mxu0 %v5276
    %5325 = vmatprep.subr.mxu0 %v5280
    %5326 = vmatpush1.msra.mxu0 %v5279
    %5327 = vmatprep.subr.mxu0 %v5283
    %5328 = vmatpush1.msra.mxu0 %v5282
    %5329 = vmatprep.subr.mxu0 %v5286
    %5330 = vmatpush1.msra.mxu0 %v5285
    %5331 = vmatprep.subr.mxu0 %v5289
    %5332 = vmatpush1.msra.mxu0 %v5288
    %5333 = vmatprep.subr.mxu0 %v5292
    %5334 = vmatpush1.msra.mxu0 %v5291
    %5335 = vmatprep.subr.mxu0 %v5295
    %5336 = vmatpush1.msra.mxu0 %v5294
    %5337 = vmatprep.subr.mxu0 %v5298
    %5338 = vmatpush1.msra.mxu0 %v5297
    %5339 = vmatprep.subr.mxu0 %v5301
    %5340 = vmatpush1.msra.mxu0 %v5300
    %5341 = vmatprep.subr.mxu0 %v5304
    %5342 = vmatpush1.msra.mxu0 %v5303
    %5343 = vmatprep.subr.mxu0 %v5307
    %5344 = vmatpush1.msra.mxu0 %v5306
    %5345 = vmatprep.subr.mxu0 %v5310
    %5346 = vmatpush1.msra.mxu0 %v5309
    %5347 = vmatprep.subr.mxu0 %v5313
    %5348 = vmatpush1.msra.mxu0 %v5312
    %5349 = vmatprep.subr.mxu0 %v5316
    %5350 = vmatpush1.msra.mxu0 %v5315
    %5351 = vmatprep.subr.mxu0 %v5319
    %5352 = vmatpush1.msra.mxu0 %v5318
    %5353 = vmatprep.subr.mxu0 0.0
    %5354 = vmatpush1.msra.mxu0 0.0
    %5355 = vmatprep.subr.mxu0 0.0
    %5356 = vmatpush1.msra.mxu0 0.0
    %5357 = vmatprep.subr.mxu0 0.0
    %5358 = vmatpush1.msra.mxu0 0.0
    %5359 = vmatprep.subr.mxu0 0.0
    %5360 = vmatpush1.msra.mxu0 0.0
    %5361 = vmatprep.subr.mxu0 0.0
    %5362 = vmatpush1.msra.mxu0 0.0
    %5363 = vmatprep.subr.mxu0 0.0
    %5364 = vmatpush1.msra.mxu0 0.0
    %5365 = vmatprep.subr.mxu0 0.0
    %5366 = vmatpush1.msra.mxu0 0.0
    %5367 = vmatprep.subr.mxu0 0.0
    %5368 = vmatpush1.msra.mxu0 0.0
    %5369 = vmatprep.subr.mxu0 0.0
    %5370 = vmatpush1.msra.mxu0 0.0
    %5371 = vmatprep.subr.mxu0 0.0
    %5372 = vmatpush1.msra.mxu0 0.0
    %5373 = vmatprep.subr.mxu0 0.0
    %5374 = vmatpush1.msra.mxu0 0.0
    %5375 = vmatprep.subr.mxu0 0.0
    %5376 = vmatpush1.msra.mxu0 0.0
    %5377 = vmatprep.subr.mxu0 0.0
    %5378 = vmatpush1.msra.mxu0 0.0
    %5379 = vmatprep.subr.mxu0 0.0
    %5380 = vmatpush1.msra.mxu0 0.0
    %5381 = vmatprep.subr.mxu0 0.0
    %5382 = vmatpush1.msra.mxu0 0.0
    %5383 = vmatprep.subr.mxu0 0.0
    %5384 = vmatpush1.msra.mxu0 0.0
    %5385 = vmatprep.mubr.f32.mxu0 0.0
    %5386 = vmatmul.mubr.f32.gmra.mrb[0].mxu0 %v5268
    %v5387 = vpop.f32.mrb[0].mxu0
    %v5388 = vadd.f32 0.0, %v5387
    %v5389 = vpop.f32.mrb[0].mxu0
    %v5390 = vadd.f32 0.0, %v5389
    %5391 = vdwg.mxu0
    %5392 = vmatprep.subr.mxu0 0.0
    %5393 = vmatpush1.msra.mxu0 %v5275
    %5394 = vmatprep.subr.mxu0 0.0
    %5395 = vmatpush1.msra.mxu0 %v5278
    %5396 = vmatprep.subr.mxu0 0.0
    %5397 = vmatpush1.msra.mxu0 %v5281
    %5398 = vmatprep.subr.mxu0 0.0
    %5399 = vmatpush1.msra.mxu0 %v5284
    %5400 = vmatprep.subr.mxu0 0.0
    %5401 = vmatpush1.msra.mxu0 %v5287
    %5402 = vmatprep.subr.mxu0 0.0
    %5403 = vmatpush1.msra.mxu0 %v5290
    %5404 = vmatprep.subr.mxu0 0.0
    %5405 = vmatpush1.msra.mxu0 %v5293
    %5406 = vmatprep.subr.mxu0 0.0
    %5407 = vmatpush1.msra.mxu0 %v5296
    %5408 = vmatprep.subr.mxu0 0.0
    %5409 = vmatpush1.msra.mxu0 %v5299
    %5410 = vmatprep.subr.mxu0 0.0
    %5411 = vmatpush1.msra.mxu0 %v5302
    %5412 = vmatprep.subr.mxu0 0.0
    %5413 = vmatpush1.msra.mxu0 %v5305
    %5414 = vmatprep.subr.mxu0 0.0
    %5415 = vmatpush1.msra.mxu0 %v5308
    %5416 = vmatprep.subr.mxu0 0.0
    %5417 = vmatpush1.msra.mxu0 %v5311
    %5418 = vmatprep.subr.mxu0 0.0
    %5419 = vmatpush1.msra.mxu0 %v5314
    %5420 = vmatprep.subr.mxu0 0.0
    %5421 = vmatpush1.msra.mxu0 %v5317
    %5422 = vmatprep.subr.mxu0 0.0
    %5423 = vmatpush1.msra.mxu0 %v5320
    %5424 = vmatprep.subr.mxu0 0.0
    %5425 = vmatpush1.msra.mxu0 0.0
    %5426 = vmatprep.subr.mxu0 0.0
    %5427 = vmatpush1.msra.mxu0 0.0
    %5428 = vmatprep.subr.mxu0 0.0
    %5429 = vmatpush1.msra.mxu0 0.0
    %5430 = vmatprep.subr.mxu0 0.0
    %5431 = vmatpush1.msra.mxu0 0.0
    %5432 = vmatprep.subr.mxu0 0.0
    %5433 = vmatpush1.msra.mxu0 0.0
    %5434 = vmatprep.subr.mxu0 0.0
    %5435 = vmatpush1.msra.mxu0 0.0
    %5436 = vmatprep.subr.mxu0 0.0
    %5437 = vmatpush1.msra.mxu0 0.0
    %5438 = vmatprep.subr.mxu0 0.0
    %5439 = vmatpush1.msra.mxu0 0.0
    %5440 = vmatprep.subr.mxu0 0.0
    %5441 = vmatpush1.msra.mxu0 0.0
    %5442 = vmatprep.subr.mxu0 0.0
    %5443 = vmatpush1.msra.mxu0 0.0
    %5444 = vmatprep.subr.mxu0 0.0
    %5445 = vmatpush1.msra.mxu0 0.0
    %5446 = vmatprep.subr.mxu0 0.0
    %5447 = vmatpush1.msra.mxu0 0.0
    %5448 = vmatprep.subr.mxu0 0.0
    %5449 = vmatpush1.msra.mxu0 0.0
    %5450 = vmatprep.subr.mxu0 0.0
    %5451 = vmatpush1.msra.mxu0 0.0
    %5452 = vmatprep.subr.mxu0 0.0
    %5453 = vmatpush1.msra.mxu0 0.0
    %5454 = vmatprep.subr.mxu0 0.0
    %5455 = vmatpush1.msra.mxu0 0.0
    %5456 = vmatprep.mubr.f32.mxu0 0.0
    %5457 = vmatmul.mubr.f32.gmra.mrb[0].mxu0 %v5268
    %v5458 = vpop.f32.mrb[0].mxu0
    %v5459 = vadd.f32 0.0, %v5458
    %v5460 = vpop.f32.mrb[0].mxu0
    %5461 = vdwg.mxu0
    %v5462 = vadd.f32 %v5270, %v5388
    %v5463 = vxor.u32 %v5462, 2147483648
    %v5464 = vmul.f32 %v5463, 1.442695
    %v5465 = vpow.pop %v5464
    %v5466 = vadd.f32 %v5465, 1.0
    %v5467 = vrcp.pop %v5466
    %v5468 = vmul.f32 1.0, %v5467
    %v5469 = vadd.f32 %v5271, %v5390
    %v5470 = vxor.u32 %v5469, 2147483648
    %v5471 = vmul.f32 %v5470, 1.442695
    %v5472 = vpow.pop %v5471
    %v5473 = vadd.f32 %v5472, 1.0
    %v5474 = vrcp.pop %v5473
    %v5475 = vmul.f32 1.0, %v5474
    %v5476 = vadd.f32 %v5459, %v4195
    %v5477 = vmul.f32 %v5468, %v5476
    %v5478 = vadd.f32 %v5272, %v5477
    %v5479 = vtanh.pop %v5478
    %v5480 = vsub.f32 %v5268, %v5479
    %v5481 = vmul.f32 %v5475, %v5480
    %v5482 = vadd.f32 %v5479, %v5481
    %5483 = vst [vmem:[%s1378] sm:$0xff] %v5482
    %v5484 = vld [vmem:[%s3440] sm:$0xff]
    %v5485 = vld [vmem:[%s3440 + $0x8] sm:$0xff]
    %v5486 = vld [vmem:[%s3440 + $0x10] sm:$0xff]
    %v5487 = vld [vmem:[%s4202] sm:$0xff]
    %v5488 = vld [vmem:[%s4202 + $0x8] sm:$0xff]
    %v5489 = vld [vmem:[%s4202 + $0x10] sm:$0xff]
    %v5490 = vld [vmem:[%s4202 + $0x18] sm:$0xff]
    %v5491 = vld [vmem:[%s4202 + $0x20] sm:$0xff]
    %v5492 = vld [vmem:[%s4202 + $0x28] sm:$0xff]
    %v5493 = vld [vmem:[%s4202 + $0x30] sm:$0xff]
    %v5494 = vld [vmem:[%s4202 + $0x38] sm:$0xff]
    %v5495 = vld [vmem:[%s4202 + $0x40] sm:$0xff]
    %v5496 = vld [vmem:[%s4202 + $0x48] sm:$0xff]
    %v5497 = vld [vmem:[%s4202 + $0x50] sm:$0xff]
    %v5498 = vld [vmem:[%s4202 + $0x58] sm:$0xff]
    %v5499 = vld [vmem:[%s4202 + $0x60] sm:$0xff]
    %v5500 = vld [vmem:[%s4202 + $0x68] sm:$0xff]
    %v5501 = vld [vmem:[%s4202 + $0x70] sm:$0xff]
    %v5502 = vld [vmem:[%s4202 + $0x78] sm:$0xff]
    %v5503 = vld [vmem:[%s4202 + $0x80] sm:$0xff]
    %v5504 = vld [vmem:[%s4202 + $0x88] sm:$0xff]
    %v5505 = vld [vmem:[%s4202 + $0x90] sm:$0xff]
    %v5506 = vld [vmem:[%s4202 + $0x98] sm:$0xff]
    %v5507 = vld [vmem:[%s4202 + $0xa0] sm:$0xff]
    %v5508 = vld [vmem:[%s4202 + $0xa8] sm:$0xff]
    %v5509 = vld [vmem:[%s4202 + $0xb0] sm:$0xff]
    %v5510 = vld [vmem:[%s4202 + $0xb8] sm:$0xff]
    %v5511 = vld [vmem:[%s4202 + $0xc0] sm:$0xff]
    %v5512 = vld [vmem:[%s4202 + $0xc8] sm:$0xff]
    %v5513 = vld [vmem:[%s4202 + $0xd0] sm:$0xff]
    %v5514 = vld [vmem:[%s4202 + $0xd8] sm:$0xff]
    %v5515 = vld [vmem:[%s4202 + $0xe0] sm:$0xff]
    %v5516 = vld [vmem:[%s4202 + $0xe8] sm:$0xff]
    %v5517 = vld [vmem:[%s4202 + $0xf0] sm:$0xff]
    %v5518 = vld [vmem:[%s4202 + $0xf8] sm:$0xff]
    %v5519 = vld [vmem:[%s4202 + $0x100] sm:$0xff]
    %v5520 = vld [vmem:[%s4202 + $0x108] sm:$0xff]
    %v5521 = vld [vmem:[%s4202 + $0x110] sm:$0xff]
    %v5522 = vld [vmem:[%s4202 + $0x118] sm:$0xff]
    %v5523 = vld [vmem:[%s4202 + $0x120] sm:$0xff]
    %v5524 = vld [vmem:[%s4202 + $0x128] sm:$0xff]
    %v5525 = vld [vmem:[%s4202 + $0x130] sm:$0xff]
    %v5526 = vld [vmem:[%s4202 + $0x138] sm:$0xff]
    %v5527 = vld [vmem:[%s4202 + $0x140] sm:$0xff]
    %v5528 = vld [vmem:[%s4202 + $0x148] sm:$0xff]
    %v5529 = vld [vmem:[%s4202 + $0x150] sm:$0xff]
    %v5530 = vld [vmem:[%s4202 + $0x158] sm:$0xff]
    %v5531 = vld [vmem:[%s4202 + $0x160] sm:$0xff]
    %v5532 = vld [vmem:[%s4202 + $0x168] sm:$0xff]
    %v5533 = vld [vmem:[%s4202 + $0x170] sm:$0xff]
    %v5534 = vld [vmem:[%s4202 + $0x178] sm:$0xff]
    %5535 = vmatprep.subr.mxu0 %v5488
    %5536 = vmatpush1.msra.mxu0 %v5487
    %5537 = vmatprep.subr.mxu0 %v5491
    %5538 = vmatpush1.msra.mxu0 %v5490
    %5539 = vmatprep.subr.mxu0 %v5494
    %5540 = vmatpush1.msra.mxu0 %v5493
    %5541 = vmatprep.subr.mxu0 %v5497
    %5542 = vmatpush1.msra.mxu0 %v5496
    %5543 = vmatprep.subr.mxu0 %v5500
    %5544 = vmatpush1.msra.mxu0 %v5499
    %5545 = vmatprep.subr.mxu0 %v5503
    %5546 = vmatpush1.msra.mxu0 %v5502
    %5547 = vmatprep.subr.mxu0 %v5506
    %5548 = vmatpush1.msra.mxu0 %v5505
    %5549 = vmatprep.subr.mxu0 %v5509
    %5550 = vmatpush1.msra.mxu0 %v5508
    %5551 = vmatprep.subr.mxu0 %v5512
    %5552 = vmatpush1.msra.mxu0 %v5511
    %5553 = vmatprep.subr.mxu0 %v5515
    %5554 = vmatpush1.msra.mxu0 %v5514
    %5555 = vmatprep.subr.mxu0 %v5518
    %5556 = vmatpush1.msra.mxu0 %v5517
    %5557 = vmatprep.subr.mxu0 %v5521
    %5558 = vmatpush1.msra.mxu0 %v5520
    %5559 = vmatprep.subr.mxu0 %v5524
    %5560 = vmatpush1.msra.mxu0 %v5523
    %5561 = vmatprep.subr.mxu0 %v5527
    %5562 = vmatpush1.msra.mxu0 %v5526
    %5563 = vmatprep.subr.mxu0 %v5530
    %5564 = vmatpush1.msra.mxu0 %v5529
    %5565 = vmatprep.subr.mxu0 %v5533
    %5566 = vmatpush1.msra.mxu0 %v5532
    %5567 = vmatprep.subr.mxu0 0.0
    %5568 = vmatpush1.msra.mxu0 0.0
    %5569 = vmatprep.subr.mxu0 0.0
    %5570 = vmatpush1.msra.mxu0 0.0
    %5571 = vmatprep.subr.mxu0 0.0
    %5572 = vmatpush1.msra.mxu0 0.0
    %5573 = vmatprep.subr.mxu0 0.0
    %5574 = vmatpush1.msra.mxu0 0.0
    %5575 = vmatprep.subr.mxu0 0.0
    %5576 = vmatpush1.msra.mxu0 0.0
    %5577 = vmatprep.subr.mxu0 0.0
    %5578 = vmatpush1.msra.mxu0 0.0
    %5579 = vmatprep.subr.mxu0 0.0
    %5580 = vmatpush1.msra.mxu0 0.0
    %5581 = vmatprep.subr.mxu0 0.0
    %5582 = vmatpush1.msra.mxu0 0.0
    %5583 = vmatprep.subr.mxu0 0.0
    %5584 = vmatpush1.msra.mxu0 0.0
    %5585 = vmatprep.subr.mxu0 0.0
    %5586 = vmatpush1.msra.mxu0 0.0
    %5587 = vmatprep.subr.mxu0 0.0
    %5588 = vmatpush1.msra.mxu0 0.0
    %5589 = vmatprep.subr.mxu0 0.0
    %5590 = vmatpush1.msra.mxu0 0.0
    %5591 = vmatprep.subr.mxu0 0.0
    %5592 = vmatpush1.msra.mxu0 0.0
    %5593 = vmatprep.subr.mxu0 0.0
    %5594 = vmatpush1.msra.mxu0 0.0
    %5595 = vmatprep.subr.mxu0 0.0
    %5596 = vmatpush1.msra.mxu0 0.0
    %5597 = vmatprep.subr.mxu0 0.0
    %5598 = vmatpush1.msra.mxu0 0.0
    %5599 = vmatprep.mubr.f32.mxu0 0.0
    %5600 = vmatmul.mubr.f32.gmra.mrb[0].mxu0 %v5482
    %v5601 = vpop.f32.mrb[0].mxu0
    %v5602 = vadd.f32 0.0, %v5601
    %v5603 = vpop.f32.mrb[0].mxu0
    %v5604 = vadd.f32 0.0, %v5603
    %5605 = vdwg.mxu0
    %5606 = vmatprep.subr.mxu0 0.0
    %5607 = vmatpush1.msra.mxu0 %v5489
    %5608 = vmatprep.subr.mxu0 0.0
    %5609 = vmatpush1.msra.mxu0 %v5492
    %5610 = vmatprep.subr.mxu0 0.0
    %5611 = vmatpush1.msra.mxu0 %v5495
    %5612 = vmatprep.subr.mxu0 0.0
    %5613 = vmatpush1.msra.mxu0 %v5498
    %5614 = vmatprep.subr.mxu0 0.0
    %5615 = vmatpush1.msra.mxu0 %v5501
    %5616 = vmatprep.subr.mxu0 0.0
    %5617 = vmatpush1.msra.mxu0 %v5504
    %5618 = vmatprep.subr.mxu0 0.0
    %5619 = vmatpush1.msra.mxu0 %v5507
    %5620 = vmatprep.subr.mxu0 0.0
    %5621 = vmatpush1.msra.mxu0 %v5510
    %5622 = vmatprep.subr.mxu0 0.0
    %5623 = vmatpush1.msra.mxu0 %v5513
    %5624 = vmatprep.subr.mxu0 0.0
    %5625 = vmatpush1.msra.mxu0 %v5516
    %5626 = vmatprep.subr.mxu0 0.0
    %5627 = vmatpush1.msra.mxu0 %v5519
    %5628 = vmatprep.subr.mxu0 0.0
    %5629 = vmatpush1.msra.mxu0 %v5522
    %5630 = vmatprep.subr.mxu0 0.0
    %5631 = vmatpush1.msra.mxu0 %v5525
    %5632 = vmatprep.subr.mxu0 0.0
    %5633 = vmatpush1.msra.mxu0 %v5528
    %5634 = vmatprep.subr.mxu0 0.0
    %5635 = vmatpush1.msra.mxu0 %v5531
    %5636 = vmatprep.subr.mxu0 0.0
    %5637 = vmatpush1.msra.mxu0 %v5534
    %5638 = vmatprep.subr.mxu0 0.0
    %5639 = vmatpush1.msra.mxu0 0.0
    %5640 = vmatprep.subr.mxu0 0.0
    %5641 = vmatpush1.msra.mxu0 0.0
    %5642 = vmatprep.subr.mxu0 0.0
    %5643 = vmatpush1.msra.mxu0 0.0
    %5644 = vmatprep.subr.mxu0 0.0
    %5645 = vmatpush1.msra.mxu0 0.0
    %5646 = vmatprep.subr.mxu0 0.0
    %5647 = vmatpush1.msra.mxu0 0.0
    %5648 = vmatprep.subr.mxu0 0.0
    %5649 = vmatpush1.msra.mxu0 0.0
    %5650 = vmatprep.subr.mxu0 0.0
    %5651 = vmatpush1.msra.mxu0 0.0
    %5652 = vmatprep.subr.mxu0 0.0
    %5653 = vmatpush1.msra.mxu0 0.0
    %5654 = vmatprep.subr.mxu0 0.0
    %5655 = vmatpush1.msra.mxu0 0.0
    %5656 = vmatprep.subr.mxu0 0.0
    %5657 = vmatpush1.msra.mxu0 0.0
    %5658 = vmatprep.subr.mxu0 0.0
    %5659 = vmatpush1.msra.mxu0 0.0
    %5660 = vmatprep.subr.mxu0 0.0
    %5661 = vmatpush1.msra.mxu0 0.0
    %5662 = vmatprep.subr.mxu0 0.0
    %5663 = vmatpush1.msra.mxu0 0.0
    %5664 = vmatprep.subr.mxu0 0.0
    %5665 = vmatpush1.msra.mxu0 0.0
    %5666 = vmatprep.subr.mxu0 0.0
    %5667 = vmatpush1.msra.mxu0 0.0
    %5668 = vmatprep.subr.mxu0 0.0
    %5669 = vmatpush1.msra.mxu0 0.0
    %5670 = vmatprep.mubr.f32.mxu0 0.0
    %5671 = vmatmul.mubr.f32.gmra.mrb[0].mxu0 %v5482
    %v5672 = vpop.f32.mrb[0].mxu0
    %v5673 = vadd.f32 0.0, %v5672
    %v5674 = vpop.f32.mrb[0].mxu0
    %5675 = vdwg.mxu0
    %v5676 = vadd.f32 %v5484, %v5602
    %v5677 = vxor.u32 %v5676, 2147483648
    %v5678 = vmul.f32 %v5677, 1.442695
    %v5679 = vpow.pop %v5678
    %v5680 = vadd.f32 %v5679, 1.0
    %v5681 = vrcp.pop %v5680
    %v5682 = vmul.f32 1.0, %v5681
    %v5683 = vadd.f32 %v5485, %v5604
    %v5684 = vxor.u32 %v5683, 2147483648
    %v5685 = vmul.f32 %v5684, 1.442695
    %v5686 = vpow.pop %v5685
    %v5687 = vadd.f32 %v5686, 1.0
    %v5688 = vrcp.pop %v5687
    %v5689 = vmul.f32 1.0, %v5688
    %v5690 = vadd.f32 %v5673, %v4195
    %v5691 = vmul.f32 %v5682, %v5690
    %v5692 = vadd.f32 %v5486, %v5691
    %v5693 = vtanh.pop %v5692
    %v5694 = vsub.f32 %v5482, %v5693
    %v5695 = vmul.f32 %v5689, %v5694
    %v5696 = vadd.f32 %v5693, %v5695
    %5697 = vst [vmem:[%s1596] sm:$0xff] %v5696
    %v5698 = vld [vmem:[%s3656] sm:$0xff]
    %v5699 = vld [vmem:[%s3656 + $0x8] sm:$0xff]
    %v5700 = vld [vmem:[%s3656 + $0x10] sm:$0xff]
    %v5701 = vld [vmem:[%s4202] sm:$0xff]
    %v5702 = vld [vmem:[%s4202 + $0x8] sm:$0xff]
    %v5703 = vld [vmem:[%s4202 + $0x10] sm:$0xff]
    %v5704 = vld [vmem:[%s4202 + $0x18] sm:$0xff]
    %v5705 = vld [vmem:[%s4202 + $0x20] sm:$0xff]
    %v5706 = vld [vmem:[%s4202 + $0x28] sm:$0xff]
    %v5707 = vld [vmem:[%s4202 + $0x30] sm:$0xff]
    %v5708 = vld [vmem:[%s4202 + $0x38] sm:$0xff]
    %v5709 = vld [vmem:[%s4202 + $0x40] sm:$0xff]
    %v5710 = vld [vmem:[%s4202 + $0x48] sm:$0xff]
    %v5711 = vld [vmem:[%s4202 + $0x50] sm:$0xff]
    %v5712 = vld [vmem:[%s4202 + $0x58] sm:$0xff]
    %v5713 = vld [vmem:[%s4202 + $0x60] sm:$0xff]
    %v5714 = vld [vmem:[%s4202 + $0x68] sm:$0xff]
    %v5715 = vld [vmem:[%s4202 + $0x70] sm:$0xff]
    %v5716 = vld [vmem:[%s4202 + $0x78] sm:$0xff]
    %v5717 = vld [vmem:[%s4202 + $0x80] sm:$0xff]
    %v5718 = vld [vmem:[%s4202 + $0x88] sm:$0xff]
    %v5719 = vld [vmem:[%s4202 + $0x90] sm:$0xff]
    %v5720 = vld [vmem:[%s4202 + $0x98] sm:$0xff]
    %v5721 = vld [vmem:[%s4202 + $0xa0] sm:$0xff]
    %v5722 = vld [vmem:[%s4202 + $0xa8] sm:$0xff]
    %v5723 = vld [vmem:[%s4202 + $0xb0] sm:$0xff]
    %v5724 = vld [vmem:[%s4202 + $0xb8] sm:$0xff]
    %v5725 = vld [vmem:[%s4202 + $0xc0] sm:$0xff]
    %v5726 = vld [vmem:[%s4202 + $0xc8] sm:$0xff]
    %v5727 = vld [vmem:[%s4202 + $0xd0] sm:$0xff]
    %v5728 = vld [vmem:[%s4202 + $0xd8] sm:$0xff]
    %v5729 = vld [vmem:[%s4202 + $0xe0] sm:$0xff]
    %v5730 = vld [vmem:[%s4202 + $0xe8] sm:$0xff]
    %v5731 = vld [vmem:[%s4202 + $0xf0] sm:$0xff]
    %v5732 = vld [vmem:[%s4202 + $0xf8] sm:$0xff]
    %v5733 = vld [vmem:[%s4202 + $0x100] sm:$0xff]
    %v5734 = vld [vmem:[%s4202 + $0x108] sm:$0xff]
    %v5735 = vld [vmem:[%s4202 + $0x110] sm:$0xff]
    %v5736 = vld [vmem:[%s4202 + $0x118] sm:$0xff]
    %v5737 = vld [vmem:[%s4202 + $0x120] sm:$0xff]
    %v5738 = vld [vmem:[%s4202 + $0x128] sm:$0xff]
    %v5739 = vld [vmem:[%s4202 + $0x130] sm:$0xff]
    %v5740 = vld [vmem:[%s4202 + $0x138] sm:$0xff]
    %v5741 = vld [vmem:[%s4202 + $0x140] sm:$0xff]
    %v5742 = vld [vmem:[%s4202 + $0x148] sm:$0xff]
    %v5743 = vld [vmem:[%s4202 + $0x150] sm:$0xff]
    %v5744 = vld [vmem:[%s4202 + $0x158] sm:$0xff]
    %v5745 = vld [vmem:[%s4202 + $0x160] sm:$0xff]
    %v5746 = vld [vmem:[%s4202 + $0x168] sm:$0xff]
    %v5747 = vld [vmem:[%s4202 + $0x170] sm:$0xff]
    %v5748 = vld [vmem:[%s4202 + $0x178] sm:$0xff]
    %5749 = vmatprep.subr.mxu0 %v5702
    %5750 = vmatpush1.msra.mxu0 %v5701
    %5751 = vmatprep.subr.mxu0 %v5705
    %5752 = vmatpush1.msra.mxu0 %v5704
    %5753 = vmatprep.subr.mxu0 %v5708
    %5754 = vmatpush1.msra.mxu0 %v5707
    %5755 = vmatprep.subr.mxu0 %v5711
    %5756 = vmatpush1.msra.mxu0 %v5710
    %5757 = vmatprep.subr.mxu0 %v5714
    %5758 = vmatpush1.msra.mxu0 %v5713
    %5759 = vmatprep.subr.mxu0 %v5717
    %5760 = vmatpush1.msra.mxu0 %v5716
    %5761 = vmatprep.subr.mxu0 %v5720
    %5762 = vmatpush1.msra.mxu0 %v5719
    %5763 = vmatprep.subr.mxu0 %v5723
    %5764 = vmatpush1.msra.mxu0 %v5722
    %5765 = vmatprep.subr.mxu0 %v5726
    %5766 = vmatpush1.msra.mxu0 %v5725
    %5767 = vmatprep.subr.mxu0 %v5729
    %5768 = vmatpush1.msra.mxu0 %v5728
    %5769 = vmatprep.subr.mxu0 %v5732
    %5770 = vmatpush1.msra.mxu0 %v5731
    %5771 = vmatprep.subr.mxu0 %v5735
    %5772 = vmatpush1.msra.mxu0 %v5734
    %5773 = vmatprep.subr.mxu0 %v5738
    %5774 = vmatpush1.msra.mxu0 %v5737
    %5775 = vmatprep.subr.mxu0 %v5741
    %5776 = vmatpush1.msra.mxu0 %v5740
    %5777 = vmatprep.subr.mxu0 %v5744
    %5778 = vmatpush1.msra.mxu0 %v5743
    %5779 = vmatprep.subr.mxu0 %v5747
    %5780 = vmatpush1.msra.mxu0 %v5746
    %5781 = vmatprep.subr.mxu0 0.0
    %5782 = vmatpush1.msra.mxu0 0.0
    %5783 = vmatprep.subr.mxu0 0.0
    %5784 = vmatpush1.msra.mxu0 0.0
    %5785 = vmatprep.subr.mxu0 0.0
    %5786 = vmatpush1.msra.mxu0 0.0
    %5787 = vmatprep.subr.mxu0 0.0
    %5788 = vmatpush1.msra.mxu0 0.0
    %5789 = vmatprep.subr.mxu0 0.0
    %5790 = vmatpush1.msra.mxu0 0.0
    %5791 = vmatprep.subr.mxu0 0.0
    %5792 = vmatpush1.msra.mxu0 0.0
    %5793 = vmatprep.subr.mxu0 0.0
    %5794 = vmatpush1.msra.mxu0 0.0
    %5795 = vmatprep.subr.mxu0 0.0
    %5796 = vmatpush1.msra.mxu0 0.0
    %5797 = vmatprep.subr.mxu0 0.0
    %5798 = vmatpush1.msra.mxu0 0.0
    %5799 = vmatprep.subr.mxu0 0.0
    %5800 = vmatpush1.msra.mxu0 0.0
    %5801 = vmatprep.subr.mxu0 0.0
    %5802 = vmatpush1.msra.mxu0 0.0
    %5803 = vmatprep.subr.mxu0 0.0
    %5804 = vmatpush1.msra.mxu0 0.0
    %5805 = vmatprep.subr.mxu0 0.0
    %5806 = vmatpush1.msra.mxu0 0.0
    %5807 = vmatprep.subr.mxu0 0.0
    %5808 = vmatpush1.msra.mxu0 0.0
    %5809 = vmatprep.subr.mxu0 0.0
    %5810 = vmatpush1.msra.mxu0 0.0
    %5811 = vmatprep.subr.mxu0 0.0
    %5812 = vmatpush1.msra.mxu0 0.0
    %5813 = vmatprep.mubr.f32.mxu0 0.0
    %5814 = vmatmul.mubr.f32.gmra.mrb[0].mxu0 %v5696
    %v5815 = vpop.f32.mrb[0].mxu0
    %v5816 = vadd.f32 0.0, %v5815
    %v5817 = vpop.f32.mrb[0].mxu0
    %v5818 = vadd.f32 0.0, %v5817
    %5819 = vdwg.mxu0
    %5820 = vmatprep.subr.mxu0 0.0
    %5821 = vmatpush1.msra.mxu0 %v5703
    %5822 = vmatprep.subr.mxu0 0.0
    %5823 = vmatpush1.msra.mxu0 %v5706
    %5824 = vmatprep.subr.mxu0 0.0
    %5825 = vmatpush1.msra.mxu0 %v5709
    %5826 = vmatprep.subr.mxu0 0.0
    %5827 = vmatpush1.msra.mxu0 %v5712
    %5828 = vmatprep.subr.mxu0 0.0
    %5829 = vmatpush1.msra.mxu0 %v5715
    %5830 = vmatprep.subr.mxu0 0.0
    %5831 = vmatpush1.msra.mxu0 %v5718
    %5832 = vmatprep.subr.mxu0 0.0
    %5833 = vmatpush1.msra.mxu0 %v5721
    %5834 = vmatprep.subr.mxu0 0.0
    %5835 = vmatpush1.msra.mxu0 %v5724
    %5836 = vmatprep.subr.mxu0 0.0
    %5837 = vmatpush1.msra.mxu0 %v5727
    %5838 = vmatprep.subr.mxu0 0.0
    %5839 = vmatpush1.msra.mxu0 %v5730
    %5840 = vmatprep.subr.mxu0 0.0
    %5841 = vmatpush1.msra.mxu0 %v5733
    %5842 = vmatprep.subr.mxu0 0.0
    %5843 = vmatpush1.msra.mxu0 %v5736
    %5844 = vmatprep.subr.mxu0 0.0
    %5845 = vmatpush1.msra.mxu0 %v5739
    %5846 = vmatprep.subr.mxu0 0.0
    %5847 = vmatpush1.msra.mxu0 %v5742
    %5848 = vmatprep.subr.mxu0 0.0
    %5849 = vmatpush1.msra.mxu0 %v5745
    %5850 = vmatprep.subr.mxu0 0.0
    %5851 = vmatpush1.msra.mxu0 %v5748
    %5852 = vmatprep.subr.mxu0 0.0
    %5853 = vmatpush1.msra.mxu0 0.0
    %5854 = vmatprep.subr.mxu0 0.0
    %5855 = vmatpush1.msra.mxu0 0.0
    %5856 = vmatprep.subr.mxu0 0.0
    %5857 = vmatpush1.msra.mxu0 0.0
    %5858 = vmatprep.subr.mxu0 0.0
    %5859 = vmatpush1.msra.mxu0 0.0
    %5860 = vmatprep.subr.mxu0 0.0
    %5861 = vmatpush1.msra.mxu0 0.0
    %5862 = vmatprep.subr.mxu0 0.0
    %5863 = vmatpush1.msra.mxu0 0.0
    %5864 = vmatprep.subr.mxu0 0.0
    %5865 = vmatpush1.msra.mxu0 0.0
    %5866 = vmatprep.subr.mxu0 0.0
    %5867 = vmatpush1.msra.mxu0 0.0
    %5868 = vmatprep.subr.mxu0 0.0
    %5869 = vmatpush1.msra.mxu0 0.0
    %5870 = vmatprep.subr.mxu0 0.0
    %5871 = vmatpush1.msra.mxu0 0.0
    %5872 = vmatprep.subr.mxu0 0.0
    %5873 = vmatpush1.msra.mxu0 0.0
    %5874 = vmatprep.subr.mxu0 0.0
    %5875 = vmatpush1.msra.mxu0 0.0
    %5876 = vmatprep.subr.mxu0 0.0
    %5877 = vmatpush1.msra.mxu0 0.0
    %5878 = vmatprep.subr.mxu0 0.0
    %5879 = vmatpush1.msra.mxu0 0.0
    %5880 = vmatprep.subr.mxu0 0.0
    %5881 = vmatpush1.msra.mxu0 0.0
    %5882 = vmatprep.subr.mxu0 0.0
    %5883 = vmatpush1.msra.mxu0 0.0
    %5884 = vmatprep.mubr.f32.mxu0 0.0
    %5885 = vmatmul.mubr.f32.gmra.mrb[0].mxu0 %v5696
    %v5886 = vpop.f32.mrb[0].mxu0
    %v5887 = vadd.f32 0.0, %v5886
    %v5888 = vpop.f32.mrb[0].mxu0
    %5889 = vdwg.mxu0
    %v5890 = vadd.f32 %v5698, %v5816
    %v5891 = vxor.u32 %v5890, 2147483648
    %v5892 = vmul.f32 %v5891, 1.442695
    %v5893 = vpow.pop %v5892
    %v5894 = vadd.f32 %v5893, 1.0
    %v5895 = vrcp.pop %v5894
    %v5896 = vmul.f32 1.0, %v5895
    %v5897 = vadd.f32 %v5699, %v5818
    %v5898 = vxor.u32 %v5897, 2147483648
    %v5899 = vmul.f32 %v5898, 1.442695
    %v5900 = vpow.pop %v5899
    %v5901 = vadd.f32 %v5900, 1.0
    %v5902 = vrcp.pop %v5901
    %v5903 = vmul.f32 1.0, %v5902
    %v5904 = vadd.f32 %v5887, %v4195
    %v5905 = vmul.f32 %v5896, %v5904
    %v5906 = vadd.f32 %v5700, %v5905
    %v5907 = vtanh.pop %v5906
    %v5908 = vsub.f32 %v5696, %v5907
    %v5909 = vmul.f32 %v5903, %v5908
    %v5910 = vadd.f32 %v5907, %v5909
    %5911 = vst [vmem:[%s1814] sm:$0xff] %v5910
    %5912 = vst [vmem:[%s4197] sm:$0xff] %v5910
    %v5913 = vld [vmem:[#allocation3] sm:$0xff]
    %v5914 = vld [vmem:[#allocation3 + $0x8] sm:$0xff]
    %v5915 = vld [vmem:[#allocation3 + $0x10] sm:$0xff]
    %v5916 = vld [vmem:[#allocation3 + $0x18] sm:$0xff]
    %v5917 = vld [vmem:[#allocation3 + $0x20] sm:$0xff]
    %v5918 = vld [vmem:[#allocation3 + $0x28] sm:$0xff]
    %v5919 = vld [vmem:[#allocation3 + $0x30] sm:$0xff]
    %v5920 = vld [vmem:[#allocation3 + $0x38] sm:$0xff]
    %s5921 = scalar_lea.vmem [#allocation4], 768
    %v5922 = vld [vmem:[%s5921] sm:$0xff]
    %v5923 = vld [vmem:[%s5921 + $0x8] sm:$0xff]
    %v5924 = vld [vmem:[%s5921 + $0x10] sm:$0xff]
    %v5925 = vld [vmem:[%s5921 + $0x18] sm:$0xff]
    %v5926 = vld [vmem:[%s5921 + $0x20] sm:$0xff]
    %v5927 = vld [vmem:[%s5921 + $0x28] sm:$0xff]
    %v5928 = vld [vmem:[%s5921 + $0x30] sm:$0xff]
    %v5929 = vld [vmem:[%s5921 + $0x38] sm:$0xff]
    %v5930 = vld [vmem:[%s5921 + $0x40] sm:$0xff]
    %v5931 = vld [vmem:[%s5921 + $0x48] sm:$0xff]
    %v5932 = vld [vmem:[%s5921 + $0x50] sm:$0xff]
    %v5933 = vld [vmem:[%s5921 + $0x58] sm:$0xff]
    %v5934 = vld [vmem:[%s5921 + $0x60] sm:$0xff]
    %v5935 = vld [vmem:[%s5921 + $0x68] sm:$0xff]
    %v5936 = vld [vmem:[%s5921 + $0x70] sm:$0xff]
    %v5937 = vld [vmem:[%s5921 + $0x78] sm:$0xff]
    %v5938 = vld [vmem:[%s5921 + $0x80] sm:$0xff]
    %v5939 = vld [vmem:[%s5921 + $0x88] sm:$0xff]
    %v5940 = vld [vmem:[%s5921 + $0x90] sm:$0xff]
    %v5941 = vld [vmem:[%s5921 + $0x98] sm:$0xff]
    %v5942 = vld [vmem:[%s5921 + $0xa0] sm:$0xff]
    %v5943 = vld [vmem:[%s5921 + $0xa8] sm:$0xff]
    %v5944 = vld [vmem:[%s5921 + $0xb0] sm:$0xff]
    %v5945 = vld [vmem:[%s5921 + $0xb8] sm:$0xff]
    %v5946 = vld [vmem:[%s5921 + $0xc0] sm:$0xff]
    %v5947 = vld [vmem:[%s5921 + $0xc8] sm:$0xff]
    %v5948 = vld [vmem:[%s5921 + $0xd0] sm:$0xff]
    %v5949 = vld [vmem:[%s5921 + $0xd8] sm:$0xff]
    %v5950 = vld [vmem:[%s5921 + $0xe0] sm:$0xff]
    %v5951 = vld [vmem:[%s5921 + $0xe8] sm:$0xff]
    %v5952 = vld [vmem:[%s5921 + $0xf0] sm:$0xff]
    %v5953 = vld [vmem:[%s5921 + $0xf8] sm:$0xff]
    %v5954 = vld [vmem:[%s5921 + $0x100] sm:$0xff]
    %v5955 = vld [vmem:[%s5921 + $0x108] sm:$0xff]
    %v5956 = vld [vmem:[%s5921 + $0x110] sm:$0xff]
    %v5957 = vld [vmem:[%s5921 + $0x118] sm:$0xff]
    %v5958 = vld [vmem:[%s5921 + $0x120] sm:$0xff]
    %v5959 = vld [vmem:[%s5921 + $0x128] sm:$0xff]
    %v5960 = vld [vmem:[%s5921 + $0x130] sm:$0xff]
    %v5961 = vld [vmem:[%s5921 + $0x138] sm:$0xff]
    %v5962 = vld [vmem:[%s5921 + $0x140] sm:$0xff]
    %v5963 = vld [vmem:[%s5921 + $0x148] sm:$0xff]
    %v5964 = vld [vmem:[%s5921 + $0x150] sm:$0xff]
    %v5965 = vld [vmem:[%s5921 + $0x158] sm:$0xff]
    %v5966 = vld [vmem:[%s5921 + $0x160] sm:$0xff]
    %v5967 = vld [vmem:[%s5921 + $0x168] sm:$0xff]
    %v5968 = vld [vmem:[%s5921 + $0x170] sm:$0xff]
    %v5969 = vld [vmem:[%s5921 + $0x178] sm:$0xff]
    %s5970 = scalar_lea.vmem %s4, 6
    %v5971 = vld [vmem:[%s5970] sm:$0x7]
    %v5973 = vlaneseq
    %v5974 = vshrl.u32 %v5973, 7
    %v5975 = vsub.s32 0, %v5974
    %v5976 = vrot.slane %v5971, %v5975
    %v5977 = vlaneseq
    %v5978 = vshrl.u32 %v5977, 7
    %v5979 = vsub.s32 1, %v5978
    %v5980 = vrot.slane %v5971, %v5979
    %v5981 = vlaneseq
    %v5982 = vshrl.u32 %v5981, 7
    %v5983 = vsub.s32 2, %v5982
    %v5984 = vrot.slane %v5971, %v5983
    %5988 = vmatprep.subr.mxu0 %v5923
    %5989 = vmatpush1.msra.mxu0 %v5922
    %5990 = vmatprep.subr.mxu0 %v5926
    %5991 = vmatpush1.msra.mxu0 %v5925
    %5992 = vmatprep.subr.mxu0 %v5929
    %5993 = vmatpush1.msra.mxu0 %v5928
    %5994 = vmatprep.subr.mxu0 %v5932
    %5995 = vmatpush1.msra.mxu0 %v5931
    %5996 = vmatprep.subr.mxu0 %v5935
    %5997 = vmatpush1.msra.mxu0 %v5934
    %5998 = vmatprep.subr.mxu0 %v5938
    %5999 = vmatpush1.msra.mxu0 %v5937
    %6000 = vmatprep.subr.mxu0 %v5941
    %6001 = vmatpush1.msra.mxu0 %v5940
    %6002 = vmatprep.subr.mxu0 %v5944
    %6003 = vmatpush1.msra.mxu0 %v5943
    %6004 = vmatprep.subr.mxu0 %v5947
    %6005 = vmatpush1.msra.mxu0 %v5946
    %6006 = vmatprep.subr.mxu0 %v5950
    %6007 = vmatpush1.msra.mxu0 %v5949
    %6008 = vmatprep.subr.mxu0 %v5953
    %6009 = vmatpush1.msra.mxu0 %v5952
    %6010 = vmatprep.subr.mxu0 %v5956
    %6011 = vmatpush1.msra.mxu0 %v5955
    %6012 = vmatprep.subr.mxu0 %v5959
    %6013 = vmatpush1.msra.mxu0 %v5958
    %6014 = vmatprep.subr.mxu0 %v5962
    %6015 = vmatpush1.msra.mxu0 %v5961
    %6016 = vmatprep.subr.mxu0 %v5965
    %6017 = vmatpush1.msra.mxu0 %v5964
    %6018 = vmatprep.subr.mxu0 %v5968
    %6019 = vmatpush1.msra.mxu0 %v5967
    %6020 = vmatprep.subr.mxu0 0.0
    %6021 = vmatpush1.msra.mxu0 0.0
    %6022 = vmatprep.subr.mxu0 0.0
    %6023 = vmatpush1.msra.mxu0 0.0
    %6024 = vmatprep.subr.mxu0 0.0
    %6025 = vmatpush1.msra.mxu0 0.0
    %6026 = vmatprep.subr.mxu0 0.0
    %6027 = vmatpush1.msra.mxu0 0.0
    %6028 = vmatprep.subr.mxu0 0.0
    %6029 = vmatpush1.msra.mxu0 0.0
    %6030 = vmatprep.subr.mxu0 0.0
    %6031 = vmatpush1.msra.mxu0 0.0
    %6032 = vmatprep.subr.mxu0 0.0
    %6033 = vmatpush1.msra.mxu0 0.0
    %6034 = vmatprep.subr.mxu0 0.0
    %6035 = vmatpush1.msra.mxu0 0.0
    %6036 = vmatprep.subr.mxu0 0.0
    %6037 = vmatpush1.msra.mxu0 0.0
    %6038 = vmatprep.subr.mxu0 0.0
    %6039 = vmatpush1.msra.mxu0 0.0
    %6040 = vmatprep.subr.mxu0 0.0
    %6041 = vmatpush1.msra.mxu0 0.0
    %6042 = vmatprep.subr.mxu0 0.0
    %6043 = vmatpush1.msra.mxu0 0.0
    %6044 = vmatprep.subr.mxu0 0.0
    %6045 = vmatpush1.msra.mxu0 0.0
    %6046 = vmatprep.subr.mxu0 0.0
    %6047 = vmatpush1.msra.mxu0 0.0
    %6048 = vmatprep.subr.mxu0 0.0
    %6049 = vmatpush1.msra.mxu0 0.0
    %6050 = vmatprep.subr.mxu0 0.0
    %6051 = vmatpush1.msra.mxu0 0.0
    %6052 = vmatprep.mubr.f32.mxu0 0.0
    %6053 = vmatmul.mubr.f32.gmra.mrb[0].mxu0 %v5913
    %v6054 = vpop.f32.mrb[0].mxu0
    %v6055 = vadd.f32 %v5976, %v6054
    %v6056 = vpop.f32.mrb[0].mxu0
    %v6057 = vadd.f32 %v5980, %v6056
    %6058 = vmatprep.mubr.f32.mxu0 0.0
    %6059 = vmatmul.mubr.f32.gmra.mrb[0].mxu0 %v5914
    %v6060 = vpop.f32.mrb[0].mxu0
    %v6061 = vadd.f32 %v5976, %v6060
    %v6062 = vpop.f32.mrb[0].mxu0
    %v6063 = vadd.f32 %v5980, %v6062
    %6064 = vmatprep.mubr.f32.mxu0 0.0
    %6065 = vmatmul.mubr.f32.gmra.mrb[0].mxu0 %v5915
    %v6066 = vpop.f32.mrb[0].mxu0
    %v6067 = vadd.f32 %v5976, %v6066
    %v6068 = vpop.f32.mrb[0].mxu0
    %v6069 = vadd.f32 %v5980, %v6068
    %6070 = vmatprep.mubr.f32.mxu0 0.0
    %6071 = vmatmul.mubr.f32.gmra.mrb[0].mxu0 %v5916
    %v6072 = vpop.f32.mrb[0].mxu0
    %v6073 = vadd.f32 %v5976, %v6072
    %v6074 = vpop.f32.mrb[0].mxu0
    %v6075 = vadd.f32 %v5980, %v6074
    %6076 = vmatprep.mubr.f32.mxu0 0.0
    %6077 = vmatmul.mubr.f32.gmra.mrb[0].mxu0 %v5917
    %v6078 = vpop.f32.mrb[0].mxu0
    %v6079 = vadd.f32 %v5976, %v6078
    %v6080 = vpop.f32.mrb[0].mxu0
    %v6081 = vadd.f32 %v5980, %v6080
    %6082 = vmatprep.mubr.f32.mxu0 0.0
    %6083 = vmatmul.mubr.f32.gmra.mrb[0].mxu0 %v5918
    %v6084 = vpop.f32.mrb[0].mxu0
    %v6085 = vadd.f32 %v5976, %v6084
    %v6086 = vpop.f32.mrb[0].mxu0
    %v6087 = vadd.f32 %v5980, %v6086
    %6088 = vmatprep.mubr.f32.mxu0 0.0
    %6089 = vmatmul.mubr.f32.gmra.mrb[0].mxu0 %v5919
    %v6090 = vpop.f32.mrb[0].mxu0
    %v6091 = vadd.f32 %v5976, %v6090
    %v6092 = vpop.f32.mrb[0].mxu0
    %v6093 = vadd.f32 %v5980, %v6092
    %6094 = vmatprep.mubr.f32.mxu0 0.0
    %6095 = vmatmul.mubr.f32.gmra.mrb[0].mxu0 %v5920
    %v6096 = vpop.f32.mrb[0].mxu0
    %v6097 = vadd.f32 %v5976, %v6096
    %v6098 = vpop.f32.mrb[0].mxu0
    %v6099 = vadd.f32 %v5980, %v6098
    %6100 = vdwg.mxu0
    %6101 = vmatprep.subr.mxu0 0.0
    %6102 = vmatpush1.msra.mxu0 %v5924
    %6103 = vmatprep.subr.mxu0 0.0
    %6104 = vmatpush1.msra.mxu0 %v5927
    %6105 = vmatprep.subr.mxu0 0.0
    %6106 = vmatpush1.msra.mxu0 %v5930
    %6107 = vmatprep.subr.mxu0 0.0
    %6108 = vmatpush1.msra.mxu0 %v5933
    %6109 = vmatprep.subr.mxu0 0.0
    %6110 = vmatpush1.msra.mxu0 %v5936
    %6111 = vmatprep.subr.mxu0 0.0
    %6112 = vmatpush1.msra.mxu0 %v5939
    %6113 = vmatprep.subr.mxu0 0.0
    %6114 = vmatpush1.msra.mxu0 %v5942
    %6115 = vmatprep.subr.mxu0 0.0
    %6116 = vmatpush1.msra.mxu0 %v5945
    %6117 = vmatprep.subr.mxu0 0.0
    %6118 = vmatpush1.msra.mxu0 %v5948
    %6119 = vmatprep.subr.mxu0 0.0
    %6120 = vmatpush1.msra.mxu0 %v5951
    %6121 = vmatprep.subr.mxu0 0.0
    %6122 = vmatpush1.msra.mxu0 %v5954
    %6123 = vmatprep.subr.mxu0 0.0
    %6124 = vmatpush1.msra.mxu0 %v5957
    %6125 = vmatprep.subr.mxu0 0.0
    %6126 = vmatpush1.msra.mxu0 %v5960
    %6127 = vmatprep.subr.mxu0 0.0
    %6128 = vmatpush1.msra.mxu0 %v5963
    %6129 = vmatprep.subr.mxu0 0.0
    %6130 = vmatpush1.msra.mxu0 %v5966
    %6131 = vmatprep.subr.mxu0 0.0
    %6132 = vmatpush1.msra.mxu0 %v5969
    %6133 = vmatprep.subr.mxu0 0.0
    %6134 = vmatpush1.msra.mxu0 0.0
    %6135 = vmatprep.subr.mxu0 0.0
    %6136 = vmatpush1.msra.mxu0 0.0
    %6137 = vmatprep.subr.mxu0 0.0
    %6138 = vmatpush1.msra.mxu0 0.0
    %6139 = vmatprep.subr.mxu0 0.0
    %6140 = vmatpush1.msra.mxu0 0.0
    %6141 = vmatprep.subr.mxu0 0.0
    %6142 = vmatpush1.msra.mxu0 0.0
    %6143 = vmatprep.subr.mxu0 0.0
    %6144 = vmatpush1.msra.mxu0 0.0
    %6145 = vmatprep.subr.mxu0 0.0
    %6146 = vmatpush1.msra.mxu0 0.0
    %6147 = vmatprep.subr.mxu0 0.0
    %6148 = vmatpush1.msra.mxu0 0.0
    %6149 = vmatprep.subr.mxu0 0.0
    %6150 = vmatpush1.msra.mxu0 0.0
    %6151 = vmatprep.subr.mxu0 0.0
    %6152 = vmatpush1.msra.mxu0 0.0
    %6153 = vmatprep.subr.mxu0 0.0
    %6154 = vmatpush1.msra.mxu0 0.0
    %6155 = vmatprep.subr.mxu0 0.0
    %6156 = vmatpush1.msra.mxu0 0.0
    %6157 = vmatprep.subr.mxu0 0.0
    %6158 = vmatpush1.msra.mxu0 0.0
    %6159 = vmatprep.subr.mxu0 0.0
    %6160 = vmatpush1.msra.mxu0 0.0
    %6161 = vmatprep.subr.mxu0 0.0
    %6162 = vmatpush1.msra.mxu0 0.0
    %6163 = vmatprep.subr.mxu0 0.0
    %6164 = vmatpush1.msra.mxu0 0.0
    %6165 = vmatprep.mubr.f32.mxu0 0.0
    %6166 = vmatmul.mubr.f32.gmra.mrb[0].mxu0 %v5913
    %v6167 = vpop.f32.mrb[0].mxu0
    %v6168 = vadd.f32 %v5984, %v6167
    %v6169 = vpop.f32.mrb[0].mxu0
    %6170 = vmatprep.mubr.f32.mxu0 0.0
    %6171 = vmatmul.mubr.f32.gmra.mrb[0].mxu0 %v5914
    %v6172 = vpop.f32.mrb[0].mxu0
    %v6173 = vadd.f32 %v5984, %v6172
    %v6174 = vpop.f32.mrb[0].mxu0
    %6175 = vmatprep.mubr.f32.mxu0 0.0
    %6176 = vmatmul.mubr.f32.gmra.mrb[0].mxu0 %v5915
    %v6177 = vpop.f32.mrb[0].mxu0
    %v6178 = vadd.f32 %v5984, %v6177
    %v6179 = vpop.f32.mrb[0].mxu0
    %6180 = vmatprep.mubr.f32.mxu0 0.0
    %6181 = vmatmul.mubr.f32.gmra.mrb[0].mxu0 %v5916
    %v6182 = vpop.f32.mrb[0].mxu0
    %v6183 = vadd.f32 %v5984, %v6182
    %v6184 = vpop.f32.mrb[0].mxu0
    %6185 = vmatprep.mubr.f32.mxu0 0.0
    %6186 = vmatmul.mubr.f32.gmra.mrb[0].mxu0 %v5917
    %v6187 = vpop.f32.mrb[0].mxu0
    %v6188 = vadd.f32 %v5984, %v6187
    %v6189 = vpop.f32.mrb[0].mxu0
    %6190 = vmatprep.mubr.f32.mxu0 0.0
    %6191 = vmatmul.mubr.f32.gmra.mrb[0].mxu0 %v5918
    %v6192 = vpop.f32.mrb[0].mxu0
    %v6193 = vadd.f32 %v5984, %v6192
    %v6194 = vpop.f32.mrb[0].mxu0
    %6195 = vmatprep.mubr.f32.mxu0 0.0
    %6196 = vmatmul.mubr.f32.gmra.mrb[0].mxu0 %v5919
    %v6197 = vpop.f32.mrb[0].mxu0
    %v6198 = vadd.f32 %v5984, %v6197
    %v6199 = vpop.f32.mrb[0].mxu0
    %6200 = vmatprep.mubr.f32.mxu0 0.0
    %6201 = vmatmul.mubr.f32.gmra.mrb[0].mxu0 %v5920
    %v6202 = vpop.f32.mrb[0].mxu0
    %v6203 = vadd.f32 %v5984, %v6202
    %v6204 = vpop.f32.mrb[0].mxu0
    %6205 = vdwg.mxu0
    %6206 = vst [vmem:[#allocation2] sm:$0xff] %v6055
    %6207 = vst [vmem:[#allocation2 + $0x8] sm:$0xff] %v6057
    %6208 = vst [vmem:[#allocation2 + $0x10] sm:$0xff] %v6168
    %6209 = vst [vmem:[#allocation2 + $0x18] sm:$0xff] %v6061
    %6210 = vst [vmem:[#allocation2 + $0x20] sm:$0xff] %v6063
    %6211 = vst [vmem:[#allocation2 + $0x28] sm:$0xff] %v6173
    %6212 = vst [vmem:[#allocation2 + $0x30] sm:$0xff] %v6067
    %6213 = vst [vmem:[#allocation2 + $0x38] sm:$0xff] %v6069
    %6214 = vst [vmem:[#allocation2 + $0x40] sm:$0xff] %v6178
    %6215 = vst [vmem:[#allocation2 + $0x48] sm:$0xff] %v6073
    %6216 = vst [vmem:[#allocation2 + $0x50] sm:$0xff] %v6075
    %6217 = vst [vmem:[#allocation2 + $0x58] sm:$0xff] %v6183
    %6218 = vst [vmem:[#allocation2 + $0x60] sm:$0xff] %v6079
    %6219 = vst [vmem:[#allocation2 + $0x68] sm:$0xff] %v6081
    %6220 = vst [vmem:[#allocation2 + $0x70] sm:$0xff] %v6188
    %6221 = vst [vmem:[#allocation2 + $0x78] sm:$0xff] %v6085
    %6222 = vst [vmem:[#allocation2 + $0x80] sm:$0xff] %v6087
    %6223 = vst [vmem:[#allocation2 + $0x88] sm:$0xff] %v6193
    %6224 = vst [vmem:[#allocation2 + $0x90] sm:$0xff] %v6091
    %6225 = vst [vmem:[#allocation2 + $0x98] sm:$0xff] %v6093
    %6226 = vst [vmem:[#allocation2 + $0xa0] sm:$0xff] %v6198
    %6227 = vst [vmem:[#allocation2 + $0xa8] sm:$0xff] %v6097
    %6228 = vst [vmem:[#allocation2 + $0xb0] sm:$0xff] %v6099
    %6229 = vst [vmem:[#allocation2 + $0xb8] sm:$0xff] %v6203
    %s6230 = scalar_lea.vmem %s5, 3
    %v6231 = vld [vmem:[%s6230] sm:$0x1]
    %v6233 = vlaneseq
    %v6234 = vshrl.u32 %v6233, 7
    %v6235 = vsub.s32 0, %v6234
    %v6236 = vrot.slane %v6231, %v6235
    %s6238 = scalar_lea.vmem %s7, 24
    %v6239 = vld [vmem:[%s6238] sm:$0xff]
    %v6240 = vld [vmem:[%s2143] sm:$0xff]
    %v6241 = vld [vmem:[%s2143 + $0x8] sm:$0xff]
    %v6242 = vld [vmem:[%s2143 + $0x10] sm:$0xff]
    %s6243 = scalar_lea.vmem [#allocation6], 1152
    %v6244 = vld [vmem:[%s6243] sm:$0xff]
    %v6245 = vld [vmem:[%s6243 + $0x8] sm:$0xff]
    %v6246 = vld [vmem:[%s6243 + $0x10] sm:$0xff]
    %v6247 = vld [vmem:[%s6243 + $0x18] sm:$0xff]
    %v6248 = vld [vmem:[%s6243 + $0x20] sm:$0xff]
    %v6249 = vld [vmem:[%s6243 + $0x28] sm:$0xff]
    %v6250 = vld [vmem:[%s6243 + $0x30] sm:$0xff]
    %v6251 = vld [vmem:[%s6243 + $0x38] sm:$0xff]
    %v6252 = vld [vmem:[%s6243 + $0x40] sm:$0xff]
    %v6253 = vld [vmem:[%s6243 + $0x48] sm:$0xff]
    %v6254 = vld [vmem:[%s6243 + $0x50] sm:$0xff]
    %v6255 = vld [vmem:[%s6243 + $0x58] sm:$0xff]
    %v6256 = vld [vmem:[%s6243 + $0x60] sm:$0xff]
    %v6257 = vld [vmem:[%s6243 + $0x68] sm:$0xff]
    %v6258 = vld [vmem:[%s6243 + $0x70] sm:$0xff]
    %v6259 = vld [vmem:[%s6243 + $0x78] sm:$0xff]
    %v6260 = vld [vmem:[%s6243 + $0x80] sm:$0xff]
    %v6261 = vld [vmem:[%s6243 + $0x88] sm:$0xff]
    %v6262 = vld [vmem:[%s6243 + $0x90] sm:$0xff]
    %v6263 = vld [vmem:[%s6243 + $0x98] sm:$0xff]
    %v6264 = vld [vmem:[%s6243 + $0xa0] sm:$0xff]
    %v6265 = vld [vmem:[%s6243 + $0xa8] sm:$0xff]
    %v6266 = vld [vmem:[%s6243 + $0xb0] sm:$0xff]
    %v6267 = vld [vmem:[%s6243 + $0xb8] sm:$0xff]
    %v6268 = vld [vmem:[%s6243 + $0xc0] sm:$0xff]
    %v6269 = vld [vmem:[%s6243 + $0xc8] sm:$0xff]
    %v6270 = vld [vmem:[%s6243 + $0xd0] sm:$0xff]
    %v6271 = vld [vmem:[%s6243 + $0xd8] sm:$0xff]
    %v6272 = vld [vmem:[%s6243 + $0xe0] sm:$0xff]
    %v6273 = vld [vmem:[%s6243 + $0xe8] sm:$0xff]
    %v6274 = vld [vmem:[%s6243 + $0xf0] sm:$0xff]
    %v6275 = vld [vmem:[%s6243 + $0xf8] sm:$0xff]
    %v6276 = vld [vmem:[%s6243 + $0x100] sm:$0xff]
    %v6277 = vld [vmem:[%s6243 + $0x108] sm:$0xff]
    %v6278 = vld [vmem:[%s6243 + $0x110] sm:$0xff]
    %v6279 = vld [vmem:[%s6243 + $0x118] sm:$0xff]
    %v6280 = vld [vmem:[%s6243 + $0x120] sm:$0xff]
    %v6281 = vld [vmem:[%s6243 + $0x128] sm:$0xff]
    %v6282 = vld [vmem:[%s6243 + $0x130] sm:$0xff]
    %v6283 = vld [vmem:[%s6243 + $0x138] sm:$0xff]
    %v6284 = vld [vmem:[%s6243 + $0x140] sm:$0xff]
    %v6285 = vld [vmem:[%s6243 + $0x148] sm:$0xff]
    %v6286 = vld [vmem:[%s6243 + $0x150] sm:$0xff]
    %v6287 = vld [vmem:[%s6243 + $0x158] sm:$0xff]
    %v6288 = vld [vmem:[%s6243 + $0x160] sm:$0xff]
    %v6289 = vld [vmem:[%s6243 + $0x168] sm:$0xff]
    %v6290 = vld [vmem:[%s6243 + $0x170] sm:$0xff]
    %v6291 = vld [vmem:[%s6243 + $0x178] sm:$0xff]
    %6292 = vmatprep.subr.mxu0 %v6245
    %6293 = vmatpush1.msra.mxu0 %v6244
    %6294 = vmatprep.subr.mxu0 %v6248
    %6295 = vmatpush1.msra.mxu0 %v6247
    %6296 = vmatprep.subr.mxu0 %v6251
    %6297 = vmatpush1.msra.mxu0 %v6250
    %6298 = vmatprep.subr.mxu0 %v6254
    %6299 = vmatpush1.msra.mxu0 %v6253
    %6300 = vmatprep.subr.mxu0 %v6257
    %6301 = vmatpush1.msra.mxu0 %v6256
    %6302 = vmatprep.subr.mxu0 %v6260
    %6303 = vmatpush1.msra.mxu0 %v6259
    %6304 = vmatprep.subr.mxu0 %v6263
    %6305 = vmatpush1.msra.mxu0 %v6262
    %6306 = vmatprep.subr.mxu0 %v6266
    %6307 = vmatpush1.msra.mxu0 %v6265
    %6308 = vmatprep.subr.mxu0 %v6269
    %6309 = vmatpush1.msra.mxu0 %v6268
    %6310 = vmatprep.subr.mxu0 %v6272
    %6311 = vmatpush1.msra.mxu0 %v6271
    %6312 = vmatprep.subr.mxu0 %v6275
    %6313 = vmatpush1.msra.mxu0 %v6274
    %6314 = vmatprep.subr.mxu0 %v6278
    %6315 = vmatpush1.msra.mxu0 %v6277
    %6316 = vmatprep.subr.mxu0 %v6281
    %6317 = vmatpush1.msra.mxu0 %v6280
    %6318 = vmatprep.subr.mxu0 %v6284
    %6319 = vmatpush1.msra.mxu0 %v6283
    %6320 = vmatprep.subr.mxu0 %v6287
    %6321 = vmatpush1.msra.mxu0 %v6286
    %6322 = vmatprep.subr.mxu0 %v6290
    %6323 = vmatpush1.msra.mxu0 %v6289
    %6324 = vmatprep.subr.mxu0 0.0
    %6325 = vmatpush1.msra.mxu0 0.0
    %6326 = vmatprep.subr.mxu0 0.0
    %6327 = vmatpush1.msra.mxu0 0.0
    %6328 = vmatprep.subr.mxu0 0.0
    %6329 = vmatpush1.msra.mxu0 0.0
    %6330 = vmatprep.subr.mxu0 0.0
    %6331 = vmatpush1.msra.mxu0 0.0
    %6332 = vmatprep.subr.mxu0 0.0
    %6333 = vmatpush1.msra.mxu0 0.0
    %6334 = vmatprep.subr.mxu0 0.0
    %6335 = vmatpush1.msra.mxu0 0.0
    %6336 = vmatprep.subr.mxu0 0.0
    %6337 = vmatpush1.msra.mxu0 0.0
    %6338 = vmatprep.subr.mxu0 0.0
    %6339 = vmatpush1.msra.mxu0 0.0
    %6340 = vmatprep.subr.mxu0 0.0
    %6341 = vmatpush1.msra.mxu0 0.0
    %6342 = vmatprep.subr.mxu0 0.0
    %6343 = vmatpush1.msra.mxu0 0.0
    %6344 = vmatprep.subr.mxu0 0.0
    %6345 = vmatpush1.msra.mxu0 0.0
    %6346 = vmatprep.subr.mxu0 0.0
    %6347 = vmatpush1.msra.mxu0 0.0
    %6348 = vmatprep.subr.mxu0 0.0
    %6349 = vmatpush1.msra.mxu0 0.0
    %6350 = vmatprep.subr.mxu0 0.0
    %6351 = vmatpush1.msra.mxu0 0.0
    %6352 = vmatprep.subr.mxu0 0.0
    %6353 = vmatpush1.msra.mxu0 0.0
    %6354 = vmatprep.subr.mxu0 0.0
    %6355 = vmatpush1.msra.mxu0 0.0
    %6356 = vmatprep.mubr.f32.mxu0 0.0
    %6357 = vmatmul.mubr.f32.gmra.mrb[0].mxu0 %v6239
    %v6358 = vpop.f32.mrb[0].mxu0
    %v6359 = vadd.f32 0.0, %v6358
    %v6360 = vpop.f32.mrb[0].mxu0
    %v6361 = vadd.f32 0.0, %v6360
    %6362 = vdwg.mxu0
    %6363 = vmatprep.subr.mxu0 0.0
    %6364 = vmatpush1.msra.mxu0 %v6246
    %6365 = vmatprep.subr.mxu0 0.0
    %6366 = vmatpush1.msra.mxu0 %v6249
    %6367 = vmatprep.subr.mxu0 0.0
    %6368 = vmatpush1.msra.mxu0 %v6252
    %6369 = vmatprep.subr.mxu0 0.0
    %6370 = vmatpush1.msra.mxu0 %v6255
    %6371 = vmatprep.subr.mxu0 0.0
    %6372 = vmatpush1.msra.mxu0 %v6258
    %6373 = vmatprep.subr.mxu0 0.0
    %6374 = vmatpush1.msra.mxu0 %v6261
    %6375 = vmatprep.subr.mxu0 0.0
    %6376 = vmatpush1.msra.mxu0 %v6264
    %6377 = vmatprep.subr.mxu0 0.0
    %6378 = vmatpush1.msra.mxu0 %v6267
    %6379 = vmatprep.subr.mxu0 0.0
    %6380 = vmatpush1.msra.mxu0 %v6270
    %6381 = vmatprep.subr.mxu0 0.0
    %6382 = vmatpush1.msra.mxu0 %v6273
    %6383 = vmatprep.subr.mxu0 0.0
    %6384 = vmatpush1.msra.mxu0 %v6276
    %6385 = vmatprep.subr.mxu0 0.0
    %6386 = vmatpush1.msra.mxu0 %v6279
    %6387 = vmatprep.subr.mxu0 0.0
    %6388 = vmatpush1.msra.mxu0 %v6282
    %6389 = vmatprep.subr.mxu0 0.0
    %6390 = vmatpush1.msra.mxu0 %v6285
    %6391 = vmatprep.subr.mxu0 0.0
    %6392 = vmatpush1.msra.mxu0 %v6288
    %6393 = vmatprep.subr.mxu0 0.0
    %6394 = vmatpush1.msra.mxu0 %v6291
    %6395 = vmatprep.subr.mxu0 0.0
    %6396 = vmatpush1.msra.mxu0 0.0
    %6397 = vmatprep.subr.mxu0 0.0
    %6398 = vmatpush1.msra.mxu0 0.0
    %6399 = vmatprep.subr.mxu0 0.0
    %6400 = vmatpush1.msra.mxu0 0.0
    %6401 = vmatprep.subr.mxu0 0.0
    %6402 = vmatpush1.msra.mxu0 0.0
    %6403 = vmatprep.subr.mxu0 0.0
    %6404 = vmatpush1.msra.mxu0 0.0
    %6405 = vmatprep.subr.mxu0 0.0
    %6406 = vmatpush1.msra.mxu0 0.0
    %6407 = vmatprep.subr.mxu0 0.0
    %6408 = vmatpush1.msra.mxu0 0.0
    %6409 = vmatprep.subr.mxu0 0.0
    %6410 = vmatpush1.msra.mxu0 0.0
    %6411 = vmatprep.subr.mxu0 0.0
    %6412 = vmatpush1.msra.mxu0 0.0
    %6413 = vmatprep.subr.mxu0 0.0
    %6414 = vmatpush1.msra.mxu0 0.0
    %6415 = vmatprep.subr.mxu0 0.0
    %6416 = vmatpush1.msra.mxu0 0.0
    %6417 = vmatprep.subr.mxu0 0.0
    %6418 = vmatpush1.msra.mxu0 0.0
    %6419 = vmatprep.subr.mxu0 0.0
    %6420 = vmatpush1.msra.mxu0 0.0
    %6421 = vmatprep.subr.mxu0 0.0
    %6422 = vmatpush1.msra.mxu0 0.0
    %6423 = vmatprep.subr.mxu0 0.0
    %6424 = vmatpush1.msra.mxu0 0.0
    %6425 = vmatprep.subr.mxu0 0.0
    %6426 = vmatpush1.msra.mxu0 0.0
    %6427 = vmatprep.mubr.f32.mxu0 0.0
    %6428 = vmatmul.mubr.f32.gmra.mrb[0].mxu0 %v6239
    %v6429 = vpop.f32.mrb[0].mxu0
    %v6430 = vadd.f32 0.0, %v6429
    %v6431 = vpop.f32.mrb[0].mxu0
    %6432 = vdwg.mxu0
    %v6433 = vadd.f32 %v6240, %v6359
    %v6434 = vxor.u32 %v6433, 2147483648
    %v6435 = vmul.f32 %v6434, 1.442695
    %v6436 = vpow.pop %v6435
    %v6437 = vadd.f32 %v6436, 1.0
    %v6438 = vrcp.pop %v6437
    %v6439 = vmul.f32 1.0, %v6438
    %v6440 = vadd.f32 %v6241, %v6361
    %v6441 = vxor.u32 %v6440, 2147483648
    %v6442 = vmul.f32 %v6441, 1.442695
    %v6443 = vpow.pop %v6442
    %v6444 = vadd.f32 %v6443, 1.0
    %v6445 = vrcp.pop %v6444
    %v6446 = vmul.f32 1.0, %v6445
    %v6447 = vadd.f32 %v6430, %v6236
    %v6448 = vmul.f32 %v6439, %v6447
    %v6449 = vadd.f32 %v6242, %v6448
    %v6450 = vtanh.pop %v6449
    %v6451 = vsub.f32 %v6239, %v6450
    %v6452 = vmul.f32 %v6446, %v6451
    %v6453 = vadd.f32 %v6450, %v6452
    %6454 = vst [vmem:[%s6] sm:$0xff] %v6453
    %v6455 = vld [vmem:[%s2360] sm:$0xff]
    %v6456 = vld [vmem:[%s2360 + $0x8] sm:$0xff]
    %v6457 = vld [vmem:[%s2360 + $0x10] sm:$0xff]
    %v6458 = vld [vmem:[%s6243] sm:$0xff]
    %v6459 = vld [vmem:[%s6243 + $0x8] sm:$0xff]
    %v6460 = vld [vmem:[%s6243 + $0x10] sm:$0xff]
    %v6461 = vld [vmem:[%s6243 + $0x18] sm:$0xff]
    %v6462 = vld [vmem:[%s6243 + $0x20] sm:$0xff]
    %v6463 = vld [vmem:[%s6243 + $0x28] sm:$0xff]
    %v6464 = vld [vmem:[%s6243 + $0x30] sm:$0xff]
    %v6465 = vld [vmem:[%s6243 + $0x38] sm:$0xff]
    %v6466 = vld [vmem:[%s6243 + $0x40] sm:$0xff]
    %v6467 = vld [vmem:[%s6243 + $0x48] sm:$0xff]
    %v6468 = vld [vmem:[%s6243 + $0x50] sm:$0xff]
    %v6469 = vld [vmem:[%s6243 + $0x58] sm:$0xff]
    %v6470 = vld [vmem:[%s6243 + $0x60] sm:$0xff]
    %v6471 = vld [vmem:[%s6243 + $0x68] sm:$0xff]
    %v6472 = vld [vmem:[%s6243 + $0x70] sm:$0xff]
    %v6473 = vld [vmem:[%s6243 + $0x78] sm:$0xff]
    %v6474 = vld [vmem:[%s6243 + $0x80] sm:$0xff]
    %v6475 = vld [vmem:[%s6243 + $0x88] sm:$0xff]
    %v6476 = vld [vmem:[%s6243 + $0x90] sm:$0xff]
    %v6477 = vld [vmem:[%s6243 + $0x98] sm:$0xff]
    %v6478 = vld [vmem:[%s6243 + $0xa0] sm:$0xff]
    %v6479 = vld [vmem:[%s6243 + $0xa8] sm:$0xff]
    %v6480 = vld [vmem:[%s6243 + $0xb0] sm:$0xff]
    %v6481 = vld [vmem:[%s6243 + $0xb8] sm:$0xff]
    %v6482 = vld [vmem:[%s6243 + $0xc0] sm:$0xff]
    %v6483 = vld [vmem:[%s6243 + $0xc8] sm:$0xff]
    %v6484 = vld [vmem:[%s6243 + $0xd0] sm:$0xff]
    %v6485 = vld [vmem:[%s6243 + $0xd8] sm:$0xff]
    %v6486 = vld [vmem:[%s6243 + $0xe0] sm:$0xff]
    %v6487 = vld [vmem:[%s6243 + $0xe8] sm:$0xff]
    %v6488 = vld [vmem:[%s6243 + $0xf0] sm:$0xff]
    %v6489 = vld [vmem:[%s6243 + $0xf8] sm:$0xff]
    %v6490 = vld [vmem:[%s6243 + $0x100] sm:$0xff]
    %v6491 = vld [vmem:[%s6243 + $0x108] sm:$0xff]
    %v6492 = vld [vmem:[%s6243 + $0x110] sm:$0xff]
    %v6493 = vld [vmem:[%s6243 + $0x118] sm:$0xff]
    %v6494 = vld [vmem:[%s6243 + $0x120] sm:$0xff]
    %v6495 = vld [vmem:[%s6243 + $0x128] sm:$0xff]
    %v6496 = vld [vmem:[%s6243 + $0x130] sm:$0xff]
    %v6497 = vld [vmem:[%s6243 + $0x138] sm:$0xff]
    %v6498 = vld [vmem:[%s6243 + $0x140] sm:$0xff]
    %v6499 = vld [vmem:[%s6243 + $0x148] sm:$0xff]
    %v6500 = vld [vmem:[%s6243 + $0x150] sm:$0xff]
    %v6501 = vld [vmem:[%s6243 + $0x158] sm:$0xff]
    %v6502 = vld [vmem:[%s6243 + $0x160] sm:$0xff]
    %v6503 = vld [vmem:[%s6243 + $0x168] sm:$0xff]
    %v6504 = vld [vmem:[%s6243 + $0x170] sm:$0xff]
    %v6505 = vld [vmem:[%s6243 + $0x178] sm:$0xff]
    %6506 = vmatprep.subr.mxu0 %v6459
    %6507 = vmatpush1.msra.mxu0 %v6458
    %6508 = vmatprep.subr.mxu0 %v6462
    %6509 = vmatpush1.msra.mxu0 %v6461
    %6510 = vmatprep.subr.mxu0 %v6465
    %6511 = vmatpush1.msra.mxu0 %v6464
    %6512 = vmatprep.subr.mxu0 %v6468
    %6513 = vmatpush1.msra.mxu0 %v6467
    %6514 = vmatprep.subr.mxu0 %v6471
    %6515 = vmatpush1.msra.mxu0 %v6470
    %6516 = vmatprep.subr.mxu0 %v6474
    %6517 = vmatpush1.msra.mxu0 %v6473
    %6518 = vmatprep.subr.mxu0 %v6477
    %6519 = vmatpush1.msra.mxu0 %v6476
    %6520 = vmatprep.subr.mxu0 %v6480
    %6521 = vmatpush1.msra.mxu0 %v6479
    %6522 = vmatprep.subr.mxu0 %v6483
    %6523 = vmatpush1.msra.mxu0 %v6482
    %6524 = vmatprep.subr.mxu0 %v6486
    %6525 = vmatpush1.msra.mxu0 %v6485
    %6526 = vmatprep.subr.mxu0 %v6489
    %6527 = vmatpush1.msra.mxu0 %v6488
    %6528 = vmatprep.subr.mxu0 %v6492
    %6529 = vmatpush1.msra.mxu0 %v6491
    %6530 = vmatprep.subr.mxu0 %v6495
    %6531 = vmatpush1.msra.mxu0 %v6494
    %6532 = vmatprep.subr.mxu0 %v6498
    %6533 = vmatpush1.msra.mxu0 %v6497
    %6534 = vmatprep.subr.mxu0 %v6501
    %6535 = vmatpush1.msra.mxu0 %v6500
    %6536 = vmatprep.subr.mxu0 %v6504
    %6537 = vmatpush1.msra.mxu0 %v6503
    %6538 = vmatprep.subr.mxu0 0.0
    %6539 = vmatpush1.msra.mxu0 0.0
    %6540 = vmatprep.subr.mxu0 0.0
    %6541 = vmatpush1.msra.mxu0 0.0
    %6542 = vmatprep.subr.mxu0 0.0
    %6543 = vmatpush1.msra.mxu0 0.0
    %6544 = vmatprep.subr.mxu0 0.0
    %6545 = vmatpush1.msra.mxu0 0.0
    %6546 = vmatprep.subr.mxu0 0.0
    %6547 = vmatpush1.msra.mxu0 0.0
    %6548 = vmatprep.subr.mxu0 0.0
    %6549 = vmatpush1.msra.mxu0 0.0
    %6550 = vmatprep.subr.mxu0 0.0
    %6551 = vmatpush1.msra.mxu0 0.0
    %6552 = vmatprep.subr.mxu0 0.0
    %6553 = vmatpush1.msra.mxu0 0.0
    %6554 = vmatprep.subr.mxu0 0.0
    %6555 = vmatpush1.msra.mxu0 0.0
    %6556 = vmatprep.subr.mxu0 0.0
    %6557 = vmatpush1.msra.mxu0 0.0
    %6558 = vmatprep.subr.mxu0 0.0
    %6559 = vmatpush1.msra.mxu0 0.0
    %6560 = vmatprep.subr.mxu0 0.0
    %6561 = vmatpush1.msra.mxu0 0.0
    %6562 = vmatprep.subr.mxu0 0.0
    %6563 = vmatpush1.msra.mxu0 0.0
    %6564 = vmatprep.subr.mxu0 0.0
    %6565 = vmatpush1.msra.mxu0 0.0
    %6566 = vmatprep.subr.mxu0 0.0
    %6567 = vmatpush1.msra.mxu0 0.0
    %6568 = vmatprep.subr.mxu0 0.0
    %6569 = vmatpush1.msra.mxu0 0.0
    %6570 = vmatprep.mubr.f32.mxu0 0.0
    %6571 = vmatmul.mubr.f32.gmra.mrb[0].mxu0 %v6453
    %v6572 = vpop.f32.mrb[0].mxu0
    %v6573 = vadd.f32 0.0, %v6572
    %v6574 = vpop.f32.mrb[0].mxu0
    %v6575 = vadd.f32 0.0, %v6574
    %6576 = vdwg.mxu0
    %6577 = vmatprep.subr.mxu0 0.0
    %6578 = vmatpush1.msra.mxu0 %v6460
    %6579 = vmatprep.subr.mxu0 0.0
    %6580 = vmatpush1.msra.mxu0 %v6463
    %6581 = vmatprep.subr.mxu0 0.0
    %6582 = vmatpush1.msra.mxu0 %v6466
    %6583 = vmatprep.subr.mxu0 0.0
    %6584 = vmatpush1.msra.mxu0 %v6469
    %6585 = vmatprep.subr.mxu0 0.0
    %6586 = vmatpush1.msra.mxu0 %v6472
    %6587 = vmatprep.subr.mxu0 0.0
    %6588 = vmatpush1.msra.mxu0 %v6475
    %6589 = vmatprep.subr.mxu0 0.0
    %6590 = vmatpush1.msra.mxu0 %v6478
    %6591 = vmatprep.subr.mxu0 0.0
    %6592 = vmatpush1.msra.mxu0 %v6481
    %6593 = vmatprep.subr.mxu0 0.0
    %6594 = vmatpush1.msra.mxu0 %v6484
    %6595 = vmatprep.subr.mxu0 0.0
    %6596 = vmatpush1.msra.mxu0 %v6487
    %6597 = vmatprep.subr.mxu0 0.0
    %6598 = vmatpush1.msra.mxu0 %v6490
    %6599 = vmatprep.subr.mxu0 0.0
    %6600 = vmatpush1.msra.mxu0 %v6493
    %6601 = vmatprep.subr.mxu0 0.0
    %6602 = vmatpush1.msra.mxu0 %v6496
    %6603 = vmatprep.subr.mxu0 0.0
    %6604 = vmatpush1.msra.mxu0 %v6499
    %6605 = vmatprep.subr.mxu0 0.0
    %6606 = vmatpush1.msra.mxu0 %v6502
    %6607 = vmatprep.subr.mxu0 0.0
    %6608 = vmatpush1.msra.mxu0 %v6505
    %6609 = vmatprep.subr.mxu0 0.0
    %6610 = vmatpush1.msra.mxu0 0.0
    %6611 = vmatprep.subr.mxu0 0.0
    %6612 = vmatpush1.msra.mxu0 0.0
    %6613 = vmatprep.subr.mxu0 0.0
    %6614 = vmatpush1.msra.mxu0 0.0
    %6615 = vmatprep.subr.mxu0 0.0
    %6616 = vmatpush1.msra.mxu0 0.0
    %6617 = vmatprep.subr.mxu0 0.0
    %6618 = vmatpush1.msra.mxu0 0.0
    %6619 = vmatprep.subr.mxu0 0.0
    %6620 = vmatpush1.msra.mxu0 0.0
    %6621 = vmatprep.subr.mxu0 0.0
    %6622 = vmatpush1.msra.mxu0 0.0
    %6623 = vmatprep.subr.mxu0 0.0
    %6624 = vmatpush1.msra.mxu0 0.0
    %6625 = vmatprep.subr.mxu0 0.0
    %6626 = vmatpush1.msra.mxu0 0.0
    %6627 = vmatprep.subr.mxu0 0.0
    %6628 = vmatpush1.msra.mxu0 0.0
    %6629 = vmatprep.subr.mxu0 0.0
    %6630 = vmatpush1.msra.mxu0 0.0
    %6631 = vmatprep.subr.mxu0 0.0
    %6632 = vmatpush1.msra.mxu0 0.0
    %6633 = vmatprep.subr.mxu0 0.0
    %6634 = vmatpush1.msra.mxu0 0.0
    %6635 = vmatprep.subr.mxu0 0.0
    %6636 = vmatpush1.msra.mxu0 0.0
    %6637 = vmatprep.subr.mxu0 0.0
    %6638 = vmatpush1.msra.mxu0 0.0
    %6639 = vmatprep.subr.mxu0 0.0
    %6640 = vmatpush1.msra.mxu0 0.0
    %6641 = vmatprep.mubr.f32.mxu0 0.0
    %6642 = vmatmul.mubr.f32.gmra.mrb[0].mxu0 %v6453
    %v6643 = vpop.f32.mrb[0].mxu0
    %v6644 = vadd.f32 0.0, %v6643
    %v6645 = vpop.f32.mrb[0].mxu0
    %6646 = vdwg.mxu0
    %v6647 = vadd.f32 %v6455, %v6573
    %v6648 = vxor.u32 %v6647, 2147483648
    %v6649 = vmul.f32 %v6648, 1.442695
    %v6650 = vpow.pop %v6649
    %v6651 = vadd.f32 %v6650, 1.0
    %v6652 = vrcp.pop %v6651
    %v6653 = vmul.f32 1.0, %v6652
    %v6654 = vadd.f32 %v6456, %v6575
    %v6655 = vxor.u32 %v6654, 2147483648
    %v6656 = vmul.f32 %v6655, 1.442695
    %v6657 = vpow.pop %v6656
    %v6658 = vadd.f32 %v6657, 1.0
    %v6659 = vrcp.pop %v6658
    %v6660 = vmul.f32 1.0, %v6659
    %v6661 = vadd.f32 %v6644, %v6236
    %v6662 = vmul.f32 %v6653, %v6661
    %v6663 = vadd.f32 %v6457, %v6662
    %v6664 = vtanh.pop %v6663
    %v6665 = vsub.f32 %v6453, %v6664
    %v6666 = vmul.f32 %v6660, %v6665
    %v6667 = vadd.f32 %v6664, %v6666
    %s6668 = scalar_lea.vmem %s6, 8
    %6669 = vst [vmem:[%s6668] sm:$0xff] %v6667
    %v6670 = vld [vmem:[%s2576] sm:$0xff]
    %v6671 = vld [vmem:[%s2576 + $0x8] sm:$0xff]
    %v6672 = vld [vmem:[%s2576 + $0x10] sm:$0xff]
    %v6673 = vld [vmem:[%s6243] sm:$0xff]
    %v6674 = vld [vmem:[%s6243 + $0x8] sm:$0xff]
    %v6675 = vld [vmem:[%s6243 + $0x10] sm:$0xff]
    %v6676 = vld [vmem:[%s6243 + $0x18] sm:$0xff]
    %v6677 = vld [vmem:[%s6243 + $0x20] sm:$0xff]
    %v6678 = vld [vmem:[%s6243 + $0x28] sm:$0xff]
    %v6679 = vld [vmem:[%s6243 + $0x30] sm:$0xff]
    %v6680 = vld [vmem:[%s6243 + $0x38] sm:$0xff]
    %v6681 = vld [vmem:[%s6243 + $0x40] sm:$0xff]
    %v6682 = vld [vmem:[%s6243 + $0x48] sm:$0xff]
    %v6683 = vld [vmem:[%s6243 + $0x50] sm:$0xff]
    %v6684 = vld [vmem:[%s6243 + $0x58] sm:$0xff]
    %v6685 = vld [vmem:[%s6243 + $0x60] sm:$0xff]
    %v6686 = vld [vmem:[%s6243 + $0x68] sm:$0xff]
    %v6687 = vld [vmem:[%s6243 + $0x70] sm:$0xff]
    %v6688 = vld [vmem:[%s6243 + $0x78] sm:$0xff]
    %v6689 = vld [vmem:[%s6243 + $0x80] sm:$0xff]
    %v6690 = vld [vmem:[%s6243 + $0x88] sm:$0xff]
    %v6691 = vld [vmem:[%s6243 + $0x90] sm:$0xff]
    %v6692 = vld [vmem:[%s6243 + $0x98] sm:$0xff]
    %v6693 = vld [vmem:[%s6243 + $0xa0] sm:$0xff]
    %v6694 = vld [vmem:[%s6243 + $0xa8] sm:$0xff]
    %v6695 = vld [vmem:[%s6243 + $0xb0] sm:$0xff]
    %v6696 = vld [vmem:[%s6243 + $0xb8] sm:$0xff]
    %v6697 = vld [vmem:[%s6243 + $0xc0] sm:$0xff]
    %v6698 = vld [vmem:[%s6243 + $0xc8] sm:$0xff]
    %v6699 = vld [vmem:[%s6243 + $0xd0] sm:$0xff]
    %v6700 = vld [vmem:[%s6243 + $0xd8] sm:$0xff]
    %v6701 = vld [vmem:[%s6243 + $0xe0] sm:$0xff]
    %v6702 = vld [vmem:[%s6243 + $0xe8] sm:$0xff]
    %v6703 = vld [vmem:[%s6243 + $0xf0] sm:$0xff]
    %v6704 = vld [vmem:[%s6243 + $0xf8] sm:$0xff]
    %v6705 = vld [vmem:[%s6243 + $0x100] sm:$0xff]
    %v6706 = vld [vmem:[%s6243 + $0x108] sm:$0xff]
    %v6707 = vld [vmem:[%s6243 + $0x110] sm:$0xff]
    %v6708 = vld [vmem:[%s6243 + $0x118] sm:$0xff]
    %v6709 = vld [vmem:[%s6243 + $0x120] sm:$0xff]
    %v6710 = vld [vmem:[%s6243 + $0x128] sm:$0xff]
    %v6711 = vld [vmem:[%s6243 + $0x130] sm:$0xff]
    %v6712 = vld [vmem:[%s6243 + $0x138] sm:$0xff]
    %v6713 = vld [vmem:[%s6243 + $0x140] sm:$0xff]
    %v6714 = vld [vmem:[%s6243 + $0x148] sm:$0xff]
    %v6715 = vld [vmem:[%s6243 + $0x150] sm:$0xff]
    %v6716 = vld [vmem:[%s6243 + $0x158] sm:$0xff]
    %v6717 = vld [vmem:[%s6243 + $0x160] sm:$0xff]
    %v6718 = vld [vmem:[%s6243 + $0x168] sm:$0xff]
    %v6719 = vld [vmem:[%s6243 + $0x170] sm:$0xff]
    %v6720 = vld [vmem:[%s6243 + $0x178] sm:$0xff]
    %6721 = vmatprep.subr.mxu0 %v6674
    %6722 = vmatpush1.msra.mxu0 %v6673
    %6723 = vmatprep.subr.mxu0 %v6677
    %6724 = vmatpush1.msra.mxu0 %v6676
    %6725 = vmatprep.subr.mxu0 %v6680
    %6726 = vmatpush1.msra.mxu0 %v6679
    %6727 = vmatprep.subr.mxu0 %v6683
    %6728 = vmatpush1.msra.mxu0 %v6682
    %6729 = vmatprep.subr.mxu0 %v6686
    %6730 = vmatpush1.msra.mxu0 %v6685
    %6731 = vmatprep.subr.mxu0 %v6689
    %6732 = vmatpush1.msra.mxu0 %v6688
    %6733 = vmatprep.subr.mxu0 %v6692
    %6734 = vmatpush1.msra.mxu0 %v6691
    %6735 = vmatprep.subr.mxu0 %v6695
    %6736 = vmatpush1.msra.mxu0 %v6694
    %6737 = vmatprep.subr.mxu0 %v6698
    %6738 = vmatpush1.msra.mxu0 %v6697
    %6739 = vmatprep.subr.mxu0 %v6701
    %6740 = vmatpush1.msra.mxu0 %v6700
    %6741 = vmatprep.subr.mxu0 %v6704
    %6742 = vmatpush1.msra.mxu0 %v6703
    %6743 = vmatprep.subr.mxu0 %v6707
    %6744 = vmatpush1.msra.mxu0 %v6706
    %6745 = vmatprep.subr.mxu0 %v6710
    %6746 = vmatpush1.msra.mxu0 %v6709
    %6747 = vmatprep.subr.mxu0 %v6713
    %6748 = vmatpush1.msra.mxu0 %v6712
    %6749 = vmatprep.subr.mxu0 %v6716
    %6750 = vmatpush1.msra.mxu0 %v6715
    %6751 = vmatprep.subr.mxu0 %v6719
    %6752 = vmatpush1.msra.mxu0 %v6718
    %6753 = vmatprep.subr.mxu0 0.0
    %6754 = vmatpush1.msra.mxu0 0.0
    %6755 = vmatprep.subr.mxu0 0.0
    %6756 = vmatpush1.msra.mxu0 0.0
    %6757 = vmatprep.subr.mxu0 0.0
    %6758 = vmatpush1.msra.mxu0 0.0
    %6759 = vmatprep.subr.mxu0 0.0
    %6760 = vmatpush1.msra.mxu0 0.0
    %6761 = vmatprep.subr.mxu0 0.0
    %6762 = vmatpush1.msra.mxu0 0.0
    %6763 = vmatprep.subr.mxu0 0.0
    %6764 = vmatpush1.msra.mxu0 0.0
    %6765 = vmatprep.subr.mxu0 0.0
    %6766 = vmatpush1.msra.mxu0 0.0
    %6767 = vmatprep.subr.mxu0 0.0
    %6768 = vmatpush1.msra.mxu0 0.0
    %6769 = vmatprep.subr.mxu0 0.0
    %6770 = vmatpush1.msra.mxu0 0.0
    %6771 = vmatprep.subr.mxu0 0.0
    %6772 = vmatpush1.msra.mxu0 0.0
    %6773 = vmatprep.subr.mxu0 0.0
    %6774 = vmatpush1.msra.mxu0 0.0
    %6775 = vmatprep.subr.mxu0 0.0
    %6776 = vmatpush1.msra.mxu0 0.0
    %6777 = vmatprep.subr.mxu0 0.0
    %6778 = vmatpush1.msra.mxu0 0.0
    %6779 = vmatprep.subr.mxu0 0.0
    %6780 = vmatpush1.msra.mxu0 0.0
    %6781 = vmatprep.subr.mxu0 0.0
    %6782 = vmatpush1.msra.mxu0 0.0
    %6783 = vmatprep.subr.mxu0 0.0
    %6784 = vmatpush1.msra.mxu0 0.0
    %6785 = vmatprep.mubr.f32.mxu0 0.0
    %6786 = vmatmul.mubr.f32.gmra.mrb[0].mxu0 %v6667
    %v6787 = vpop.f32.mrb[0].mxu0
    %v6788 = vadd.f32 0.0, %v6787
    %v6789 = vpop.f32.mrb[0].mxu0
    %v6790 = vadd.f32 0.0, %v6789
    %6791 = vdwg.mxu0
    %6792 = vmatprep.subr.mxu0 0.0
    %6793 = vmatpush1.msra.mxu0 %v6675
    %6794 = vmatprep.subr.mxu0 0.0
    %6795 = vmatpush1.msra.mxu0 %v6678
    %6796 = vmatprep.subr.mxu0 0.0
    %6797 = vmatpush1.msra.mxu0 %v6681
    %6798 = vmatprep.subr.mxu0 0.0
    %6799 = vmatpush1.msra.mxu0 %v6684
    %6800 = vmatprep.subr.mxu0 0.0
    %6801 = vmatpush1.msra.mxu0 %v6687
    %6802 = vmatprep.subr.mxu0 0.0
    %6803 = vmatpush1.msra.mxu0 %v6690
    %6804 = vmatprep.subr.mxu0 0.0
    %6805 = vmatpush1.msra.mxu0 %v6693
    %6806 = vmatprep.subr.mxu0 0.0
    %6807 = vmatpush1.msra.mxu0 %v6696
    %6808 = vmatprep.subr.mxu0 0.0
    %6809 = vmatpush1.msra.mxu0 %v6699
    %6810 = vmatprep.subr.mxu0 0.0
    %6811 = vmatpush1.msra.mxu0 %v6702
    %6812 = vmatprep.subr.mxu0 0.0
    %6813 = vmatpush1.msra.mxu0 %v6705
    %6814 = vmatprep.subr.mxu0 0.0
    %6815 = vmatpush1.msra.mxu0 %v6708
    %6816 = vmatprep.subr.mxu0 0.0
    %6817 = vmatpush1.msra.mxu0 %v6711
    %6818 = vmatprep.subr.mxu0 0.0
    %6819 = vmatpush1.msra.mxu0 %v6714
    %6820 = vmatprep.subr.mxu0 0.0
    %6821 = vmatpush1.msra.mxu0 %v6717
    %6822 = vmatprep.subr.mxu0 0.0
    %6823 = vmatpush1.msra.mxu0 %v6720
    %6824 = vmatprep.subr.mxu0 0.0
    %6825 = vmatpush1.msra.mxu0 0.0
    %6826 = vmatprep.subr.mxu0 0.0
    %6827 = vmatpush1.msra.mxu0 0.0
    %6828 = vmatprep.subr.mxu0 0.0
    %6829 = vmatpush1.msra.mxu0 0.0
    %6830 = vmatprep.subr.mxu0 0.0
    %6831 = vmatpush1.msra.mxu0 0.0
    %6832 = vmatprep.subr.mxu0 0.0
    %6833 = vmatpush1.msra.mxu0 0.0
    %6834 = vmatprep.subr.mxu0 0.0
    %6835 = vmatpush1.msra.mxu0 0.0
    %6836 = vmatprep.subr.mxu0 0.0
    %6837 = vmatpush1.msra.mxu0 0.0
    %6838 = vmatprep.subr.mxu0 0.0
    %6839 = vmatpush1.msra.mxu0 0.0
    %6840 = vmatprep.subr.mxu0 0.0
    %6841 = vmatpush1.msra.mxu0 0.0
    %6842 = vmatprep.subr.mxu0 0.0
    %6843 = vmatpush1.msra.mxu0 0.0
    %6844 = vmatprep.subr.mxu0 0.0
    %6845 = vmatpush1.msra.mxu0 0.0
    %6846 = vmatprep.subr.mxu0 0.0
    %6847 = vmatpush1.msra.mxu0 0.0
    %6848 = vmatprep.subr.mxu0 0.0
    %6849 = vmatpush1.msra.mxu0 0.0
    %6850 = vmatprep.subr.mxu0 0.0
    %6851 = vmatpush1.msra.mxu0 0.0
    %6852 = vmatprep.subr.mxu0 0.0
    %6853 = vmatpush1.msra.mxu0 0.0
    %6854 = vmatprep.subr.mxu0 0.0
    %6855 = vmatpush1.msra.mxu0 0.0
    %6856 = vmatprep.mubr.f32.mxu0 0.0
    %6857 = vmatmul.mubr.f32.gmra.mrb[0].mxu0 %v6667
    %v6858 = vpop.f32.mrb[0].mxu0
    %v6859 = vadd.f32 0.0, %v6858
    %v6860 = vpop.f32.mrb[0].mxu0
    %6861 = vdwg.mxu0
    %v6862 = vadd.f32 %v6670, %v6788
    %v6863 = vxor.u32 %v6862, 2147483648
    %v6864 = vmul.f32 %v6863, 1.442695
    %v6865 = vpow.pop %v6864
    %v6866 = vadd.f32 %v6865, 1.0
    %v6867 = vrcp.pop %v6866
    %v6868 = vmul.f32 1.0, %v6867
    %v6869 = vadd.f32 %v6671, %v6790
    %v6870 = vxor.u32 %v6869, 2147483648
    %v6871 = vmul.f32 %v6870, 1.442695
    %v6872 = vpow.pop %v6871
    %v6873 = vadd.f32 %v6872, 1.0
    %v6874 = vrcp.pop %v6873
    %v6875 = vmul.f32 1.0, %v6874
    %v6876 = vadd.f32 %v6859, %v6236
    %v6877 = vmul.f32 %v6868, %v6876
    %v6878 = vadd.f32 %v6672, %v6877
    %v6879 = vtanh.pop %v6878
    %v6880 = vsub.f32 %v6667, %v6879
    %v6881 = vmul.f32 %v6875, %v6880
    %v6882 = vadd.f32 %v6879, %v6881
    %s6883 = scalar_lea.vmem %s6, 16
    %6884 = vst [vmem:[%s6883] sm:$0xff] %v6882
    %v6885 = vld [vmem:[%s2792] sm:$0xff]
    %v6886 = vld [vmem:[%s2792 + $0x8] sm:$0xff]
    %v6887 = vld [vmem:[%s2792 + $0x10] sm:$0xff]
    %v6888 = vld [vmem:[%s6243] sm:$0xff]
    %v6889 = vld [vmem:[%s6243 + $0x8] sm:$0xff]
    %v6890 = vld [vmem:[%s6243 + $0x10] sm:$0xff]
    %v6891 = vld [vmem:[%s6243 + $0x18] sm:$0xff]
    %v6892 = vld [vmem:[%s6243 + $0x20] sm:$0xff]
    %v6893 = vld [vmem:[%s6243 + $0x28] sm:$0xff]
    %v6894 = vld [vmem:[%s6243 + $0x30] sm:$0xff]
    %v6895 = vld [vmem:[%s6243 + $0x38] sm:$0xff]
    %v6896 = vld [vmem:[%s6243 + $0x40] sm:$0xff]
    %v6897 = vld [vmem:[%s6243 + $0x48] sm:$0xff]
    %v6898 = vld [vmem:[%s6243 + $0x50] sm:$0xff]
    %v6899 = vld [vmem:[%s6243 + $0x58] sm:$0xff]
    %v6900 = vld [vmem:[%s6243 + $0x60] sm:$0xff]
    %v6901 = vld [vmem:[%s6243 + $0x68] sm:$0xff]
    %v6902 = vld [vmem:[%s6243 + $0x70] sm:$0xff]
    %v6903 = vld [vmem:[%s6243 + $0x78] sm:$0xff]
    %v6904 = vld [vmem:[%s6243 + $0x80] sm:$0xff]
    %v6905 = vld [vmem:[%s6243 + $0x88] sm:$0xff]
    %v6906 = vld [vmem:[%s6243 + $0x90] sm:$0xff]
    %v6907 = vld [vmem:[%s6243 + $0x98] sm:$0xff]
    %v6908 = vld [vmem:[%s6243 + $0xa0] sm:$0xff]
    %v6909 = vld [vmem:[%s6243 + $0xa8] sm:$0xff]
    %v6910 = vld [vmem:[%s6243 + $0xb0] sm:$0xff]
    %v6911 = vld [vmem:[%s6243 + $0xb8] sm:$0xff]
    %v6912 = vld [vmem:[%s6243 + $0xc0] sm:$0xff]
    %v6913 = vld [vmem:[%s6243 + $0xc8] sm:$0xff]
    %v6914 = vld [vmem:[%s6243 + $0xd0] sm:$0xff]
    %v6915 = vld [vmem:[%s6243 + $0xd8] sm:$0xff]
    %v6916 = vld [vmem:[%s6243 + $0xe0] sm:$0xff]
    %v6917 = vld [vmem:[%s6243 + $0xe8] sm:$0xff]
    %v6918 = vld [vmem:[%s6243 + $0xf0] sm:$0xff]
    %v6919 = vld [vmem:[%s6243 + $0xf8] sm:$0xff]
    %v6920 = vld [vmem:[%s6243 + $0x100] sm:$0xff]
    %v6921 = vld [vmem:[%s6243 + $0x108] sm:$0xff]
    %v6922 = vld [vmem:[%s6243 + $0x110] sm:$0xff]
    %v6923 = vld [vmem:[%s6243 + $0x118] sm:$0xff]
    %v6924 = vld [vmem:[%s6243 + $0x120] sm:$0xff]
    %v6925 = vld [vmem:[%s6243 + $0x128] sm:$0xff]
    %v6926 = vld [vmem:[%s6243 + $0x130] sm:$0xff]
    %v6927 = vld [vmem:[%s6243 + $0x138] sm:$0xff]
    %v6928 = vld [vmem:[%s6243 + $0x140] sm:$0xff]
    %v6929 = vld [vmem:[%s6243 + $0x148] sm:$0xff]
    %v6930 = vld [vmem:[%s6243 + $0x150] sm:$0xff]
    %v6931 = vld [vmem:[%s6243 + $0x158] sm:$0xff]
    %v6932 = vld [vmem:[%s6243 + $0x160] sm:$0xff]
    %v6933 = vld [vmem:[%s6243 + $0x168] sm:$0xff]
    %v6934 = vld [vmem:[%s6243 + $0x170] sm:$0xff]
    %v6935 = vld [vmem:[%s6243 + $0x178] sm:$0xff]
    %6936 = vmatprep.subr.mxu0 %v6889
    %6937 = vmatpush1.msra.mxu0 %v6888
    %6938 = vmatprep.subr.mxu0 %v6892
    %6939 = vmatpush1.msra.mxu0 %v6891
    %6940 = vmatprep.subr.mxu0 %v6895
    %6941 = vmatpush1.msra.mxu0 %v6894
    %6942 = vmatprep.subr.mxu0 %v6898
    %6943 = vmatpush1.msra.mxu0 %v6897
    %6944 = vmatprep.subr.mxu0 %v6901
    %6945 = vmatpush1.msra.mxu0 %v6900
    %6946 = vmatprep.subr.mxu0 %v6904
    %6947 = vmatpush1.msra.mxu0 %v6903
    %6948 = vmatprep.subr.mxu0 %v6907
    %6949 = vmatpush1.msra.mxu0 %v6906
    %6950 = vmatprep.subr.mxu0 %v6910
    %6951 = vmatpush1.msra.mxu0 %v6909
    %6952 = vmatprep.subr.mxu0 %v6913
    %6953 = vmatpush1.msra.mxu0 %v6912
    %6954 = vmatprep.subr.mxu0 %v6916
    %6955 = vmatpush1.msra.mxu0 %v6915
    %6956 = vmatprep.subr.mxu0 %v6919
    %6957 = vmatpush1.msra.mxu0 %v6918
    %6958 = vmatprep.subr.mxu0 %v6922
    %6959 = vmatpush1.msra.mxu0 %v6921
    %6960 = vmatprep.subr.mxu0 %v6925
    %6961 = vmatpush1.msra.mxu0 %v6924
    %6962 = vmatprep.subr.mxu0 %v6928
    %6963 = vmatpush1.msra.mxu0 %v6927
    %6964 = vmatprep.subr.mxu0 %v6931
    %6965 = vmatpush1.msra.mxu0 %v6930
    %6966 = vmatprep.subr.mxu0 %v6934
    %6967 = vmatpush1.msra.mxu0 %v6933
    %6968 = vmatprep.subr.mxu0 0.0
    %6969 = vmatpush1.msra.mxu0 0.0
    %6970 = vmatprep.subr.mxu0 0.0
    %6971 = vmatpush1.msra.mxu0 0.0
    %6972 = vmatprep.subr.mxu0 0.0
    %6973 = vmatpush1.msra.mxu0 0.0
    %6974 = vmatprep.subr.mxu0 0.0
    %6975 = vmatpush1.msra.mxu0 0.0
    %6976 = vmatprep.subr.mxu0 0.0
    %6977 = vmatpush1.msra.mxu0 0.0
    %6978 = vmatprep.subr.mxu0 0.0
    %6979 = vmatpush1.msra.mxu0 0.0
    %6980 = vmatprep.subr.mxu0 0.0
    %6981 = vmatpush1.msra.mxu0 0.0
    %6982 = vmatprep.subr.mxu0 0.0
    %6983 = vmatpush1.msra.mxu0 0.0
    %6984 = vmatprep.subr.mxu0 0.0
    %6985 = vmatpush1.msra.mxu0 0.0
    %6986 = vmatprep.subr.mxu0 0.0
    %6987 = vmatpush1.msra.mxu0 0.0
    %6988 = vmatprep.subr.mxu0 0.0
    %6989 = vmatpush1.msra.mxu0 0.0
    %6990 = vmatprep.subr.mxu0 0.0
    %6991 = vmatpush1.msra.mxu0 0.0
    %6992 = vmatprep.subr.mxu0 0.0
    %6993 = vmatpush1.msra.mxu0 0.0
    %6994 = vmatprep.subr.mxu0 0.0
    %6995 = vmatpush1.msra.mxu0 0.0
    %6996 = vmatprep.subr.mxu0 0.0
    %6997 = vmatpush1.msra.mxu0 0.0
    %6998 = vmatprep.subr.mxu0 0.0
    %6999 = vmatpush1.msra.mxu0 0.0
    %7000 = vmatprep.mubr.f32.mxu0 0.0
    %7001 = vmatmul.mubr.f32.gmra.mrb[0].mxu0 %v6882
    %v7002 = vpop.f32.mrb[0].mxu0
    %v7003 = vadd.f32 0.0, %v7002
    %v7004 = vpop.f32.mrb[0].mxu0
    %v7005 = vadd.f32 0.0, %v7004
    %7006 = vdwg.mxu0
    %7007 = vmatprep.subr.mxu0 0.0
    %7008 = vmatpush1.msra.mxu0 %v6890
    %7009 = vmatprep.subr.mxu0 0.0
    %7010 = vmatpush1.msra.mxu0 %v6893
    %7011 = vmatprep.subr.mxu0 0.0
    %7012 = vmatpush1.msra.mxu0 %v6896
    %7013 = vmatprep.subr.mxu0 0.0
    %7014 = vmatpush1.msra.mxu0 %v6899
    %7015 = vmatprep.subr.mxu0 0.0
    %7016 = vmatpush1.msra.mxu0 %v6902
    %7017 = vmatprep.subr.mxu0 0.0
    %7018 = vmatpush1.msra.mxu0 %v6905
    %7019 = vmatprep.subr.mxu0 0.0
    %7020 = vmatpush1.msra.mxu0 %v6908
    %7021 = vmatprep.subr.mxu0 0.0
    %7022 = vmatpush1.msra.mxu0 %v6911
    %7023 = vmatprep.subr.mxu0 0.0
    %7024 = vmatpush1.msra.mxu0 %v6914
    %7025 = vmatprep.subr.mxu0 0.0
    %7026 = vmatpush1.msra.mxu0 %v6917
    %7027 = vmatprep.subr.mxu0 0.0
    %7028 = vmatpush1.msra.mxu0 %v6920
    %7029 = vmatprep.subr.mxu0 0.0
    %7030 = vmatpush1.msra.mxu0 %v6923
    %7031 = vmatprep.subr.mxu0 0.0
    %7032 = vmatpush1.msra.mxu0 %v6926
    %7033 = vmatprep.subr.mxu0 0.0
    %7034 = vmatpush1.msra.mxu0 %v6929
    %7035 = vmatprep.subr.mxu0 0.0
    %7036 = vmatpush1.msra.mxu0 %v6932
    %7037 = vmatprep.subr.mxu0 0.0
    %7038 = vmatpush1.msra.mxu0 %v6935
    %7039 = vmatprep.subr.mxu0 0.0
    %7040 = vmatpush1.msra.mxu0 0.0
    %7041 = vmatprep.subr.mxu0 0.0
    %7042 = vmatpush1.msra.mxu0 0.0
    %7043 = vmatprep.subr.mxu0 0.0
    %7044 = vmatpush1.msra.mxu0 0.0
    %7045 = vmatprep.subr.mxu0 0.0
    %7046 = vmatpush1.msra.mxu0 0.0
    %7047 = vmatprep.subr.mxu0 0.0
    %7048 = vmatpush1.msra.mxu0 0.0
    %7049 = vmatprep.subr.mxu0 0.0
    %7050 = vmatpush1.msra.mxu0 0.0
    %7051 = vmatprep.subr.mxu0 0.0
    %7052 = vmatpush1.msra.mxu0 0.0
    %7053 = vmatprep.subr.mxu0 0.0
    %7054 = vmatpush1.msra.mxu0 0.0
    %7055 = vmatprep.subr.mxu0 0.0
    %7056 = vmatpush1.msra.mxu0 0.0
    %7057 = vmatprep.subr.mxu0 0.0
    %7058 = vmatpush1.msra.mxu0 0.0
    %7059 = vmatprep.subr.mxu0 0.0
    %7060 = vmatpush1.msra.mxu0 0.0
    %7061 = vmatprep.subr.mxu0 0.0
    %7062 = vmatpush1.msra.mxu0 0.0
    %7063 = vmatprep.subr.mxu0 0.0
    %7064 = vmatpush1.msra.mxu0 0.0
    %7065 = vmatprep.subr.mxu0 0.0
    %7066 = vmatpush1.msra.mxu0 0.0
    %7067 = vmatprep.subr.mxu0 0.0
    %7068 = vmatpush1.msra.mxu0 0.0
    %7069 = vmatprep.subr.mxu0 0.0
    %7070 = vmatpush1.msra.mxu0 0.0
    %7071 = vmatprep.mubr.f32.mxu0 0.0
    %7072 = vmatmul.mubr.f32.gmra.mrb[0].mxu0 %v6882
    %v7073 = vpop.f32.mrb[0].mxu0
    %v7074 = vadd.f32 0.0, %v7073
    %v7075 = vpop.f32.mrb[0].mxu0
    %7076 = vdwg.mxu0
    %v7077 = vadd.f32 %v6885, %v7003
    %v7078 = vxor.u32 %v7077, 2147483648
    %v7079 = vmul.f32 %v7078, 1.442695
    %v7080 = vpow.pop %v7079
    %v7081 = vadd.f32 %v7080, 1.0
    %v7082 = vrcp.pop %v7081
    %v7083 = vmul.f32 1.0, %v7082
    %v7084 = vadd.f32 %v6886, %v7005
    %v7085 = vxor.u32 %v7084, 2147483648
    %v7086 = vmul.f32 %v7085, 1.442695
    %v7087 = vpow.pop %v7086
    %v7088 = vadd.f32 %v7087, 1.0
    %v7089 = vrcp.pop %v7088
    %v7090 = vmul.f32 1.0, %v7089
    %v7091 = vadd.f32 %v7074, %v6236
    %v7092 = vmul.f32 %v7083, %v7091
    %v7093 = vadd.f32 %v6887, %v7092
    %v7094 = vtanh.pop %v7093
    %v7095 = vsub.f32 %v6882, %v7094
    %v7096 = vmul.f32 %v7090, %v7095
    %v7097 = vadd.f32 %v7094, %v7096
    %s7098 = scalar_lea.vmem %s6, 24
    %7099 = vst [vmem:[%s7098] sm:$0xff] %v7097
    %v7100 = vld [vmem:[%s3008] sm:$0xff]
    %v7101 = vld [vmem:[%s3008 + $0x8] sm:$0xff]
    %v7102 = vld [vmem:[%s3008 + $0x10] sm:$0xff]
    %v7103 = vld [vmem:[%s6243] sm:$0xff]
    %v7104 = vld [vmem:[%s6243 + $0x8] sm:$0xff]
    %v7105 = vld [vmem:[%s6243 + $0x10] sm:$0xff]
    %v7106 = vld [vmem:[%s6243 + $0x18] sm:$0xff]
    %v7107 = vld [vmem:[%s6243 + $0x20] sm:$0xff]
    %v7108 = vld [vmem:[%s6243 + $0x28] sm:$0xff]
    %v7109 = vld [vmem:[%s6243 + $0x30] sm:$0xff]
    %v7110 = vld [vmem:[%s6243 + $0x38] sm:$0xff]
    %v7111 = vld [vmem:[%s6243 + $0x40] sm:$0xff]
    %v7112 = vld [vmem:[%s6243 + $0x48] sm:$0xff]
    %v7113 = vld [vmem:[%s6243 + $0x50] sm:$0xff]
    %v7114 = vld [vmem:[%s6243 + $0x58] sm:$0xff]
    %v7115 = vld [vmem:[%s6243 + $0x60] sm:$0xff]
    %v7116 = vld [vmem:[%s6243 + $0x68] sm:$0xff]
    %v7117 = vld [vmem:[%s6243 + $0x70] sm:$0xff]
    %v7118 = vld [vmem:[%s6243 + $0x78] sm:$0xff]
    %v7119 = vld [vmem:[%s6243 + $0x80] sm:$0xff]
    %v7120 = vld [vmem:[%s6243 + $0x88] sm:$0xff]
    %v7121 = vld [vmem:[%s6243 + $0x90] sm:$0xff]
    %v7122 = vld [vmem:[%s6243 + $0x98] sm:$0xff]
    %v7123 = vld [vmem:[%s6243 + $0xa0] sm:$0xff]
    %v7124 = vld [vmem:[%s6243 + $0xa8] sm:$0xff]
    %v7125 = vld [vmem:[%s6243 + $0xb0] sm:$0xff]
    %v7126 = vld [vmem:[%s6243 + $0xb8] sm:$0xff]
    %v7127 = vld [vmem:[%s6243 + $0xc0] sm:$0xff]
    %v7128 = vld [vmem:[%s6243 + $0xc8] sm:$0xff]
    %v7129 = vld [vmem:[%s6243 + $0xd0] sm:$0xff]
    %v7130 = vld [vmem:[%s6243 + $0xd8] sm:$0xff]
    %v7131 = vld [vmem:[%s6243 + $0xe0] sm:$0xff]
    %v7132 = vld [vmem:[%s6243 + $0xe8] sm:$0xff]
    %v7133 = vld [vmem:[%s6243 + $0xf0] sm:$0xff]
    %v7134 = vld [vmem:[%s6243 + $0xf8] sm:$0xff]
    %v7135 = vld [vmem:[%s6243 + $0x100] sm:$0xff]
    %v7136 = vld [vmem:[%s6243 + $0x108] sm:$0xff]
    %v7137 = vld [vmem:[%s6243 + $0x110] sm:$0xff]
    %v7138 = vld [vmem:[%s6243 + $0x118] sm:$0xff]
    %v7139 = vld [vmem:[%s6243 + $0x120] sm:$0xff]
    %v7140 = vld [vmem:[%s6243 + $0x128] sm:$0xff]
    %v7141 = vld [vmem:[%s6243 + $0x130] sm:$0xff]
    %v7142 = vld [vmem:[%s6243 + $0x138] sm:$0xff]
    %v7143 = vld [vmem:[%s6243 + $0x140] sm:$0xff]
    %v7144 = vld [vmem:[%s6243 + $0x148] sm:$0xff]
    %v7145 = vld [vmem:[%s6243 + $0x150] sm:$0xff]
    %v7146 = vld [vmem:[%s6243 + $0x158] sm:$0xff]
    %v7147 = vld [vmem:[%s6243 + $0x160] sm:$0xff]
    %v7148 = vld [vmem:[%s6243 + $0x168] sm:$0xff]
    %v7149 = vld [vmem:[%s6243 + $0x170] sm:$0xff]
    %v7150 = vld [vmem:[%s6243 + $0x178] sm:$0xff]
    %7151 = vmatprep.subr.mxu0 %v7104
    %7152 = vmatpush1.msra.mxu0 %v7103
    %7153 = vmatprep.subr.mxu0 %v7107
    %7154 = vmatpush1.msra.mxu0 %v7106
    %7155 = vmatprep.subr.mxu0 %v7110
    %7156 = vmatpush1.msra.mxu0 %v7109
    %7157 = vmatprep.subr.mxu0 %v7113
    %7158 = vmatpush1.msra.mxu0 %v7112
    %7159 = vmatprep.subr.mxu0 %v7116
    %7160 = vmatpush1.msra.mxu0 %v7115
    %7161 = vmatprep.subr.mxu0 %v7119
    %7162 = vmatpush1.msra.mxu0 %v7118
    %7163 = vmatprep.subr.mxu0 %v7122
    %7164 = vmatpush1.msra.mxu0 %v7121
    %7165 = vmatprep.subr.mxu0 %v7125
    %7166 = vmatpush1.msra.mxu0 %v7124
    %7167 = vmatprep.subr.mxu0 %v7128
    %7168 = vmatpush1.msra.mxu0 %v7127
    %7169 = vmatprep.subr.mxu0 %v7131
    %7170 = vmatpush1.msra.mxu0 %v7130
    %7171 = vmatprep.subr.mxu0 %v7134
    %7172 = vmatpush1.msra.mxu0 %v7133
    %7173 = vmatprep.subr.mxu0 %v7137
    %7174 = vmatpush1.msra.mxu0 %v7136
    %7175 = vmatprep.subr.mxu0 %v7140
    %7176 = vmatpush1.msra.mxu0 %v7139
    %7177 = vmatprep.subr.mxu0 %v7143
    %7178 = vmatpush1.msra.mxu0 %v7142
    %7179 = vmatprep.subr.mxu0 %v7146
    %7180 = vmatpush1.msra.mxu0 %v7145
    %7181 = vmatprep.subr.mxu0 %v7149
    %7182 = vmatpush1.msra.mxu0 %v7148
    %7183 = vmatprep.subr.mxu0 0.0
    %7184 = vmatpush1.msra.mxu0 0.0
    %7185 = vmatprep.subr.mxu0 0.0
    %7186 = vmatpush1.msra.mxu0 0.0
    %7187 = vmatprep.subr.mxu0 0.0
    %7188 = vmatpush1.msra.mxu0 0.0
    %7189 = vmatprep.subr.mxu0 0.0
    %7190 = vmatpush1.msra.mxu0 0.0
    %7191 = vmatprep.subr.mxu0 0.0
    %7192 = vmatpush1.msra.mxu0 0.0
    %7193 = vmatprep.subr.mxu0 0.0
    %7194 = vmatpush1.msra.mxu0 0.0
    %7195 = vmatprep.subr.mxu0 0.0
    %7196 = vmatpush1.msra.mxu0 0.0
    %7197 = vmatprep.subr.mxu0 0.0
    %7198 = vmatpush1.msra.mxu0 0.0
    %7199 = vmatprep.subr.mxu0 0.0
    %7200 = vmatpush1.msra.mxu0 0.0
    %7201 = vmatprep.subr.mxu0 0.0
    %7202 = vmatpush1.msra.mxu0 0.0
    %7203 = vmatprep.subr.mxu0 0.0
    %7204 = vmatpush1.msra.mxu0 0.0
    %7205 = vmatprep.subr.mxu0 0.0
    %7206 = vmatpush1.msra.mxu0 0.0
    %7207 = vmatprep.subr.mxu0 0.0
    %7208 = vmatpush1.msra.mxu0 0.0
    %7209 = vmatprep.subr.mxu0 0.0
    %7210 = vmatpush1.msra.mxu0 0.0
    %7211 = vmatprep.subr.mxu0 0.0
    %7212 = vmatpush1.msra.mxu0 0.0
    %7213 = vmatprep.subr.mxu0 0.0
    %7214 = vmatpush1.msra.mxu0 0.0
    %7215 = vmatprep.mubr.f32.mxu0 0.0
    %7216 = vmatmul.mubr.f32.gmra.mrb[0].mxu0 %v7097
    %v7217 = vpop.f32.mrb[0].mxu0
    %v7218 = vadd.f32 0.0, %v7217
    %v7219 = vpop.f32.mrb[0].mxu0
    %v7220 = vadd.f32 0.0, %v7219
    %7221 = vdwg.mxu0
    %7222 = vmatprep.subr.mxu0 0.0
    %7223 = vmatpush1.msra.mxu0 %v7105
    %7224 = vmatprep.subr.mxu0 0.0
    %7225 = vmatpush1.msra.mxu0 %v7108
    %7226 = vmatprep.subr.mxu0 0.0
    %7227 = vmatpush1.msra.mxu0 %v7111
    %7228 = vmatprep.subr.mxu0 0.0
    %7229 = vmatpush1.msra.mxu0 %v7114
    %7230 = vmatprep.subr.mxu0 0.0
    %7231 = vmatpush1.msra.mxu0 %v7117
    %7232 = vmatprep.subr.mxu0 0.0
    %7233 = vmatpush1.msra.mxu0 %v7120
    %7234 = vmatprep.subr.mxu0 0.0
    %7235 = vmatpush1.msra.mxu0 %v7123
    %7236 = vmatprep.subr.mxu0 0.0
    %7237 = vmatpush1.msra.mxu0 %v7126
    %7238 = vmatprep.subr.mxu0 0.0
    %7239 = vmatpush1.msra.mxu0 %v7129
    %7240 = vmatprep.subr.mxu0 0.0
    %7241 = vmatpush1.msra.mxu0 %v7132
    %7242 = vmatprep.subr.mxu0 0.0
    %7243 = vmatpush1.msra.mxu0 %v7135
    %7244 = vmatprep.subr.mxu0 0.0
    %7245 = vmatpush1.msra.mxu0 %v7138
    %7246 = vmatprep.subr.mxu0 0.0
    %7247 = vmatpush1.msra.mxu0 %v7141
    %7248 = vmatprep.subr.mxu0 0.0
    %7249 = vmatpush1.msra.mxu0 %v7144
    %7250 = vmatprep.subr.mxu0 0.0
    %7251 = vmatpush1.msra.mxu0 %v7147
    %7252 = vmatprep.subr.mxu0 0.0
    %7253 = vmatpush1.msra.mxu0 %v7150
    %7254 = vmatprep.subr.mxu0 0.0
    %7255 = vmatpush1.msra.mxu0 0.0
    %7256 = vmatprep.subr.mxu0 0.0
    %7257 = vmatpush1.msra.mxu0 0.0
    %7258 = vmatprep.subr.mxu0 0.0
    %7259 = vmatpush1.msra.mxu0 0.0
    %7260 = vmatprep.subr.mxu0 0.0
    %7261 = vmatpush1.msra.mxu0 0.0
    %7262 = vmatprep.subr.mxu0 0.0
    %7263 = vmatpush1.msra.mxu0 0.0
    %7264 = vmatprep.subr.mxu0 0.0
    %7265 = vmatpush1.msra.mxu0 0.0
    %7266 = vmatprep.subr.mxu0 0.0
    %7267 = vmatpush1.msra.mxu0 0.0
    %7268 = vmatprep.subr.mxu0 0.0
    %7269 = vmatpush1.msra.mxu0 0.0
    %7270 = vmatprep.subr.mxu0 0.0
    %7271 = vmatpush1.msra.mxu0 0.0
    %7272 = vmatprep.subr.mxu0 0.0
    %7273 = vmatpush1.msra.mxu0 0.0
    %7274 = vmatprep.subr.mxu0 0.0
    %7275 = vmatpush1.msra.mxu0 0.0
    %7276 = vmatprep.subr.mxu0 0.0
    %7277 = vmatpush1.msra.mxu0 0.0
    %7278 = vmatprep.subr.mxu0 0.0
    %7279 = vmatpush1.msra.mxu0 0.0
    %7280 = vmatprep.subr.mxu0 0.0
    %7281 = vmatpush1.msra.mxu0 0.0
    %7282 = vmatprep.subr.mxu0 0.0
    %7283 = vmatpush1.msra.mxu0 0.0
    %7284 = vmatprep.subr.mxu0 0.0
    %7285 = vmatpush1.msra.mxu0 0.0
    %7286 = vmatprep.mubr.f32.mxu0 0.0
    %7287 = vmatmul.mubr.f32.gmra.mrb[0].mxu0 %v7097
    %v7288 = vpop.f32.mrb[0].mxu0
    %v7289 = vadd.f32 0.0, %v7288
    %v7290 = vpop.f32.mrb[0].mxu0
    %7291 = vdwg.mxu0
    %v7292 = vadd.f32 %v7100, %v7218
    %v7293 = vxor.u32 %v7292, 2147483648
    %v7294 = vmul.f32 %v7293, 1.442695
    %v7295 = vpow.pop %v7294
    %v7296 = vadd.f32 %v7295, 1.0
    %v7297 = vrcp.pop %v7296
    %v7298 = vmul.f32 1.0, %v7297
    %v7299 = vadd.f32 %v7101, %v7220
    %v7300 = vxor.u32 %v7299, 2147483648
    %v7301 = vmul.f32 %v7300, 1.442695
    %v7302 = vpow.pop %v7301
    %v7303 = vadd.f32 %v7302, 1.0
    %v7304 = vrcp.pop %v7303
    %v7305 = vmul.f32 1.0, %v7304
    %v7306 = vadd.f32 %v7289, %v6236
    %v7307 = vmul.f32 %v7298, %v7306
    %v7308 = vadd.f32 %v7102, %v7307
    %v7309 = vtanh.pop %v7308
    %v7310 = vsub.f32 %v7097, %v7309
    %v7311 = vmul.f32 %v7305, %v7310
    %v7312 = vadd.f32 %v7309, %v7311
    %s7313 = scalar_lea.vmem %s6, 32
    %7314 = vst [vmem:[%s7313] sm:$0xff] %v7312
    %v7315 = vld [vmem:[%s3224] sm:$0xff]
    %v7316 = vld [vmem:[%s3224 + $0x8] sm:$0xff]
    %v7317 = vld [vmem:[%s3224 + $0x10] sm:$0xff]
    %v7318 = vld [vmem:[%s6243] sm:$0xff]
    %v7319 = vld [vmem:[%s6243 + $0x8] sm:$0xff]
    %v7320 = vld [vmem:[%s6243 + $0x10] sm:$0xff]
    %v7321 = vld [vmem:[%s6243 + $0x18] sm:$0xff]
    %v7322 = vld [vmem:[%s6243 + $0x20] sm:$0xff]
    %v7323 = vld [vmem:[%s6243 + $0x28] sm:$0xff]
    %v7324 = vld [vmem:[%s6243 + $0x30] sm:$0xff]
    %v7325 = vld [vmem:[%s6243 + $0x38] sm:$0xff]
    %v7326 = vld [vmem:[%s6243 + $0x40] sm:$0xff]
    %v7327 = vld [vmem:[%s6243 + $0x48] sm:$0xff]
    %v7328 = vld [vmem:[%s6243 + $0x50] sm:$0xff]
    %v7329 = vld [vmem:[%s6243 + $0x58] sm:$0xff]
    %v7330 = vld [vmem:[%s6243 + $0x60] sm:$0xff]
    %v7331 = vld [vmem:[%s6243 + $0x68] sm:$0xff]
    %v7332 = vld [vmem:[%s6243 + $0x70] sm:$0xff]
    %v7333 = vld [vmem:[%s6243 + $0x78] sm:$0xff]
    %v7334 = vld [vmem:[%s6243 + $0x80] sm:$0xff]
    %v7335 = vld [vmem:[%s6243 + $0x88] sm:$0xff]
    %v7336 = vld [vmem:[%s6243 + $0x90] sm:$0xff]
    %v7337 = vld [vmem:[%s6243 + $0x98] sm:$0xff]
    %v7338 = vld [vmem:[%s6243 + $0xa0] sm:$0xff]
    %v7339 = vld [vmem:[%s6243 + $0xa8] sm:$0xff]
    %v7340 = vld [vmem:[%s6243 + $0xb0] sm:$0xff]
    %v7341 = vld [vmem:[%s6243 + $0xb8] sm:$0xff]
    %v7342 = vld [vmem:[%s6243 + $0xc0] sm:$0xff]
    %v7343 = vld [vmem:[%s6243 + $0xc8] sm:$0xff]
    %v7344 = vld [vmem:[%s6243 + $0xd0] sm:$0xff]
    %v7345 = vld [vmem:[%s6243 + $0xd8] sm:$0xff]
    %v7346 = vld [vmem:[%s6243 + $0xe0] sm:$0xff]
    %v7347 = vld [vmem:[%s6243 + $0xe8] sm:$0xff]
    %v7348 = vld [vmem:[%s6243 + $0xf0] sm:$0xff]
    %v7349 = vld [vmem:[%s6243 + $0xf8] sm:$0xff]
    %v7350 = vld [vmem:[%s6243 + $0x100] sm:$0xff]
    %v7351 = vld [vmem:[%s6243 + $0x108] sm:$0xff]
    %v7352 = vld [vmem:[%s6243 + $0x110] sm:$0xff]
    %v7353 = vld [vmem:[%s6243 + $0x118] sm:$0xff]
    %v7354 = vld [vmem:[%s6243 + $0x120] sm:$0xff]
    %v7355 = vld [vmem:[%s6243 + $0x128] sm:$0xff]
    %v7356 = vld [vmem:[%s6243 + $0x130] sm:$0xff]
    %v7357 = vld [vmem:[%s6243 + $0x138] sm:$0xff]
    %v7358 = vld [vmem:[%s6243 + $0x140] sm:$0xff]
    %v7359 = vld [vmem:[%s6243 + $0x148] sm:$0xff]
    %v7360 = vld [vmem:[%s6243 + $0x150] sm:$0xff]
    %v7361 = vld [vmem:[%s6243 + $0x158] sm:$0xff]
    %v7362 = vld [vmem:[%s6243 + $0x160] sm:$0xff]
    %v7363 = vld [vmem:[%s6243 + $0x168] sm:$0xff]
    %v7364 = vld [vmem:[%s6243 + $0x170] sm:$0xff]
    %v7365 = vld [vmem:[%s6243 + $0x178] sm:$0xff]
    %7366 = vmatprep.subr.mxu0 %v7319
    %7367 = vmatpush1.msra.mxu0 %v7318
    %7368 = vmatprep.subr.mxu0 %v7322
    %7369 = vmatpush1.msra.mxu0 %v7321
    %7370 = vmatprep.subr.mxu0 %v7325
    %7371 = vmatpush1.msra.mxu0 %v7324
    %7372 = vmatprep.subr.mxu0 %v7328
    %7373 = vmatpush1.msra.mxu0 %v7327
    %7374 = vmatprep.subr.mxu0 %v7331
    %7375 = vmatpush1.msra.mxu0 %v7330
    %7376 = vmatprep.subr.mxu0 %v7334
    %7377 = vmatpush1.msra.mxu0 %v7333
    %7378 = vmatprep.subr.mxu0 %v7337
    %7379 = vmatpush1.msra.mxu0 %v7336
    %7380 = vmatprep.subr.mxu0 %v7340
    %7381 = vmatpush1.msra.mxu0 %v7339
    %7382 = vmatprep.subr.mxu0 %v7343
    %7383 = vmatpush1.msra.mxu0 %v7342
    %7384 = vmatprep.subr.mxu0 %v7346
    %7385 = vmatpush1.msra.mxu0 %v7345
    %7386 = vmatprep.subr.mxu0 %v7349
    %7387 = vmatpush1.msra.mxu0 %v7348
    %7388 = vmatprep.subr.mxu0 %v7352
    %7389 = vmatpush1.msra.mxu0 %v7351
    %7390 = vmatprep.subr.mxu0 %v7355
    %7391 = vmatpush1.msra.mxu0 %v7354
    %7392 = vmatprep.subr.mxu0 %v7358
    %7393 = vmatpush1.msra.mxu0 %v7357
    %7394 = vmatprep.subr.mxu0 %v7361
    %7395 = vmatpush1.msra.mxu0 %v7360
    %7396 = vmatprep.subr.mxu0 %v7364
    %7397 = vmatpush1.msra.mxu0 %v7363
    %7398 = vmatprep.subr.mxu0 0.0
    %7399 = vmatpush1.msra.mxu0 0.0
    %7400 = vmatprep.subr.mxu0 0.0
    %7401 = vmatpush1.msra.mxu0 0.0
    %7402 = vmatprep.subr.mxu0 0.0
    %7403 = vmatpush1.msra.mxu0 0.0
    %7404 = vmatprep.subr.mxu0 0.0
    %7405 = vmatpush1.msra.mxu0 0.0
    %7406 = vmatprep.subr.mxu0 0.0
    %7407 = vmatpush1.msra.mxu0 0.0
    %7408 = vmatprep.subr.mxu0 0.0
    %7409 = vmatpush1.msra.mxu0 0.0
    %7410 = vmatprep.subr.mxu0 0.0
    %7411 = vmatpush1.msra.mxu0 0.0
    %7412 = vmatprep.subr.mxu0 0.0
    %7413 = vmatpush1.msra.mxu0 0.0
    %7414 = vmatprep.subr.mxu0 0.0
    %7415 = vmatpush1.msra.mxu0 0.0
    %7416 = vmatprep.subr.mxu0 0.0
    %7417 = vmatpush1.msra.mxu0 0.0
    %7418 = vmatprep.subr.mxu0 0.0
    %7419 = vmatpush1.msra.mxu0 0.0
    %7420 = vmatprep.subr.mxu0 0.0
    %7421 = vmatpush1.msra.mxu0 0.0
    %7422 = vmatprep.subr.mxu0 0.0
    %7423 = vmatpush1.msra.mxu0 0.0
    %7424 = vmatprep.subr.mxu0 0.0
    %7425 = vmatpush1.msra.mxu0 0.0
    %7426 = vmatprep.subr.mxu0 0.0
    %7427 = vmatpush1.msra.mxu0 0.0
    %7428 = vmatprep.subr.mxu0 0.0
    %7429 = vmatpush1.msra.mxu0 0.0
    %7430 = vmatprep.mubr.f32.mxu0 0.0
    %7431 = vmatmul.mubr.f32.gmra.mrb[0].mxu0 %v7312
    %v7432 = vpop.f32.mrb[0].mxu0
    %v7433 = vadd.f32 0.0, %v7432
    %v7434 = vpop.f32.mrb[0].mxu0
    %v7435 = vadd.f32 0.0, %v7434
    %7436 = vdwg.mxu0
    %7437 = vmatprep.subr.mxu0 0.0
    %7438 = vmatpush1.msra.mxu0 %v7320
    %7439 = vmatprep.subr.mxu0 0.0
    %7440 = vmatpush1.msra.mxu0 %v7323
    %7441 = vmatprep.subr.mxu0 0.0
    %7442 = vmatpush1.msra.mxu0 %v7326
    %7443 = vmatprep.subr.mxu0 0.0
    %7444 = vmatpush1.msra.mxu0 %v7329
    %7445 = vmatprep.subr.mxu0 0.0
    %7446 = vmatpush1.msra.mxu0 %v7332
    %7447 = vmatprep.subr.mxu0 0.0
    %7448 = vmatpush1.msra.mxu0 %v7335
    %7449 = vmatprep.subr.mxu0 0.0
    %7450 = vmatpush1.msra.mxu0 %v7338
    %7451 = vmatprep.subr.mxu0 0.0
    %7452 = vmatpush1.msra.mxu0 %v7341
    %7453 = vmatprep.subr.mxu0 0.0
    %7454 = vmatpush1.msra.mxu0 %v7344
    %7455 = vmatprep.subr.mxu0 0.0
    %7456 = vmatpush1.msra.mxu0 %v7347
    %7457 = vmatprep.subr.mxu0 0.0
    %7458 = vmatpush1.msra.mxu0 %v7350
    %7459 = vmatprep.subr.mxu0 0.0
    %7460 = vmatpush1.msra.mxu0 %v7353
    %7461 = vmatprep.subr.mxu0 0.0
    %7462 = vmatpush1.msra.mxu0 %v7356
    %7463 = vmatprep.subr.mxu0 0.0
    %7464 = vmatpush1.msra.mxu0 %v7359
    %7465 = vmatprep.subr.mxu0 0.0
    %7466 = vmatpush1.msra.mxu0 %v7362
    %7467 = vmatprep.subr.mxu0 0.0
    %7468 = vmatpush1.msra.mxu0 %v7365
    %7469 = vmatprep.subr.mxu0 0.0
    %7470 = vmatpush1.msra.mxu0 0.0
    %7471 = vmatprep.subr.mxu0 0.0
    %7472 = vmatpush1.msra.mxu0 0.0
    %7473 = vmatprep.subr.mxu0 0.0
    %7474 = vmatpush1.msra.mxu0 0.0
    %7475 = vmatprep.subr.mxu0 0.0
    %7476 = vmatpush1.msra.mxu0 0.0
    %7477 = vmatprep.subr.mxu0 0.0
    %7478 = vmatpush1.msra.mxu0 0.0
    %7479 = vmatprep.subr.mxu0 0.0
    %7480 = vmatpush1.msra.mxu0 0.0
    %7481 = vmatprep.subr.mxu0 0.0
    %7482 = vmatpush1.msra.mxu0 0.0
    %7483 = vmatprep.subr.mxu0 0.0
    %7484 = vmatpush1.msra.mxu0 0.0
    %7485 = vmatprep.subr.mxu0 0.0
    %7486 = vmatpush1.msra.mxu0 0.0
    %7487 = vmatprep.subr.mxu0 0.0
    %7488 = vmatpush1.msra.mxu0 0.0
    %7489 = vmatprep.subr.mxu0 0.0
    %7490 = vmatpush1.msra.mxu0 0.0
    %7491 = vmatprep.subr.mxu0 0.0
    %7492 = vmatpush1.msra.mxu0 0.0
    %7493 = vmatprep.subr.mxu0 0.0
    %7494 = vmatpush1.msra.mxu0 0.0
    %7495 = vmatprep.subr.mxu0 0.0
    %7496 = vmatpush1.msra.mxu0 0.0
    %7497 = vmatprep.subr.mxu0 0.0
    %7498 = vmatpush1.msra.mxu0 0.0
    %7499 = vmatprep.subr.mxu0 0.0
    %7500 = vmatpush1.msra.mxu0 0.0
    %7501 = vmatprep.mubr.f32.mxu0 0.0
    %7502 = vmatmul.mubr.f32.gmra.mrb[0].mxu0 %v7312
    %v7503 = vpop.f32.mrb[0].mxu0
    %v7504 = vadd.f32 0.0, %v7503
    %v7505 = vpop.f32.mrb[0].mxu0
    %7506 = vdwg.mxu0
    %v7507 = vadd.f32 %v7315, %v7433
    %v7508 = vxor.u32 %v7507, 2147483648
    %v7509 = vmul.f32 %v7508, 1.442695
    %v7510 = vpow.pop %v7509
    %v7511 = vadd.f32 %v7510, 1.0
    %v7512 = vrcp.pop %v7511
    %v7513 = vmul.f32 1.0, %v7512
    %v7514 = vadd.f32 %v7316, %v7435
    %v7515 = vxor.u32 %v7514, 2147483648
    %v7516 = vmul.f32 %v7515, 1.442695
    %v7517 = vpow.pop %v7516
    %v7518 = vadd.f32 %v7517, 1.0
    %v7519 = vrcp.pop %v7518
    %v7520 = vmul.f32 1.0, %v7519
    %v7521 = vadd.f32 %v7504, %v6236
    %v7522 = vmul.f32 %v7513, %v7521
    %v7523 = vadd.f32 %v7317, %v7522
    %v7524 = vtanh.pop %v7523
    %v7525 = vsub.f32 %v7312, %v7524
    %v7526 = vmul.f32 %v7520, %v7525
    %v7527 = vadd.f32 %v7524, %v7526
    %s7528 = scalar_lea.vmem %s6, 40
    %7529 = vst [vmem:[%s7528] sm:$0xff] %v7527
    %v7530 = vld [vmem:[%s3440] sm:$0xff]
    %v7531 = vld [vmem:[%s3440 + $0x8] sm:$0xff]
    %v7532 = vld [vmem:[%s3440 + $0x10] sm:$0xff]
    %v7533 = vld [vmem:[%s6243] sm:$0xff]
    %v7534 = vld [vmem:[%s6243 + $0x8] sm:$0xff]
    %v7535 = vld [vmem:[%s6243 + $0x10] sm:$0xff]
    %v7536 = vld [vmem:[%s6243 + $0x18] sm:$0xff]
    %v7537 = vld [vmem:[%s6243 + $0x20] sm:$0xff]
    %v7538 = vld [vmem:[%s6243 + $0x28] sm:$0xff]
    %v7539 = vld [vmem:[%s6243 + $0x30] sm:$0xff]
    %v7540 = vld [vmem:[%s6243 + $0x38] sm:$0xff]
    %v7541 = vld [vmem:[%s6243 + $0x40] sm:$0xff]
    %v7542 = vld [vmem:[%s6243 + $0x48] sm:$0xff]
    %v7543 = vld [vmem:[%s6243 + $0x50] sm:$0xff]
    %v7544 = vld [vmem:[%s6243 + $0x58] sm:$0xff]
    %v7545 = vld [vmem:[%s6243 + $0x60] sm:$0xff]
    %v7546 = vld [vmem:[%s6243 + $0x68] sm:$0xff]
    %v7547 = vld [vmem:[%s6243 + $0x70] sm:$0xff]
    %v7548 = vld [vmem:[%s6243 + $0x78] sm:$0xff]
    %v7549 = vld [vmem:[%s6243 + $0x80] sm:$0xff]
    %v7550 = vld [vmem:[%s6243 + $0x88] sm:$0xff]
    %v7551 = vld [vmem:[%s6243 + $0x90] sm:$0xff]
    %v7552 = vld [vmem:[%s6243 + $0x98] sm:$0xff]
    %v7553 = vld [vmem:[%s6243 + $0xa0] sm:$0xff]
    %v7554 = vld [vmem:[%s6243 + $0xa8] sm:$0xff]
    %v7555 = vld [vmem:[%s6243 + $0xb0] sm:$0xff]
    %v7556 = vld [vmem:[%s6243 + $0xb8] sm:$0xff]
    %v7557 = vld [vmem:[%s6243 + $0xc0] sm:$0xff]
    %v7558 = vld [vmem:[%s6243 + $0xc8] sm:$0xff]
    %v7559 = vld [vmem:[%s6243 + $0xd0] sm:$0xff]
    %v7560 = vld [vmem:[%s6243 + $0xd8] sm:$0xff]
    %v7561 = vld [vmem:[%s6243 + $0xe0] sm:$0xff]
    %v7562 = vld [vmem:[%s6243 + $0xe8] sm:$0xff]
    %v7563 = vld [vmem:[%s6243 + $0xf0] sm:$0xff]
    %v7564 = vld [vmem:[%s6243 + $0xf8] sm:$0xff]
    %v7565 = vld [vmem:[%s6243 + $0x100] sm:$0xff]
    %v7566 = vld [vmem:[%s6243 + $0x108] sm:$0xff]
    %v7567 = vld [vmem:[%s6243 + $0x110] sm:$0xff]
    %v7568 = vld [vmem:[%s6243 + $0x118] sm:$0xff]
    %v7569 = vld [vmem:[%s6243 + $0x120] sm:$0xff]
    %v7570 = vld [vmem:[%s6243 + $0x128] sm:$0xff]
    %v7571 = vld [vmem:[%s6243 + $0x130] sm:$0xff]
    %v7572 = vld [vmem:[%s6243 + $0x138] sm:$0xff]
    %v7573 = vld [vmem:[%s6243 + $0x140] sm:$0xff]
    %v7574 = vld [vmem:[%s6243 + $0x148] sm:$0xff]
    %v7575 = vld [vmem:[%s6243 + $0x150] sm:$0xff]
    %v7576 = vld [vmem:[%s6243 + $0x158] sm:$0xff]
    %v7577 = vld [vmem:[%s6243 + $0x160] sm:$0xff]
    %v7578 = vld [vmem:[%s6243 + $0x168] sm:$0xff]
    %v7579 = vld [vmem:[%s6243 + $0x170] sm:$0xff]
    %v7580 = vld [vmem:[%s6243 + $0x178] sm:$0xff]
    %7581 = vmatprep.subr.mxu0 %v7534
    %7582 = vmatpush1.msra.mxu0 %v7533
    %7583 = vmatprep.subr.mxu0 %v7537
    %7584 = vmatpush1.msra.mxu0 %v7536
    %7585 = vmatprep.subr.mxu0 %v7540
    %7586 = vmatpush1.msra.mxu0 %v7539
    %7587 = vmatprep.subr.mxu0 %v7543
    %7588 = vmatpush1.msra.mxu0 %v7542
    %7589 = vmatprep.subr.mxu0 %v7546
    %7590 = vmatpush1.msra.mxu0 %v7545
    %7591 = vmatprep.subr.mxu0 %v7549
    %7592 = vmatpush1.msra.mxu0 %v7548
    %7593 = vmatprep.subr.mxu0 %v7552
    %7594 = vmatpush1.msra.mxu0 %v7551
    %7595 = vmatprep.subr.mxu0 %v7555
    %7596 = vmatpush1.msra.mxu0 %v7554
    %7597 = vmatprep.subr.mxu0 %v7558
    %7598 = vmatpush1.msra.mxu0 %v7557
    %7599 = vmatprep.subr.mxu0 %v7561
    %7600 = vmatpush1.msra.mxu0 %v7560
    %7601 = vmatprep.subr.mxu0 %v7564
    %7602 = vmatpush1.msra.mxu0 %v7563
    %7603 = vmatprep.subr.mxu0 %v7567
    %7604 = vmatpush1.msra.mxu0 %v7566
    %7605 = vmatprep.subr.mxu0 %v7570
    %7606 = vmatpush1.msra.mxu0 %v7569
    %7607 = vmatprep.subr.mxu0 %v7573
    %7608 = vmatpush1.msra.mxu0 %v7572
    %7609 = vmatprep.subr.mxu0 %v7576
    %7610 = vmatpush1.msra.mxu0 %v7575
    %7611 = vmatprep.subr.mxu0 %v7579
    %7612 = vmatpush1.msra.mxu0 %v7578
    %7613 = vmatprep.subr.mxu0 0.0
    %7614 = vmatpush1.msra.mxu0 0.0
    %7615 = vmatprep.subr.mxu0 0.0
    %7616 = vmatpush1.msra.mxu0 0.0
    %7617 = vmatprep.subr.mxu0 0.0
    %7618 = vmatpush1.msra.mxu0 0.0
    %7619 = vmatprep.subr.mxu0 0.0
    %7620 = vmatpush1.msra.mxu0 0.0
    %7621 = vmatprep.subr.mxu0 0.0
    %7622 = vmatpush1.msra.mxu0 0.0
    %7623 = vmatprep.subr.mxu0 0.0
    %7624 = vmatpush1.msra.mxu0 0.0
    %7625 = vmatprep.subr.mxu0 0.0
    %7626 = vmatpush1.msra.mxu0 0.0
    %7627 = vmatprep.subr.mxu0 0.0
    %7628 = vmatpush1.msra.mxu0 0.0
    %7629 = vmatprep.subr.mxu0 0.0
    %7630 = vmatpush1.msra.mxu0 0.0
    %7631 = vmatprep.subr.mxu0 0.0
    %7632 = vmatpush1.msra.mxu0 0.0
    %7633 = vmatprep.subr.mxu0 0.0
    %7634 = vmatpush1.msra.mxu0 0.0
    %7635 = vmatprep.subr.mxu0 0.0
    %7636 = vmatpush1.msra.mxu0 0.0
    %7637 = vmatprep.subr.mxu0 0.0
    %7638 = vmatpush1.msra.mxu0 0.0
    %7639 = vmatprep.subr.mxu0 0.0
    %7640 = vmatpush1.msra.mxu0 0.0
    %7641 = vmatprep.subr.mxu0 0.0
    %7642 = vmatpush1.msra.mxu0 0.0
    %7643 = vmatprep.subr.mxu0 0.0
    %7644 = vmatpush1.msra.mxu0 0.0
    %7645 = vmatprep.mubr.f32.mxu0 0.0
    %7646 = vmatmul.mubr.f32.gmra.mrb[0].mxu0 %v7527
    %v7647 = vpop.f32.mrb[0].mxu0
    %v7648 = vadd.f32 0.0, %v7647
    %v7649 = vpop.f32.mrb[0].mxu0
    %v7650 = vadd.f32 0.0, %v7649
    %7651 = vdwg.mxu0
    %7652 = vmatprep.subr.mxu0 0.0
    %7653 = vmatpush1.msra.mxu0 %v7535
    %7654 = vmatprep.subr.mxu0 0.0
    %7655 = vmatpush1.msra.mxu0 %v7538
    %7656 = vmatprep.subr.mxu0 0.0
    %7657 = vmatpush1.msra.mxu0 %v7541
    %7658 = vmatprep.subr.mxu0 0.0
    %7659 = vmatpush1.msra.mxu0 %v7544
    %7660 = vmatprep.subr.mxu0 0.0
    %7661 = vmatpush1.msra.mxu0 %v7547
    %7662 = vmatprep.subr.mxu0 0.0
    %7663 = vmatpush1.msra.mxu0 %v7550
    %7664 = vmatprep.subr.mxu0 0.0
    %7665 = vmatpush1.msra.mxu0 %v7553
    %7666 = vmatprep.subr.mxu0 0.0
    %7667 = vmatpush1.msra.mxu0 %v7556
    %7668 = vmatprep.subr.mxu0 0.0
    %7669 = vmatpush1.msra.mxu0 %v7559
    %7670 = vmatprep.subr.mxu0 0.0
    %7671 = vmatpush1.msra.mxu0 %v7562
    %7672 = vmatprep.subr.mxu0 0.0
    %7673 = vmatpush1.msra.mxu0 %v7565
    %7674 = vmatprep.subr.mxu0 0.0
    %7675 = vmatpush1.msra.mxu0 %v7568
    %7676 = vmatprep.subr.mxu0 0.0
    %7677 = vmatpush1.msra.mxu0 %v7571
    %7678 = vmatprep.subr.mxu0 0.0
    %7679 = vmatpush1.msra.mxu0 %v7574
    %7680 = vmatprep.subr.mxu0 0.0
    %7681 = vmatpush1.msra.mxu0 %v7577
    %7682 = vmatprep.subr.mxu0 0.0
    %7683 = vmatpush1.msra.mxu0 %v7580
    %7684 = vmatprep.subr.mxu0 0.0
    %7685 = vmatpush1.msra.mxu0 0.0
    %7686 = vmatprep.subr.mxu0 0.0
    %7687 = vmatpush1.msra.mxu0 0.0
    %7688 = vmatprep.subr.mxu0 0.0
    %7689 = vmatpush1.msra.mxu0 0.0
    %7690 = vmatprep.subr.mxu0 0.0
    %7691 = vmatpush1.msra.mxu0 0.0
    %7692 = vmatprep.subr.mxu0 0.0
    %7693 = vmatpush1.msra.mxu0 0.0
    %7694 = vmatprep.subr.mxu0 0.0
    %7695 = vmatpush1.msra.mxu0 0.0
    %7696 = vmatprep.subr.mxu0 0.0
    %7697 = vmatpush1.msra.mxu0 0.0
    %7698 = vmatprep.subr.mxu0 0.0
    %7699 = vmatpush1.msra.mxu0 0.0
    %7700 = vmatprep.subr.mxu0 0.0
    %7701 = vmatpush1.msra.mxu0 0.0
    %7702 = vmatprep.subr.mxu0 0.0
    %7703 = vmatpush1.msra.mxu0 0.0
    %7704 = vmatprep.subr.mxu0 0.0
    %7705 = vmatpush1.msra.mxu0 0.0
    %7706 = vmatprep.subr.mxu0 0.0
    %7707 = vmatpush1.msra.mxu0 0.0
    %7708 = vmatprep.subr.mxu0 0.0
    %7709 = vmatpush1.msra.mxu0 0.0
    %7710 = vmatprep.subr.mxu0 0.0
    %7711 = vmatpush1.msra.mxu0 0.0
    %7712 = vmatprep.subr.mxu0 0.0
    %7713 = vmatpush1.msra.mxu0 0.0
    %7714 = vmatprep.subr.mxu0 0.0
    %7715 = vmatpush1.msra.mxu0 0.0
    %7716 = vmatprep.mubr.f32.mxu0 0.0
    %7717 = vmatmul.mubr.f32.gmra.mrb[0].mxu0 %v7527
    %v7718 = vpop.f32.mrb[0].mxu0
    %v7719 = vadd.f32 0.0, %v7718
    %v7720 = vpop.f32.mrb[0].mxu0
    %7721 = vdwg.mxu0
    %v7722 = vadd.f32 %v7530, %v7648
    %v7723 = vxor.u32 %v7722, 2147483648
    %v7724 = vmul.f32 %v7723, 1.442695
    %v7725 = vpow.pop %v7724
    %v7726 = vadd.f32 %v7725, 1.0
    %v7727 = vrcp.pop %v7726
    %v7728 = vmul.f32 1.0, %v7727
    %v7729 = vadd.f32 %v7531, %v7650
    %v7730 = vxor.u32 %v7729, 2147483648
    %v7731 = vmul.f32 %v7730, 1.442695
    %v7732 = vpow.pop %v7731
    %v7733 = vadd.f32 %v7732, 1.0
    %v7734 = vrcp.pop %v7733
    %v7735 = vmul.f32 1.0, %v7734
    %v7736 = vadd.f32 %v7719, %v6236
    %v7737 = vmul.f32 %v7728, %v7736
    %v7738 = vadd.f32 %v7532, %v7737
    %v7739 = vtanh.pop %v7738
    %v7740 = vsub.f32 %v7527, %v7739
    %v7741 = vmul.f32 %v7735, %v7740
    %v7742 = vadd.f32 %v7739, %v7741
    %s7743 = scalar_lea.vmem %s6, 48
    %7744 = vst [vmem:[%s7743] sm:$0xff] %v7742
    %v7745 = vld [vmem:[%s3656] sm:$0xff]
    %v7746 = vld [vmem:[%s3656 + $0x8] sm:$0xff]
    %v7747 = vld [vmem:[%s3656 + $0x10] sm:$0xff]
    %v7748 = vld [vmem:[%s6243] sm:$0xff]
    %v7749 = vld [vmem:[%s6243 + $0x8] sm:$0xff]
    %v7750 = vld [vmem:[%s6243 + $0x10] sm:$0xff]
    %v7751 = vld [vmem:[%s6243 + $0x18] sm:$0xff]
    %v7752 = vld [vmem:[%s6243 + $0x20] sm:$0xff]
    %v7753 = vld [vmem:[%s6243 + $0x28] sm:$0xff]
    %v7754 = vld [vmem:[%s6243 + $0x30] sm:$0xff]
    %v7755 = vld [vmem:[%s6243 + $0x38] sm:$0xff]
    %v7756 = vld [vmem:[%s6243 + $0x40] sm:$0xff]
    %v7757 = vld [vmem:[%s6243 + $0x48] sm:$0xff]
    %v7758 = vld [vmem:[%s6243 + $0x50] sm:$0xff]
    %v7759 = vld [vmem:[%s6243 + $0x58] sm:$0xff]
    %v7760 = vld [vmem:[%s6243 + $0x60] sm:$0xff]
    %v7761 = vld [vmem:[%s6243 + $0x68] sm:$0xff]
    %v7762 = vld [vmem:[%s6243 + $0x70] sm:$0xff]
    %v7763 = vld [vmem:[%s6243 + $0x78] sm:$0xff]
    %v7764 = vld [vmem:[%s6243 + $0x80] sm:$0xff]
    %v7765 = vld [vmem:[%s6243 + $0x88] sm:$0xff]
    %v7766 = vld [vmem:[%s6243 + $0x90] sm:$0xff]
    %v7767 = vld [vmem:[%s6243 + $0x98] sm:$0xff]
    %v7768 = vld [vmem:[%s6243 + $0xa0] sm:$0xff]
    %v7769 = vld [vmem:[%s6243 + $0xa8] sm:$0xff]
    %v7770 = vld [vmem:[%s6243 + $0xb0] sm:$0xff]
    %v7771 = vld [vmem:[%s6243 + $0xb8] sm:$0xff]
    %v7772 = vld [vmem:[%s6243 + $0xc0] sm:$0xff]
    %v7773 = vld [vmem:[%s6243 + $0xc8] sm:$0xff]
    %v7774 = vld [vmem:[%s6243 + $0xd0] sm:$0xff]
    %v7775 = vld [vmem:[%s6243 + $0xd8] sm:$0xff]
    %v7776 = vld [vmem:[%s6243 + $0xe0] sm:$0xff]
    %v7777 = vld [vmem:[%s6243 + $0xe8] sm:$0xff]
    %v7778 = vld [vmem:[%s6243 + $0xf0] sm:$0xff]
    %v7779 = vld [vmem:[%s6243 + $0xf8] sm:$0xff]
    %v7780 = vld [vmem:[%s6243 + $0x100] sm:$0xff]
    %v7781 = vld [vmem:[%s6243 + $0x108] sm:$0xff]
    %v7782 = vld [vmem:[%s6243 + $0x110] sm:$0xff]
    %v7783 = vld [vmem:[%s6243 + $0x118] sm:$0xff]
    %v7784 = vld [vmem:[%s6243 + $0x120] sm:$0xff]
    %v7785 = vld [vmem:[%s6243 + $0x128] sm:$0xff]
    %v7786 = vld [vmem:[%s6243 + $0x130] sm:$0xff]
    %v7787 = vld [vmem:[%s6243 + $0x138] sm:$0xff]
    %v7788 = vld [vmem:[%s6243 + $0x140] sm:$0xff]
    %v7789 = vld [vmem:[%s6243 + $0x148] sm:$0xff]
    %v7790 = vld [vmem:[%s6243 + $0x150] sm:$0xff]
    %v7791 = vld [vmem:[%s6243 + $0x158] sm:$0xff]
    %v7792 = vld [vmem:[%s6243 + $0x160] sm:$0xff]
    %v7793 = vld [vmem:[%s6243 + $0x168] sm:$0xff]
    %v7794 = vld [vmem:[%s6243 + $0x170] sm:$0xff]
    %v7795 = vld [vmem:[%s6243 + $0x178] sm:$0xff]
    %7796 = vmatprep.subr.mxu0 %v7749
    %7797 = vmatpush1.msra.mxu0 %v7748
    %7798 = vmatprep.subr.mxu0 %v7752
    %7799 = vmatpush1.msra.mxu0 %v7751
    %7800 = vmatprep.subr.mxu0 %v7755
    %7801 = vmatpush1.msra.mxu0 %v7754
    %7802 = vmatprep.subr.mxu0 %v7758
    %7803 = vmatpush1.msra.mxu0 %v7757
    %7804 = vmatprep.subr.mxu0 %v7761
    %7805 = vmatpush1.msra.mxu0 %v7760
    %7806 = vmatprep.subr.mxu0 %v7764
    %7807 = vmatpush1.msra.mxu0 %v7763
    %7808 = vmatprep.subr.mxu0 %v7767
    %7809 = vmatpush1.msra.mxu0 %v7766
    %7810 = vmatprep.subr.mxu0 %v7770
    %7811 = vmatpush1.msra.mxu0 %v7769
    %7812 = vmatprep.subr.mxu0 %v7773
    %7813 = vmatpush1.msra.mxu0 %v7772
    %7814 = vmatprep.subr.mxu0 %v7776
    %7815 = vmatpush1.msra.mxu0 %v7775
    %7816 = vmatprep.subr.mxu0 %v7779
    %7817 = vmatpush1.msra.mxu0 %v7778
    %7818 = vmatprep.subr.mxu0 %v7782
    %7819 = vmatpush1.msra.mxu0 %v7781
    %7820 = vmatprep.subr.mxu0 %v7785
    %7821 = vmatpush1.msra.mxu0 %v7784
    %7822 = vmatprep.subr.mxu0 %v7788
    %7823 = vmatpush1.msra.mxu0 %v7787
    %7824 = vmatprep.subr.mxu0 %v7791
    %7825 = vmatpush1.msra.mxu0 %v7790
    %7826 = vmatprep.subr.mxu0 %v7794
    %7827 = vmatpush1.msra.mxu0 %v7793
    %7828 = vmatprep.subr.mxu0 0.0
    %7829 = vmatpush1.msra.mxu0 0.0
    %7830 = vmatprep.subr.mxu0 0.0
    %7831 = vmatpush1.msra.mxu0 0.0
    %7832 = vmatprep.subr.mxu0 0.0
    %7833 = vmatpush1.msra.mxu0 0.0
    %7834 = vmatprep.subr.mxu0 0.0
    %7835 = vmatpush1.msra.mxu0 0.0
    %7836 = vmatprep.subr.mxu0 0.0
    %7837 = vmatpush1.msra.mxu0 0.0
    %7838 = vmatprep.subr.mxu0 0.0
    %7839 = vmatpush1.msra.mxu0 0.0
    %7840 = vmatprep.subr.mxu0 0.0
    %7841 = vmatpush1.msra.mxu0 0.0
    %7842 = vmatprep.subr.mxu0 0.0
    %7843 = vmatpush1.msra.mxu0 0.0
    %7844 = vmatprep.subr.mxu0 0.0
    %7845 = vmatpush1.msra.mxu0 0.0
    %7846 = vmatprep.subr.mxu0 0.0
    %7847 = vmatpush1.msra.mxu0 0.0
    %7848 = vmatprep.subr.mxu0 0.0
    %7849 = vmatpush1.msra.mxu0 0.0
    %7850 = vmatprep.subr.mxu0 0.0
    %7851 = vmatpush1.msra.mxu0 0.0
    %7852 = vmatprep.subr.mxu0 0.0
    %7853 = vmatpush1.msra.mxu0 0.0
    %7854 = vmatprep.subr.mxu0 0.0
    %7855 = vmatpush1.msra.mxu0 0.0
    %7856 = vmatprep.subr.mxu0 0.0
    %7857 = vmatpush1.msra.mxu0 0.0
    %7858 = vmatprep.subr.mxu0 0.0
    %7859 = vmatpush1.msra.mxu0 0.0
    %7860 = vmatprep.mubr.f32.mxu0 0.0
    %7861 = vmatmul.mubr.f32.gmra.mrb[0].mxu0 %v7742
    %v7862 = vpop.f32.mrb[0].mxu0
    %v7863 = vadd.f32 0.0, %v7862
    %v7864 = vpop.f32.mrb[0].mxu0
    %v7865 = vadd.f32 0.0, %v7864
    %7866 = vdwg.mxu0
    %7867 = vmatprep.subr.mxu0 0.0
    %7868 = vmatpush1.msra.mxu0 %v7750
    %7869 = vmatprep.subr.mxu0 0.0
    %7870 = vmatpush1.msra.mxu0 %v7753
    %7871 = vmatprep.subr.mxu0 0.0
    %7872 = vmatpush1.msra.mxu0 %v7756
    %7873 = vmatprep.subr.mxu0 0.0
    %7874 = vmatpush1.msra.mxu0 %v7759
    %7875 = vmatprep.subr.mxu0 0.0
    %7876 = vmatpush1.msra.mxu0 %v7762
    %7877 = vmatprep.subr.mxu0 0.0
    %7878 = vmatpush1.msra.mxu0 %v7765
    %7879 = vmatprep.subr.mxu0 0.0
    %7880 = vmatpush1.msra.mxu0 %v7768
    %7881 = vmatprep.subr.mxu0 0.0
    %7882 = vmatpush1.msra.mxu0 %v7771
    %7883 = vmatprep.subr.mxu0 0.0
    %7884 = vmatpush1.msra.mxu0 %v7774
    %7885 = vmatprep.subr.mxu0 0.0
    %7886 = vmatpush1.msra.mxu0 %v7777
    %7887 = vmatprep.subr.mxu0 0.0
    %7888 = vmatpush1.msra.mxu0 %v7780
    %7889 = vmatprep.subr.mxu0 0.0
    %7890 = vmatpush1.msra.mxu0 %v7783
    %7891 = vmatprep.subr.mxu0 0.0
    %7892 = vmatpush1.msra.mxu0 %v7786
    %7893 = vmatprep.subr.mxu0 0.0
    %7894 = vmatpush1.msra.mxu0 %v7789
    %7895 = vmatprep.subr.mxu0 0.0
    %7896 = vmatpush1.msra.mxu0 %v7792
    %7897 = vmatprep.subr.mxu0 0.0
    %7898 = vmatpush1.msra.mxu0 %v7795
    %7899 = vmatprep.subr.mxu0 0.0
    %7900 = vmatpush1.msra.mxu0 0.0
    %7901 = vmatprep.subr.mxu0 0.0
    %7902 = vmatpush1.msra.mxu0 0.0
    %7903 = vmatprep.subr.mxu0 0.0
    %7904 = vmatpush1.msra.mxu0 0.0
    %7905 = vmatprep.subr.mxu0 0.0
    %7906 = vmatpush1.msra.mxu0 0.0
    %7907 = vmatprep.subr.mxu0 0.0
    %7908 = vmatpush1.msra.mxu0 0.0
    %7909 = vmatprep.subr.mxu0 0.0
    %7910 = vmatpush1.msra.mxu0 0.0
    %7911 = vmatprep.subr.mxu0 0.0
    %7912 = vmatpush1.msra.mxu0 0.0
    %7913 = vmatprep.subr.mxu0 0.0
    %7914 = vmatpush1.msra.mxu0 0.0
    %7915 = vmatprep.subr.mxu0 0.0
    %7916 = vmatpush1.msra.mxu0 0.0
    %7917 = vmatprep.subr.mxu0 0.0
    %7918 = vmatpush1.msra.mxu0 0.0
    %7919 = vmatprep.subr.mxu0 0.0
    %7920 = vmatpush1.msra.mxu0 0.0
    %7921 = vmatprep.subr.mxu0 0.0
    %7922 = vmatpush1.msra.mxu0 0.0
    %7923 = vmatprep.subr.mxu0 0.0
    %7924 = vmatpush1.msra.mxu0 0.0
    %7925 = vmatprep.subr.mxu0 0.0
    %7926 = vmatpush1.msra.mxu0 0.0
    %7927 = vmatprep.subr.mxu0 0.0
    %7928 = vmatpush1.msra.mxu0 0.0
    %7929 = vmatprep.subr.mxu0 0.0
    %7930 = vmatpush1.msra.mxu0 0.0
    %7931 = vmatprep.mubr.f32.mxu0 0.0
    %7932 = vmatmul.mubr.f32.gmra.mrb[0].mxu0 %v7742
    %v7933 = vpop.f32.mrb[0].mxu0
    %v7934 = vadd.f32 0.0, %v7933
    %v7935 = vpop.f32.mrb[0].mxu0
    %7936 = vdwg.mxu0
    %v7937 = vadd.f32 %v7745, %v7863
    %v7938 = vxor.u32 %v7937, 2147483648
    %v7939 = vmul.f32 %v7938, 1.442695
    %v7940 = vpow.pop %v7939
    %v7941 = vadd.f32 %v7940, 1.0
    %v7942 = vrcp.pop %v7941
    %v7943 = vmul.f32 1.0, %v7942
    %v7944 = vadd.f32 %v7746, %v7865
    %v7945 = vxor.u32 %v7944, 2147483648
    %v7946 = vmul.f32 %v7945, 1.442695
    %v7947 = vpow.pop %v7946
    %v7948 = vadd.f32 %v7947, 1.0
    %v7949 = vrcp.pop %v7948
    %v7950 = vmul.f32 1.0, %v7949
    %v7951 = vadd.f32 %v7934, %v6236
    %v7952 = vmul.f32 %v7943, %v7951
    %v7953 = vadd.f32 %v7747, %v7952
    %v7954 = vtanh.pop %v7953
    %v7955 = vsub.f32 %v7742, %v7954
    %v7956 = vmul.f32 %v7950, %v7955
    %v7957 = vadd.f32 %v7954, %v7956
    %s7958 = scalar_lea.vmem %s6, 56
    %7959 = vst [vmem:[%s7958] sm:$0xff] %v7957
    %7960 = vst [vmem:[%s6238] sm:$0xff] %v7957
    // Predicated region
    $region38: #{pt_gru_encoder_forward.1} parent=1 // pred_check
      _
    $region39: #{pt_gru_encoder_forward.1} parent=1 // pred_check_branch
      %7962 = sbr.rel (0) target = $region41
    $region40: #{pt_gru_encoder_forward.1} parent=1 // pred_region
      _
    $region41: #{pt_gru_encoder_forward.1} parent=1 // pred_fallthru
      _
    // Predicated region
    $region42: #{pt_gru_encoder_forward.1} parent=1 // pred_check
      _
    $region43: #{pt_gru_encoder_forward.1} parent=1 // pred_check_branch
      %7964 = sbr.rel (0) target = $region45
    $region44: #{pt_gru_encoder_forward.1} parent=1 // pred_region
      _
    $region45: #{pt_gru_encoder_forward.1} parent=1 // pred_fallthru
      _
    // Predicated region
    $region46: #{pt_gru_encoder_forward.1} parent=1 // pred_check
      _
    $region47: #{pt_gru_encoder_forward.1} parent=1 // pred_check_branch
      %7966 = sbr.rel (0) target = $region49
    $region48: #{pt_gru_encoder_forward.1} parent=1 // pred_region
      _
    $region49: #{pt_gru_encoder_forward.1} parent=1 // pred_fallthru
      _
    // Predicated region
    $region50: #{pt_gru_encoder_forward.1} parent=1 // pred_check
      _
    $region51: #{pt_gru_encoder_forward.1} parent=1 // pred_check_branch
      %7968 = sbr.rel (0) target = $region53
    $region52: #{pt_gru_encoder_forward.1} parent=1 // pred_region
      _
    $region53: #{pt_gru_encoder_forward.1} parent=1 // pred_fallthru
      _
    %7969 = vsyncpa [#allocation5], 1
    %7970 = vsyncpa [#allocation7], 1

</llo_original>
